<compile_context>
chip_gen: v7x
topology: tpu7x:2x2x1
jax: 0.10.0
libtpu: 0.0.40
codegen_flags: <defaults>
</compile_context>

<pallas_src>
import jax
import jax.numpy as jnp
from jax.experimental import pallas as pl
from jax.experimental.pallas import tpu as pltpu

LANE = 128          # lane width (last dim alignment)
SUBLANE = 8         # sublane width (second-to-last dim alignment)
TB_ENC = 32         # encoder timesteps per grid iteration
TB_DEC = 8          # decoder (target) timesteps per grid iteration
# TODO(synk): tune per generation (raise toward 64-100 MiB on v5e/v6e, cap ~48 MiB on v7x).
VMEM_LIMIT_BYTES = 32 * 1024 * 1024


def _round_up(x, m):
    return -(-x // m) * m


# ----------------------------------------------------------------------------
# Parameter packing helpers (wrapper-side glue).
# ----------------------------------------------------------------------------
def _pad_gate_cols(w, h, h_pad):
    """(R, 4h) -> (R, 4*h_pad) placing gate k's real columns at [k*h_pad, k*h_pad+h)."""
    r = w.shape[0]
    out = jnp.zeros((r, 4 * h_pad), w.dtype)
    for k in range(4):
        out = out.at[:, k * h_pad:k * h_pad + h].set(w[:, k * h:(k + 1) * h])
    return out


def _pad_rows(w, rows_pad):
    return jnp.pad(w, ((0, rows_pad - w.shape[0]), (0, 0)))


# ----------------------------------------------------------------------------
# Encoder kernel: single-layer LSTM. Grid iterates over time blocks; h/c carried
# in VMEM scratch (time axis sequential / "arbitrary").
# ----------------------------------------------------------------------------
def run_encoder(x_rows, w_in, w_hh, b, np_, tb_enc):
    """x_rows: (Tip*Np, Dp) bf16 time-major rows, w_in: (Dp, 4Hp) bf16,
    w_hh: (Hp, 4Hp) bf16, b: (1, 4Hp) f32 -> enc: (Np, Tip, Hp) f32 (batch-major)."""
    total_rows, Dp = x_rows.shape
    Np = np_
    Tip = total_rows // Np
    Hp = w_hh.shape[0]
    n_blocks = Tip // tb_enc

    def kernel(x_ref, wi_ref, wh_ref, b_ref, out_ref, h_sc, c_sc):
        @pl.when(pl.program_id(0) == 0)
        def _():
            h_sc[...] = jnp.zeros_like(h_sc)
            c_sc[...] = jnp.zeros_like(c_sc)

        h = h_sc[...]
        c = c_sc[...]
        w_hh_v = wh_ref[...]

        # Hoisted input projection for the whole time block (M = tb*Np, not Np);
        # bias folded in once so the step loop only adds the recurrent term.
        pre = jnp.dot(x_ref[...], wi_ref[...],
                      preferred_element_type=jnp.float32) + b_ref[...]

        for s in range(tb_enc):                      # statically unrolled block
            g_in = pre[s * Np:(s + 1) * Np, :]       # contiguous, 8-row aligned slice
            gates = g_in + jnp.dot(h.astype(jnp.bfloat16), w_hh_v,
                                   preferred_element_type=jnp.float32)
            gi = jax.nn.sigmoid(gates[:, 0 * Hp:1 * Hp])   # lane slices at Hp=128
            gf = jax.nn.sigmoid(gates[:, 1 * Hp:2 * Hp])
            gg = jnp.tanh(gates[:, 2 * Hp:3 * Hp])
            go = jax.nn.sigmoid(gates[:, 3 * Hp:4 * Hp])
            c = gf * c + gi * gg
            h = go * jnp.tanh(c)
            out_ref[:, s, :] = h                     # batch-major enc for attention

        h_sc[...] = h
        c_sc[...] = c

    return pl.pallas_call(
        kernel,
        out_shape=jax.ShapeDtypeStruct((Np, Tip, Hp), jnp.float32),
        grid_spec=pltpu.PrefetchScalarGridSpec(
            num_scalar_prefetch=0,
            grid=(n_blocks,),
            in_specs=[
                pl.BlockSpec((tb_enc * Np, Dp), lambda t: (t, 0)),
                pl.BlockSpec((Dp, 4 * Hp), lambda t: (0, 0)),
                pl.BlockSpec((Hp, 4 * Hp), lambda t: (0, 0)),
                pl.BlockSpec((1, 4 * Hp), lambda t: (0, 0)),
            ],
            out_specs=pl.BlockSpec((Np, tb_enc, Hp), lambda t: (0, t, 0)),
            scratch_shapes=[pltpu.VMEM((Np, Hp), jnp.float32),
                            pltpu.VMEM((Np, Hp), jnp.float32)],
        ),
        compiler_params=pltpu.CompilerParams(
            dimension_semantics=("arbitrary",),
            vmem_limit_bytes=VMEM_LIMIT_BYTES),
    )(x_rows, w_in, w_hh, b)


# ----------------------------------------------------------------------------
# Decoder kernel: teacher-forced LSTM + dot-product attention per step; output
# projection + cross-entropy deferred to one batched matmul per time block.
# ----------------------------------------------------------------------------
def run_decoder(emb_rows, tgt_rows, ce_mask, enc, w_e, w_rec, b_dec, w_out, b_out, *,
                n_real, td_real, ti_real, v_real, np_, tb_dec):
    """emb_rows: (Tdp*Np, Ep) bf16, tgt_rows: (Tdp*Np, 1) i32, ce_mask: (Tdp*Np, 1) f32,
    enc: (Np, Tip, Hp) bf16, w_e: (Ep, 4Hp) bf16, w_rec: (2Hp, 4Hp) bf16 (rows [ctx; h]),
    b_dec: (1, 4Hp) f32, w_out: (2Hp, Vp) bf16 (rows [h; ctx]), b_out: (1, Vp) f32."""
    Np = np_
    total_rows, Ep = emb_rows.shape
    Tdp = total_rows // Np
    _, Tip, Hp = enc.shape
    Vp = w_out.shape[1]
    n_blocks = Tdp // tb_dec
    R = tb_dec * Np
    denom = float(n_real * td_real)

    def kernel(emb_ref, tgt_ref, mask_ref, enc_ref, we_ref, wr_ref, b_ref,
               wo_ref, bo_ref, att_ref, loss_ref,
               h_sc, c_sc, ctx_sc, hc_sc, ce_sc):
        tb = pl.program_id(0)

        @pl.when(tb == 0)
        def _():
            h_sc[...] = jnp.zeros_like(h_sc)
            c_sc[...] = jnp.zeros_like(c_sc)
            ctx_sc[...] = jnp.zeros_like(ctx_sc)
            ce_sc[...] = jnp.zeros_like(ce_sc)

        h = h_sc[...]
        c = c_sc[...]
        ctx = ctx_sc[...]

        enc_v = enc_ref[...]            # (Np, Tip, Hp) bf16 attention memory (VMEM)
        w_rec_v = wr_ref[...]
        w_c_v = w_rec_v[:Hp]            # ctx -> gates
        w_h_v = w_rec_v[Hp:]            # h   -> gates

        # Hoisted input projection for the whole target block, bias folded in once.
        pre = jnp.dot(emb_ref[...], we_ref[...],
                      preferred_element_type=jnp.float32) + b_ref[...]

        # hoisted masks (broadcasts are not CSE'd inside the unrolled loop)
        ti_valid = jax.lax.broadcasted_iota(jnp.int32, (Np, Tip), 1) < ti_real

        for s in range(tb_dec):          # statically unrolled target steps
            g_in = pre[s * Np:(s + 1) * Np, :]
            gates = (g_in
                     + jnp.dot(ctx.astype(jnp.bfloat16), w_c_v,
                               preferred_element_type=jnp.float32)
                     + jnp.dot(h.astype(jnp.bfloat16), w_h_v,
                               preferred_element_type=jnp.float32))
            gi = jax.nn.sigmoid(gates[:, 0 * Hp:1 * Hp])
            gf = jax.nn.sigmoid(gates[:, 1 * Hp:2 * Hp])
            gg = jnp.tanh(gates[:, 2 * Hp:3 * Hp])
            go = jax.nn.sigmoid(gates[:, 3 * Hp:4 * Hp])
            c = gf * c + gi * gg
            h = go * jnp.tanh(c)

            # dot-product attention on the MXU (batched over N, singleton query)
            scores = jnp.einsum('nqh,nth->nqt',
                                h.astype(jnp.bfloat16)[:, None, :], enc_v,
                                preferred_element_type=jnp.float32)[:, 0, :]   # (Np, Tip)
            scores = jnp.where(ti_valid, scores, -1e30)       # mask padded frames
            m = jnp.max(scores, axis=-1, keepdims=True)
            e = jnp.where(ti_valid, jnp.exp(scores - m), 0.0)
            att = e / jnp.sum(e, axis=-1, keepdims=True)      # exact normalization
            ctx = jnp.einsum('nqt,nth->nqh',
                             att.astype(jnp.bfloat16)[:, None, :], enc_v,
                             preferred_element_type=jnp.float32)[:, 0, :]      # (Np, Hp)

            att_ref[s] = att
            # stash h/ctx for the deferred (post-loop) output projection + CE
            hc_sc[s * Np:(s + 1) * Np, 0 * Hp:1 * Hp] = h
            hc_sc[s * Np:(s + 1) * Np, 1 * Hp:2 * Hp] = ctx

        h_sc[...] = h
        c_sc[...] = c
        ctx_sc[...] = ctx

        # --- deferred output projection + cross-entropy for the whole block ---
        hc = hc_sc[...].astype(jnp.bfloat16)                               # (R, 2Hp)
        logits = jnp.dot(hc, wo_ref[...],
                         preferred_element_type=jnp.float32) + bo_ref[...]  # (R, Vp)
        v_valid = jax.lax.broadcasted_iota(jnp.int32, (1, Vp), 1) < v_real
        logits = jnp.where(v_valid, logits, -1e30)             # mask padded vocab
        lm = jnp.max(logits, axis=-1, keepdims=True)
        lse = lm + jnp.log(jnp.sum(jnp.where(v_valid, jnp.exp(logits - lm), 0.0),
                                   axis=-1, keepdims=True))                 # (R, 1)
        tgt_col = tgt_ref[...]                                              # (R, 1) i32
        v_iota = jax.lax.broadcasted_iota(jnp.int32, (R, Vp), 1)
        tgt_logit = jnp.sum(jnp.where(v_iota == tgt_col, logits, 0.0),
                            axis=-1, keepdims=True)                         # (R, 1)
        # TODO(synk): IGNORE_ID / per-example target-length masking of the original LAS
        # decoder is not implemented (synthetic targets are unpadded); ce_mask only
        # masks wrapper padding of the batch / step dims.
        ce_sc[...] = ce_sc[...] + jnp.sum(mask_ref[...] * (lse - tgt_logit)).reshape(1, 1)

        @pl.when(tb == pl.num_programs(0) - 1)
        def _():
            loss_ref[...] = ce_sc[...] / denom

    att_tm, loss = pl.pallas_call(
        kernel,
        out_shape=(jax.ShapeDtypeStruct((Tdp, Np, Tip), jnp.float32),
                   jax.ShapeDtypeStruct((1, 1), jnp.float32)),
        grid_spec=pltpu.PrefetchScalarGridSpec(
            num_scalar_prefetch=0,
            grid=(n_blocks,),
            in_specs=[
                pl.BlockSpec((R, Ep), lambda t: (t, 0)),
                # TODO(synk): int32 labels / mask would ideally live in SMEM (scalar
                # prefetch); kept as tiny lane-1 VMEM blocks for a proven lowering.
                pl.BlockSpec((R, 1), lambda t: (t, 0)),
                pl.BlockSpec((R, 1), lambda t: (t, 0)),
                pl.BlockSpec((Np, Tip, Hp), lambda t: (0, 0, 0)),
                pl.BlockSpec((Ep, 4 * Hp), lambda t: (0, 0)),
                pl.BlockSpec((2 * Hp, 4 * Hp), lambda t: (0, 0)),
                pl.BlockSpec((1, 4 * Hp), lambda t: (0, 0)),
                pl.BlockSpec((2 * Hp, Vp), lambda t: (0, 0)),
                pl.BlockSpec((1, Vp), lambda t: (0, 0)),
            ],
            out_specs=(pl.BlockSpec((tb_dec, Np, Tip), lambda t: (t, 0, 0)),
                       pl.BlockSpec((1, 1), lambda t: (0, 0))),
            scratch_shapes=[pltpu.VMEM((Np, Hp), jnp.float32),
                            pltpu.VMEM((Np, Hp), jnp.float32),
                            pltpu.VMEM((Np, Hp), jnp.float32),
                            pltpu.VMEM((R, 2 * Hp), jnp.float32),
                            pltpu.VMEM((1, 1), jnp.float32)],
        ),
        compiler_params=pltpu.CompilerParams(
            dimension_semantics=("arbitrary",),
            vmem_limit_bytes=VMEM_LIMIT_BYTES),
    )(emb_rows, tgt_rows, ce_mask, enc, w_e, w_rec, b_dec, w_out, b_out)
    return att_tm, loss


# ----------------------------------------------------------------------------
# Parameters (logical, unpadded) and Seq2Seq forward wrapper
# ----------------------------------------------------------------------------
def init_params(key, D, H, E, V):
    ks = jax.random.split(key, 8)
    s = 0.1
    params = dict(
        enc_w_ih=jax.random.normal(ks[0], (D, 4 * H)) * s,
        enc_w_hh=jax.random.normal(ks[1], (H, 4 * H)) * s,
        enc_b=jnp.zeros((1, 4 * H)),
        emb=jax.random.normal(ks[2], (V, E)) * s,
        dec_w_e=jax.random.normal(ks[3], (E, 4 * H)) * s,
        dec_w_c=jax.random.normal(ks[4], (H, 4 * H)) * s,
        dec_w_hh=jax.random.normal(ks[5], (H, 4 * H)) * s,
        dec_b=jnp.zeros((1, 4 * H)),
        dec_w_oh=jax.random.normal(ks[6], (H, V)) * s,
        dec_w_oc=jax.random.normal(ks[7], (H, V)) * s,
        dec_b_o=jnp.zeros((1, V)),
    )
    return jax.tree.map(lambda a: a.astype(jnp.float32), params)


def seq2seq_forward(params, padded_input, input_lengths, padded_target,
                    sos_id, eos_id):
    """padded_input: (N, Ti, D)  input_lengths: (N,)  padded_target: (N, To) int32
    Returns (loss scalar, att_w (N, To+1, Ti)) -- same contract as Seq2Seq.forward."""
    # TODO(synk): input_lengths / pack_padded_sequence masking is not implemented
    # (synthetic inputs use full lengths); real ragged batches would additionally
    # mask the attention scores per example.
    del input_lengths

    N, Ti, D = padded_input.shape
    _, To = padded_target.shape
    V, E = params['emb'].shape
    H = params['enc_w_hh'].shape[0]
    Td = To + 1

    Np = _round_up(N, SUBLANE)
    Dp = _round_up(D, LANE)
    Hp = _round_up(H, LANE)
    Ep = _round_up(E, LANE)
    Vp = _round_up(V, LANE)
    Tip = _round_up(Ti, LANE)                 # lane-dense attention dim, /TB_ENC
    Tdp = _round_up(Td, TB_DEC)

    bf16 = jnp.bfloat16

    # ---- pack + pad parameters; MXU operands cast to bf16 (glue) ----
    w_enc_in = _pad_rows(_pad_gate_cols(params['enc_w_ih'], H, Hp), Dp).astype(bf16)
    w_enc_hh = _pad_rows(_pad_gate_cols(params['enc_w_hh'], H, Hp), Hp).astype(bf16)
    b_enc = _pad_gate_cols(params['enc_b'], H, Hp)                       # (1, 4Hp) f32

    w_dec_e = _pad_rows(_pad_gate_cols(params['dec_w_e'], H, Hp), Ep).astype(bf16)
    w_dec_rec = jnp.concatenate([
        _pad_rows(_pad_gate_cols(params['dec_w_c'], H, Hp), Hp),
        _pad_rows(_pad_gate_cols(params['dec_w_hh'], H, Hp), Hp),
    ], axis=0).astype(bf16)                                              # (2Hp, 4Hp)
    b_dec = _pad_gate_cols(params['dec_b'], H, Hp)                       # (1, 4Hp) f32

    w_out = jnp.concatenate([
        jnp.pad(params['dec_w_oh'], ((0, Hp - H), (0, Vp - V))),
        jnp.pad(params['dec_w_oc'], ((0, Hp - H), (0, Vp - V))),
    ], axis=0).astype(bf16)                                              # (2Hp, Vp)
    b_out = jnp.pad(params['dec_b_o'], ((0, 0), (0, Vp - V)))            # (1, Vp) f32

    # ---- encoder: time-major rows so the hoisted projection/per-step slices are
    #      contiguous; output is batch-major f32, cast to bf16 for attention ----
    x_p = jnp.pad(padded_input.astype(jnp.float32),
                  ((0, Np - N), (0, Tip - Ti), (0, Dp - D)))
    x_rows = jnp.transpose(x_p, (1, 0, 2)).reshape(Tip * Np, Dp).astype(bf16)
    enc = run_encoder(x_rows, w_enc_in, w_enc_hh, b_enc, Np, TB_ENC)     # (Np, Tip, Hp)
    enc_b = enc.astype(bf16)

    # ---- decoder (teacher forcing: <sos> + ys  vs  ys + <eos>) ----
    tgt_i32 = padded_target.astype(jnp.int32)
    ys_in = jnp.concatenate([jnp.full((N, 1), sos_id, jnp.int32), tgt_i32], 1)   # (N, Td)
    ys_out = jnp.concatenate([tgt_i32, jnp.full((N, 1), eos_id, jnp.int32)], 1)  # (N, Td)

    emb_tab = jnp.pad(params['emb'], ((0, 0), (0, Ep - E)))              # (V, Ep)
    emb_seq = emb_tab[ys_in]                                             # (N, Td, Ep)
    emb_p = jnp.pad(emb_seq, ((0, Np - N), (0, Tdp - Td), (0, 0)))
    emb_rows = jnp.transpose(emb_p, (1, 0, 2)).reshape(Tdp * Np, Ep).astype(bf16)

    tgt_p = jnp.pad(ys_out, ((0, Np - N), (0, Tdp - Td)))
    tgt_rows = jnp.transpose(tgt_p, (1, 0)).reshape(Tdp * Np, 1)         # (Tdp*Np, 1)

    # CE validity mask (real batch rows x real teacher-forcing steps)
    ce_mask = (jnp.arange(Tdp)[:, None] < Td) & (jnp.arange(Np)[None, :] < N)
    ce_mask = ce_mask.astype(jnp.float32).reshape(Tdp * Np, 1)

    att_tm, loss = run_decoder(
        emb_rows, tgt_rows, ce_mask, enc_b, w_dec_e, w_dec_rec, b_dec, w_out, b_out,
        n_real=N, td_real=Td, ti_real=Ti, v_real=V, np_=Np, tb_dec=TB_DEC)

    att_w = jnp.transpose(att_tm, (1, 0, 2))[:N, :Td, :Ti]               # (N, To+1, Ti)
    return loss[0, 0], att_w


# ----------------------------------------------------------------------------
# Pure-JAX reference (unpadded, f32) for correctness checking.
# ----------------------------------------------------------------------------
def seq2seq_reference(params, padded_input, padded_target, sos_id, eos_id):
    N, Ti, _ = padded_input.shape
    H = params['enc_w_hh'].shape[0]
    To = padded_target.shape[1]

    h = jnp.zeros((N, H)); c = jnp.zeros((N, H))
    enc_steps = []
    for t in range(Ti):
        gates = (padded_input[:, t, :] @ params['enc_w_ih']
                 + h @ params['enc_w_hh'] + params['enc_b'])
        gi = jax.nn.sigmoid(gates[:, 0 * H:1 * H]); gf = jax.nn.sigmoid(gates[:, 1 * H:2 * H])
        gg = jnp.tanh(gates[:, 2 * H:3 * H]); go = jax.nn.sigmoid(gates[:, 3 * H:4 * H])
        c = gf * c + gi * gg; h = go * jnp.tanh(c)
        enc_steps.append(h)
    enc = jnp.stack(enc_steps, axis=1)                            # (N, Ti, H)

    tgt_i32 = padded_target.astype(jnp.int32)
    ys_in = jnp.concatenate([jnp.full((N, 1), sos_id, jnp.int32), tgt_i32], 1)
    ys_out = jnp.concatenate([tgt_i32, jnp.full((N, 1), eos_id, jnp.int32)], 1)
    emb = params['emb'][ys_in]

    h = jnp.zeros((N, H)); c = jnp.zeros((N, H)); ctx = jnp.zeros((N, H))
    ce_sum = 0.0
    att_steps = []
    for t in range(To + 1):
        gates = (emb[:, t, :] @ params['dec_w_e'] + ctx @ params['dec_w_c']
                 + h @ params['dec_w_hh'] + params['dec_b'])
        gi = jax.nn.sigmoid(gates[:, 0 * H:1 * H]); gf = jax.nn.sigmoid(gates[:, 1 * H:2 * H])
        gg = jnp.tanh(gates[:, 2 * H:3 * H]); go = jax.nn.sigmoid(gates[:, 3 * H:4 * H])
        c = gf * c + gi * gg; h = go * jnp.tanh(c)
        scores = jnp.einsum('nh,nth->nt', h, enc)
        att = jax.nn.softmax(scores, axis=-1)
        ctx = jnp.einsum('nt,nth->nh', att, enc)
        logits = h @ params['dec_w_oh'] + ctx @ params['dec_w_oc'] + params['dec_b_o']
        lse = jax.scipy.special.logsumexp(logits, axis=-1)
        tgt_logit = jnp.take_along_axis(logits, ys_out[:, t:t + 1], axis=-1)[:, 0]
        ce_sum = ce_sum + jnp.sum(lse - tgt_logit)
        att_steps.append(att)
    loss = ce_sum / (N * (To + 1))
    return loss, jnp.stack(att_steps, axis=1)


if __name__ == "__main__":
    N, Ti, D, H, E, To, V = 2, 8, 16, 32, 32, 6, 16
    SOS, EOS = V - 2, V - 1

    key = jax.random.PRNGKey(0)
    kp, kx, kt = jax.random.split(key, 3)
    params = init_params(kp, D, H, E, V)

    padded_input = jax.random.normal(kx, (N, Ti, D), jnp.float32)
    input_lengths = jnp.full((N,), Ti, jnp.int32)
    padded_target = jax.random.randint(kt, (N, To), 0, V - 2, jnp.int32)

    loss, att_w = seq2seq_forward(params, padded_input, input_lengths,
                                  padded_target, SOS, EOS)
    jax.block_until_ready((loss, att_w))

    assert att_w.shape == (N, To + 1, Ti)
    assert bool(jnp.isfinite(loss))
    # attention weights are an exactly-normalized softmax over the real Ti
    assert bool(jnp.allclose(att_w.sum(-1), 1.0, atol=5e-3))

    # pure-JAX f32 reference check (loose tol: bf16 MXU operands in the kernel)
    ref_loss, ref_att = seq2seq_reference(params, padded_input, padded_target, SOS, EOS)
    assert bool(jnp.abs(loss - ref_loss) < 5e-2), (float(loss), float(ref_loss))
    assert bool(jnp.max(jnp.abs(att_w - ref_att)) < 5e-2)

    print("KERNEL_OK")
</pallas_src>

<mosaic_0001>
module attributes {stable_mosaic.version = 11 : i64} {
  func.func @kernel(%arg0: i32, %arg1: memref<256x128xbf16, #tpu.memory_space<vmem>>, %arg2: memref<128x512xbf16, #tpu.memory_space<vmem>>, %arg3: memref<128x512xbf16, #tpu.memory_space<vmem>>, %arg4: memref<1x512xf32, #tpu.memory_space<vmem>>, %arg5: memref<8x32x128xf32, #tpu.memory_space<vmem>>, %arg6: memref<8x128xf32, #tpu.memory_space<vmem>>, %arg7: memref<8x128xf32, #tpu.memory_space<vmem>>) attributes {dimension_semantics = [#tpu.dimension_semantics<arbitrary>], iteration_bounds = array<i64: 4>, scalar_prefetch = 0 : i64, scratch_operands = 2 : i64, tpu.core_type = #tpu.core_type<tc>, window_params = [{transform_indices = @transform_0, window_bounds = array<i64: 256, 128>}, {pipeline_mode = #tpu.pipeline_mode<synchronous>, transform_indices = @transform_1, window_bounds = array<i64: 128, 512>}, {pipeline_mode = #tpu.pipeline_mode<synchronous>, transform_indices = @transform_2, window_bounds = array<i64: 128, 512>}, {pipeline_mode = #tpu.pipeline_mode<synchronous>, transform_indices = @transform_3, window_bounds = array<i64: 1, 512>}, {transform_indices = @transform_4, window_bounds = array<i64: 8, 32, 128>}]} {
    %c0_i32 = arith.constant 0 : i32
    %0 = arith.cmpi eq, %arg0, %c0_i32 : i32
    %1 = arith.extui %0 : i1 to i32
    %c0_i32_0 = arith.constant 0 : i32
    %2 = arith.cmpi ne, %1, %c0_i32_0 : i32
    scf.if %2 {
      %cst_209 = arith.constant 0.000000e+00 : f32
      %1038 = vector.broadcast %cst_209 : f32 to vector<8x128xf32>
      %c0_210 = arith.constant 0 : index
      %c0_211 = arith.constant 0 : index
      %1039 = vector.load %arg6[%c0_210, %c0_211] : memref<8x128xf32, #tpu.memory_space<vmem>>, vector<8x128xf32>
      tpu.vector_store %arg6[%c0_210, %c0_211], %1038 {strides = array<i32>} : memref<8x128xf32, #tpu.memory_space<vmem>>, vector<8x128xf32>,
      %cst_212 = arith.constant 0.000000e+00 : f32
      %1040 = vector.broadcast %cst_212 : f32 to vector<8x128xf32>
      %c0_213 = arith.constant 0 : index
      %c0_214 = arith.constant 0 : index
      %1041 = vector.load %arg7[%c0_213, %c0_214] : memref<8x128xf32, #tpu.memory_space<vmem>>, vector<8x128xf32>
      tpu.vector_store %arg7[%c0_213, %c0_214], %1040 {strides = array<i32>} : memref<8x128xf32, #tpu.memory_space<vmem>>, vector<8x128xf32>,
    } else {
    }
    %c0 = arith.constant 0 : index
    %c0_1 = arith.constant 0 : index
    %3 = vector.load %arg6[%c0, %c0_1] : memref<8x128xf32, #tpu.memory_space<vmem>>, vector<8x128xf32>
    %c0_2 = arith.constant 0 : index
    %c0_3 = arith.constant 0 : index
    %4 = vector.load %arg7[%c0_2, %c0_3] : memref<8x128xf32, #tpu.memory_space<vmem>>, vector<8x128xf32>
    %c0_4 = arith.constant 0 : index
    %c0_5 = arith.constant 0 : index
    %5 = vector.load %arg3[%c0_4, %c0_5] : memref<128x512xbf16, #tpu.memory_space<vmem>>, vector<128x512xbf16>
    %c0_6 = arith.constant 0 : index
    %c0_7 = arith.constant 0 : index
    %6 = vector.load %arg1[%c0_6, %c0_7] : memref<256x128xbf16, #tpu.memory_space<vmem>>, vector<256x128xbf16>
    %c0_8 = arith.constant 0 : index
    %c0_9 = arith.constant 0 : index
    %7 = vector.load %arg2[%c0_8, %c0_9] : memref<128x512xbf16, #tpu.memory_space<vmem>>, vector<128x512xbf16>
    %cst = arith.constant dense<0.000000e+00> : vector<256x512xf32>
    %8 = tpu.matmul %6, %7, %cst {dimension_numbers = #tpu.dot_dimension_numbers<[1], [0], [0], [1], [0, 0, 1, 1], [], []>} : vector<256x128xbf16>, vector<128x512xbf16>, vector<256x512xf32> -> vector<256x512xf32>
    %c0_10 = arith.constant 0 : index
    %c0_11 = arith.constant 0 : index
    %9 = vector.load %arg4[%c0_10, %c0_11] : memref<1x512xf32, #tpu.memory_space<vmem>>, vector<1x512xf32>
    %10 = vector.broadcast %9 : vector<1x512xf32> to vector<256x512xf32>
    %11 = arith.addf %8, %10 : vector<256x512xf32>
    %12 = vector.extract_strided_slice %11 {offsets = [0, 0], sizes = [8, 512], strides = [1, 1]} : vector<256x512xf32> to vector<8x512xf32>
    %13 = arith.truncf %3 : vector<8x128xf32> to vector<8x128xbf16>
    %cst_12 = arith.constant dense<0.000000e+00> : vector<8x512xf32>
    %14 = tpu.matmul %13, %5, %cst_12 {dimension_numbers = #tpu.dot_dimension_numbers<[1], [0], [0], [1], [0, 0, 1, 1], [], []>} : vector<8x128xbf16>, vector<128x512xbf16>, vector<8x512xf32> -> vector<8x512xf32>
    %15 = arith.addf %12, %14 : vector<8x512xf32>
    %16 = vector.extract_strided_slice %15 {offsets = [0, 0], sizes = [8, 128], strides = [1, 1]} : vector<8x512xf32> to vector<8x128xf32>
    %17 = arith.negf %16 : vector<8x128xf32>
    %18 = math.exp %17 : vector<8x128xf32>
    %cst_13 = arith.constant 1.000000e+00 : f32
    %19 = vector.broadcast %cst_13 : f32 to vector<8x128xf32>
    %20 = arith.addf %19, %18 : vector<8x128xf32>
    %21 = arith.divf %19, %20 : vector<8x128xf32>
    %22 = vector.extract_strided_slice %15 {offsets = [0, 128], sizes = [8, 128], strides = [1, 1]} : vector<8x512xf32> to vector<8x128xf32>
    %23 = arith.negf %22 : vector<8x128xf32>
    %24 = math.exp %23 : vector<8x128xf32>
    %cst_14 = arith.constant 1.000000e+00 : f32
    %25 = vector.broadcast %cst_14 : f32 to vector<8x128xf32>
    %26 = arith.addf %25, %24 : vector<8x128xf32>
    %27 = arith.divf %25, %26 : vector<8x128xf32>
    %28 = vector.extract_strided_slice %15 {offsets = [0, 256], sizes = [8, 128], strides = [1, 1]} : vector<8x512xf32> to vector<8x128xf32>
    %29 = math.tanh %28 : vector<8x128xf32>
    %30 = vector.extract_strided_slice %15 {offsets = [0, 384], sizes = [8, 128], strides = [1, 1]} : vector<8x512xf32> to vector<8x128xf32>
    %31 = arith.negf %30 : vector<8x128xf32>
    %32 = math.exp %31 : vector<8x128xf32>
    %cst_15 = arith.constant 1.000000e+00 : f32
    %33 = vector.broadcast %cst_15 : f32 to vector<8x128xf32>
    %34 = arith.addf %33, %32 : vector<8x128xf32>
    %35 = arith.divf %33, %34 : vector<8x128xf32>
    %36 = arith.mulf %27, %4 : vector<8x128xf32>
    %37 = arith.mulf %21, %29 : vector<8x128xf32>
    %38 = arith.addf %36, %37 : vector<8x128xf32>
    %39 = math.tanh %38 : vector<8x128xf32>
    %40 = arith.mulf %35, %39 : vector<8x128xf32>
    %c0_16 = arith.constant 0 : index
    %c0_17 = arith.constant 0 : index
    %c0_18 = arith.constant 0 : index
    %41 = vector.load %arg5[%c0_16, %c0_17, %c0_18] : memref<8x32x128xf32, #tpu.memory_space<vmem>>, vector<8x1x128xf32>
    %42 = vector.shape_cast %41 : vector<8x1x128xf32> to vector<8x128xf32>
    %43 = vector.shape_cast %40 : vector<8x128xf32> to vector<8x1x128xf32>
    tpu.vector_store %arg5[%c0_16, %c0_17, %c0_18], %43 {strides = array<i32>} : memref<8x32x128xf32, #tpu.memory_space<vmem>>, vector<8x1x128xf32>,
    %44 = vector.extract_strided_slice %11 {offsets = [8, 0], sizes = [8, 512], strides = [1, 1]} : vector<256x512xf32> to vector<8x512xf32>
    %45 = arith.truncf %40 : vector<8x128xf32> to vector<8x128xbf16>
    %cst_19 = arith.constant dense<0.000000e+00> : vector<8x512xf32>
    %46 = tpu.matmul %45, %5, %cst_19 {dimension_numbers = #tpu.dot_dimension_numbers<[1], [0], [0], [1], [0, 0, 1, 1], [], []>} : vector<8x128xbf16>, vector<128x512xbf16>, vector<8x512xf32> -> vector<8x512xf32>
    %47 = arith.addf %44, %46 : vector<8x512xf32>
    %48 = vector.extract_strided_slice %47 {offsets = [0, 0], sizes = [8, 128], strides = [1, 1]} : vector<8x512xf32> to vector<8x128xf32>
    %49 = arith.negf %48 : vector<8x128xf32>
    %50 = math.exp %49 : vector<8x128xf32>
    %cst_20 = arith.constant 1.000000e+00 : f32
    %51 = vector.broadcast %cst_20 : f32 to vector<8x128xf32>
    %52 = arith.addf %51, %50 : vector<8x128xf32>
    %53 = arith.divf %51, %52 : vector<8x128xf32>
    %54 = vector.extract_strided_slice %47 {offsets = [0, 128], sizes = [8, 128], strides = [1, 1]} : vector<8x512xf32> to vector<8x128xf32>
    %55 = arith.negf %54 : vector<8x128xf32>
    %56 = math.exp %55 : vector<8x128xf32>
    %cst_21 = arith.constant 1.000000e+00 : f32
    %57 = vector.broadcast %cst_21 : f32 to vector<8x128xf32>
    %58 = arith.addf %57, %56 : vector<8x128xf32>
    %59 = arith.divf %57, %58 : vector<8x128xf32>
    %60 = vector.extract_strided_slice %47 {offsets = [0, 256], sizes = [8, 128], strides = [1, 1]} : vector<8x512xf32> to vector<8x128xf32>
    %61 = math.tanh %60 : vector<8x128xf32>
    %62 = vector.extract_strided_slice %47 {offsets = [0, 384], sizes = [8, 128], strides = [1, 1]} : vector<8x512xf32> to vector<8x128xf32>
    %63 = arith.negf %62 : vector<8x128xf32>
    %64 = math.exp %63 : vector<8x128xf32>
    %cst_22 = arith.constant 1.000000e+00 : f32
    %65 = vector.broadcast %cst_22 : f32 to vector<8x128xf32>
    %66 = arith.addf %65, %64 : vector<8x128xf32>
    %67 = arith.divf %65, %66 : vector<8x128xf32>
    %68 = arith.mulf %59, %38 : vector<8x128xf32>
    %69 = arith.mulf %53, %61 : vector<8x128xf32>
    %70 = arith.addf %68, %69 : vector<8x128xf32>
    %71 = math.tanh %70 : vector<8x128xf32>
    %72 = arith.mulf %67, %71 : vector<8x128xf32>
    %c0_23 = arith.constant 0 : index
    %c1 = arith.constant 1 : index
    %c0_24 = arith.constant 0 : index
    %73 = vector.load %arg5[%c0_23, %c1, %c0_24] : memref<8x32x128xf32, #tpu.memory_space<vmem>>, vector<8x1x128xf32>
    %74 = vector.shape_cast %73 : vector<8x1x128xf32> to vector<8x128xf32>
    %75 = vector.shape_cast %72 : vector<8x128xf32> to vector<8x1x128xf32>
    tpu.vector_store %arg5[%c0_23, %c1, %c0_24], %75 {strides = array<i32>} : memref<8x32x128xf32, #tpu.memory_space<vmem>>, vector<8x1x128xf32>,
    %76 = vector.extract_strided_slice %11 {offsets = [16, 0], sizes = [8, 512], strides = [1, 1]} : vector<256x512xf32> to vector<8x512xf32>
    %77 = arith.truncf %72 : vector<8x128xf32> to vector<8x128xbf16>
    %cst_25 = arith.constant dense<0.000000e+00> : vector<8x512xf32>
    %78 = tpu.matmul %77, %5, %cst_25 {dimension_numbers = #tpu.dot_dimension_numbers<[1], [0], [0], [1], [0, 0, 1, 1], [], []>} : vector<8x128xbf16>, vector<128x512xbf16>, vector<8x512xf32> -> vector<8x512xf32>
    %79 = arith.addf %76, %78 : vector<8x512xf32>
    %80 = vector.extract_strided_slice %79 {offsets = [0, 0], sizes = [8, 128], strides = [1, 1]} : vector<8x512xf32> to vector<8x128xf32>
    %81 = arith.negf %80 : vector<8x128xf32>
    %82 = math.exp %81 : vector<8x128xf32>
    %cst_26 = arith.constant 1.000000e+00 : f32
    %83 = vector.broadcast %cst_26 : f32 to vector<8x128xf32>
    %84 = arith.addf %83, %82 : vector<8x128xf32>
    %85 = arith.divf %83, %84 : vector<8x128xf32>
    %86 = vector.extract_strided_slice %79 {offsets = [0, 128], sizes = [8, 128], strides = [1, 1]} : vector<8x512xf32> to vector<8x128xf32>
    %87 = arith.negf %86 : vector<8x128xf32>
    %88 = math.exp %87 : vector<8x128xf32>
    %cst_27 = arith.constant 1.000000e+00 : f32
    %89 = vector.broadcast %cst_27 : f32 to vector<8x128xf32>
    %90 = arith.addf %89, %88 : vector<8x128xf32>
    %91 = arith.divf %89, %90 : vector<8x128xf32>
    %92 = vector.extract_strided_slice %79 {offsets = [0, 256], sizes = [8, 128], strides = [1, 1]} : vector<8x512xf32> to vector<8x128xf32>
    %93 = math.tanh %92 : vector<8x128xf32>
    %94 = vector.extract_strided_slice %79 {offsets = [0, 384], sizes = [8, 128], strides = [1, 1]} : vector<8x512xf32> to vector<8x128xf32>
    %95 = arith.negf %94 : vector<8x128xf32>
    %96 = math.exp %95 : vector<8x128xf32>
    %cst_28 = arith.constant 1.000000e+00 : f32
    %97 = vector.broadcast %cst_28 : f32 to vector<8x128xf32>
    %98 = arith.addf %97, %96 : vector<8x128xf32>
    %99 = arith.divf %97, %98 : vector<8x128xf32>
    %100 = arith.mulf %91, %70 : vector<8x128xf32>
    %101 = arith.mulf %85, %93 : vector<8x128xf32>
    %102 = arith.addf %100, %101 : vector<8x128xf32>
    %103 = math.tanh %102 : vector<8x128xf32>
    %104 = arith.mulf %99, %103 : vector<8x128xf32>
    %c0_29 = arith.constant 0 : index
    %c2 = arith.constant 2 : index
    %c0_30 = arith.constant 0 : index
    %105 = vector.load %arg5[%c0_29, %c2, %c0_30] : memref<8x32x128xf32, #tpu.memory_space<vmem>>, vector<8x1x128xf32>
    %106 = vector.shape_cast %105 : vector<8x1x128xf32> to vector<8x128xf32>
    %107 = vector.shape_cast %104 : vector<8x128xf32> to vector<8x1x128xf32>
    tpu.vector_store %arg5[%c0_29, %c2, %c0_30], %107 {strides = array<i32>} : memref<8x32x128xf32, #tpu.memory_space<vmem>>, vector<8x1x128xf32>,
    %108 = vector.extract_strided_slice %11 {offsets = [24, 0], sizes = [8, 512], strides = [1, 1]} : vector<256x512xf32> to vector<8x512xf32>
    %109 = arith.truncf %104 : vector<8x128xf32> to vector<8x128xbf16>
    %cst_31 = arith.constant dense<0.000000e+00> : vector<8x512xf32>
    %110 = tpu.matmul %109, %5, %cst_31 {dimension_numbers = #tpu.dot_dimension_numbers<[1], [0], [0], [1], [0, 0, 1, 1], [], []>} : vector<8x128xbf16>, vector<128x512xbf16>, vector<8x512xf32> -> vector<8x512xf32>
    %111 = arith.addf %108, %110 : vector<8x512xf32>
    %112 = vector.extract_strided_slice %111 {offsets = [0, 0], sizes = [8, 128], strides = [1, 1]} : vector<8x512xf32> to vector<8x128xf32>
    %113 = arith.negf %112 : vector<8x128xf32>
    %114 = math.exp %113 : vector<8x128xf32>
    %cst_32 = arith.constant 1.000000e+00 : f32
    %115 = vector.broadcast %cst_32 : f32 to vector<8x128xf32>
    %116 = arith.addf %115, %114 : vector<8x128xf32>
    %117 = arith.divf %115, %116 : vector<8x128xf32>
    %118 = vector.extract_strided_slice %111 {offsets = [0, 128], sizes = [8, 128], strides = [1, 1]} : vector<8x512xf32> to vector<8x128xf32>
    %119 = arith.negf %118 : vector<8x128xf32>
    %120 = math.exp %119 : vector<8x128xf32>
    %cst_33 = arith.constant 1.000000e+00 : f32
    %121 = vector.broadcast %cst_33 : f32 to vector<8x128xf32>
    %122 = arith.addf %121, %120 : vector<8x128xf32>
    %123 = arith.divf %121, %122 : vector<8x128xf32>
    %124 = vector.extract_strided_slice %111 {offsets = [0, 256], sizes = [8, 128], strides = [1, 1]} : vector<8x512xf32> to vector<8x128xf32>
    %125 = math.tanh %124 : vector<8x128xf32>
    %126 = vector.extract_strided_slice %111 {offsets = [0, 384], sizes = [8, 128], strides = [1, 1]} : vector<8x512xf32> to vector<8x128xf32>
    %127 = arith.negf %126 : vector<8x128xf32>
    %128 = math.exp %127 : vector<8x128xf32>
    %cst_34 = arith.constant 1.000000e+00 : f32
    %129 = vector.broadcast %cst_34 : f32 to vector<8x128xf32>
    %130 = arith.addf %129, %128 : vector<8x128xf32>
    %131 = arith.divf %129, %130 : vector<8x128xf32>
    %132 = arith.mulf %123, %102 : vector<8x128xf32>
    %133 = arith.mulf %117, %125 : vector<8x128xf32>
    %134 = arith.addf %132, %133 : vector<8x128xf32>
    %135 = math.tanh %134 : vector<8x128xf32>
    %136 = arith.mulf %131, %135 : vector<8x128xf32>
    %c0_35 = arith.constant 0 : index
    %c3 = arith.constant 3 : index
    %c0_36 = arith.constant 0 : index
    %137 = vector.load %arg5[%c0_35, %c3, %c0_36] : memref<8x32x128xf32, #tpu.memory_space<vmem>>, vector<8x1x128xf32>
    %138 = vector.shape_cast %137 : vector<8x1x128xf32> to vector<8x128xf32>
    %139 = vector.shape_cast %136 : vector<8x128xf32> to vector<8x1x128xf32>
    tpu.vector_store %arg5[%c0_35, %c3, %c0_36], %139 {strides = array<i32>} : memref<8x32x128xf32, #tpu.memory_space<vmem>>, vector<8x1x128xf32>,
    %140 = vector.extract_strided_slice %11 {offsets = [32, 0], sizes = [8, 512], strides = [1, 1]} : vector<256x512xf32> to vector<8x512xf32>
    %141 = arith.truncf %136 : vector<8x128xf32> to vector<8x128xbf16>
    %cst_37 = arith.constant dense<0.000000e+00> : vector<8x512xf32>
    %142 = tpu.matmul %141, %5, %cst_37 {dimension_numbers = #tpu.dot_dimension_numbers<[1], [0], [0], [1], [0, 0, 1, 1], [], []>} : vector<8x128xbf16>, vector<128x512xbf16>, vector<8x512xf32> -> vector<8x512xf32>
    %143 = arith.addf %140, %142 : vector<8x512xf32>
    %144 = vector.extract_strided_slice %143 {offsets = [0, 0], sizes = [8, 128], strides = [1, 1]} : vector<8x512xf32> to vector<8x128xf32>
    %145 = arith.negf %144 : vector<8x128xf32>
    %146 = math.exp %145 : vector<8x128xf32>
    %cst_38 = arith.constant 1.000000e+00 : f32
    %147 = vector.broadcast %cst_38 : f32 to vector<8x128xf32>
    %148 = arith.addf %147, %146 : vector<8x128xf32>
    %149 = arith.divf %147, %148 : vector<8x128xf32>
    %150 = vector.extract_strided_slice %143 {offsets = [0, 128], sizes = [8, 128], strides = [1, 1]} : vector<8x512xf32> to vector<8x128xf32>
    %151 = arith.negf %150 : vector<8x128xf32>
    %152 = math.exp %151 : vector<8x128xf32>
    %cst_39 = arith.constant 1.000000e+00 : f32
    %153 = vector.broadcast %cst_39 : f32 to vector<8x128xf32>
    %154 = arith.addf %153, %152 : vector<8x128xf32>
    %155 = arith.divf %153, %154 : vector<8x128xf32>
    %156 = vector.extract_strided_slice %143 {offsets = [0, 256], sizes = [8, 128], strides = [1, 1]} : vector<8x512xf32> to vector<8x128xf32>
    %157 = math.tanh %156 : vector<8x128xf32>
    %158 = vector.extract_strided_slice %143 {offsets = [0, 384], sizes = [8, 128], strides = [1, 1]} : vector<8x512xf32> to vector<8x128xf32>
    %159 = arith.negf %158 : vector<8x128xf32>
    %160 = math.exp %159 : vector<8x128xf32>
    %cst_40 = arith.constant 1.000000e+00 : f32
    %161 = vector.broadcast %cst_40 : f32 to vector<8x128xf32>
    %162 = arith.addf %161, %160 : vector<8x128xf32>
    %163 = arith.divf %161, %162 : vector<8x128xf32>
    %164 = arith.mulf %155, %134 : vector<8x128xf32>
    %165 = arith.mulf %149, %157 : vector<8x128xf32>
    %166 = arith.addf %164, %165 : vector<8x128xf32>
    %167 = math.tanh %166 : vector<8x128xf32>
    %168 = arith.mulf %163, %167 : vector<8x128xf32>
    %c0_41 = arith.constant 0 : index
    %c4 = arith.constant 4 : index
    %c0_42 = arith.constant 0 : index
    %169 = vector.load %arg5[%c0_41, %c4, %c0_42] : memref<8x32x128xf32, #tpu.memory_space<vmem>>, vector<8x1x128xf32>
    %170 = vector.shape_cast %169 : vector<8x1x128xf32> to vector<8x128xf32>
    %171 = vector.shape_cast %168 : vector<8x128xf32> to vector<8x1x128xf32>
    tpu.vector_store %arg5[%c0_41, %c4, %c0_42], %171 {strides = array<i32>} : memref<8x32x128xf32, #tpu.memory_space<vmem>>, vector<8x1x128xf32>,
    %172 = vector.extract_strided_slice %11 {offsets = [40, 0], sizes = [8, 512], strides = [1, 1]} : vector<256x512xf32> to vector<8x512xf32>
    %173 = arith.truncf %168 : vector<8x128xf32> to vector<8x128xbf16>
    %cst_43 = arith.constant dense<0.000000e+00> : vector<8x512xf32>
    %174 = tpu.matmul %173, %5, %cst_43 {dimension_numbers = #tpu.dot_dimension_numbers<[1], [0], [0], [1], [0, 0, 1, 1], [], []>} : vector<8x128xbf16>, vector<128x512xbf16>, vector<8x512xf32> -> vector<8x512xf32>
    %175 = arith.addf %172, %174 : vector<8x512xf32>
    %176 = vector.extract_strided_slice %175 {offsets = [0, 0], sizes = [8, 128], strides = [1, 1]} : vector<8x512xf32> to vector<8x128xf32>
    %177 = arith.negf %176 : vector<8x128xf32>
    %178 = math.exp %177 : vector<8x128xf32>
    %cst_44 = arith.constant 1.000000e+00 : f32
    %179 = vector.broadcast %cst_44 : f32 to vector<8x128xf32>
    %180 = arith.addf %179, %178 : vector<8x128xf32>
    %181 = arith.divf %179, %180 : vector<8x128xf32>
    %182 = vector.extract_strided_slice %175 {offsets = [0, 128], sizes = [8, 128], strides = [1, 1]} : vector<8x512xf32> to vector<8x128xf32>
    %183 = arith.negf %182 : vector<8x128xf32>
    %184 = math.exp %183 : vector<8x128xf32>
    %cst_45 = arith.constant 1.000000e+00 : f32
    %185 = vector.broadcast %cst_45 : f32 to vector<8x128xf32>
    %186 = arith.addf %185, %184 : vector<8x128xf32>
    %187 = arith.divf %185, %186 : vector<8x128xf32>
    %188 = vector.extract_strided_slice %175 {offsets = [0, 256], sizes = [8, 128], strides = [1, 1]} : vector<8x512xf32> to vector<8x128xf32>
    %189 = math.tanh %188 : vector<8x128xf32>
    %190 = vector.extract_strided_slice %175 {offsets = [0, 384], sizes = [8, 128], strides = [1, 1]} : vector<8x512xf32> to vector<8x128xf32>
    %191 = arith.negf %190 : vector<8x128xf32>
    %192 = math.exp %191 : vector<8x128xf32>
    %cst_46 = arith.constant 1.000000e+00 : f32
    %193 = vector.broadcast %cst_46 : f32 to vector<8x128xf32>
    %194 = arith.addf %193, %192 : vector<8x128xf32>
    %195 = arith.divf %193, %194 : vector<8x128xf32>
    %196 = arith.mulf %187, %166 : vector<8x128xf32>
    %197 = arith.mulf %181, %189 : vector<8x128xf32>
    %198 = arith.addf %196, %197 : vector<8x128xf32>
    %199 = math.tanh %198 : vector<8x128xf32>
    %200 = arith.mulf %195, %199 : vector<8x128xf32>
    %c0_47 = arith.constant 0 : index
    %c5 = arith.constant 5 : index
    %c0_48 = arith.constant 0 : index
    %201 = vector.load %arg5[%c0_47, %c5, %c0_48] : memref<8x32x128xf32, #tpu.memory_space<vmem>>, vector<8x1x128xf32>
    %202 = vector.shape_cast %201 : vector<8x1x128xf32> to vector<8x128xf32>
    %203 = vector.shape_cast %200 : vector<8x128xf32> to vector<8x1x128xf32>
    tpu.vector_store %arg5[%c0_47, %c5, %c0_48], %203 {strides = array<i32>} : memref<8x32x128xf32, #tpu.memory_space<vmem>>, vector<8x1x128xf32>,
    %204 = vector.extract_strided_slice %11 {offsets = [48, 0], sizes = [8, 512], strides = [1, 1]} : vector<256x512xf32> to vector<8x512xf32>
    %205 = arith.truncf %200 : vector<8x128xf32> to vector<8x128xbf16>
    %cst_49 = arith.constant dense<0.000000e+00> : vector<8x512xf32>
    %206 = tpu.matmul %205, %5, %cst_49 {dimension_numbers = #tpu.dot_dimension_numbers<[1], [0], [0], [1], [0, 0, 1, 1], [], []>} : vector<8x128xbf16>, vector<128x512xbf16>, vector<8x512xf32> -> vector<8x512xf32>
    %207 = arith.addf %204, %206 : vector<8x512xf32>
    %208 = vector.extract_strided_slice %207 {offsets = [0, 0], sizes = [8, 128], strides = [1, 1]} : vector<8x512xf32> to vector<8x128xf32>
    %209 = arith.negf %208 : vector<8x128xf32>
    %210 = math.exp %209 : vector<8x128xf32>
    %cst_50 = arith.constant 1.000000e+00 : f32
    %211 = vector.broadcast %cst_50 : f32 to vector<8x128xf32>
    %212 = arith.addf %211, %210 : vector<8x128xf32>
    %213 = arith.divf %211, %212 : vector<8x128xf32>
    %214 = vector.extract_strided_slice %207 {offsets = [0, 128], sizes = [8, 128], strides = [1, 1]} : vector<8x512xf32> to vector<8x128xf32>
    %215 = arith.negf %214 : vector<8x128xf32>
    %216 = math.exp %215 : vector<8x128xf32>
    %cst_51 = arith.constant 1.000000e+00 : f32
    %217 = vector.broadcast %cst_51 : f32 to vector<8x128xf32>
    %218 = arith.addf %217, %216 : vector<8x128xf32>
    %219 = arith.divf %217, %218 : vector<8x128xf32>
    %220 = vector.extract_strided_slice %207 {offsets = [0, 256], sizes = [8, 128], strides = [1, 1]} : vector<8x512xf32> to vector<8x128xf32>
    %221 = math.tanh %220 : vector<8x128xf32>
    %222 = vector.extract_strided_slice %207 {offsets = [0, 384], sizes = [8, 128], strides = [1, 1]} : vector<8x512xf32> to vector<8x128xf32>
    %223 = arith.negf %222 : vector<8x128xf32>
    %224 = math.exp %223 : vector<8x128xf32>
    %cst_52 = arith.constant 1.000000e+00 : f32
    %225 = vector.broadcast %cst_52 : f32 to vector<8x128xf32>
    %226 = arith.addf %225, %224 : vector<8x128xf32>
    %227 = arith.divf %225, %226 : vector<8x128xf32>
    %228 = arith.mulf %219, %198 : vector<8x128xf32>
    %229 = arith.mulf %213, %221 : vector<8x128xf32>
    %230 = arith.addf %228, %229 : vector<8x128xf32>
    %231 = math.tanh %230 : vector<8x128xf32>
    %232 = arith.mulf %227, %231 : vector<8x128xf32>
    %c0_53 = arith.constant 0 : index
    %c6 = arith.constant 6 : index
    %c0_54 = arith.constant 0 : index
    %233 = vector.load %arg5[%c0_53, %c6, %c0_54] : memref<8x32x128xf32, #tpu.memory_space<vmem>>, vector<8x1x128xf32>
    %234 = vector.shape_cast %233 : vector<8x1x128xf32> to vector<8x128xf32>
    %235 = vector.shape_cast %232 : vector<8x128xf32> to vector<8x1x128xf32>
    tpu.vector_store %arg5[%c0_53, %c6, %c0_54], %235 {strides = array<i32>} : memref<8x32x128xf32, #tpu.memory_space<vmem>>, vector<8x1x128xf32>,
    %236 = vector.extract_strided_slice %11 {offsets = [56, 0], sizes = [8, 512], strides = [1, 1]} : vector<256x512xf32> to vector<8x512xf32>
    %237 = arith.truncf %232 : vector<8x128xf32> to vector<8x128xbf16>
    %cst_55 = arith.constant dense<0.000000e+00> : vector<8x512xf32>
    %238 = tpu.matmul %237, %5, %cst_55 {dimension_numbers = #tpu.dot_dimension_numbers<[1], [0], [0], [1], [0, 0, 1, 1], [], []>} : vector<8x128xbf16>, vector<128x512xbf16>, vector<8x512xf32> -> vector<8x512xf32>
    %239 = arith.addf %236, %238 : vector<8x512xf32>
    %240 = vector.extract_strided_slice %239 {offsets = [0, 0], sizes = [8, 128], strides = [1, 1]} : vector<8x512xf32> to vector<8x128xf32>
    %241 = arith.negf %240 : vector<8x128xf32>
    %242 = math.exp %241 : vector<8x128xf32>
    %cst_56 = arith.constant 1.000000e+00 : f32
    %243 = vector.broadcast %cst_56 : f32 to vector<8x128xf32>
    %244 = arith.addf %243, %242 : vector<8x128xf32>
    %245 = arith.divf %243, %244 : vector<8x128xf32>
    %246 = vector.extract_strided_slice %239 {offsets = [0, 128], sizes = [8, 128], strides = [1, 1]} : vector<8x512xf32> to vector<8x128xf32>
    %247 = arith.negf %246 : vector<8x128xf32>
    %248 = math.exp %247 : vector<8x128xf32>
    %cst_57 = arith.constant 1.000000e+00 : f32
    %249 = vector.broadcast %cst_57 : f32 to vector<8x128xf32>
    %250 = arith.addf %249, %248 : vector<8x128xf32>
    %251 = arith.divf %249, %250 : vector<8x128xf32>
    %252 = vector.extract_strided_slice %239 {offsets = [0, 256], sizes = [8, 128], strides = [1, 1]} : vector<8x512xf32> to vector<8x128xf32>
    %253 = math.tanh %252 : vector<8x128xf32>
    %254 = vector.extract_strided_slice %239 {offsets = [0, 384], sizes = [8, 128], strides = [1, 1]} : vector<8x512xf32> to vector<8x128xf32>
    %255 = arith.negf %254 : vector<8x128xf32>
    %256 = math.exp %255 : vector<8x128xf32>
    %cst_58 = arith.constant 1.000000e+00 : f32
    %257 = vector.broadcast %cst_58 : f32 to vector<8x128xf32>
    %258 = arith.addf %257, %256 : vector<8x128xf32>
    %259 = arith.divf %257, %258 : vector<8x128xf32>
    %260 = arith.mulf %251, %230 : vector<8x128xf32>
    %261 = arith.mulf %245, %253 : vector<8x128xf32>
    %262 = arith.addf %260, %261 : vector<8x128xf32>
    %263 = math.tanh %262 : vector<8x128xf32>
    %264 = arith.mulf %259, %263 : vector<8x128xf32>
    %c0_59 = arith.constant 0 : index
    %c7 = arith.constant 7 : index
    %c0_60 = arith.constant 0 : index
    %265 = vector.load %arg5[%c0_59, %c7, %c0_60] : memref<8x32x128xf32, #tpu.memory_space<vmem>>, vector<8x1x128xf32>
    %266 = vector.shape_cast %265 : vector<8x1x128xf32> to vector<8x128xf32>
    %267 = vector.shape_cast %264 : vector<8x128xf32> to vector<8x1x128xf32>
    tpu.vector_store %arg5[%c0_59, %c7, %c0_60], %267 {strides = array<i32>} : memref<8x32x128xf32, #tpu.memory_space<vmem>>, vector<8x1x128xf32>,
    %268 = vector.extract_strided_slice %11 {offsets = [64, 0], sizes = [8, 512], strides = [1, 1]} : vector<256x512xf32> to vector<8x512xf32>
    %269 = arith.truncf %264 : vector<8x128xf32> to vector<8x128xbf16>
    %cst_61 = arith.constant dense<0.000000e+00> : vector<8x512xf32>
    %270 = tpu.matmul %269, %5, %cst_61 {dimension_numbers = #tpu.dot_dimension_numbers<[1], [0], [0], [1], [0, 0, 1, 1], [], []>} : vector<8x128xbf16>, vector<128x512xbf16>, vector<8x512xf32> -> vector<8x512xf32>
    %271 = arith.addf %268, %270 : vector<8x512xf32>
    %272 = vector.extract_strided_slice %271 {offsets = [0, 0], sizes = [8, 128], strides = [1, 1]} : vector<8x512xf32> to vector<8x128xf32>
    %273 = arith.negf %272 : vector<8x128xf32>
    %274 = math.exp %273 : vector<8x128xf32>
    %cst_62 = arith.constant 1.000000e+00 : f32
    %275 = vector.broadcast %cst_62 : f32 to vector<8x128xf32>
    %276 = arith.addf %275, %274 : vector<8x128xf32>
    %277 = arith.divf %275, %276 : vector<8x128xf32>
    %278 = vector.extract_strided_slice %271 {offsets = [0, 128], sizes = [8, 128], strides = [1, 1]} : vector<8x512xf32> to vector<8x128xf32>
    %279 = arith.negf %278 : vector<8x128xf32>
    %280 = math.exp %279 : vector<8x128xf32>
    %cst_63 = arith.constant 1.000000e+00 : f32
    %281 = vector.broadcast %cst_63 : f32 to vector<8x128xf32>
    %282 = arith.addf %281, %280 : vector<8x128xf32>
    %283 = arith.divf %281, %282 : vector<8x128xf32>
    %284 = vector.extract_strided_slice %271 {offsets = [0, 256], sizes = [8, 128], strides = [1, 1]} : vector<8x512xf32> to vector<8x128xf32>
    %285 = math.tanh %284 : vector<8x128xf32>
    %286 = vector.extract_strided_slice %271 {offsets = [0, 384], sizes = [8, 128], strides = [1, 1]} : vector<8x512xf32> to vector<8x128xf32>
    %287 = arith.negf %286 : vector<8x128xf32>
    %288 = math.exp %287 : vector<8x128xf32>
    %cst_64 = arith.constant 1.000000e+00 : f32
    %289 = vector.broadcast %cst_64 : f32 to vector<8x128xf32>
    %290 = arith.addf %289, %288 : vector<8x128xf32>
    %291 = arith.divf %289, %290 : vector<8x128xf32>
    %292 = arith.mulf %283, %262 : vector<8x128xf32>
    %293 = arith.mulf %277, %285 : vector<8x128xf32>
    %294 = arith.addf %292, %293 : vector<8x128xf32>
    %295 = math.tanh %294 : vector<8x128xf32>
    %296 = arith.mulf %291, %295 : vector<8x128xf32>
    %c0_65 = arith.constant 0 : index
    %c8 = arith.constant 8 : index
    %c0_66 = arith.constant 0 : index
    %297 = vector.load %arg5[%c0_65, %c8, %c0_66] : memref<8x32x128xf32, #tpu.memory_space<vmem>>, vector<8x1x128xf32>
    %298 = vector.shape_cast %297 : vector<8x1x128xf32> to vector<8x128xf32>
    %299 = vector.shape_cast %296 : vector<8x128xf32> to vector<8x1x128xf32>
    tpu.vector_store %arg5[%c0_65, %c8, %c0_66], %299 {strides = array<i32>} : memref<8x32x128xf32, #tpu.memory_space<vmem>>, vector<8x1x128xf32>,
    %300 = vector.extract_strided_slice %11 {offsets = [72, 0], sizes = [8, 512], strides = [1, 1]} : vector<256x512xf32> to vector<8x512xf32>
    %301 = arith.truncf %296 : vector<8x128xf32> to vector<8x128xbf16>
    %cst_67 = arith.constant dense<0.000000e+00> : vector<8x512xf32>
    %302 = tpu.matmul %301, %5, %cst_67 {dimension_numbers = #tpu.dot_dimension_numbers<[1], [0], [0], [1], [0, 0, 1, 1], [], []>} : vector<8x128xbf16>, vector<128x512xbf16>, vector<8x512xf32> -> vector<8x512xf32>
    %303 = arith.addf %300, %302 : vector<8x512xf32>
    %304 = vector.extract_strided_slice %303 {offsets = [0, 0], sizes = [8, 128], strides = [1, 1]} : vector<8x512xf32> to vector<8x128xf32>
    %305 = arith.negf %304 : vector<8x128xf32>
    %306 = math.exp %305 : vector<8x128xf32>
    %cst_68 = arith.constant 1.000000e+00 : f32
    %307 = vector.broadcast %cst_68 : f32 to vector<8x128xf32>
    %308 = arith.addf %307, %306 : vector<8x128xf32>
    %309 = arith.divf %307, %308 : vector<8x128xf32>
    %310 = vector.extract_strided_slice %303 {offsets = [0, 128], sizes = [8, 128], strides = [1, 1]} : vector<8x512xf32> to vector<8x128xf32>
    %311 = arith.negf %310 : vector<8x128xf32>
    %312 = math.exp %311 : vector<8x128xf32>
    %cst_69 = arith.constant 1.000000e+00 : f32
    %313 = vector.broadcast %cst_69 : f32 to vector<8x128xf32>
    %314 = arith.addf %313, %312 : vector<8x128xf32>
    %315 = arith.divf %313, %314 : vector<8x128xf32>
    %316 = vector.extract_strided_slice %303 {offsets = [0, 256], sizes = [8, 128], strides = [1, 1]} : vector<8x512xf32> to vector<8x128xf32>
    %317 = math.tanh %316 : vector<8x128xf32>
    %318 = vector.extract_strided_slice %303 {offsets = [0, 384], sizes = [8, 128], strides = [1, 1]} : vector<8x512xf32> to vector<8x128xf32>
    %319 = arith.negf %318 : vector<8x128xf32>
    %320 = math.exp %319 : vector<8x128xf32>
    %cst_70 = arith.constant 1.000000e+00 : f32
    %321 = vector.broadcast %cst_70 : f32 to vector<8x128xf32>
    %322 = arith.addf %321, %320 : vector<8x128xf32>
    %323 = arith.divf %321, %322 : vector<8x128xf32>
    %324 = arith.mulf %315, %294 : vector<8x128xf32>
    %325 = arith.mulf %309, %317 : vector<8x128xf32>
    %326 = arith.addf %324, %325 : vector<8x128xf32>
    %327 = math.tanh %326 : vector<8x128xf32>
    %328 = arith.mulf %323, %327 : vector<8x128xf32>
    %c0_71 = arith.constant 0 : index
    %c9 = arith.constant 9 : index
    %c0_72 = arith.constant 0 : index
    %329 = vector.load %arg5[%c0_71, %c9, %c0_72] : memref<8x32x128xf32, #tpu.memory_space<vmem>>, vector<8x1x128xf32>
    %330 = vector.shape_cast %329 : vector<8x1x128xf32> to vector<8x128xf32>
    %331 = vector.shape_cast %328 : vector<8x128xf32> to vector<8x1x128xf32>
    tpu.vector_store %arg5[%c0_71, %c9, %c0_72], %331 {strides = array<i32>} : memref<8x32x128xf32, #tpu.memory_space<vmem>>, vector<8x1x128xf32>,
    %332 = vector.extract_strided_slice %11 {offsets = [80, 0], sizes = [8, 512], strides = [1, 1]} : vector<256x512xf32> to vector<8x512xf32>
    %333 = arith.truncf %328 : vector<8x128xf32> to vector<8x128xbf16>
    %cst_73 = arith.constant dense<0.000000e+00> : vector<8x512xf32>
    %334 = tpu.matmul %333, %5, %cst_73 {dimension_numbers = #tpu.dot_dimension_numbers<[1], [0], [0], [1], [0, 0, 1, 1], [], []>} : vector<8x128xbf16>, vector<128x512xbf16>, vector<8x512xf32> -> vector<8x512xf32>
    %335 = arith.addf %332, %334 : vector<8x512xf32>
    %336 = vector.extract_strided_slice %335 {offsets = [0, 0], sizes = [8, 128], strides = [1, 1]} : vector<8x512xf32> to vector<8x128xf32>
    %337 = arith.negf %336 : vector<8x128xf32>
    %338 = math.exp %337 : vector<8x128xf32>
    %cst_74 = arith.constant 1.000000e+00 : f32
    %339 = vector.broadcast %cst_74 : f32 to vector<8x128xf32>
    %340 = arith.addf %339, %338 : vector<8x128xf32>
    %341 = arith.divf %339, %340 : vector<8x128xf32>
    %342 = vector.extract_strided_slice %335 {offsets = [0, 128], sizes = [8, 128], strides = [1, 1]} : vector<8x512xf32> to vector<8x128xf32>
    %343 = arith.negf %342 : vector<8x128xf32>
    %344 = math.exp %343 : vector<8x128xf32>
    %cst_75 = arith.constant 1.000000e+00 : f32
    %345 = vector.broadcast %cst_75 : f32 to vector<8x128xf32>
    %346 = arith.addf %345, %344 : vector<8x128xf32>
    %347 = arith.divf %345, %346 : vector<8x128xf32>
    %348 = vector.extract_strided_slice %335 {offsets = [0, 256], sizes = [8, 128], strides = [1, 1]} : vector<8x512xf32> to vector<8x128xf32>
    %349 = math.tanh %348 : vector<8x128xf32>
    %350 = vector.extract_strided_slice %335 {offsets = [0, 384], sizes = [8, 128], strides = [1, 1]} : vector<8x512xf32> to vector<8x128xf32>
    %351 = arith.negf %350 : vector<8x128xf32>
    %352 = math.exp %351 : vector<8x128xf32>
    %cst_76 = arith.constant 1.000000e+00 : f32
    %353 = vector.broadcast %cst_76 : f32 to vector<8x128xf32>
    %354 = arith.addf %353, %352 : vector<8x128xf32>
    %355 = arith.divf %353, %354 : vector<8x128xf32>
    %356 = arith.mulf %347, %326 : vector<8x128xf32>
    %357 = arith.mulf %341, %349 : vector<8x128xf32>
    %358 = arith.addf %356, %357 : vector<8x128xf32>
    %359 = math.tanh %358 : vector<8x128xf32>
    %360 = arith.mulf %355, %359 : vector<8x128xf32>
    %c0_77 = arith.constant 0 : index
    %c10 = arith.constant 10 : index
    %c0_78 = arith.constant 0 : index
    %361 = vector.load %arg5[%c0_77, %c10, %c0_78] : memref<8x32x128xf32, #tpu.memory_space<vmem>>, vector<8x1x128xf32>
    %362 = vector.shape_cast %361 : vector<8x1x128xf32> to vector<8x128xf32>
    %363 = vector.shape_cast %360 : vector<8x128xf32> to vector<8x1x128xf32>
    tpu.vector_store %arg5[%c0_77, %c10, %c0_78], %363 {strides = array<i32>} : memref<8x32x128xf32, #tpu.memory_space<vmem>>, vector<8x1x128xf32>,
    %364 = vector.extract_strided_slice %11 {offsets = [88, 0], sizes = [8, 512], strides = [1, 1]} : vector<256x512xf32> to vector<8x512xf32>
    %365 = arith.truncf %360 : vector<8x128xf32> to vector<8x128xbf16>
    %cst_79 = arith.constant dense<0.000000e+00> : vector<8x512xf32>
    %366 = tpu.matmul %365, %5, %cst_79 {dimension_numbers = #tpu.dot_dimension_numbers<[1], [0], [0], [1], [0, 0, 1, 1], [], []>} : vector<8x128xbf16>, vector<128x512xbf16>, vector<8x512xf32> -> vector<8x512xf32>
    %367 = arith.addf %364, %366 : vector<8x512xf32>
    %368 = vector.extract_strided_slice %367 {offsets = [0, 0], sizes = [8, 128], strides = [1, 1]} : vector<8x512xf32> to vector<8x128xf32>
    %369 = arith.negf %368 : vector<8x128xf32>
    %370 = math.exp %369 : vector<8x128xf32>
    %cst_80 = arith.constant 1.000000e+00 : f32
    %371 = vector.broadcast %cst_80 : f32 to vector<8x128xf32>
    %372 = arith.addf %371, %370 : vector<8x128xf32>
    %373 = arith.divf %371, %372 : vector<8x128xf32>
    %374 = vector.extract_strided_slice %367 {offsets = [0, 128], sizes = [8, 128], strides = [1, 1]} : vector<8x512xf32> to vector<8x128xf32>
    %375 = arith.negf %374 : vector<8x128xf32>
    %376 = math.exp %375 : vector<8x128xf32>
    %cst_81 = arith.constant 1.000000e+00 : f32
    %377 = vector.broadcast %cst_81 : f32 to vector<8x128xf32>
    %378 = arith.addf %377, %376 : vector<8x128xf32>
    %379 = arith.divf %377, %378 : vector<8x128xf32>
    %380 = vector.extract_strided_slice %367 {offsets = [0, 256], sizes = [8, 128], strides = [1, 1]} : vector<8x512xf32> to vector<8x128xf32>
    %381 = math.tanh %380 : vector<8x128xf32>
    %382 = vector.extract_strided_slice %367 {offsets = [0, 384], sizes = [8, 128], strides = [1, 1]} : vector<8x512xf32> to vector<8x128xf32>
    %383 = arith.negf %382 : vector<8x128xf32>
    %384 = math.exp %383 : vector<8x128xf32>
    %cst_82 = arith.constant 1.000000e+00 : f32
    %385 = vector.broadcast %cst_82 : f32 to vector<8x128xf32>
    %386 = arith.addf %385, %384 : vector<8x128xf32>
    %387 = arith.divf %385, %386 : vector<8x128xf32>
    %388 = arith.mulf %379, %358 : vector<8x128xf32>
    %389 = arith.mulf %373, %381 : vector<8x128xf32>
    %390 = arith.addf %388, %389 : vector<8x128xf32>
    %391 = math.tanh %390 : vector<8x128xf32>
    %392 = arith.mulf %387, %391 : vector<8x128xf32>
    %c0_83 = arith.constant 0 : index
    %c11 = arith.constant 11 : index
    %c0_84 = arith.constant 0 : index
    %393 = vector.load %arg5[%c0_83, %c11, %c0_84] : memref<8x32x128xf32, #tpu.memory_space<vmem>>, vector<8x1x128xf32>
    %394 = vector.shape_cast %393 : vector<8x1x128xf32> to vector<8x128xf32>
    %395 = vector.shape_cast %392 : vector<8x128xf32> to vector<8x1x128xf32>
    tpu.vector_store %arg5[%c0_83, %c11, %c0_84], %395 {strides = array<i32>} : memref<8x32x128xf32, #tpu.memory_space<vmem>>, vector<8x1x128xf32>,
    %396 = vector.extract_strided_slice %11 {offsets = [96, 0], sizes = [8, 512], strides = [1, 1]} : vector<256x512xf32> to vector<8x512xf32>
    %397 = arith.truncf %392 : vector<8x128xf32> to vector<8x128xbf16>
    %cst_85 = arith.constant dense<0.000000e+00> : vector<8x512xf32>
    %398 = tpu.matmul %397, %5, %cst_85 {dimension_numbers = #tpu.dot_dimension_numbers<[1], [0], [0], [1], [0, 0, 1, 1], [], []>} : vector<8x128xbf16>, vector<128x512xbf16>, vector<8x512xf32> -> vector<8x512xf32>
    %399 = arith.addf %396, %398 : vector<8x512xf32>
    %400 = vector.extract_strided_slice %399 {offsets = [0, 0], sizes = [8, 128], strides = [1, 1]} : vector<8x512xf32> to vector<8x128xf32>
    %401 = arith.negf %400 : vector<8x128xf32>
    %402 = math.exp %401 : vector<8x128xf32>
    %cst_86 = arith.constant 1.000000e+00 : f32
    %403 = vector.broadcast %cst_86 : f32 to vector<8x128xf32>
    %404 = arith.addf %403, %402 : vector<8x128xf32>
    %405 = arith.divf %403, %404 : vector<8x128xf32>
    %406 = vector.extract_strided_slice %399 {offsets = [0, 128], sizes = [8, 128], strides = [1, 1]} : vector<8x512xf32> to vector<8x128xf32>
    %407 = arith.negf %406 : vector<8x128xf32>
    %408 = math.exp %407 : vector<8x128xf32>
    %cst_87 = arith.constant 1.000000e+00 : f32
    %409 = vector.broadcast %cst_87 : f32 to vector<8x128xf32>
    %410 = arith.addf %409, %408 : vector<8x128xf32>
    %411 = arith.divf %409, %410 : vector<8x128xf32>
    %412 = vector.extract_strided_slice %399 {offsets = [0, 256], sizes = [8, 128], strides = [1, 1]} : vector<8x512xf32> to vector<8x128xf32>
    %413 = math.tanh %412 : vector<8x128xf32>
    %414 = vector.extract_strided_slice %399 {offsets = [0, 384], sizes = [8, 128], strides = [1, 1]} : vector<8x512xf32> to vector<8x128xf32>
    %415 = arith.negf %414 : vector<8x128xf32>
    %416 = math.exp %415 : vector<8x128xf32>
    %cst_88 = arith.constant 1.000000e+00 : f32
    %417 = vector.broadcast %cst_88 : f32 to vector<8x128xf32>
    %418 = arith.addf %417, %416 : vector<8x128xf32>
    %419 = arith.divf %417, %418 : vector<8x128xf32>
    %420 = arith.mulf %411, %390 : vector<8x128xf32>
    %421 = arith.mulf %405, %413 : vector<8x128xf32>
    %422 = arith.addf %420, %421 : vector<8x128xf32>
    %423 = math.tanh %422 : vector<8x128xf32>
    %424 = arith.mulf %419, %423 : vector<8x128xf32>
    %c0_89 = arith.constant 0 : index
    %c12 = arith.constant 12 : index
    %c0_90 = arith.constant 0 : index
    %425 = vector.load %arg5[%c0_89, %c12, %c0_90] : memref<8x32x128xf32, #tpu.memory_space<vmem>>, vector<8x1x128xf32>
    %426 = vector.shape_cast %425 : vector<8x1x128xf32> to vector<8x128xf32>
    %427 = vector.shape_cast %424 : vector<8x128xf32> to vector<8x1x128xf32>
    tpu.vector_store %arg5[%c0_89, %c12, %c0_90], %427 {strides = array<i32>} : memref<8x32x128xf32, #tpu.memory_space<vmem>>, vector<8x1x128xf32>,
    %428 = vector.extract_strided_slice %11 {offsets = [104, 0], sizes = [8, 512], strides = [1, 1]} : vector<256x512xf32> to vector<8x512xf32>
    %429 = arith.truncf %424 : vector<8x128xf32> to vector<8x128xbf16>
    %cst_91 = arith.constant dense<0.000000e+00> : vector<8x512xf32>
    %430 = tpu.matmul %429, %5, %cst_91 {dimension_numbers = #tpu.dot_dimension_numbers<[1], [0], [0], [1], [0, 0, 1, 1], [], []>} : vector<8x128xbf16>, vector<128x512xbf16>, vector<8x512xf32> -> vector<8x512xf32>
    %431 = arith.addf %428, %430 : vector<8x512xf32>
    %432 = vector.extract_strided_slice %431 {offsets = [0, 0], sizes = [8, 128], strides = [1, 1]} : vector<8x512xf32> to vector<8x128xf32>
    %433 = arith.negf %432 : vector<8x128xf32>
    %434 = math.exp %433 : vector<8x128xf32>
    %cst_92 = arith.constant 1.000000e+00 : f32
    %435 = vector.broadcast %cst_92 : f32 to vector<8x128xf32>
    %436 = arith.addf %435, %434 : vector<8x128xf32>
    %437 = arith.divf %435, %436 : vector<8x128xf32>
    %438 = vector.extract_strided_slice %431 {offsets = [0, 128], sizes = [8, 128], strides = [1, 1]} : vector<8x512xf32> to vector<8x128xf32>
    %439 = arith.negf %438 : vector<8x128xf32>
    %440 = math.exp %439 : vector<8x128xf32>
    %cst_93 = arith.constant 1.000000e+00 : f32
    %441 = vector.broadcast %cst_93 : f32 to vector<8x128xf32>
    %442 = arith.addf %441, %440 : vector<8x128xf32>
    %443 = arith.divf %441, %442 : vector<8x128xf32>
    %444 = vector.extract_strided_slice %431 {offsets = [0, 256], sizes = [8, 128], strides = [1, 1]} : vector<8x512xf32> to vector<8x128xf32>
    %445 = math.tanh %444 : vector<8x128xf32>
    %446 = vector.extract_strided_slice %431 {offsets = [0, 384], sizes = [8, 128], strides = [1, 1]} : vector<8x512xf32> to vector<8x128xf32>
    %447 = arith.negf %446 : vector<8x128xf32>
    %448 = math.exp %447 : vector<8x128xf32>
    %cst_94 = arith.constant 1.000000e+00 : f32
    %449 = vector.broadcast %cst_94 : f32 to vector<8x128xf32>
    %450 = arith.addf %449, %448 : vector<8x128xf32>
    %451 = arith.divf %449, %450 : vector<8x128xf32>
    %452 = arith.mulf %443, %422 : vector<8x128xf32>
    %453 = arith.mulf %437, %445 : vector<8x128xf32>
    %454 = arith.addf %452, %453 : vector<8x128xf32>
    %455 = math.tanh %454 : vector<8x128xf32>
    %456 = arith.mulf %451, %455 : vector<8x128xf32>
    %c0_95 = arith.constant 0 : index
    %c13 = arith.constant 13 : index
    %c0_96 = arith.constant 0 : index
    %457 = vector.load %arg5[%c0_95, %c13, %c0_96] : memref<8x32x128xf32, #tpu.memory_space<vmem>>, vector<8x1x128xf32>
    %458 = vector.shape_cast %457 : vector<8x1x128xf32> to vector<8x128xf32>
    %459 = vector.shape_cast %456 : vector<8x128xf32> to vector<8x1x128xf32>
    tpu.vector_store %arg5[%c0_95, %c13, %c0_96], %459 {strides = array<i32>} : memref<8x32x128xf32, #tpu.memory_space<vmem>>, vector<8x1x128xf32>,
    %460 = vector.extract_strided_slice %11 {offsets = [112, 0], sizes = [8, 512], strides = [1, 1]} : vector<256x512xf32> to vector<8x512xf32>
    %461 = arith.truncf %456 : vector<8x128xf32> to vector<8x128xbf16>
    %cst_97 = arith.constant dense<0.000000e+00> : vector<8x512xf32>
    %462 = tpu.matmul %461, %5, %cst_97 {dimension_numbers = #tpu.dot_dimension_numbers<[1], [0], [0], [1], [0, 0, 1, 1], [], []>} : vector<8x128xbf16>, vector<128x512xbf16>, vector<8x512xf32> -> vector<8x512xf32>
    %463 = arith.addf %460, %462 : vector<8x512xf32>
    %464 = vector.extract_strided_slice %463 {offsets = [0, 0], sizes = [8, 128], strides = [1, 1]} : vector<8x512xf32> to vector<8x128xf32>
    %465 = arith.negf %464 : vector<8x128xf32>
    %466 = math.exp %465 : vector<8x128xf32>
    %cst_98 = arith.constant 1.000000e+00 : f32
    %467 = vector.broadcast %cst_98 : f32 to vector<8x128xf32>
    %468 = arith.addf %467, %466 : vector<8x128xf32>
    %469 = arith.divf %467, %468 : vector<8x128xf32>
    %470 = vector.extract_strided_slice %463 {offsets = [0, 128], sizes = [8, 128], strides = [1, 1]} : vector<8x512xf32> to vector<8x128xf32>
    %471 = arith.negf %470 : vector<8x128xf32>
    %472 = math.exp %471 : vector<8x128xf32>
    %cst_99 = arith.constant 1.000000e+00 : f32
    %473 = vector.broadcast %cst_99 : f32 to vector<8x128xf32>
    %474 = arith.addf %473, %472 : vector<8x128xf32>
    %475 = arith.divf %473, %474 : vector<8x128xf32>
    %476 = vector.extract_strided_slice %463 {offsets = [0, 256], sizes = [8, 128], strides = [1, 1]} : vector<8x512xf32> to vector<8x128xf32>
    %477 = math.tanh %476 : vector<8x128xf32>
    %478 = vector.extract_strided_slice %463 {offsets = [0, 384], sizes = [8, 128], strides = [1, 1]} : vector<8x512xf32> to vector<8x128xf32>
    %479 = arith.negf %478 : vector<8x128xf32>
    %480 = math.exp %479 : vector<8x128xf32>
    %cst_100 = arith.constant 1.000000e+00 : f32
    %481 = vector.broadcast %cst_100 : f32 to vector<8x128xf32>
    %482 = arith.addf %481, %480 : vector<8x128xf32>
    %483 = arith.divf %481, %482 : vector<8x128xf32>
    %484 = arith.mulf %475, %454 : vector<8x128xf32>
    %485 = arith.mulf %469, %477 : vector<8x128xf32>
    %486 = arith.addf %484, %485 : vector<8x128xf32>
    %487 = math.tanh %486 : vector<8x128xf32>
    %488 = arith.mulf %483, %487 : vector<8x128xf32>
    %c0_101 = arith.constant 0 : index
    %c14 = arith.constant 14 : index
    %c0_102 = arith.constant 0 : index
    %489 = vector.load %arg5[%c0_101, %c14, %c0_102] : memref<8x32x128xf32, #tpu.memory_space<vmem>>, vector<8x1x128xf32>
    %490 = vector.shape_cast %489 : vector<8x1x128xf32> to vector<8x128xf32>
    %491 = vector.shape_cast %488 : vector<8x128xf32> to vector<8x1x128xf32>
    tpu.vector_store %arg5[%c0_101, %c14, %c0_102], %491 {strides = array<i32>} : memref<8x32x128xf32, #tpu.memory_space<vmem>>, vector<8x1x128xf32>,
    %492 = vector.extract_strided_slice %11 {offsets = [120, 0], sizes = [8, 512], strides = [1, 1]} : vector<256x512xf32> to vector<8x512xf32>
    %493 = arith.truncf %488 : vector<8x128xf32> to vector<8x128xbf16>
    %cst_103 = arith.constant dense<0.000000e+00> : vector<8x512xf32>
    %494 = tpu.matmul %493, %5, %cst_103 {dimension_numbers = #tpu.dot_dimension_numbers<[1], [0], [0], [1], [0, 0, 1, 1], [], []>} : vector<8x128xbf16>, vector<128x512xbf16>, vector<8x512xf32> -> vector<8x512xf32>
    %495 = arith.addf %492, %494 : vector<8x512xf32>
    %496 = vector.extract_strided_slice %495 {offsets = [0, 0], sizes = [8, 128], strides = [1, 1]} : vector<8x512xf32> to vector<8x128xf32>
    %497 = arith.negf %496 : vector<8x128xf32>
    %498 = math.exp %497 : vector<8x128xf32>
    %cst_104 = arith.constant 1.000000e+00 : f32
    %499 = vector.broadcast %cst_104 : f32 to vector<8x128xf32>
    %500 = arith.addf %499, %498 : vector<8x128xf32>
    %501 = arith.divf %499, %500 : vector<8x128xf32>
    %502 = vector.extract_strided_slice %495 {offsets = [0, 128], sizes = [8, 128], strides = [1, 1]} : vector<8x512xf32> to vector<8x128xf32>
    %503 = arith.negf %502 : vector<8x128xf32>
    %504 = math.exp %503 : vector<8x128xf32>
    %cst_105 = arith.constant 1.000000e+00 : f32
    %505 = vector.broadcast %cst_105 : f32 to vector<8x128xf32>
    %506 = arith.addf %505, %504 : vector<8x128xf32>
    %507 = arith.divf %505, %506 : vector<8x128xf32>
    %508 = vector.extract_strided_slice %495 {offsets = [0, 256], sizes = [8, 128], strides = [1, 1]} : vector<8x512xf32> to vector<8x128xf32>
    %509 = math.tanh %508 : vector<8x128xf32>
    %510 = vector.extract_strided_slice %495 {offsets = [0, 384], sizes = [8, 128], strides = [1, 1]} : vector<8x512xf32> to vector<8x128xf32>
    %511 = arith.negf %510 : vector<8x128xf32>
    %512 = math.exp %511 : vector<8x128xf32>
    %cst_106 = arith.constant 1.000000e+00 : f32
    %513 = vector.broadcast %cst_106 : f32 to vector<8x128xf32>
    %514 = arith.addf %513, %512 : vector<8x128xf32>
    %515 = arith.divf %513, %514 : vector<8x128xf32>
    %516 = arith.mulf %507, %486 : vector<8x128xf32>
    %517 = arith.mulf %501, %509 : vector<8x128xf32>
    %518 = arith.addf %516, %517 : vector<8x128xf32>
    %519 = math.tanh %518 : vector<8x128xf32>
    %520 = arith.mulf %515, %519 : vector<8x128xf32>
    %c0_107 = arith.constant 0 : index
    %c15 = arith.constant 15 : index
    %c0_108 = arith.constant 0 : index
    %521 = vector.load %arg5[%c0_107, %c15, %c0_108] : memref<8x32x128xf32, #tpu.memory_space<vmem>>, vector<8x1x128xf32>
    %522 = vector.shape_cast %521 : vector<8x1x128xf32> to vector<8x128xf32>
    %523 = vector.shape_cast %520 : vector<8x128xf32> to vector<8x1x128xf32>
    tpu.vector_store %arg5[%c0_107, %c15, %c0_108], %523 {strides = array<i32>} : memref<8x32x128xf32, #tpu.memory_space<vmem>>, vector<8x1x128xf32>,
    %524 = vector.extract_strided_slice %11 {offsets = [128, 0], sizes = [8, 512], strides = [1, 1]} : vector<256x512xf32> to vector<8x512xf32>
    %525 = arith.truncf %520 : vector<8x128xf32> to vector<8x128xbf16>
    %cst_109 = arith.constant dense<0.000000e+00> : vector<8x512xf32>
    %526 = tpu.matmul %525, %5, %cst_109 {dimension_numbers = #tpu.dot_dimension_numbers<[1], [0], [0], [1], [0, 0, 1, 1], [], []>} : vector<8x128xbf16>, vector<128x512xbf16>, vector<8x512xf32> -> vector<8x512xf32>
    %527 = arith.addf %524, %526 : vector<8x512xf32>
    %528 = vector.extract_strided_slice %527 {offsets = [0, 0], sizes = [8, 128], strides = [1, 1]} : vector<8x512xf32> to vector<8x128xf32>
    %529 = arith.negf %528 : vector<8x128xf32>
    %530 = math.exp %529 : vector<8x128xf32>
    %cst_110 = arith.constant 1.000000e+00 : f32
    %531 = vector.broadcast %cst_110 : f32 to vector<8x128xf32>
    %532 = arith.addf %531, %530 : vector<8x128xf32>
    %533 = arith.divf %531, %532 : vector<8x128xf32>
    %534 = vector.extract_strided_slice %527 {offsets = [0, 128], sizes = [8, 128], strides = [1, 1]} : vector<8x512xf32> to vector<8x128xf32>
    %535 = arith.negf %534 : vector<8x128xf32>
    %536 = math.exp %535 : vector<8x128xf32>
    %cst_111 = arith.constant 1.000000e+00 : f32
    %537 = vector.broadcast %cst_111 : f32 to vector<8x128xf32>
    %538 = arith.addf %537, %536 : vector<8x128xf32>
    %539 = arith.divf %537, %538 : vector<8x128xf32>
    %540 = vector.extract_strided_slice %527 {offsets = [0, 256], sizes = [8, 128], strides = [1, 1]} : vector<8x512xf32> to vector<8x128xf32>
    %541 = math.tanh %540 : vector<8x128xf32>
    %542 = vector.extract_strided_slice %527 {offsets = [0, 384], sizes = [8, 128], strides = [1, 1]} : vector<8x512xf32> to vector<8x128xf32>
    %543 = arith.negf %542 : vector<8x128xf32>
    %544 = math.exp %543 : vector<8x128xf32>
    %cst_112 = arith.constant 1.000000e+00 : f32
    %545 = vector.broadcast %cst_112 : f32 to vector<8x128xf32>
    %546 = arith.addf %545, %544 : vector<8x128xf32>
    %547 = arith.divf %545, %546 : vector<8x128xf32>
    %548 = arith.mulf %539, %518 : vector<8x128xf32>
    %549 = arith.mulf %533, %541 : vector<8x128xf32>
    %550 = arith.addf %548, %549 : vector<8x128xf32>
    %551 = math.tanh %550 : vector<8x128xf32>
    %552 = arith.mulf %547, %551 : vector<8x128xf32>
    %c0_113 = arith.constant 0 : index
    %c16 = arith.constant 16 : index
    %c0_114 = arith.constant 0 : index
    %553 = vector.load %arg5[%c0_113, %c16, %c0_114] : memref<8x32x128xf32, #tpu.memory_space<vmem>>, vector<8x1x128xf32>
    %554 = vector.shape_cast %553 : vector<8x1x128xf32> to vector<8x128xf32>
    %555 = vector.shape_cast %552 : vector<8x128xf32> to vector<8x1x128xf32>
    tpu.vector_store %arg5[%c0_113, %c16, %c0_114], %555 {strides = array<i32>} : memref<8x32x128xf32, #tpu.memory_space<vmem>>, vector<8x1x128xf32>,
    %556 = vector.extract_strided_slice %11 {offsets = [136, 0], sizes = [8, 512], strides = [1, 1]} : vector<256x512xf32> to vector<8x512xf32>
    %557 = arith.truncf %552 : vector<8x128xf32> to vector<8x128xbf16>
    %cst_115 = arith.constant dense<0.000000e+00> : vector<8x512xf32>
    %558 = tpu.matmul %557, %5, %cst_115 {dimension_numbers = #tpu.dot_dimension_numbers<[1], [0], [0], [1], [0, 0, 1, 1], [], []>} : vector<8x128xbf16>, vector<128x512xbf16>, vector<8x512xf32> -> vector<8x512xf32>
    %559 = arith.addf %556, %558 : vector<8x512xf32>
    %560 = vector.extract_strided_slice %559 {offsets = [0, 0], sizes = [8, 128], strides = [1, 1]} : vector<8x512xf32> to vector<8x128xf32>
    %561 = arith.negf %560 : vector<8x128xf32>
    %562 = math.exp %561 : vector<8x128xf32>
    %cst_116 = arith.constant 1.000000e+00 : f32
    %563 = vector.broadcast %cst_116 : f32 to vector<8x128xf32>
    %564 = arith.addf %563, %562 : vector<8x128xf32>
    %565 = arith.divf %563, %564 : vector<8x128xf32>
    %566 = vector.extract_strided_slice %559 {offsets = [0, 128], sizes = [8, 128], strides = [1, 1]} : vector<8x512xf32> to vector<8x128xf32>
    %567 = arith.negf %566 : vector<8x128xf32>
    %568 = math.exp %567 : vector<8x128xf32>
    %cst_117 = arith.constant 1.000000e+00 : f32
    %569 = vector.broadcast %cst_117 : f32 to vector<8x128xf32>
    %570 = arith.addf %569, %568 : vector<8x128xf32>
    %571 = arith.divf %569, %570 : vector<8x128xf32>
    %572 = vector.extract_strided_slice %559 {offsets = [0, 256], sizes = [8, 128], strides = [1, 1]} : vector<8x512xf32> to vector<8x128xf32>
    %573 = math.tanh %572 : vector<8x128xf32>
    %574 = vector.extract_strided_slice %559 {offsets = [0, 384], sizes = [8, 128], strides = [1, 1]} : vector<8x512xf32> to vector<8x128xf32>
    %575 = arith.negf %574 : vector<8x128xf32>
    %576 = math.exp %575 : vector<8x128xf32>
    %cst_118 = arith.constant 1.000000e+00 : f32
    %577 = vector.broadcast %cst_118 : f32 to vector<8x128xf32>
    %578 = arith.addf %577, %576 : vector<8x128xf32>
    %579 = arith.divf %577, %578 : vector<8x128xf32>
    %580 = arith.mulf %571, %550 : vector<8x128xf32>
    %581 = arith.mulf %565, %573 : vector<8x128xf32>
    %582 = arith.addf %580, %581 : vector<8x128xf32>
    %583 = math.tanh %582 : vector<8x128xf32>
    %584 = arith.mulf %579, %583 : vector<8x128xf32>
    %c0_119 = arith.constant 0 : index
    %c17 = arith.constant 17 : index
    %c0_120 = arith.constant 0 : index
    %585 = vector.load %arg5[%c0_119, %c17, %c0_120] : memref<8x32x128xf32, #tpu.memory_space<vmem>>, vector<8x1x128xf32>
    %586 = vector.shape_cast %585 : vector<8x1x128xf32> to vector<8x128xf32>
    %587 = vector.shape_cast %584 : vector<8x128xf32> to vector<8x1x128xf32>
    tpu.vector_store %arg5[%c0_119, %c17, %c0_120], %587 {strides = array<i32>} : memref<8x32x128xf32, #tpu.memory_space<vmem>>, vector<8x1x128xf32>,
    %588 = vector.extract_strided_slice %11 {offsets = [144, 0], sizes = [8, 512], strides = [1, 1]} : vector<256x512xf32> to vector<8x512xf32>
    %589 = arith.truncf %584 : vector<8x128xf32> to vector<8x128xbf16>
    %cst_121 = arith.constant dense<0.000000e+00> : vector<8x512xf32>
    %590 = tpu.matmul %589, %5, %cst_121 {dimension_numbers = #tpu.dot_dimension_numbers<[1], [0], [0], [1], [0, 0, 1, 1], [], []>} : vector<8x128xbf16>, vector<128x512xbf16>, vector<8x512xf32> -> vector<8x512xf32>
    %591 = arith.addf %588, %590 : vector<8x512xf32>
    %592 = vector.extract_strided_slice %591 {offsets = [0, 0], sizes = [8, 128], strides = [1, 1]} : vector<8x512xf32> to vector<8x128xf32>
    %593 = arith.negf %592 : vector<8x128xf32>
    %594 = math.exp %593 : vector<8x128xf32>
    %cst_122 = arith.constant 1.000000e+00 : f32
    %595 = vector.broadcast %cst_122 : f32 to vector<8x128xf32>
    %596 = arith.addf %595, %594 : vector<8x128xf32>
    %597 = arith.divf %595, %596 : vector<8x128xf32>
    %598 = vector.extract_strided_slice %591 {offsets = [0, 128], sizes = [8, 128], strides = [1, 1]} : vector<8x512xf32> to vector<8x128xf32>
    %599 = arith.negf %598 : vector<8x128xf32>
    %600 = math.exp %599 : vector<8x128xf32>
    %cst_123 = arith.constant 1.000000e+00 : f32
    %601 = vector.broadcast %cst_123 : f32 to vector<8x128xf32>
    %602 = arith.addf %601, %600 : vector<8x128xf32>
    %603 = arith.divf %601, %602 : vector<8x128xf32>
    %604 = vector.extract_strided_slice %591 {offsets = [0, 256], sizes = [8, 128], strides = [1, 1]} : vector<8x512xf32> to vector<8x128xf32>
    %605 = math.tanh %604 : vector<8x128xf32>
    %606 = vector.extract_strided_slice %591 {offsets = [0, 384], sizes = [8, 128], strides = [1, 1]} : vector<8x512xf32> to vector<8x128xf32>
    %607 = arith.negf %606 : vector<8x128xf32>
    %608 = math.exp %607 : vector<8x128xf32>
    %cst_124 = arith.constant 1.000000e+00 : f32
    %609 = vector.broadcast %cst_124 : f32 to vector<8x128xf32>
    %610 = arith.addf %609, %608 : vector<8x128xf32>
    %611 = arith.divf %609, %610 : vector<8x128xf32>
    %612 = arith.mulf %603, %582 : vector<8x128xf32>
    %613 = arith.mulf %597, %605 : vector<8x128xf32>
    %614 = arith.addf %612, %613 : vector<8x128xf32>
    %615 = math.tanh %614 : vector<8x128xf32>
    %616 = arith.mulf %611, %615 : vector<8x128xf32>
    %c0_125 = arith.constant 0 : index
    %c18 = arith.constant 18 : index
    %c0_126 = arith.constant 0 : index
    %617 = vector.load %arg5[%c0_125, %c18, %c0_126] : memref<8x32x128xf32, #tpu.memory_space<vmem>>, vector<8x1x128xf32>
    %618 = vector.shape_cast %617 : vector<8x1x128xf32> to vector<8x128xf32>
    %619 = vector.shape_cast %616 : vector<8x128xf32> to vector<8x1x128xf32>
    tpu.vector_store %arg5[%c0_125, %c18, %c0_126], %619 {strides = array<i32>} : memref<8x32x128xf32, #tpu.memory_space<vmem>>, vector<8x1x128xf32>,
    %620 = vector.extract_strided_slice %11 {offsets = [152, 0], sizes = [8, 512], strides = [1, 1]} : vector<256x512xf32> to vector<8x512xf32>
    %621 = arith.truncf %616 : vector<8x128xf32> to vector<8x128xbf16>
    %cst_127 = arith.constant dense<0.000000e+00> : vector<8x512xf32>
    %622 = tpu.matmul %621, %5, %cst_127 {dimension_numbers = #tpu.dot_dimension_numbers<[1], [0], [0], [1], [0, 0, 1, 1], [], []>} : vector<8x128xbf16>, vector<128x512xbf16>, vector<8x512xf32> -> vector<8x512xf32>
    %623 = arith.addf %620, %622 : vector<8x512xf32>
    %624 = vector.extract_strided_slice %623 {offsets = [0, 0], sizes = [8, 128], strides = [1, 1]} : vector<8x512xf32> to vector<8x128xf32>
    %625 = arith.negf %624 : vector<8x128xf32>
    %626 = math.exp %625 : vector<8x128xf32>
    %cst_128 = arith.constant 1.000000e+00 : f32
    %627 = vector.broadcast %cst_128 : f32 to vector<8x128xf32>
    %628 = arith.addf %627, %626 : vector<8x128xf32>
    %629 = arith.divf %627, %628 : vector<8x128xf32>
    %630 = vector.extract_strided_slice %623 {offsets = [0, 128], sizes = [8, 128], strides = [1, 1]} : vector<8x512xf32> to vector<8x128xf32>
    %631 = arith.negf %630 : vector<8x128xf32>
    %632 = math.exp %631 : vector<8x128xf32>
    %cst_129 = arith.constant 1.000000e+00 : f32
    %633 = vector.broadcast %cst_129 : f32 to vector<8x128xf32>
    %634 = arith.addf %633, %632 : vector<8x128xf32>
    %635 = arith.divf %633, %634 : vector<8x128xf32>
    %636 = vector.extract_strided_slice %623 {offsets = [0, 256], sizes = [8, 128], strides = [1, 1]} : vector<8x512xf32> to vector<8x128xf32>
    %637 = math.tanh %636 : vector<8x128xf32>
    %638 = vector.extract_strided_slice %623 {offsets = [0, 384], sizes = [8, 128], strides = [1, 1]} : vector<8x512xf32> to vector<8x128xf32>
    %639 = arith.negf %638 : vector<8x128xf32>
    %640 = math.exp %639 : vector<8x128xf32>
    %cst_130 = arith.constant 1.000000e+00 : f32
    %641 = vector.broadcast %cst_130 : f32 to vector<8x128xf32>
    %642 = arith.addf %641, %640 : vector<8x128xf32>
    %643 = arith.divf %641, %642 : vector<8x128xf32>
    %644 = arith.mulf %635, %614 : vector<8x128xf32>
    %645 = arith.mulf %629, %637 : vector<8x128xf32>
    %646 = arith.addf %644, %645 : vector<8x128xf32>
    %647 = math.tanh %646 : vector<8x128xf32>
    %648 = arith.mulf %643, %647 : vector<8x128xf32>
    %c0_131 = arith.constant 0 : index
    %c19 = arith.constant 19 : index
    %c0_132 = arith.constant 0 : index
    %649 = vector.load %arg5[%c0_131, %c19, %c0_132] : memref<8x32x128xf32, #tpu.memory_space<vmem>>, vector<8x1x128xf32>
    %650 = vector.shape_cast %649 : vector<8x1x128xf32> to vector<8x128xf32>
    %651 = vector.shape_cast %648 : vector<8x128xf32> to vector<8x1x128xf32>
    tpu.vector_store %arg5[%c0_131, %c19, %c0_132], %651 {strides = array<i32>} : memref<8x32x128xf32, #tpu.memory_space<vmem>>, vector<8x1x128xf32>,
    %652 = vector.extract_strided_slice %11 {offsets = [160, 0], sizes = [8, 512], strides = [1, 1]} : vector<256x512xf32> to vector<8x512xf32>
    %653 = arith.truncf %648 : vector<8x128xf32> to vector<8x128xbf16>
    %cst_133 = arith.constant dense<0.000000e+00> : vector<8x512xf32>
    %654 = tpu.matmul %653, %5, %cst_133 {dimension_numbers = #tpu.dot_dimension_numbers<[1], [0], [0], [1], [0, 0, 1, 1], [], []>} : vector<8x128xbf16>, vector<128x512xbf16>, vector<8x512xf32> -> vector<8x512xf32>
    %655 = arith.addf %652, %654 : vector<8x512xf32>
    %656 = vector.extract_strided_slice %655 {offsets = [0, 0], sizes = [8, 128], strides = [1, 1]} : vector<8x512xf32> to vector<8x128xf32>
    %657 = arith.negf %656 : vector<8x128xf32>
    %658 = math.exp %657 : vector<8x128xf32>
    %cst_134 = arith.constant 1.000000e+00 : f32
    %659 = vector.broadcast %cst_134 : f32 to vector<8x128xf32>
    %660 = arith.addf %659, %658 : vector<8x128xf32>
    %661 = arith.divf %659, %660 : vector<8x128xf32>
    %662 = vector.extract_strided_slice %655 {offsets = [0, 128], sizes = [8, 128], strides = [1, 1]} : vector<8x512xf32> to vector<8x128xf32>
    %663 = arith.negf %662 : vector<8x128xf32>
    %664 = math.exp %663 : vector<8x128xf32>
    %cst_135 = arith.constant 1.000000e+00 : f32
    %665 = vector.broadcast %cst_135 : f32 to vector<8x128xf32>
    %666 = arith.addf %665, %664 : vector<8x128xf32>
    %667 = arith.divf %665, %666 : vector<8x128xf32>
    %668 = vector.extract_strided_slice %655 {offsets = [0, 256], sizes = [8, 128], strides = [1, 1]} : vector<8x512xf32> to vector<8x128xf32>
    %669 = math.tanh %668 : vector<8x128xf32>
    %670 = vector.extract_strided_slice %655 {offsets = [0, 384], sizes = [8, 128], strides = [1, 1]} : vector<8x512xf32> to vector<8x128xf32>
    %671 = arith.negf %670 : vector<8x128xf32>
    %672 = math.exp %671 : vector<8x128xf32>
    %cst_136 = arith.constant 1.000000e+00 : f32
    %673 = vector.broadcast %cst_136 : f32 to vector<8x128xf32>
    %674 = arith.addf %673, %672 : vector<8x128xf32>
    %675 = arith.divf %673, %674 : vector<8x128xf32>
    %676 = arith.mulf %667, %646 : vector<8x128xf32>
    %677 = arith.mulf %661, %669 : vector<8x128xf32>
    %678 = arith.addf %676, %677 : vector<8x128xf32>
    %679 = math.tanh %678 : vector<8x128xf32>
    %680 = arith.mulf %675, %679 : vector<8x128xf32>
    %c0_137 = arith.constant 0 : index
    %c20 = arith.constant 20 : index
    %c0_138 = arith.constant 0 : index
    %681 = vector.load %arg5[%c0_137, %c20, %c0_138] : memref<8x32x128xf32, #tpu.memory_space<vmem>>, vector<8x1x128xf32>
    %682 = vector.shape_cast %681 : vector<8x1x128xf32> to vector<8x128xf32>
    %683 = vector.shape_cast %680 : vector<8x128xf32> to vector<8x1x128xf32>
    tpu.vector_store %arg5[%c0_137, %c20, %c0_138], %683 {strides = array<i32>} : memref<8x32x128xf32, #tpu.memory_space<vmem>>, vector<8x1x128xf32>,
    %684 = vector.extract_strided_slice %11 {offsets = [168, 0], sizes = [8, 512], strides = [1, 1]} : vector<256x512xf32> to vector<8x512xf32>
    %685 = arith.truncf %680 : vector<8x128xf32> to vector<8x128xbf16>
    %cst_139 = arith.constant dense<0.000000e+00> : vector<8x512xf32>
    %686 = tpu.matmul %685, %5, %cst_139 {dimension_numbers = #tpu.dot_dimension_numbers<[1], [0], [0], [1], [0, 0, 1, 1], [], []>} : vector<8x128xbf16>, vector<128x512xbf16>, vector<8x512xf32> -> vector<8x512xf32>
    %687 = arith.addf %684, %686 : vector<8x512xf32>
    %688 = vector.extract_strided_slice %687 {offsets = [0, 0], sizes = [8, 128], strides = [1, 1]} : vector<8x512xf32> to vector<8x128xf32>
    %689 = arith.negf %688 : vector<8x128xf32>
    %690 = math.exp %689 : vector<8x128xf32>
    %cst_140 = arith.constant 1.000000e+00 : f32
    %691 = vector.broadcast %cst_140 : f32 to vector<8x128xf32>
    %692 = arith.addf %691, %690 : vector<8x128xf32>
    %693 = arith.divf %691, %692 : vector<8x128xf32>
    %694 = vector.extract_strided_slice %687 {offsets = [0, 128], sizes = [8, 128], strides = [1, 1]} : vector<8x512xf32> to vector<8x128xf32>
    %695 = arith.negf %694 : vector<8x128xf32>
    %696 = math.exp %695 : vector<8x128xf32>
    %cst_141 = arith.constant 1.000000e+00 : f32
    %697 = vector.broadcast %cst_141 : f32 to vector<8x128xf32>
    %698 = arith.addf %697, %696 : vector<8x128xf32>
    %699 = arith.divf %697, %698 : vector<8x128xf32>
    %700 = vector.extract_strided_slice %687 {offsets = [0, 256], sizes = [8, 128], strides = [1, 1]} : vector<8x512xf32> to vector<8x128xf32>
    %701 = math.tanh %700 : vector<8x128xf32>
    %702 = vector.extract_strided_slice %687 {offsets = [0, 384], sizes = [8, 128], strides = [1, 1]} : vector<8x512xf32> to vector<8x128xf32>
    %703 = arith.negf %702 : vector<8x128xf32>
    %704 = math.exp %703 : vector<8x128xf32>
    %cst_142 = arith.constant 1.000000e+00 : f32
    %705 = vector.broadcast %cst_142 : f32 to vector<8x128xf32>
    %706 = arith.addf %705, %704 : vector<8x128xf32>
    %707 = arith.divf %705, %706 : vector<8x128xf32>
    %708 = arith.mulf %699, %678 : vector<8x128xf32>
    %709 = arith.mulf %693, %701 : vector<8x128xf32>
    %710 = arith.addf %708, %709 : vector<8x128xf32>
    %711 = math.tanh %710 : vector<8x128xf32>
    %712 = arith.mulf %707, %711 : vector<8x128xf32>
    %c0_143 = arith.constant 0 : index
    %c21 = arith.constant 21 : index
    %c0_144 = arith.constant 0 : index
    %713 = vector.load %arg5[%c0_143, %c21, %c0_144] : memref<8x32x128xf32, #tpu.memory_space<vmem>>, vector<8x1x128xf32>
    %714 = vector.shape_cast %713 : vector<8x1x128xf32> to vector<8x128xf32>
    %715 = vector.shape_cast %712 : vector<8x128xf32> to vector<8x1x128xf32>
    tpu.vector_store %arg5[%c0_143, %c21, %c0_144], %715 {strides = array<i32>} : memref<8x32x128xf32, #tpu.memory_space<vmem>>, vector<8x1x128xf32>,
    %716 = vector.extract_strided_slice %11 {offsets = [176, 0], sizes = [8, 512], strides = [1, 1]} : vector<256x512xf32> to vector<8x512xf32>
    %717 = arith.truncf %712 : vector<8x128xf32> to vector<8x128xbf16>
    %cst_145 = arith.constant dense<0.000000e+00> : vector<8x512xf32>
    %718 = tpu.matmul %717, %5, %cst_145 {dimension_numbers = #tpu.dot_dimension_numbers<[1], [0], [0], [1], [0, 0, 1, 1], [], []>} : vector<8x128xbf16>, vector<128x512xbf16>, vector<8x512xf32> -> vector<8x512xf32>
    %719 = arith.addf %716, %718 : vector<8x512xf32>
    %720 = vector.extract_strided_slice %719 {offsets = [0, 0], sizes = [8, 128], strides = [1, 1]} : vector<8x512xf32> to vector<8x128xf32>
    %721 = arith.negf %720 : vector<8x128xf32>
    %722 = math.exp %721 : vector<8x128xf32>
    %cst_146 = arith.constant 1.000000e+00 : f32
    %723 = vector.broadcast %cst_146 : f32 to vector<8x128xf32>
    %724 = arith.addf %723, %722 : vector<8x128xf32>
    %725 = arith.divf %723, %724 : vector<8x128xf32>
    %726 = vector.extract_strided_slice %719 {offsets = [0, 128], sizes = [8, 128], strides = [1, 1]} : vector<8x512xf32> to vector<8x128xf32>
    %727 = arith.negf %726 : vector<8x128xf32>
    %728 = math.exp %727 : vector<8x128xf32>
    %cst_147 = arith.constant 1.000000e+00 : f32
    %729 = vector.broadcast %cst_147 : f32 to vector<8x128xf32>
    %730 = arith.addf %729, %728 : vector<8x128xf32>
    %731 = arith.divf %729, %730 : vector<8x128xf32>
    %732 = vector.extract_strided_slice %719 {offsets = [0, 256], sizes = [8, 128], strides = [1, 1]} : vector<8x512xf32> to vector<8x128xf32>
    %733 = math.tanh %732 : vector<8x128xf32>
    %734 = vector.extract_strided_slice %719 {offsets = [0, 384], sizes = [8, 128], strides = [1, 1]} : vector<8x512xf32> to vector<8x128xf32>
    %735 = arith.negf %734 : vector<8x128xf32>
    %736 = math.exp %735 : vector<8x128xf32>
    %cst_148 = arith.constant 1.000000e+00 : f32
    %737 = vector.broadcast %cst_148 : f32 to vector<8x128xf32>
    %738 = arith.addf %737, %736 : vector<8x128xf32>
    %739 = arith.divf %737, %738 : vector<8x128xf32>
    %740 = arith.mulf %731, %710 : vector<8x128xf32>
    %741 = arith.mulf %725, %733 : vector<8x128xf32>
    %742 = arith.addf %740, %741 : vector<8x128xf32>
    %743 = math.tanh %742 : vector<8x128xf32>
    %744 = arith.mulf %739, %743 : vector<8x128xf32>
    %c0_149 = arith.constant 0 : index
    %c22 = arith.constant 22 : index
    %c0_150 = arith.constant 0 : index
    %745 = vector.load %arg5[%c0_149, %c22, %c0_150] : memref<8x32x128xf32, #tpu.memory_space<vmem>>, vector<8x1x128xf32>
    %746 = vector.shape_cast %745 : vector<8x1x128xf32> to vector<8x128xf32>
    %747 = vector.shape_cast %744 : vector<8x128xf32> to vector<8x1x128xf32>
    tpu.vector_store %arg5[%c0_149, %c22, %c0_150], %747 {strides = array<i32>} : memref<8x32x128xf32, #tpu.memory_space<vmem>>, vector<8x1x128xf32>,
    %748 = vector.extract_strided_slice %11 {offsets = [184, 0], sizes = [8, 512], strides = [1, 1]} : vector<256x512xf32> to vector<8x512xf32>
    %749 = arith.truncf %744 : vector<8x128xf32> to vector<8x128xbf16>
    %cst_151 = arith.constant dense<0.000000e+00> : vector<8x512xf32>
    %750 = tpu.matmul %749, %5, %cst_151 {dimension_numbers = #tpu.dot_dimension_numbers<[1], [0], [0], [1], [0, 0, 1, 1], [], []>} : vector<8x128xbf16>, vector<128x512xbf16>, vector<8x512xf32> -> vector<8x512xf32>
    %751 = arith.addf %748, %750 : vector<8x512xf32>
    %752 = vector.extract_strided_slice %751 {offsets = [0, 0], sizes = [8, 128], strides = [1, 1]} : vector<8x512xf32> to vector<8x128xf32>
    %753 = arith.negf %752 : vector<8x128xf32>
    %754 = math.exp %753 : vector<8x128xf32>
    %cst_152 = arith.constant 1.000000e+00 : f32
    %755 = vector.broadcast %cst_152 : f32 to vector<8x128xf32>
    %756 = arith.addf %755, %754 : vector<8x128xf32>
    %757 = arith.divf %755, %756 : vector<8x128xf32>
    %758 = vector.extract_strided_slice %751 {offsets = [0, 128], sizes = [8, 128], strides = [1, 1]} : vector<8x512xf32> to vector<8x128xf32>
    %759 = arith.negf %758 : vector<8x128xf32>
    %760 = math.exp %759 : vector<8x128xf32>
    %cst_153 = arith.constant 1.000000e+00 : f32
    %761 = vector.broadcast %cst_153 : f32 to vector<8x128xf32>
    %762 = arith.addf %761, %760 : vector<8x128xf32>
    %763 = arith.divf %761, %762 : vector<8x128xf32>
    %764 = vector.extract_strided_slice %751 {offsets = [0, 256], sizes = [8, 128], strides = [1, 1]} : vector<8x512xf32> to vector<8x128xf32>
    %765 = math.tanh %764 : vector<8x128xf32>
    %766 = vector.extract_strided_slice %751 {offsets = [0, 384], sizes = [8, 128], strides = [1, 1]} : vector<8x512xf32> to vector<8x128xf32>
    %767 = arith.negf %766 : vector<8x128xf32>
    %768 = math.exp %767 : vector<8x128xf32>
    %cst_154 = arith.constant 1.000000e+00 : f32
    %769 = vector.broadcast %cst_154 : f32 to vector<8x128xf32>
    %770 = arith.addf %769, %768 : vector<8x128xf32>
    %771 = arith.divf %769, %770 : vector<8x128xf32>
    %772 = arith.mulf %763, %742 : vector<8x128xf32>
    %773 = arith.mulf %757, %765 : vector<8x128xf32>
    %774 = arith.addf %772, %773 : vector<8x128xf32>
    %775 = math.tanh %774 : vector<8x128xf32>
    %776 = arith.mulf %771, %775 : vector<8x128xf32>
    %c0_155 = arith.constant 0 : index
    %c23 = arith.constant 23 : index
    %c0_156 = arith.constant 0 : index
    %777 = vector.load %arg5[%c0_155, %c23, %c0_156] : memref<8x32x128xf32, #tpu.memory_space<vmem>>, vector<8x1x128xf32>
    %778 = vector.shape_cast %777 : vector<8x1x128xf32> to vector<8x128xf32>
    %779 = vector.shape_cast %776 : vector<8x128xf32> to vector<8x1x128xf32>
    tpu.vector_store %arg5[%c0_155, %c23, %c0_156], %779 {strides = array<i32>} : memref<8x32x128xf32, #tpu.memory_space<vmem>>, vector<8x1x128xf32>,
    %780 = vector.extract_strided_slice %11 {offsets = [192, 0], sizes = [8, 512], strides = [1, 1]} : vector<256x512xf32> to vector<8x512xf32>
    %781 = arith.truncf %776 : vector<8x128xf32> to vector<8x128xbf16>
    %cst_157 = arith.constant dense<0.000000e+00> : vector<8x512xf32>
    %782 = tpu.matmul %781, %5, %cst_157 {dimension_numbers = #tpu.dot_dimension_numbers<[1], [0], [0], [1], [0, 0, 1, 1], [], []>} : vector<8x128xbf16>, vector<128x512xbf16>, vector<8x512xf32> -> vector<8x512xf32>
    %783 = arith.addf %780, %782 : vector<8x512xf32>
    %784 = vector.extract_strided_slice %783 {offsets = [0, 0], sizes = [8, 128], strides = [1, 1]} : vector<8x512xf32> to vector<8x128xf32>
    %785 = arith.negf %784 : vector<8x128xf32>
    %786 = math.exp %785 : vector<8x128xf32>
    %cst_158 = arith.constant 1.000000e+00 : f32
    %787 = vector.broadcast %cst_158 : f32 to vector<8x128xf32>
    %788 = arith.addf %787, %786 : vector<8x128xf32>
    %789 = arith.divf %787, %788 : vector<8x128xf32>
    %790 = vector.extract_strided_slice %783 {offsets = [0, 128], sizes = [8, 128], strides = [1, 1]} : vector<8x512xf32> to vector<8x128xf32>
    %791 = arith.negf %790 : vector<8x128xf32>
    %792 = math.exp %791 : vector<8x128xf32>
    %cst_159 = arith.constant 1.000000e+00 : f32
    %793 = vector.broadcast %cst_159 : f32 to vector<8x128xf32>
    %794 = arith.addf %793, %792 : vector<8x128xf32>
    %795 = arith.divf %793, %794 : vector<8x128xf32>
    %796 = vector.extract_strided_slice %783 {offsets = [0, 256], sizes = [8, 128], strides = [1, 1]} : vector<8x512xf32> to vector<8x128xf32>
    %797 = math.tanh %796 : vector<8x128xf32>
    %798 = vector.extract_strided_slice %783 {offsets = [0, 384], sizes = [8, 128], strides = [1, 1]} : vector<8x512xf32> to vector<8x128xf32>
    %799 = arith.negf %798 : vector<8x128xf32>
    %800 = math.exp %799 : vector<8x128xf32>
    %cst_160 = arith.constant 1.000000e+00 : f32
    %801 = vector.broadcast %cst_160 : f32 to vector<8x128xf32>
    %802 = arith.addf %801, %800 : vector<8x128xf32>
    %803 = arith.divf %801, %802 : vector<8x128xf32>
    %804 = arith.mulf %795, %774 : vector<8x128xf32>
    %805 = arith.mulf %789, %797 : vector<8x128xf32>
    %806 = arith.addf %804, %805 : vector<8x128xf32>
    %807 = math.tanh %806 : vector<8x128xf32>
    %808 = arith.mulf %803, %807 : vector<8x128xf32>
    %c0_161 = arith.constant 0 : index
    %c24 = arith.constant 24 : index
    %c0_162 = arith.constant 0 : index
    %809 = vector.load %arg5[%c0_161, %c24, %c0_162] : memref<8x32x128xf32, #tpu.memory_space<vmem>>, vector<8x1x128xf32>
    %810 = vector.shape_cast %809 : vector<8x1x128xf32> to vector<8x128xf32>
    %811 = vector.shape_cast %808 : vector<8x128xf32> to vector<8x1x128xf32>
    tpu.vector_store %arg5[%c0_161, %c24, %c0_162], %811 {strides = array<i32>} : memref<8x32x128xf32, #tpu.memory_space<vmem>>, vector<8x1x128xf32>,
    %812 = vector.extract_strided_slice %11 {offsets = [200, 0], sizes = [8, 512], strides = [1, 1]} : vector<256x512xf32> to vector<8x512xf32>
    %813 = arith.truncf %808 : vector<8x128xf32> to vector<8x128xbf16>
    %cst_163 = arith.constant dense<0.000000e+00> : vector<8x512xf32>
    %814 = tpu.matmul %813, %5, %cst_163 {dimension_numbers = #tpu.dot_dimension_numbers<[1], [0], [0], [1], [0, 0, 1, 1], [], []>} : vector<8x128xbf16>, vector<128x512xbf16>, vector<8x512xf32> -> vector<8x512xf32>
    %815 = arith.addf %812, %814 : vector<8x512xf32>
    %816 = vector.extract_strided_slice %815 {offsets = [0, 0], sizes = [8, 128], strides = [1, 1]} : vector<8x512xf32> to vector<8x128xf32>
    %817 = arith.negf %816 : vector<8x128xf32>
    %818 = math.exp %817 : vector<8x128xf32>
    %cst_164 = arith.constant 1.000000e+00 : f32
    %819 = vector.broadcast %cst_164 : f32 to vector<8x128xf32>
    %820 = arith.addf %819, %818 : vector<8x128xf32>
    %821 = arith.divf %819, %820 : vector<8x128xf32>
    %822 = vector.extract_strided_slice %815 {offsets = [0, 128], sizes = [8, 128], strides = [1, 1]} : vector<8x512xf32> to vector<8x128xf32>
    %823 = arith.negf %822 : vector<8x128xf32>
    %824 = math.exp %823 : vector<8x128xf32>
    %cst_165 = arith.constant 1.000000e+00 : f32
    %825 = vector.broadcast %cst_165 : f32 to vector<8x128xf32>
    %826 = arith.addf %825, %824 : vector<8x128xf32>
    %827 = arith.divf %825, %826 : vector<8x128xf32>
    %828 = vector.extract_strided_slice %815 {offsets = [0, 256], sizes = [8, 128], strides = [1, 1]} : vector<8x512xf32> to vector<8x128xf32>
    %829 = math.tanh %828 : vector<8x128xf32>
    %830 = vector.extract_strided_slice %815 {offsets = [0, 384], sizes = [8, 128], strides = [1, 1]} : vector<8x512xf32> to vector<8x128xf32>
    %831 = arith.negf %830 : vector<8x128xf32>
    %832 = math.exp %831 : vector<8x128xf32>
    %cst_166 = arith.constant 1.000000e+00 : f32
    %833 = vector.broadcast %cst_166 : f32 to vector<8x128xf32>
    %834 = arith.addf %833, %832 : vector<8x128xf32>
    %835 = arith.divf %833, %834 : vector<8x128xf32>
    %836 = arith.mulf %827, %806 : vector<8x128xf32>
    %837 = arith.mulf %821, %829 : vector<8x128xf32>
    %838 = arith.addf %836, %837 : vector<8x128xf32>
    %839 = math.tanh %838 : vector<8x128xf32>
    %840 = arith.mulf %835, %839 : vector<8x128xf32>
    %c0_167 = arith.constant 0 : index
    %c25 = arith.constant 25 : index
    %c0_168 = arith.constant 0 : index
    %841 = vector.load %arg5[%c0_167, %c25, %c0_168] : memref<8x32x128xf32, #tpu.memory_space<vmem>>, vector<8x1x128xf32>
    %842 = vector.shape_cast %841 : vector<8x1x128xf32> to vector<8x128xf32>
    %843 = vector.shape_cast %840 : vector<8x128xf32> to vector<8x1x128xf32>
    tpu.vector_store %arg5[%c0_167, %c25, %c0_168], %843 {strides = array<i32>} : memref<8x32x128xf32, #tpu.memory_space<vmem>>, vector<8x1x128xf32>,
    %844 = vector.extract_strided_slice %11 {offsets = [208, 0], sizes = [8, 512], strides = [1, 1]} : vector<256x512xf32> to vector<8x512xf32>
    %845 = arith.truncf %840 : vector<8x128xf32> to vector<8x128xbf16>
    %cst_169 = arith.constant dense<0.000000e+00> : vector<8x512xf32>
    %846 = tpu.matmul %845, %5, %cst_169 {dimension_numbers = #tpu.dot_dimension_numbers<[1], [0], [0], [1], [0, 0, 1, 1], [], []>} : vector<8x128xbf16>, vector<128x512xbf16>, vector<8x512xf32> -> vector<8x512xf32>
    %847 = arith.addf %844, %846 : vector<8x512xf32>
    %848 = vector.extract_strided_slice %847 {offsets = [0, 0], sizes = [8, 128], strides = [1, 1]} : vector<8x512xf32> to vector<8x128xf32>
    %849 = arith.negf %848 : vector<8x128xf32>
    %850 = math.exp %849 : vector<8x128xf32>
    %cst_170 = arith.constant 1.000000e+00 : f32
    %851 = vector.broadcast %cst_170 : f32 to vector<8x128xf32>
    %852 = arith.addf %851, %850 : vector<8x128xf32>
    %853 = arith.divf %851, %852 : vector<8x128xf32>
    %854 = vector.extract_strided_slice %847 {offsets = [0, 128], sizes = [8, 128], strides = [1, 1]} : vector<8x512xf32> to vector<8x128xf32>
    %855 = arith.negf %854 : vector<8x128xf32>
    %856 = math.exp %855 : vector<8x128xf32>
    %cst_171 = arith.constant 1.000000e+00 : f32
    %857 = vector.broadcast %cst_171 : f32 to vector<8x128xf32>
    %858 = arith.addf %857, %856 : vector<8x128xf32>
    %859 = arith.divf %857, %858 : vector<8x128xf32>
    %860 = vector.extract_strided_slice %847 {offsets = [0, 256], sizes = [8, 128], strides = [1, 1]} : vector<8x512xf32> to vector<8x128xf32>
    %861 = math.tanh %860 : vector<8x128xf32>
    %862 = vector.extract_strided_slice %847 {offsets = [0, 384], sizes = [8, 128], strides = [1, 1]} : vector<8x512xf32> to vector<8x128xf32>
    %863 = arith.negf %862 : vector<8x128xf32>
    %864 = math.exp %863 : vector<8x128xf32>
    %cst_172 = arith.constant 1.000000e+00 : f32
    %865 = vector.broadcast %cst_172 : f32 to vector<8x128xf32>
    %866 = arith.addf %865, %864 : vector<8x128xf32>
    %867 = arith.divf %865, %866 : vector<8x128xf32>
    %868 = arith.mulf %859, %838 : vector<8x128xf32>
    %869 = arith.mulf %853, %861 : vector<8x128xf32>
    %870 = arith.addf %868, %869 : vector<8x128xf32>
    %871 = math.tanh %870 : vector<8x128xf32>
    %872 = arith.mulf %867, %871 : vector<8x128xf32>
    %c0_173 = arith.constant 0 : index
    %c26 = arith.constant 26 : index
    %c0_174 = arith.constant 0 : index
    %873 = vector.load %arg5[%c0_173, %c26, %c0_174] : memref<8x32x128xf32, #tpu.memory_space<vmem>>, vector<8x1x128xf32>
    %874 = vector.shape_cast %873 : vector<8x1x128xf32> to vector<8x128xf32>
    %875 = vector.shape_cast %872 : vector<8x128xf32> to vector<8x1x128xf32>
    tpu.vector_store %arg5[%c0_173, %c26, %c0_174], %875 {strides = array<i32>} : memref<8x32x128xf32, #tpu.memory_space<vmem>>, vector<8x1x128xf32>,
    %876 = vector.extract_strided_slice %11 {offsets = [216, 0], sizes = [8, 512], strides = [1, 1]} : vector<256x512xf32> to vector<8x512xf32>
    %877 = arith.truncf %872 : vector<8x128xf32> to vector<8x128xbf16>
    %cst_175 = arith.constant dense<0.000000e+00> : vector<8x512xf32>
    %878 = tpu.matmul %877, %5, %cst_175 {dimension_numbers = #tpu.dot_dimension_numbers<[1], [0], [0], [1], [0, 0, 1, 1], [], []>} : vector<8x128xbf16>, vector<128x512xbf16>, vector<8x512xf32> -> vector<8x512xf32>
    %879 = arith.addf %876, %878 : vector<8x512xf32>
    %880 = vector.extract_strided_slice %879 {offsets = [0, 0], sizes = [8, 128], strides = [1, 1]} : vector<8x512xf32> to vector<8x128xf32>
    %881 = arith.negf %880 : vector<8x128xf32>
    %882 = math.exp %881 : vector<8x128xf32>
    %cst_176 = arith.constant 1.000000e+00 : f32
    %883 = vector.broadcast %cst_176 : f32 to vector<8x128xf32>
    %884 = arith.addf %883, %882 : vector<8x128xf32>
    %885 = arith.divf %883, %884 : vector<8x128xf32>
    %886 = vector.extract_strided_slice %879 {offsets = [0, 128], sizes = [8, 128], strides = [1, 1]} : vector<8x512xf32> to vector<8x128xf32>
    %887 = arith.negf %886 : vector<8x128xf32>
    %888 = math.exp %887 : vector<8x128xf32>
    %cst_177 = arith.constant 1.000000e+00 : f32
    %889 = vector.broadcast %cst_177 : f32 to vector<8x128xf32>
    %890 = arith.addf %889, %888 : vector<8x128xf32>
    %891 = arith.divf %889, %890 : vector<8x128xf32>
    %892 = vector.extract_strided_slice %879 {offsets = [0, 256], sizes = [8, 128], strides = [1, 1]} : vector<8x512xf32> to vector<8x128xf32>
    %893 = math.tanh %892 : vector<8x128xf32>
    %894 = vector.extract_strided_slice %879 {offsets = [0, 384], sizes = [8, 128], strides = [1, 1]} : vector<8x512xf32> to vector<8x128xf32>
    %895 = arith.negf %894 : vector<8x128xf32>
    %896 = math.exp %895 : vector<8x128xf32>
    %cst_178 = arith.constant 1.000000e+00 : f32
    %897 = vector.broadcast %cst_178 : f32 to vector<8x128xf32>
    %898 = arith.addf %897, %896 : vector<8x128xf32>
    %899 = arith.divf %897, %898 : vector<8x128xf32>
    %900 = arith.mulf %891, %870 : vector<8x128xf32>
    %901 = arith.mulf %885, %893 : vector<8x128xf32>
    %902 = arith.addf %900, %901 : vector<8x128xf32>
    %903 = math.tanh %902 : vector<8x128xf32>
    %904 = arith.mulf %899, %903 : vector<8x128xf32>
    %c0_179 = arith.constant 0 : index
    %c27 = arith.constant 27 : index
    %c0_180 = arith.constant 0 : index
    %905 = vector.load %arg5[%c0_179, %c27, %c0_180] : memref<8x32x128xf32, #tpu.memory_space<vmem>>, vector<8x1x128xf32>
    %906 = vector.shape_cast %905 : vector<8x1x128xf32> to vector<8x128xf32>
    %907 = vector.shape_cast %904 : vector<8x128xf32> to vector<8x1x128xf32>
    tpu.vector_store %arg5[%c0_179, %c27, %c0_180], %907 {strides = array<i32>} : memref<8x32x128xf32, #tpu.memory_space<vmem>>, vector<8x1x128xf32>,
    %908 = vector.extract_strided_slice %11 {offsets = [224, 0], sizes = [8, 512], strides = [1, 1]} : vector<256x512xf32> to vector<8x512xf32>
    %909 = arith.truncf %904 : vector<8x128xf32> to vector<8x128xbf16>
    %cst_181 = arith.constant dense<0.000000e+00> : vector<8x512xf32>
    %910 = tpu.matmul %909, %5, %cst_181 {dimension_numbers = #tpu.dot_dimension_numbers<[1], [0], [0], [1], [0, 0, 1, 1], [], []>} : vector<8x128xbf16>, vector<128x512xbf16>, vector<8x512xf32> -> vector<8x512xf32>
    %911 = arith.addf %908, %910 : vector<8x512xf32>
    %912 = vector.extract_strided_slice %911 {offsets = [0, 0], sizes = [8, 128], strides = [1, 1]} : vector<8x512xf32> to vector<8x128xf32>
    %913 = arith.negf %912 : vector<8x128xf32>
    %914 = math.exp %913 : vector<8x128xf32>
    %cst_182 = arith.constant 1.000000e+00 : f32
    %915 = vector.broadcast %cst_182 : f32 to vector<8x128xf32>
    %916 = arith.addf %915, %914 : vector<8x128xf32>
    %917 = arith.divf %915, %916 : vector<8x128xf32>
    %918 = vector.extract_strided_slice %911 {offsets = [0, 128], sizes = [8, 128], strides = [1, 1]} : vector<8x512xf32> to vector<8x128xf32>
    %919 = arith.negf %918 : vector<8x128xf32>
    %920 = math.exp %919 : vector<8x128xf32>
    %cst_183 = arith.constant 1.000000e+00 : f32
    %921 = vector.broadcast %cst_183 : f32 to vector<8x128xf32>
    %922 = arith.addf %921, %920 : vector<8x128xf32>
    %923 = arith.divf %921, %922 : vector<8x128xf32>
    %924 = vector.extract_strided_slice %911 {offsets = [0, 256], sizes = [8, 128], strides = [1, 1]} : vector<8x512xf32> to vector<8x128xf32>
    %925 = math.tanh %924 : vector<8x128xf32>
    %926 = vector.extract_strided_slice %911 {offsets = [0, 384], sizes = [8, 128], strides = [1, 1]} : vector<8x512xf32> to vector<8x128xf32>
    %927 = arith.negf %926 : vector<8x128xf32>
    %928 = math.exp %927 : vector<8x128xf32>
    %cst_184 = arith.constant 1.000000e+00 : f32
    %929 = vector.broadcast %cst_184 : f32 to vector<8x128xf32>
    %930 = arith.addf %929, %928 : vector<8x128xf32>
    %931 = arith.divf %929, %930 : vector<8x128xf32>
    %932 = arith.mulf %923, %902 : vector<8x128xf32>
    %933 = arith.mulf %917, %925 : vector<8x128xf32>
    %934 = arith.addf %932, %933 : vector<8x128xf32>
    %935 = math.tanh %934 : vector<8x128xf32>
    %936 = arith.mulf %931, %935 : vector<8x128xf32>
    %c0_185 = arith.constant 0 : index
    %c28 = arith.constant 28 : index
    %c0_186 = arith.constant 0 : index
    %937 = vector.load %arg5[%c0_185, %c28, %c0_186] : memref<8x32x128xf32, #tpu.memory_space<vmem>>, vector<8x1x128xf32>
    %938 = vector.shape_cast %937 : vector<8x1x128xf32> to vector<8x128xf32>
    %939 = vector.shape_cast %936 : vector<8x128xf32> to vector<8x1x128xf32>
    tpu.vector_store %arg5[%c0_185, %c28, %c0_186], %939 {strides = array<i32>} : memref<8x32x128xf32, #tpu.memory_space<vmem>>, vector<8x1x128xf32>,
    %940 = vector.extract_strided_slice %11 {offsets = [232, 0], sizes = [8, 512], strides = [1, 1]} : vector<256x512xf32> to vector<8x512xf32>
    %941 = arith.truncf %936 : vector<8x128xf32> to vector<8x128xbf16>
    %cst_187 = arith.constant dense<0.000000e+00> : vector<8x512xf32>
    %942 = tpu.matmul %941, %5, %cst_187 {dimension_numbers = #tpu.dot_dimension_numbers<[1], [0], [0], [1], [0, 0, 1, 1], [], []>} : vector<8x128xbf16>, vector<128x512xbf16>, vector<8x512xf32> -> vector<8x512xf32>
    %943 = arith.addf %940, %942 : vector<8x512xf32>
    %944 = vector.extract_strided_slice %943 {offsets = [0, 0], sizes = [8, 128], strides = [1, 1]} : vector<8x512xf32> to vector<8x128xf32>
    %945 = arith.negf %944 : vector<8x128xf32>
    %946 = math.exp %945 : vector<8x128xf32>
    %cst_188 = arith.constant 1.000000e+00 : f32
    %947 = vector.broadcast %cst_188 : f32 to vector<8x128xf32>
    %948 = arith.addf %947, %946 : vector<8x128xf32>
    %949 = arith.divf %947, %948 : vector<8x128xf32>
    %950 = vector.extract_strided_slice %943 {offsets = [0, 128], sizes = [8, 128], strides = [1, 1]} : vector<8x512xf32> to vector<8x128xf32>
    %951 = arith.negf %950 : vector<8x128xf32>
    %952 = math.exp %951 : vector<8x128xf32>
    %cst_189 = arith.constant 1.000000e+00 : f32
    %953 = vector.broadcast %cst_189 : f32 to vector<8x128xf32>
    %954 = arith.addf %953, %952 : vector<8x128xf32>
    %955 = arith.divf %953, %954 : vector<8x128xf32>
    %956 = vector.extract_strided_slice %943 {offsets = [0, 256], sizes = [8, 128], strides = [1, 1]} : vector<8x512xf32> to vector<8x128xf32>
    %957 = math.tanh %956 : vector<8x128xf32>
    %958 = vector.extract_strided_slice %943 {offsets = [0, 384], sizes = [8, 128], strides = [1, 1]} : vector<8x512xf32> to vector<8x128xf32>
    %959 = arith.negf %958 : vector<8x128xf32>
    %960 = math.exp %959 : vector<8x128xf32>
    %cst_190 = arith.constant 1.000000e+00 : f32
    %961 = vector.broadcast %cst_190 : f32 to vector<8x128xf32>
    %962 = arith.addf %961, %960 : vector<8x128xf32>
    %963 = arith.divf %961, %962 : vector<8x128xf32>
    %964 = arith.mulf %955, %934 : vector<8x128xf32>
    %965 = arith.mulf %949, %957 : vector<8x128xf32>
    %966 = arith.addf %964, %965 : vector<8x128xf32>
    %967 = math.tanh %966 : vector<8x128xf32>
    %968 = arith.mulf %963, %967 : vector<8x128xf32>
    %c0_191 = arith.constant 0 : index
    %c29 = arith.constant 29 : index
    %c0_192 = arith.constant 0 : index
    %969 = vector.load %arg5[%c0_191, %c29, %c0_192] : memref<8x32x128xf32, #tpu.memory_space<vmem>>, vector<8x1x128xf32>
    %970 = vector.shape_cast %969 : vector<8x1x128xf32> to vector<8x128xf32>
    %971 = vector.shape_cast %968 : vector<8x128xf32> to vector<8x1x128xf32>
    tpu.vector_store %arg5[%c0_191, %c29, %c0_192], %971 {strides = array<i32>} : memref<8x32x128xf32, #tpu.memory_space<vmem>>, vector<8x1x128xf32>,
    %972 = vector.extract_strided_slice %11 {offsets = [240, 0], sizes = [8, 512], strides = [1, 1]} : vector<256x512xf32> to vector<8x512xf32>
    %973 = arith.truncf %968 : vector<8x128xf32> to vector<8x128xbf16>
    %cst_193 = arith.constant dense<0.000000e+00> : vector<8x512xf32>
    %974 = tpu.matmul %973, %5, %cst_193 {dimension_numbers = #tpu.dot_dimension_numbers<[1], [0], [0], [1], [0, 0, 1, 1], [], []>} : vector<8x128xbf16>, vector<128x512xbf16>, vector<8x512xf32> -> vector<8x512xf32>
    %975 = arith.addf %972, %974 : vector<8x512xf32>
    %976 = vector.extract_strided_slice %975 {offsets = [0, 0], sizes = [8, 128], strides = [1, 1]} : vector<8x512xf32> to vector<8x128xf32>
    %977 = arith.negf %976 : vector<8x128xf32>
    %978 = math.exp %977 : vector<8x128xf32>
    %cst_194 = arith.constant 1.000000e+00 : f32
    %979 = vector.broadcast %cst_194 : f32 to vector<8x128xf32>
    %980 = arith.addf %979, %978 : vector<8x128xf32>
    %981 = arith.divf %979, %980 : vector<8x128xf32>
    %982 = vector.extract_strided_slice %975 {offsets = [0, 128], sizes = [8, 128], strides = [1, 1]} : vector<8x512xf32> to vector<8x128xf32>
    %983 = arith.negf %982 : vector<8x128xf32>
    %984 = math.exp %983 : vector<8x128xf32>
    %cst_195 = arith.constant 1.000000e+00 : f32
    %985 = vector.broadcast %cst_195 : f32 to vector<8x128xf32>
    %986 = arith.addf %985, %984 : vector<8x128xf32>
    %987 = arith.divf %985, %986 : vector<8x128xf32>
    %988 = vector.extract_strided_slice %975 {offsets = [0, 256], sizes = [8, 128], strides = [1, 1]} : vector<8x512xf32> to vector<8x128xf32>
    %989 = math.tanh %988 : vector<8x128xf32>
    %990 = vector.extract_strided_slice %975 {offsets = [0, 384], sizes = [8, 128], strides = [1, 1]} : vector<8x512xf32> to vector<8x128xf32>
    %991 = arith.negf %990 : vector<8x128xf32>
    %992 = math.exp %991 : vector<8x128xf32>
    %cst_196 = arith.constant 1.000000e+00 : f32
    %993 = vector.broadcast %cst_196 : f32 to vector<8x128xf32>
    %994 = arith.addf %993, %992 : vector<8x128xf32>
    %995 = arith.divf %993, %994 : vector<8x128xf32>
    %996 = arith.mulf %987, %966 : vector<8x128xf32>
    %997 = arith.mulf %981, %989 : vector<8x128xf32>
    %998 = arith.addf %996, %997 : vector<8x128xf32>
    %999 = math.tanh %998 : vector<8x128xf32>
    %1000 = arith.mulf %995, %999 : vector<8x128xf32>
    %c0_197 = arith.constant 0 : index
    %c30 = arith.constant 30 : index
    %c0_198 = arith.constant 0 : index
    %1001 = vector.load %arg5[%c0_197, %c30, %c0_198] : memref<8x32x128xf32, #tpu.memory_space<vmem>>, vector<8x1x128xf32>
    %1002 = vector.shape_cast %1001 : vector<8x1x128xf32> to vector<8x128xf32>
    %1003 = vector.shape_cast %1000 : vector<8x128xf32> to vector<8x1x128xf32>
    tpu.vector_store %arg5[%c0_197, %c30, %c0_198], %1003 {strides = array<i32>} : memref<8x32x128xf32, #tpu.memory_space<vmem>>, vector<8x1x128xf32>,
    %1004 = vector.extract_strided_slice %11 {offsets = [248, 0], sizes = [8, 512], strides = [1, 1]} : vector<256x512xf32> to vector<8x512xf32>
    %1005 = arith.truncf %1000 : vector<8x128xf32> to vector<8x128xbf16>
    %cst_199 = arith.constant dense<0.000000e+00> : vector<8x512xf32>
    %1006 = tpu.matmul %1005, %5, %cst_199 {dimension_numbers = #tpu.dot_dimension_numbers<[1], [0], [0], [1], [0, 0, 1, 1], [], []>} : vector<8x128xbf16>, vector<128x512xbf16>, vector<8x512xf32> -> vector<8x512xf32>
    %1007 = arith.addf %1004, %1006 : vector<8x512xf32>
    %1008 = vector.extract_strided_slice %1007 {offsets = [0, 0], sizes = [8, 128], strides = [1, 1]} : vector<8x512xf32> to vector<8x128xf32>
    %1009 = arith.negf %1008 : vector<8x128xf32>
    %1010 = math.exp %1009 : vector<8x128xf32>
    %cst_200 = arith.constant 1.000000e+00 : f32
    %1011 = vector.broadcast %cst_200 : f32 to vector<8x128xf32>
    %1012 = arith.addf %1011, %1010 : vector<8x128xf32>
    %1013 = arith.divf %1011, %1012 : vector<8x128xf32>
    %1014 = vector.extract_strided_slice %1007 {offsets = [0, 128], sizes = [8, 128], strides = [1, 1]} : vector<8x512xf32> to vector<8x128xf32>
    %1015 = arith.negf %1014 : vector<8x128xf32>
    %1016 = math.exp %1015 : vector<8x128xf32>
    %cst_201 = arith.constant 1.000000e+00 : f32
    %1017 = vector.broadcast %cst_201 : f32 to vector<8x128xf32>
    %1018 = arith.addf %1017, %1016 : vector<8x128xf32>
    %1019 = arith.divf %1017, %1018 : vector<8x128xf32>
    %1020 = vector.extract_strided_slice %1007 {offsets = [0, 256], sizes = [8, 128], strides = [1, 1]} : vector<8x512xf32> to vector<8x128xf32>
    %1021 = math.tanh %1020 : vector<8x128xf32>
    %1022 = vector.extract_strided_slice %1007 {offsets = [0, 384], sizes = [8, 128], strides = [1, 1]} : vector<8x512xf32> to vector<8x128xf32>
    %1023 = arith.negf %1022 : vector<8x128xf32>
    %1024 = math.exp %1023 : vector<8x128xf32>
    %cst_202 = arith.constant 1.000000e+00 : f32
    %1025 = vector.broadcast %cst_202 : f32 to vector<8x128xf32>
    %1026 = arith.addf %1025, %1024 : vector<8x128xf32>
    %1027 = arith.divf %1025, %1026 : vector<8x128xf32>
    %1028 = arith.mulf %1019, %998 : vector<8x128xf32>
    %1029 = arith.mulf %1013, %1021 : vector<8x128xf32>
    %1030 = arith.addf %1028, %1029 : vector<8x128xf32>
    %1031 = math.tanh %1030 : vector<8x128xf32>
    %1032 = arith.mulf %1027, %1031 : vector<8x128xf32>
    %c0_203 = arith.constant 0 : index
    %c31 = arith.constant 31 : index
    %c0_204 = arith.constant 0 : index
    %1033 = vector.load %arg5[%c0_203, %c31, %c0_204] : memref<8x32x128xf32, #tpu.memory_space<vmem>>, vector<8x1x128xf32>
    %1034 = vector.shape_cast %1033 : vector<8x1x128xf32> to vector<8x128xf32>
    %1035 = vector.shape_cast %1032 : vector<8x128xf32> to vector<8x1x128xf32>
    tpu.vector_store %arg5[%c0_203, %c31, %c0_204], %1035 {strides = array<i32>} : memref<8x32x128xf32, #tpu.memory_space<vmem>>, vector<8x1x128xf32>,
    %c0_205 = arith.constant 0 : index
    %c0_206 = arith.constant 0 : index
    %1036 = vector.load %arg6[%c0_205, %c0_206] : memref<8x128xf32, #tpu.memory_space<vmem>>, vector<8x128xf32>
    tpu.vector_store %arg6[%c0_205, %c0_206], %1032 {strides = array<i32>} : memref<8x128xf32, #tpu.memory_space<vmem>>, vector<8x128xf32>,
    %c0_207 = arith.constant 0 : index
    %c0_208 = arith.constant 0 : index
    %1037 = vector.load %arg7[%c0_207, %c0_208] : memref<8x128xf32, #tpu.memory_space<vmem>>, vector<8x128xf32>
    tpu.vector_store %arg7[%c0_207, %c0_208], %1030 {strides = array<i32>} : memref<8x128xf32, #tpu.memory_space<vmem>>, vector<8x128xf32>,
    return
  }
  func.func @transform_0(%arg0: i32) -> (i32, i32) {
    %c0_i32 = arith.constant 0 : i32
    %c0_i32_0 = arith.constant 0 : i32
    return %arg0, %c0_i32 : i32, i32
  }
  func.func @transform_1(%arg0: i32) -> (i32, i32) {
    %c0_i32 = arith.constant 0 : i32
    %c0_i32_0 = arith.constant 0 : i32
    %c0_i32_1 = arith.constant 0 : i32
    return %c0_i32, %c0_i32_0 : i32, i32
  }
  func.func @transform_2(%arg0: i32) -> (i32, i32) {
    %c0_i32 = arith.constant 0 : i32
    %c0_i32_0 = arith.constant 0 : i32
    %c0_i32_1 = arith.constant 0 : i32
    return %c0_i32, %c0_i32_0 : i32, i32
  }
  func.func @transform_3(%arg0: i32) -> (i32, i32) {
    %c0_i32 = arith.constant 0 : i32
    %c0_i32_0 = arith.constant 0 : i32
    %c0_i32_1 = arith.constant 0 : i32
    return %c0_i32, %c0_i32_0 : i32, i32
  }
  func.func @transform_4(%arg0: i32) -> (i32, i32, i32) {
    %c0_i32 = arith.constant 0 : i32
    %c0_i32_0 = arith.constant 0 : i32
    %c0_i32_1 = arith.constant 0 : i32
    return %c0_i32, %arg0, %c0_i32_0 : i32, i32, i32
  }
}

</mosaic_0001>

<llo_original>
// kernel: tpu_custom_call.1
$region0: #{tpu_custom_call.1}
  #allocation0 [shape = 'u32[]', space=smem, size = 0x4, offset = 0x4, fixed_abs, tag = 'smem constant byte address 0x4 - core index']
  #allocation1 [shape = 'u32[144,128]{1,0:T(1,128)}', space=vmem, size = 0x12000, scoped, tag = 'internal scratch']
  #allocation2 [shape = 'f32[8,128]{1,0:T(8,128)}', space=vmem, size = 0x1000, scoped, tag = 'scratch operand']
  #allocation3 [shape = 'f32[8,128]{1,0:T(8,128)}', space=vmem, size = 0x1000, scoped, tag = 'scratch operand']
  #allocation11 [shape = 's32[]', space=sflag, size = 0x4, offset = 0, fixed_abs, tag = 'sflag constant byte address 0x0 - dummy sync flag']
  %s0 = inlined_call_operand.hbm [shape: bf16[1024,128], index: 0, kind: input, shape index: {}]
  %s1 = inlined_call_operand.hbm [shape: bf16[128,512], index: 1, kind: input, shape index: {}]
  %s2 = inlined_call_operand.hbm [shape: bf16[128,512], index: 2, kind: input, shape index: {}]
  %s3 = inlined_call_operand.vmem [shape: f32[1,512], index: 3, kind: input, shape index: {}]
  %s4 = inlined_call_operand.hbm [shape: f32[8,128,128], index: 4, kind: output, shape index: {}]
  %s5 = sld [smem:[#allocation0]]
  $region65: #{tpu_custom_call.1} parent=0
    _
  %s7 = ssub.s32 1, %s5
  %s8 = scalar_select 0, %s7, %s5
  $region1: #{tpu_custom_call.1} parent=0
    #allocation4 [shape = 'u8[131072]{0}', space=vmem, size = 0x20000, scoped, tag = 'input window, operand 0']
    #allocation5 [shape = 's32[2]{0}', space=sflag, size = 0x8, scoped, tag = 'scoped memory for tpu_custom_call.1']
    #allocation6 [shape = 's32[2]{0}', space=sflag, size = 0x8, scoped, tag = 'scoped memory for tpu_custom_call.1']
    #allocation7 [shape = 'u8[131072]{0}', space=vmem, size = 0x20000, scoped, tag = 'input window, operand 1, single buffered']
    #allocation8 [shape = 's32[1]{0}', space=sflag, size = 0x4, scoped, tag = 'scoped memory for tpu_custom_call.1']
    #allocation9 [shape = 'u8[131072]{0}', space=vmem, size = 0x20000, scoped, tag = 'input window, operand 2, single buffered']
    #allocation10 [shape = 'u8[262144]{0}', space=vmem, size = 0x40000, scoped, tag = 'output window, operand 0']
    %9 = vsyncpa [#allocation5], 0
    %s10 = scalar_lea.sflag [#allocation5], 1
    %11 = vsyncpa %s10, 0
    %12 = vsyncpa [#allocation8], 0
    %13 = vsyncpa [#allocation6], 0
    %s14 = scalar_lea.sflag [#allocation6], 1
    %15 = vsyncpa %s14, 0
    loop: start=0, step=1, limit=6
    $region2: #{tpu_custom_call.1} parent=1 // loop_pre_header
      _
    $region3: #{tpu_custom_call.1} parent=1 // loop_header
      %s17 = sphi 0, %s21
      %p18 = scmp.ge.s32.totalorder %s17, 6
      %s27 = sphi 0, %s29
      %s30 = sphi 0, %s27
      %s31 = sphi 0, %s30
      %s47 = sphi 0, %s31
      %s51 = sphi 0, %s51
      %s53 = sphi 0, %s51
      %s54 = sphi 0, %s53
      %s68 = sphi 0, %s54
      %s72 = sphi 0, %s72
      %s74 = sphi 0, %s72
      %s75 = sphi 0, %s74
      %s89 = sphi 0, %s75
      %s93 = sphi 0, %s93
      %s95 = sphi 0, %s93
      %s96 = sphi 0, %s95
      %s110 = sphi 0, %s96
      %s116 = sphi 0, %s118
      %s119 = sphi 0, %s116
      %s120 = sphi 0, %s119
      %s136 = sphi 0, %s120
    $region4: #{tpu_custom_call.1} parent=1 // loop_header_branch
      %20 = sbr.rel (%p18) target = $region8
    $region5: #{tpu_custom_call.1} parent=1 // loop_body
      %s22 = ssub.s32 %s17, 1
      %s23 = ssub.s32 %s17, 2
      %s24 = sadd.s32 %s17, 1
      %s25 = ssub.s32 %s17, %s24
      %p26 = scmp.eq.s32.totalorder %s25, 0
      %s28 = sadd.s32 %s27, 1
      %s29 = scalar_select %p26, %s27, %s28
      %p32 = pneg %p26
      %p33 = scmp.eq.s32.totalorder %s17, 3
      %p34 = por %p32, %p33
      %p35 = scmp.ne.s32.totalorder %s27, %s30
      %p36 = scmp.eq.s32.totalorder %s17, 0
      %p37 = por %p35, %p36
      %p38 = scmp.ne.s32.totalorder %s27, %s30
      %p39 = scmp.eq.s32.totalorder %s22, 3
      %p40 = por %p38, %p39
      %p41 = scmp.ne.s32.totalorder %s30, %s31
      %p42 = scmp.eq.s32.totalorder %s22, 0
      %p43 = por %p41, %p42
      %p44 = scmp.ne.s32.totalorder %s30, %s31
      %p45 = scmp.eq.s32.totalorder %s23, 3
      %p46 = por %p44, %p45
      %p48 = scmp.ne.s32.totalorder %s31, %s47
      %p49 = scmp.eq.s32.totalorder %s23, 0
      %p50 = por %p48, %p49
      %s52 = sadd.s32 %s51, 1
      %p55 = scmp.eq.s32.totalorder %s17, 3
      %p56 = scmp.ne.s32.totalorder %s51, %s53
      %p57 = scmp.eq.s32.totalorder %s17, 0
      %p58 = por %p56, %p57
      %p59 = scmp.ne.s32.totalorder %s51, %s53
      %p60 = scmp.eq.s32.totalorder %s22, 3
      %p61 = por %p59, %p60
      %p62 = scmp.ne.s32.totalorder %s53, %s54
      %p63 = scmp.eq.s32.totalorder %s22, 0
      %p64 = por %p62, %p63
      %p65 = scmp.ne.s32.totalorder %s53, %s54
      %p66 = scmp.eq.s32.totalorder %s23, 3
      %p67 = por %p65, %p66
      %p69 = scmp.ne.s32.totalorder %s54, %s68
      %p70 = scmp.eq.s32.totalorder %s23, 0
      %p71 = por %p69, %p70
      %s73 = sadd.s32 %s72, 1
      %p76 = scmp.eq.s32.totalorder %s17, 3
      %p77 = scmp.ne.s32.totalorder %s72, %s74
      %p78 = scmp.eq.s32.totalorder %s17, 0
      %p79 = por %p77, %p78
      %p80 = scmp.ne.s32.totalorder %s72, %s74
      %p81 = scmp.eq.s32.totalorder %s22, 3
      %p82 = por %p80, %p81
      %p83 = scmp.ne.s32.totalorder %s74, %s75
      %p84 = scmp.eq.s32.totalorder %s22, 0
      %p85 = por %p83, %p84
      %p86 = scmp.ne.s32.totalorder %s74, %s75
      %p87 = scmp.eq.s32.totalorder %s23, 3
      %p88 = por %p86, %p87
      %p90 = scmp.ne.s32.totalorder %s75, %s89
      %p91 = scmp.eq.s32.totalorder %s23, 0
      %p92 = por %p90, %p91
      %s94 = sadd.s32 %s93, 1
      %p97 = scmp.eq.s32.totalorder %s17, 3
      %p98 = scmp.ne.s32.totalorder %s93, %s95
      %p99 = scmp.eq.s32.totalorder %s17, 0
      %p100 = por %p98, %p99
      %p101 = scmp.ne.s32.totalorder %s93, %s95
      %p102 = scmp.eq.s32.totalorder %s22, 3
      %p103 = por %p101, %p102
      %p104 = scmp.ne.s32.totalorder %s95, %s96
      %p105 = scmp.eq.s32.totalorder %s22, 0
      %p106 = por %p104, %p105
      %p107 = scmp.ne.s32.totalorder %s95, %s96
      %p108 = scmp.eq.s32.totalorder %s23, 3
      %p109 = por %p107, %p108
      %p111 = scmp.ne.s32.totalorder %s96, %s110
      %p112 = scmp.eq.s32.totalorder %s23, 0
      %p113 = por %p111, %p112
      %s114 = ssub.s32 %s17, %s24
      %p115 = scmp.eq.s32.totalorder %s114, 0
      %s117 = sadd.s32 %s116, 1
      %s118 = scalar_select %p115, %s116, %s117
      %p121 = pneg %p115
      %p122 = scmp.eq.s32.totalorder %s17, 3
      %p123 = por %p121, %p122
      %p124 = scmp.ne.s32.totalorder %s116, %s119
      %p125 = scmp.eq.s32.totalorder %s17, 0
      %p126 = por %p124, %p125
      %p127 = scmp.ne.s32.totalorder %s116, %s119
      %p128 = scmp.eq.s32.totalorder %s22, 3
      %p129 = por %p127, %p128
      %p130 = scmp.ne.s32.totalorder %s119, %s120
      %p131 = scmp.eq.s32.totalorder %s22, 0
      %p132 = por %p130, %p131
      %p133 = scmp.ne.s32.totalorder %s119, %s120
      %p134 = scmp.eq.s32.totalorder %s23, 3
      %p135 = por %p133, %p134
      %p137 = scmp.ne.s32.totalorder %s120, %s136
      %p138 = scmp.eq.s32.totalorder %s23, 0
      %p139 = por %p137, %p138
      %p140 = scmp.le.s32.totalorder 1, %s17
      %p141 = scmp.lt.s32.totalorder %s17, 5
      %p142 = pnand %p140, %p141
      %p143 = pneg %p142
      // Predicated region
      $region9: #{tpu_custom_call.1} parent=5 // pred_check
        _
      $region10: #{tpu_custom_call.1} parent=5 // pred_check_branch
        %145 = sbr.rel (%p142) target = $region12
      $region11: #{tpu_custom_call.1} parent=5 // pred_region
        %s146 = ssub.s32 %s17, 1
        // Predicated region
        $region13: #{tpu_custom_call.1} parent=11 // pred_check
          %p147 = pneg %p64
        $region14: #{tpu_custom_call.1} parent=11 // pred_check_branch
          %149 = sbr.rel (%p147) target = $region16
        $region15: #{tpu_custom_call.1} parent=11 // pred_region
          %s151 = ssub.s32 4096, 4096
          %152 = vsyncadd [#allocation8], %s151
          %s153 = sshll.u32 [#allocation7], 4
          %s154 = int_to_ptr.vmem [resolvable:$true] %s153
          %159 = dma.hbm_to_vmem [thread:$0]  %s1, 4096, %s154, [#allocation8], 256, 256, 16
        $region16: #{tpu_custom_call.1} parent=11 // pred_fallthru
          _
        // Predicated region
        $region17: #{tpu_custom_call.1} parent=11 // pred_check
          %p160 = pneg %p85
        $region18: #{tpu_custom_call.1} parent=11 // pred_check_branch
          %162 = sbr.rel (%p160) target = $region20
        $region19: #{tpu_custom_call.1} parent=11 // pred_region
          %s164 = ssub.s32 4096, 4096
          %165 = vsyncadd [#allocation8], %s164
          %s166 = sshll.u32 [#allocation9], 4
          %s167 = int_to_ptr.vmem [resolvable:$true] %s166
          %172 = dma.hbm_to_vmem [thread:$0]  %s2, 4096, %s167, [#allocation8], 256, 256, 16
        $region20: #{tpu_custom_call.1} parent=11 // pred_fallthru
          _
        // Predicated region
        $region21: #{tpu_custom_call.1} parent=11 // pred_check
          %p173 = pneg %p106
        $region22: #{tpu_custom_call.1} parent=11 // pred_check_branch
          %175 = sbr.rel (%p173) target = $region24
        $region23: #{tpu_custom_call.1} parent=11 // pred_region
          _
        $region24: #{tpu_custom_call.1} parent=11 // pred_fallthru
          _
      $region12: #{tpu_custom_call.1} parent=5 // pred_fallthru
        _
      %p176 = scmp.lt.s32.totalorder %s17, 4
      // Predicated region
      $region25: #{tpu_custom_call.1} parent=5 // pred_check
        %p177 = pneg %p176
      $region26: #{tpu_custom_call.1} parent=5 // pred_check_branch
        %179 = sbr.rel (%p177) target = $region28
      $region27: #{tpu_custom_call.1} parent=5 // pred_region
        // Predicated region
        $region29: #{tpu_custom_call.1} parent=27 // pred_check
          %p180 = pneg %p37
        $region30: #{tpu_custom_call.1} parent=27 // pred_check_branch
          %182 = sbr.rel (%p180) target = $region32
        $region31: #{tpu_custom_call.1} parent=27 // pred_region
          %s183 = sand.u32 %s27, 1
          %s184 = scalar_lea.sflag [#allocation5], %s183
          %s185 = sand.u32 %s27, 1
          %s186 = smul.addr %s185, 128
          %s187 = scalar_lea.vmem [#allocation4], %s186
          %s188 = smul.u32 32, %s17
          %s190 = ssub.s32 2048, 2048
          %191 = vsyncadd %s184, %s190
          %s192 = smul.addr %s188, 64
          %s193 = scalar_lea.hbm %s0, %s192
          %s194 = sshll.u32 %s187, 4
          %s195 = int_to_ptr.vmem [resolvable:$true] %s194
          %200 = dma.hbm_to_vmem [thread:$0]  %s193, 2048, %s195, %s184, 64, 64, 4
        $region32: #{tpu_custom_call.1} parent=27 // pred_fallthru
          _
      $region28: #{tpu_custom_call.1} parent=5 // pred_fallthru
        _
      %p201 = scmp.le.s32.totalorder 1, %s17
      %p202 = scmp.lt.s32.totalorder %s17, 5
      %p203 = pnand %p201, %p202
      %p204 = pneg %p203
      // Predicated region
      $region33: #{tpu_custom_call.1} parent=5 // pred_check
        _
      $region34: #{tpu_custom_call.1} parent=5 // pred_check_branch
        %206 = sbr.rel (%p203) target = $region36
      $region35: #{tpu_custom_call.1} parent=5 // pred_region
        %s207 = ssub.s32 %s17, 1
        %s208 = sand.u32 %s30, 1
        %s209 = scalar_lea.sflag [#allocation5], %s208
        %s210 = sand.u32 %s30, 1
        %s211 = smul.addr %s210, 128
        %s212 = scalar_lea.vmem [#allocation4], %s211
        // Predicated region
        $region37: #{tpu_custom_call.1} parent=35 // pred_check
          %p213 = pneg %p43
        $region38: #{tpu_custom_call.1} parent=35 // pred_check_branch
          %215 = sbr.rel (%p213) target = $region40
        $region39: #{tpu_custom_call.1} parent=35 // pred_region
          %216 = dma.done %s209, 2048
        $region40: #{tpu_custom_call.1} parent=35 // pred_fallthru
          _
        // Predicated region
        $region41: #{tpu_custom_call.1} parent=35 // pred_check
          %p217 = pneg %p64
        $region42: #{tpu_custom_call.1} parent=35 // pred_check_branch
          %219 = sbr.rel (%p217) target = $region44
        $region43: #{tpu_custom_call.1} parent=35 // pred_region
          %220 = dma.done [#allocation8], 4096
        $region44: #{tpu_custom_call.1} parent=35 // pred_fallthru
          _
        // Predicated region
        $region45: #{tpu_custom_call.1} parent=35 // pred_check
          %p221 = pneg %p85
        $region46: #{tpu_custom_call.1} parent=35 // pred_check_branch
          %223 = sbr.rel (%p221) target = $region48
        $region47: #{tpu_custom_call.1} parent=35 // pred_region
          %224 = dma.done [#allocation8], 4096
        $region48: #{tpu_custom_call.1} parent=35 // pred_fallthru
          _
        %s225 = sand.u32 %s30, 1
        %s226 = scalar_lea.sflag [#allocation5], %s225
        %s227 = sand.u32 %s30, 1
        %s228 = smul.addr %s227, 128
        %s229 = scalar_lea.vmem [#allocation4], %s228
        %p230 = pneg %p43
        %p231 = pneg %p40
        %p232 = pneg %p64
        %p233 = pneg %p61
        %p234 = pneg %p85
        %p235 = pneg %p82
        %p236 = pneg %p106
        %p237 = pneg %p103
        %p238 = pneg %p132
        %p239 = pneg %p129
        %s240 = sand.u32 %s119, 1
        %s241 = scalar_lea.sflag [#allocation6], %s240
        %s242 = sand.u32 %s119, 1
        %s243 = smul.addr %s242, 256
        %s244 = scalar_lea.vmem [#allocation10], %s243
        %s245 = smul.u32 32, %s22
        %s246 = smul.u32 4, %s22
        %p248 = scmp.eq.s32.totalorder %s22, 0
        // Predicated region
        $region49: #{tpu_custom_call.1} parent=35 // pred_check
          %p249 = pneg %p248
        $region50: #{tpu_custom_call.1} parent=35 // pred_check_branch
          %251 = sbr.rel (%p249) target = $region52
        $region51: #{tpu_custom_call.1} parent=35 // pred_region
          %252 = vst [vmem:[#allocation2] sm:$0xff] 0.0
          %253 = vst [vmem:[#allocation3] sm:$0xff] 0.0
        $region52: #{tpu_custom_call.1} parent=35 // pred_fallthru
          _
        %v254 = vld [vmem:[#allocation2] sm:$0xff]
        %v255 = vld [vmem:[#allocation3] sm:$0xff]
        %v256 = vld [vmem:[#allocation9] sm:$0xff]
        %v257 = vld [vmem:[#allocation9 + $0x8] sm:$0xff]
        %v258 = vld [vmem:[#allocation9 + $0x10] sm:$0xff]
        %v259 = vld [vmem:[#allocation9 + $0x18] sm:$0xff]
        %v260 = vld [vmem:[#allocation9 + $0x20] sm:$0xff]
        %v261 = vld [vmem:[#allocation9 + $0x28] sm:$0xff]
        %v262 = vld [vmem:[#allocation9 + $0x30] sm:$0xff]
        %v263 = vld [vmem:[#allocation9 + $0x38] sm:$0xff]
        %v264 = vld [vmem:[#allocation9 + $0x40] sm:$0xff]
        %v265 = vld [vmem:[#allocation9 + $0x48] sm:$0xff]
        %v266 = vld [vmem:[#allocation9 + $0x50] sm:$0xff]
        %v267 = vld [vmem:[#allocation9 + $0x58] sm:$0xff]
        %v268 = vld [vmem:[#allocation9 + $0x60] sm:$0xff]
        %v269 = vld [vmem:[#allocation9 + $0x68] sm:$0xff]
        %v270 = vld [vmem:[#allocation9 + $0x70] sm:$0xff]
        %v271 = vld [vmem:[#allocation9 + $0x78] sm:$0xff]
        %v272 = vld [vmem:[#allocation9 + $0x80] sm:$0xff]
        %v273 = vld [vmem:[#allocation9 + $0x88] sm:$0xff]
        %v274 = vld [vmem:[#allocation9 + $0x90] sm:$0xff]
        %v275 = vld [vmem:[#allocation9 + $0x98] sm:$0xff]
        %v276 = vld [vmem:[#allocation9 + $0xa0] sm:$0xff]
        %v277 = vld [vmem:[#allocation9 + $0xa8] sm:$0xff]
        %v278 = vld [vmem:[#allocation9 + $0xb0] sm:$0xff]
        %v279 = vld [vmem:[#allocation9 + $0xb8] sm:$0xff]
        %v280 = vld [vmem:[#allocation9 + $0xc0] sm:$0xff]
        %v281 = vld [vmem:[#allocation9 + $0xc8] sm:$0xff]
        %v282 = vld [vmem:[#allocation9 + $0xd0] sm:$0xff]
        %v283 = vld [vmem:[#allocation9 + $0xd8] sm:$0xff]
        %v284 = vld [vmem:[#allocation9 + $0xe0] sm:$0xff]
        %v285 = vld [vmem:[#allocation9 + $0xe8] sm:$0xff]
        %v286 = vld [vmem:[#allocation9 + $0xf0] sm:$0xff]
        %v287 = vld [vmem:[#allocation9 + $0xf8] sm:$0xff]
        %v288 = vld [vmem:[%s212] sm:$0xf]
        %v289 = vld [vmem:[%s212 + $0x4] sm:$0xf]
        %v290 = vld [vmem:[%s212 + $0x8] sm:$0xf]
        %v291 = vld [vmem:[%s212 + $0xc] sm:$0xf]
        %v292 = vld [vmem:[%s212 + $0x10] sm:$0xf]
        %v293 = vld [vmem:[%s212 + $0x14] sm:$0xf]
        %v294 = vld [vmem:[%s212 + $0x18] sm:$0xf]
        %v295 = vld [vmem:[%s212 + $0x1c] sm:$0xf]
        %v296 = vld [vmem:[%s212 + $0x20] sm:$0xf]
        %v297 = vld [vmem:[%s212 + $0x24] sm:$0xf]
        %v298 = vld [vmem:[%s212 + $0x28] sm:$0xf]
        %v299 = vld [vmem:[%s212 + $0x2c] sm:$0xf]
        %v300 = vld [vmem:[%s212 + $0x30] sm:$0xf]
        %v301 = vld [vmem:[%s212 + $0x34] sm:$0xf]
        %v302 = vld [vmem:[%s212 + $0x38] sm:$0xf]
        %v303 = vld [vmem:[%s212 + $0x3c] sm:$0xf]
        %v304 = vld [vmem:[%s212 + $0x40] sm:$0xf]
        %v305 = vld [vmem:[%s212 + $0x44] sm:$0xf]
        %v306 = vld [vmem:[%s212 + $0x48] sm:$0xf]
        %v307 = vld [vmem:[%s212 + $0x4c] sm:$0xf]
        %v308 = vld [vmem:[%s212 + $0x50] sm:$0xf]
        %v309 = vld [vmem:[%s212 + $0x54] sm:$0xf]
        %v310 = vld [vmem:[%s212 + $0x58] sm:$0xf]
        %v311 = vld [vmem:[%s212 + $0x5c] sm:$0xf]
        %v312 = vld [vmem:[%s212 + $0x60] sm:$0xf]
        %v313 = vld [vmem:[%s212 + $0x64] sm:$0xf]
        %v314 = vld [vmem:[%s212 + $0x68] sm:$0xf]
        %v315 = vld [vmem:[%s212 + $0x6c] sm:$0xf]
        %v316 = vld [vmem:[%s212 + $0x70] sm:$0xf]
        %v317 = vld [vmem:[%s212 + $0x74] sm:$0xf]
        %v318 = vld [vmem:[%s212 + $0x78] sm:$0xf]
        %v319 = vld [vmem:[%s212 + $0x7c] sm:$0xf]
        %v320 = vld [vmem:[#allocation7] sm:$0xff]
        %v321 = vld [vmem:[#allocation7 + $0x8] sm:$0xff]
        %v322 = vld [vmem:[#allocation7 + $0x10] sm:$0xff]
        %v323 = vld [vmem:[#allocation7 + $0x18] sm:$0xff]
        %v324 = vld [vmem:[#allocation7 + $0x20] sm:$0xff]
        %v325 = vld [vmem:[#allocation7 + $0x28] sm:$0xff]
        %v326 = vld [vmem:[#allocation7 + $0x30] sm:$0xff]
        %v327 = vld [vmem:[#allocation7 + $0x38] sm:$0xff]
        %v328 = vld [vmem:[#allocation7 + $0x40] sm:$0xff]
        %v329 = vld [vmem:[#allocation7 + $0x48] sm:$0xff]
        %v330 = vld [vmem:[#allocation7 + $0x50] sm:$0xff]
        %v331 = vld [vmem:[#allocation7 + $0x58] sm:$0xff]
        %v332 = vld [vmem:[#allocation7 + $0x60] sm:$0xff]
        %v333 = vld [vmem:[#allocation7 + $0x68] sm:$0xff]
        %v334 = vld [vmem:[#allocation7 + $0x70] sm:$0xff]
        %v335 = vld [vmem:[#allocation7 + $0x78] sm:$0xff]
        %v336 = vld [vmem:[#allocation7 + $0x80] sm:$0xff]
        %v337 = vld [vmem:[#allocation7 + $0x88] sm:$0xff]
        %v338 = vld [vmem:[#allocation7 + $0x90] sm:$0xff]
        %v339 = vld [vmem:[#allocation7 + $0x98] sm:$0xff]
        %v340 = vld [vmem:[#allocation7 + $0xa0] sm:$0xff]
        %v341 = vld [vmem:[#allocation7 + $0xa8] sm:$0xff]
        %v342 = vld [vmem:[#allocation7 + $0xb0] sm:$0xff]
        %v343 = vld [vmem:[#allocation7 + $0xb8] sm:$0xff]
        %v344 = vld [vmem:[#allocation7 + $0xc0] sm:$0xff]
        %v345 = vld [vmem:[#allocation7 + $0xc8] sm:$0xff]
        %v346 = vld [vmem:[#allocation7 + $0xd0] sm:$0xff]
        %v347 = vld [vmem:[#allocation7 + $0xd8] sm:$0xff]
        %v348 = vld [vmem:[#allocation7 + $0xe0] sm:$0xff]
        %v349 = vld [vmem:[#allocation7 + $0xe8] sm:$0xff]
        %v350 = vld [vmem:[#allocation7 + $0xf0] sm:$0xff]
        %v351 = vld [vmem:[#allocation7 + $0xf8] sm:$0xff]
        %v352 = vld [vmem:[%s3] sm:$0xf]
        %v354 = vlaneseq
        %v355 = vshrl.u32 %v354, 7
        %v356 = vsub.s32 0, %v355
        %v357 = vrot.slane %v352, %v356
        %v358 = vlaneseq
        %v359 = vshrl.u32 %v358, 7
        %v360 = vsub.s32 1, %v359
        %v361 = vrot.slane %v352, %v360
        %v362 = vlaneseq
        %v363 = vshrl.u32 %v362, 7
        %v364 = vsub.s32 2, %v363
        %v365 = vrot.slane %v352, %v364
        %v366 = vlaneseq
        %v367 = vshrl.u32 %v366, 7
        %v368 = vsub.s32 3, %v367
        %v369 = vrot.slane %v352, %v368
        %v406 = vunpack.c.l.b16 %v288
        %v407 = vunpack.c.l.b16 %v289
        %v408 = vunpack.c.l.b16 %v290
        %v409 = vunpack.c.l.b16 %v291
        %v410 = vunpack.c.l.b16 %v292
        %v411 = vunpack.c.l.b16 %v293
        %v412 = vunpack.c.l.b16 %v294
        %v413 = vunpack.c.l.b16 %v295
        %v414 = vunpack.c.l.b16 %v296
        %v415 = vunpack.c.l.b16 %v297
        %v416 = vunpack.c.l.b16 %v298
        %v417 = vunpack.c.l.b16 %v299
        %v418 = vunpack.c.l.b16 %v300
        %v419 = vunpack.c.l.b16 %v301
        %v420 = vunpack.c.l.b16 %v302
        %v421 = vunpack.c.l.b16 %v303
        %v422 = vunpack.c.l.b16 %v304
        %v423 = vunpack.c.l.b16 %v305
        %v424 = vunpack.c.l.b16 %v306
        %v425 = vunpack.c.l.b16 %v307
        %v426 = vunpack.c.l.b16 %v308
        %v427 = vunpack.c.l.b16 %v309
        %v428 = vunpack.c.l.b16 %v310
        %v429 = vunpack.c.l.b16 %v311
        %v430 = vunpack.c.l.b16 %v312
        %v431 = vunpack.c.l.b16 %v313
        %v432 = vunpack.c.l.b16 %v314
        %v433 = vunpack.c.l.b16 %v315
        %v434 = vunpack.c.l.b16 %v316
        %v435 = vunpack.c.l.b16 %v317
        %v436 = vunpack.c.l.b16 %v318
        %v437 = vunpack.c.l.b16 %v319
        %v438 = vpack.c.b16 %v407, %v406
        %v439 = vpack.c.b16 %v409, %v408
        %v440 = vpack.c.b16 %v411, %v410
        %v441 = vpack.c.b16 %v413, %v412
        %v442 = vpack.c.b16 %v415, %v414
        %v443 = vpack.c.b16 %v417, %v416
        %v444 = vpack.c.b16 %v419, %v418
        %v445 = vpack.c.b16 %v421, %v420
        %v446 = vpack.c.b16 %v423, %v422
        %v447 = vpack.c.b16 %v425, %v424
        %v448 = vpack.c.b16 %v427, %v426
        %v449 = vpack.c.b16 %v429, %v428
        %v450 = vpack.c.b16 %v431, %v430
        %v451 = vpack.c.b16 %v433, %v432
        %v452 = vpack.c.b16 %v435, %v434
        %v453 = vpack.c.b16 %v437, %v436
        %v502 = vunpack.c.l.b16 %v320
        %v503 = vunpack.c.h.b16 %v320
        %v504 = vunpack.c.l.b16 %v321
        %v505 = vunpack.c.h.b16 %v321
        %v506 = vunpack.c.l.b16 %v322
        %v507 = vunpack.c.h.b16 %v322
        %v508 = vunpack.c.l.b16 %v323
        %v509 = vunpack.c.h.b16 %v323
        %v510 = vunpack.c.l.b16 %v324
        %v511 = vunpack.c.h.b16 %v324
        %v512 = vunpack.c.l.b16 %v325
        %v513 = vunpack.c.h.b16 %v325
        %v514 = vunpack.c.l.b16 %v326
        %v515 = vunpack.c.h.b16 %v326
        %v516 = vunpack.c.l.b16 %v327
        %v517 = vunpack.c.h.b16 %v327
        %v518 = vunpack.c.l.b16 %v328
        %v519 = vunpack.c.h.b16 %v328
        %v520 = vunpack.c.l.b16 %v329
        %v521 = vunpack.c.h.b16 %v329
        %v522 = vunpack.c.l.b16 %v330
        %v523 = vunpack.c.h.b16 %v330
        %v524 = vunpack.c.l.b16 %v331
        %v525 = vunpack.c.h.b16 %v331
        %v526 = vunpack.c.l.b16 %v332
        %v527 = vunpack.c.h.b16 %v332
        %v528 = vunpack.c.l.b16 %v333
        %v529 = vunpack.c.h.b16 %v333
        %v530 = vunpack.c.l.b16 %v334
        %v531 = vunpack.c.h.b16 %v334
        %v532 = vunpack.c.l.b16 %v335
        %v533 = vunpack.c.h.b16 %v335
        %v534 = vunpack.c.l.b16 %v336
        %v535 = vunpack.c.h.b16 %v336
        %v536 = vunpack.c.l.b16 %v337
        %v537 = vunpack.c.h.b16 %v337
        %v538 = vunpack.c.l.b16 %v338
        %v539 = vunpack.c.h.b16 %v338
        %v540 = vunpack.c.l.b16 %v339
        %v541 = vunpack.c.h.b16 %v339
        %v542 = vunpack.c.l.b16 %v340
        %v543 = vunpack.c.h.b16 %v340
        %v544 = vunpack.c.l.b16 %v341
        %v545 = vunpack.c.h.b16 %v341
        %v546 = vunpack.c.l.b16 %v342
        %v547 = vunpack.c.h.b16 %v342
        %v548 = vunpack.c.l.b16 %v343
        %v549 = vunpack.c.h.b16 %v343
        %v550 = vunpack.c.l.b16 %v344
        %v551 = vunpack.c.h.b16 %v344
        %v552 = vunpack.c.l.b16 %v345
        %v553 = vunpack.c.h.b16 %v345
        %v554 = vunpack.c.l.b16 %v346
        %v555 = vunpack.c.h.b16 %v346
        %v556 = vunpack.c.l.b16 %v347
        %v557 = vunpack.c.h.b16 %v347
        %v558 = vunpack.c.l.b16 %v348
        %v559 = vunpack.c.h.b16 %v348
        %v560 = vunpack.c.l.b16 %v349
        %v561 = vunpack.c.h.b16 %v349
        %v562 = vunpack.c.l.b16 %v350
        %v563 = vunpack.c.h.b16 %v350
        %v564 = vunpack.c.l.b16 %v351
        %v565 = vunpack.c.h.b16 %v351
        %v566 = vpack.c.b16 %v506, %v502
        %v567 = vpack.c.b16 %v507, %v503
        %v568 = vpack.c.b16 %v508, %v504
        %v569 = vpack.c.b16 %v509, %v505
        %v570 = vpack.c.b16 %v514, %v510
        %v571 = vpack.c.b16 %v515, %v511
        %v572 = vpack.c.b16 %v516, %v512
        %v573 = vpack.c.b16 %v517, %v513
        %v574 = vpack.c.b16 %v522, %v518
        %v575 = vpack.c.b16 %v523, %v519
        %v576 = vpack.c.b16 %v524, %v520
        %v577 = vpack.c.b16 %v525, %v521
        %v578 = vpack.c.b16 %v530, %v526
        %v579 = vpack.c.b16 %v531, %v527
        %v580 = vpack.c.b16 %v532, %v528
        %v581 = vpack.c.b16 %v533, %v529
        %v582 = vpack.c.b16 %v538, %v534
        %v583 = vpack.c.b16 %v539, %v535
        %v584 = vpack.c.b16 %v540, %v536
        %v585 = vpack.c.b16 %v541, %v537
        %v586 = vpack.c.b16 %v546, %v542
        %v587 = vpack.c.b16 %v547, %v543
        %v588 = vpack.c.b16 %v548, %v544
        %v589 = vpack.c.b16 %v549, %v545
        %v590 = vpack.c.b16 %v554, %v550
        %v591 = vpack.c.b16 %v555, %v551
        %v592 = vpack.c.b16 %v556, %v552
        %v593 = vpack.c.b16 %v557, %v553
        %v594 = vpack.c.b16 %v562, %v558
        %v595 = vpack.c.b16 %v563, %v559
        %v596 = vpack.c.b16 %v564, %v560
        %v597 = vpack.c.b16 %v565, %v561
        %630 = vmatprep.subr.bf16.mxu0 %v567
        %631 = vmatpush1.bf16.msra.mxu0 %v566
        %632 = vmatprep.subr.bf16.mxu0 %v571
        %633 = vmatpush1.bf16.msra.mxu0 %v570
        %634 = vmatprep.subr.bf16.mxu0 %v575
        %635 = vmatpush1.bf16.msra.mxu0 %v574
        %636 = vmatprep.subr.bf16.mxu0 %v579
        %637 = vmatpush1.bf16.msra.mxu0 %v578
        %638 = vmatprep.subr.bf16.mxu0 %v583
        %639 = vmatpush1.bf16.msra.mxu0 %v582
        %640 = vmatprep.subr.bf16.mxu0 %v587
        %641 = vmatpush1.bf16.msra.mxu0 %v586
        %642 = vmatprep.subr.bf16.mxu0 %v591
        %643 = vmatpush1.bf16.msra.mxu0 %v590
        %644 = vmatprep.subr.bf16.mxu0 %v595
        %645 = vmatpush1.bf16.msra.mxu0 %v594
        %646 = vmatprep.subr.bf16.mxu0 0
        %647 = vmatpush1.bf16.msra.mxu0 0
        %648 = vmatprep.subr.bf16.mxu0 0
        %649 = vmatpush1.bf16.msra.mxu0 0
        %650 = vmatprep.subr.bf16.mxu0 0
        %651 = vmatpush1.bf16.msra.mxu0 0
        %652 = vmatprep.subr.bf16.mxu0 0
        %653 = vmatpush1.bf16.msra.mxu0 0
        %654 = vmatprep.subr.bf16.mxu0 0
        %655 = vmatpush1.bf16.msra.mxu0 0
        %656 = vmatprep.subr.bf16.mxu0 0
        %657 = vmatpush1.bf16.msra.mxu0 0
        %658 = vmatprep.subr.bf16.mxu0 0
        %659 = vmatpush1.bf16.msra.mxu0 0
        %660 = vmatprep.subr.bf16.mxu0 0
        %661 = vmatpush1.bf16.msra.mxu0 0
        %662 = vmatprep.mubr.bf16.mxu0 0
        %663 = vmatmul.mubr.bf16.gmra.mrb[0].mxu0 %v438
        %v664 = vpop.f32.mrb[0].mxu0
        %v665 = vadd.f32 %v357, %v664
        %v666 = vpop.f32.mrb[0].mxu0
        %v667 = vadd.f32 %v361, %v666
        %v668 = vpop.f32.mrb[0].mxu0
        %v669 = vadd.f32 %v357, %v668
        %v670 = vpop.f32.mrb[0].mxu0
        %v671 = vadd.f32 %v361, %v670
        %672 = vmatprep.mubr.bf16.mxu0 0
        %673 = vmatmul.mubr.bf16.gmra.mrb[0].mxu0 %v439
        %v674 = vpop.f32.mrb[0].mxu0
        %v675 = vadd.f32 %v357, %v674
        %v676 = vpop.f32.mrb[0].mxu0
        %v677 = vadd.f32 %v361, %v676
        %v678 = vpop.f32.mrb[0].mxu0
        %v679 = vadd.f32 %v357, %v678
        %v680 = vpop.f32.mrb[0].mxu0
        %v681 = vadd.f32 %v361, %v680
        %682 = vmatprep.mubr.bf16.mxu0 0
        %683 = vmatmul.mubr.bf16.gmra.mrb[0].mxu0 %v440
        %v684 = vpop.f32.mrb[0].mxu0
        %v685 = vadd.f32 %v357, %v684
        %v686 = vpop.f32.mrb[0].mxu0
        %v687 = vadd.f32 %v361, %v686
        %v688 = vpop.f32.mrb[0].mxu0
        %v689 = vadd.f32 %v357, %v688
        %v690 = vpop.f32.mrb[0].mxu0
        %v691 = vadd.f32 %v361, %v690
        %692 = vmatprep.mubr.bf16.mxu0 0
        %693 = vmatmul.mubr.bf16.gmra.mrb[0].mxu0 %v441
        %v694 = vpop.f32.mrb[0].mxu0
        %v695 = vadd.f32 %v357, %v694
        %v696 = vpop.f32.mrb[0].mxu0
        %v697 = vadd.f32 %v361, %v696
        %v698 = vpop.f32.mrb[0].mxu0
        %v699 = vadd.f32 %v357, %v698
        %v700 = vpop.f32.mrb[0].mxu0
        %v701 = vadd.f32 %v361, %v700
        %702 = vmatprep.mubr.bf16.mxu0 0
        %703 = vmatmul.mubr.bf16.gmra.mrb[0].mxu0 %v442
        %v704 = vpop.f32.mrb[0].mxu0
        %v705 = vadd.f32 %v357, %v704
        %v706 = vpop.f32.mrb[0].mxu0
        %v707 = vadd.f32 %v361, %v706
        %v708 = vpop.f32.mrb[0].mxu0
        %v709 = vadd.f32 %v357, %v708
        %v710 = vpop.f32.mrb[0].mxu0
        %v711 = vadd.f32 %v361, %v710
        %712 = vmatprep.mubr.bf16.mxu0 0
        %713 = vmatmul.mubr.bf16.gmra.mrb[0].mxu0 %v443
        %v714 = vpop.f32.mrb[0].mxu0
        %v715 = vadd.f32 %v357, %v714
        %v716 = vpop.f32.mrb[0].mxu0
        %v717 = vadd.f32 %v361, %v716
        %v718 = vpop.f32.mrb[0].mxu0
        %v719 = vadd.f32 %v357, %v718
        %v720 = vpop.f32.mrb[0].mxu0
        %v721 = vadd.f32 %v361, %v720
        %722 = vmatprep.mubr.bf16.mxu0 0
        %723 = vmatmul.mubr.bf16.gmra.mrb[0].mxu0 %v444
        %v724 = vpop.f32.mrb[0].mxu0
        %v725 = vadd.f32 %v357, %v724
        %v726 = vpop.f32.mrb[0].mxu0
        %v727 = vadd.f32 %v361, %v726
        %v728 = vpop.f32.mrb[0].mxu0
        %v729 = vadd.f32 %v357, %v728
        %v730 = vpop.f32.mrb[0].mxu0
        %v731 = vadd.f32 %v361, %v730
        %732 = vmatprep.mubr.bf16.mxu0 0
        %733 = vmatmul.mubr.bf16.gmra.mrb[0].mxu0 %v445
        %v734 = vpop.f32.mrb[0].mxu0
        %v735 = vadd.f32 %v357, %v734
        %v736 = vpop.f32.mrb[0].mxu0
        %v737 = vadd.f32 %v361, %v736
        %v738 = vpop.f32.mrb[0].mxu0
        %v739 = vadd.f32 %v357, %v738
        %v740 = vpop.f32.mrb[0].mxu0
        %v741 = vadd.f32 %v361, %v740
        %742 = vmatprep.mubr.bf16.mxu0 0
        %743 = vmatmul.mubr.bf16.gmra.mrb[0].mxu0 %v446
        %v744 = vpop.f32.mrb[0].mxu0
        %v745 = vadd.f32 %v357, %v744
        %v746 = vpop.f32.mrb[0].mxu0
        %v747 = vadd.f32 %v361, %v746
        %v748 = vpop.f32.mrb[0].mxu0
        %v749 = vadd.f32 %v357, %v748
        %v750 = vpop.f32.mrb[0].mxu0
        %v751 = vadd.f32 %v361, %v750
        %752 = vmatprep.mubr.bf16.mxu0 0
        %753 = vmatmul.mubr.bf16.gmra.mrb[0].mxu0 %v447
        %v754 = vpop.f32.mrb[0].mxu0
        %v755 = vadd.f32 %v357, %v754
        %v756 = vpop.f32.mrb[0].mxu0
        %v757 = vadd.f32 %v361, %v756
        %v758 = vpop.f32.mrb[0].mxu0
        %v759 = vadd.f32 %v357, %v758
        %v760 = vpop.f32.mrb[0].mxu0
        %v761 = vadd.f32 %v361, %v760
        %762 = vmatprep.mubr.bf16.mxu0 0
        %763 = vmatmul.mubr.bf16.gmra.mrb[0].mxu0 %v448
        %v764 = vpop.f32.mrb[0].mxu0
        %v765 = vadd.f32 %v357, %v764
        %v766 = vpop.f32.mrb[0].mxu0
        %v767 = vadd.f32 %v361, %v766
        %v768 = vpop.f32.mrb[0].mxu0
        %v769 = vadd.f32 %v357, %v768
        %v770 = vpop.f32.mrb[0].mxu0
        %v771 = vadd.f32 %v361, %v770
        %772 = vmatprep.mubr.bf16.mxu0 0
        %773 = vmatmul.mubr.bf16.gmra.mrb[0].mxu0 %v449
        %v774 = vpop.f32.mrb[0].mxu0
        %v775 = vadd.f32 %v357, %v774
        %v776 = vpop.f32.mrb[0].mxu0
        %v777 = vadd.f32 %v361, %v776
        %v778 = vpop.f32.mrb[0].mxu0
        %v779 = vadd.f32 %v357, %v778
        %v780 = vpop.f32.mrb[0].mxu0
        %v781 = vadd.f32 %v361, %v780
        %782 = vmatprep.mubr.bf16.mxu0 0
        %783 = vmatmul.mubr.bf16.gmra.mrb[0].mxu0 %v450
        %v784 = vpop.f32.mrb[0].mxu0
        %v785 = vadd.f32 %v357, %v784
        %v786 = vpop.f32.mrb[0].mxu0
        %v787 = vadd.f32 %v361, %v786
        %v788 = vpop.f32.mrb[0].mxu0
        %v789 = vadd.f32 %v357, %v788
        %v790 = vpop.f32.mrb[0].mxu0
        %v791 = vadd.f32 %v361, %v790
        %792 = vmatprep.mubr.bf16.mxu0 0
        %793 = vmatmul.mubr.bf16.gmra.mrb[0].mxu0 %v451
        %v794 = vpop.f32.mrb[0].mxu0
        %v795 = vadd.f32 %v357, %v794
        %v796 = vpop.f32.mrb[0].mxu0
        %v797 = vadd.f32 %v361, %v796
        %v798 = vpop.f32.mrb[0].mxu0
        %v799 = vadd.f32 %v357, %v798
        %v800 = vpop.f32.mrb[0].mxu0
        %v801 = vadd.f32 %v361, %v800
        %802 = vmatprep.mubr.bf16.mxu0 0
        %803 = vmatmul.mubr.bf16.gmra.mrb[0].mxu0 %v452
        %v804 = vpop.f32.mrb[0].mxu0
        %v805 = vadd.f32 %v357, %v804
        %v806 = vpop.f32.mrb[0].mxu0
        %v807 = vadd.f32 %v361, %v806
        %v808 = vpop.f32.mrb[0].mxu0
        %v809 = vadd.f32 %v357, %v808
        %v810 = vpop.f32.mrb[0].mxu0
        %v811 = vadd.f32 %v361, %v810
        %812 = vmatprep.mubr.bf16.mxu0 0
        %813 = vmatmul.mubr.bf16.gmra.mrb[0].mxu0 %v453
        %v814 = vpop.f32.mrb[0].mxu0
        %v815 = vadd.f32 %v357, %v814
        %v816 = vpop.f32.mrb[0].mxu0
        %v817 = vadd.f32 %v361, %v816
        %v818 = vpop.f32.mrb[0].mxu0
        %v819 = vadd.f32 %v357, %v818
        %v820 = vpop.f32.mrb[0].mxu0
        %v821 = vadd.f32 %v361, %v820
        %822 = vdwg.mxu0
        %823 = vmatprep.subr.bf16.mxu0 %v569
        %824 = vmatpush1.bf16.msra.mxu0 %v568
        %825 = vmatprep.subr.bf16.mxu0 %v573
        %826 = vmatpush1.bf16.msra.mxu0 %v572
        %827 = vmatprep.subr.bf16.mxu0 %v577
        %828 = vmatpush1.bf16.msra.mxu0 %v576
        %829 = vmatprep.subr.bf16.mxu0 %v581
        %830 = vmatpush1.bf16.msra.mxu0 %v580
        %831 = vmatprep.subr.bf16.mxu0 %v585
        %832 = vmatpush1.bf16.msra.mxu0 %v584
        %833 = vmatprep.subr.bf16.mxu0 %v589
        %834 = vmatpush1.bf16.msra.mxu0 %v588
        %835 = vmatprep.subr.bf16.mxu0 %v593
        %836 = vmatpush1.bf16.msra.mxu0 %v592
        %837 = vmatprep.subr.bf16.mxu0 %v597
        %838 = vmatpush1.bf16.msra.mxu0 %v596
        %839 = vmatprep.subr.bf16.mxu0 0
        %840 = vmatpush1.bf16.msra.mxu0 0
        %841 = vmatprep.subr.bf16.mxu0 0
        %842 = vmatpush1.bf16.msra.mxu0 0
        %843 = vmatprep.subr.bf16.mxu0 0
        %844 = vmatpush1.bf16.msra.mxu0 0
        %845 = vmatprep.subr.bf16.mxu0 0
        %846 = vmatpush1.bf16.msra.mxu0 0
        %847 = vmatprep.subr.bf16.mxu0 0
        %848 = vmatpush1.bf16.msra.mxu0 0
        %849 = vmatprep.subr.bf16.mxu0 0
        %850 = vmatpush1.bf16.msra.mxu0 0
        %851 = vmatprep.subr.bf16.mxu0 0
        %852 = vmatpush1.bf16.msra.mxu0 0
        %853 = vmatprep.subr.bf16.mxu0 0
        %854 = vmatpush1.bf16.msra.mxu0 0
        %855 = vmatprep.mubr.bf16.mxu0 0
        %856 = vmatmul.mubr.bf16.gmra.mrb[0].mxu0 %v438
        %v857 = vpop.f32.mrb[0].mxu0
        %v858 = vadd.f32 %v365, %v857
        %v859 = vpop.f32.mrb[0].mxu0
        %v860 = vadd.f32 %v369, %v859
        %v861 = vpop.f32.mrb[0].mxu0
        %v862 = vadd.f32 %v365, %v861
        %v863 = vpop.f32.mrb[0].mxu0
        %v864 = vadd.f32 %v369, %v863
        %865 = vmatprep.mubr.bf16.mxu0 0
        %866 = vmatmul.mubr.bf16.gmra.mrb[0].mxu0 %v439
        %v867 = vpop.f32.mrb[0].mxu0
        %v868 = vadd.f32 %v365, %v867
        %v869 = vpop.f32.mrb[0].mxu0
        %v870 = vadd.f32 %v369, %v869
        %v871 = vpop.f32.mrb[0].mxu0
        %v872 = vadd.f32 %v365, %v871
        %v873 = vpop.f32.mrb[0].mxu0
        %v874 = vadd.f32 %v369, %v873
        %875 = vmatprep.mubr.bf16.mxu0 0
        %876 = vmatmul.mubr.bf16.gmra.mrb[0].mxu0 %v440
        %v877 = vpop.f32.mrb[0].mxu0
        %v878 = vadd.f32 %v365, %v877
        %v879 = vpop.f32.mrb[0].mxu0
        %v880 = vadd.f32 %v369, %v879
        %v881 = vpop.f32.mrb[0].mxu0
        %v882 = vadd.f32 %v365, %v881
        %v883 = vpop.f32.mrb[0].mxu0
        %v884 = vadd.f32 %v369, %v883
        %885 = vmatprep.mubr.bf16.mxu0 0
        %886 = vmatmul.mubr.bf16.gmra.mrb[0].mxu0 %v441
        %v887 = vpop.f32.mrb[0].mxu0
        %v888 = vadd.f32 %v365, %v887
        %v889 = vpop.f32.mrb[0].mxu0
        %v890 = vadd.f32 %v369, %v889
        %v891 = vpop.f32.mrb[0].mxu0
        %v892 = vadd.f32 %v365, %v891
        %v893 = vpop.f32.mrb[0].mxu0
        %v894 = vadd.f32 %v369, %v893
        %895 = vmatprep.mubr.bf16.mxu0 0
        %896 = vmatmul.mubr.bf16.gmra.mrb[0].mxu0 %v442
        %v897 = vpop.f32.mrb[0].mxu0
        %v898 = vadd.f32 %v365, %v897
        %v899 = vpop.f32.mrb[0].mxu0
        %v900 = vadd.f32 %v369, %v899
        %v901 = vpop.f32.mrb[0].mxu0
        %v902 = vadd.f32 %v365, %v901
        %v903 = vpop.f32.mrb[0].mxu0
        %v904 = vadd.f32 %v369, %v903
        %905 = vmatprep.mubr.bf16.mxu0 0
        %906 = vmatmul.mubr.bf16.gmra.mrb[0].mxu0 %v443
        %v907 = vpop.f32.mrb[0].mxu0
        %v908 = vadd.f32 %v365, %v907
        %v909 = vpop.f32.mrb[0].mxu0
        %v910 = vadd.f32 %v369, %v909
        %v911 = vpop.f32.mrb[0].mxu0
        %v912 = vadd.f32 %v365, %v911
        %v913 = vpop.f32.mrb[0].mxu0
        %v914 = vadd.f32 %v369, %v913
        %915 = vmatprep.mubr.bf16.mxu0 0
        %916 = vmatmul.mubr.bf16.gmra.mrb[0].mxu0 %v444
        %v917 = vpop.f32.mrb[0].mxu0
        %v918 = vadd.f32 %v365, %v917
        %v919 = vpop.f32.mrb[0].mxu0
        %v920 = vadd.f32 %v369, %v919
        %v921 = vpop.f32.mrb[0].mxu0
        %v922 = vadd.f32 %v365, %v921
        %v923 = vpop.f32.mrb[0].mxu0
        %v924 = vadd.f32 %v369, %v923
        %925 = vmatprep.mubr.bf16.mxu0 0
        %926 = vmatmul.mubr.bf16.gmra.mrb[0].mxu0 %v445
        %v927 = vpop.f32.mrb[0].mxu0
        %v928 = vadd.f32 %v365, %v927
        %v929 = vpop.f32.mrb[0].mxu0
        %v930 = vadd.f32 %v369, %v929
        %v931 = vpop.f32.mrb[0].mxu0
        %v932 = vadd.f32 %v365, %v931
        %v933 = vpop.f32.mrb[0].mxu0
        %v934 = vadd.f32 %v369, %v933
        %935 = vmatprep.mubr.bf16.mxu0 0
        %936 = vmatmul.mubr.bf16.gmra.mrb[0].mxu0 %v446
        %v937 = vpop.f32.mrb[0].mxu0
        %v938 = vadd.f32 %v365, %v937
        %v939 = vpop.f32.mrb[0].mxu0
        %v940 = vadd.f32 %v369, %v939
        %v941 = vpop.f32.mrb[0].mxu0
        %v942 = vadd.f32 %v365, %v941
        %v943 = vpop.f32.mrb[0].mxu0
        %v944 = vadd.f32 %v369, %v943
        %945 = vmatprep.mubr.bf16.mxu0 0
        %946 = vmatmul.mubr.bf16.gmra.mrb[0].mxu0 %v447
        %v947 = vpop.f32.mrb[0].mxu0
        %v948 = vadd.f32 %v365, %v947
        %v949 = vpop.f32.mrb[0].mxu0
        %v950 = vadd.f32 %v369, %v949
        %v951 = vpop.f32.mrb[0].mxu0
        %v952 = vadd.f32 %v365, %v951
        %v953 = vpop.f32.mrb[0].mxu0
        %v954 = vadd.f32 %v369, %v953
        %955 = vmatprep.mubr.bf16.mxu0 0
        %956 = vmatmul.mubr.bf16.gmra.mrb[0].mxu0 %v448
        %v957 = vpop.f32.mrb[0].mxu0
        %v958 = vadd.f32 %v365, %v957
        %v959 = vpop.f32.mrb[0].mxu0
        %v960 = vadd.f32 %v369, %v959
        %v961 = vpop.f32.mrb[0].mxu0
        %v962 = vadd.f32 %v365, %v961
        %v963 = vpop.f32.mrb[0].mxu0
        %v964 = vadd.f32 %v369, %v963
        %965 = vmatprep.mubr.bf16.mxu0 0
        %966 = vmatmul.mubr.bf16.gmra.mrb[0].mxu0 %v449
        %v967 = vpop.f32.mrb[0].mxu0
        %v968 = vadd.f32 %v365, %v967
        %v969 = vpop.f32.mrb[0].mxu0
        %v970 = vadd.f32 %v369, %v969
        %v971 = vpop.f32.mrb[0].mxu0
        %v972 = vadd.f32 %v365, %v971
        %v973 = vpop.f32.mrb[0].mxu0
        %v974 = vadd.f32 %v369, %v973
        %975 = vmatprep.mubr.bf16.mxu0 0
        %976 = vmatmul.mubr.bf16.gmra.mrb[0].mxu0 %v450
        %v977 = vpop.f32.mrb[0].mxu0
        %v978 = vadd.f32 %v365, %v977
        %v979 = vpop.f32.mrb[0].mxu0
        %v980 = vadd.f32 %v369, %v979
        %v981 = vpop.f32.mrb[0].mxu0
        %v982 = vadd.f32 %v365, %v981
        %v983 = vpop.f32.mrb[0].mxu0
        %v984 = vadd.f32 %v369, %v983
        %985 = vmatprep.mubr.bf16.mxu0 0
        %986 = vmatmul.mubr.bf16.gmra.mrb[0].mxu0 %v451
        %v987 = vpop.f32.mrb[0].mxu0
        %v988 = vadd.f32 %v365, %v987
        %v989 = vpop.f32.mrb[0].mxu0
        %v990 = vadd.f32 %v369, %v989
        %v991 = vpop.f32.mrb[0].mxu0
        %v992 = vadd.f32 %v365, %v991
        %v993 = vpop.f32.mrb[0].mxu0
        %v994 = vadd.f32 %v369, %v993
        %995 = vmatprep.mubr.bf16.mxu0 0
        %996 = vmatmul.mubr.bf16.gmra.mrb[0].mxu0 %v452
        %v997 = vpop.f32.mrb[0].mxu0
        %v998 = vadd.f32 %v365, %v997
        %v999 = vpop.f32.mrb[0].mxu0
        %v1000 = vadd.f32 %v369, %v999
        %v1001 = vpop.f32.mrb[0].mxu0
        %v1002 = vadd.f32 %v365, %v1001
        %v1003 = vpop.f32.mrb[0].mxu0
        %v1004 = vadd.f32 %v369, %v1003
        %1005 = vmatprep.mubr.bf16.mxu0 0
        %1006 = vmatmul.mubr.bf16.gmra.mrb[0].mxu0 %v453
        %v1007 = vpop.f32.mrb[0].mxu0
        %v1008 = vadd.f32 %v365, %v1007
        %v1009 = vpop.f32.mrb[0].mxu0
        %v1010 = vadd.f32 %v369, %v1009
        %v1011 = vpop.f32.mrb[0].mxu0
        %v1012 = vadd.f32 %v365, %v1011
        %v1013 = vpop.f32.mrb[0].mxu0
        %v1014 = vadd.f32 %v369, %v1013
        %1015 = vdwg.mxu0
        %v1016 = vpack.c.bf16 %v254, %v254
        %v1049 = vunpack.c.l.b16 %v256
        %v1050 = vunpack.c.h.b16 %v256
        %v1051 = vunpack.c.l.b16 %v257
        %v1052 = vunpack.c.h.b16 %v257
        %v1053 = vunpack.c.l.b16 %v258
        %v1054 = vunpack.c.h.b16 %v258
        %v1055 = vunpack.c.l.b16 %v259
        %v1056 = vunpack.c.h.b16 %v259
        %v1057 = vunpack.c.l.b16 %v260
        %v1058 = vunpack.c.h.b16 %v260
        %v1059 = vunpack.c.l.b16 %v261
        %v1060 = vunpack.c.h.b16 %v261
        %v1061 = vunpack.c.l.b16 %v262
        %v1062 = vunpack.c.h.b16 %v262
        %v1063 = vunpack.c.l.b16 %v263
        %v1064 = vunpack.c.h.b16 %v263
        %v1065 = vunpack.c.l.b16 %v264
        %v1066 = vunpack.c.h.b16 %v264
        %v1067 = vunpack.c.l.b16 %v265
        %v1068 = vunpack.c.h.b16 %v265
        %v1069 = vunpack.c.l.b16 %v266
        %v1070 = vunpack.c.h.b16 %v266
        %v1071 = vunpack.c.l.b16 %v267
        %v1072 = vunpack.c.h.b16 %v267
        %v1073 = vunpack.c.l.b16 %v268
        %v1074 = vunpack.c.h.b16 %v268
        %v1075 = vunpack.c.l.b16 %v269
        %v1076 = vunpack.c.h.b16 %v269
        %v1077 = vunpack.c.l.b16 %v270
        %v1078 = vunpack.c.h.b16 %v270
        %v1079 = vunpack.c.l.b16 %v271
        %v1080 = vunpack.c.h.b16 %v271
        %v1081 = vunpack.c.l.b16 %v272
        %v1082 = vunpack.c.h.b16 %v272
        %v1083 = vunpack.c.l.b16 %v273
        %v1084 = vunpack.c.h.b16 %v273
        %v1085 = vunpack.c.l.b16 %v274
        %v1086 = vunpack.c.h.b16 %v274
        %v1087 = vunpack.c.l.b16 %v275
        %v1088 = vunpack.c.h.b16 %v275
        %v1089 = vunpack.c.l.b16 %v276
        %v1090 = vunpack.c.h.b16 %v276
        %v1091 = vunpack.c.l.b16 %v277
        %v1092 = vunpack.c.h.b16 %v277
        %v1093 = vunpack.c.l.b16 %v278
        %v1094 = vunpack.c.h.b16 %v278
        %v1095 = vunpack.c.l.b16 %v279
        %v1096 = vunpack.c.h.b16 %v279
        %v1097 = vunpack.c.l.b16 %v280
        %v1098 = vunpack.c.h.b16 %v280
        %v1099 = vunpack.c.l.b16 %v281
        %v1100 = vunpack.c.h.b16 %v281
        %v1101 = vunpack.c.l.b16 %v282
        %v1102 = vunpack.c.h.b16 %v282
        %v1103 = vunpack.c.l.b16 %v283
        %v1104 = vunpack.c.h.b16 %v283
        %v1105 = vunpack.c.l.b16 %v284
        %v1106 = vunpack.c.h.b16 %v284
        %v1107 = vunpack.c.l.b16 %v285
        %v1108 = vunpack.c.h.b16 %v285
        %v1109 = vunpack.c.l.b16 %v286
        %v1110 = vunpack.c.h.b16 %v286
        %v1111 = vunpack.c.l.b16 %v287
        %v1112 = vunpack.c.h.b16 %v287
        %v1113 = vpack.c.b16 %v1053, %v1049
        %v1114 = vpack.c.b16 %v1054, %v1050
        %v1115 = vpack.c.b16 %v1055, %v1051
        %v1116 = vpack.c.b16 %v1056, %v1052
        %v1117 = vpack.c.b16 %v1061, %v1057
        %v1118 = vpack.c.b16 %v1062, %v1058
        %v1119 = vpack.c.b16 %v1063, %v1059
        %v1120 = vpack.c.b16 %v1064, %v1060
        %v1121 = vpack.c.b16 %v1069, %v1065
        %v1122 = vpack.c.b16 %v1070, %v1066
        %v1123 = vpack.c.b16 %v1071, %v1067
        %v1124 = vpack.c.b16 %v1072, %v1068
        %v1125 = vpack.c.b16 %v1077, %v1073
        %v1126 = vpack.c.b16 %v1078, %v1074
        %v1127 = vpack.c.b16 %v1079, %v1075
        %v1128 = vpack.c.b16 %v1080, %v1076
        %v1129 = vpack.c.b16 %v1085, %v1081
        %v1130 = vpack.c.b16 %v1086, %v1082
        %v1131 = vpack.c.b16 %v1087, %v1083
        %v1132 = vpack.c.b16 %v1088, %v1084
        %v1133 = vpack.c.b16 %v1093, %v1089
        %v1134 = vpack.c.b16 %v1094, %v1090
        %v1135 = vpack.c.b16 %v1095, %v1091
        %v1136 = vpack.c.b16 %v1096, %v1092
        %v1137 = vpack.c.b16 %v1101, %v1097
        %v1138 = vpack.c.b16 %v1102, %v1098
        %v1139 = vpack.c.b16 %v1103, %v1099
        %v1140 = vpack.c.b16 %v1104, %v1100
        %v1141 = vpack.c.b16 %v1109, %v1105
        %v1142 = vpack.c.b16 %v1110, %v1106
        %v1143 = vpack.c.b16 %v1111, %v1107
        %v1144 = vpack.c.b16 %v1112, %v1108
        %1177 = vmatprep.subr.bf16.mxu0 %v1114
        %1178 = vmatpush1.bf16.msra.mxu0 %v1113
        %1179 = vmatprep.subr.bf16.mxu0 %v1118
        %1180 = vmatpush1.bf16.msra.mxu0 %v1117
        %1181 = vmatprep.subr.bf16.mxu0 %v1122
        %1182 = vmatpush1.bf16.msra.mxu0 %v1121
        %1183 = vmatprep.subr.bf16.mxu0 %v1126
        %1184 = vmatpush1.bf16.msra.mxu0 %v1125
        %1185 = vmatprep.subr.bf16.mxu0 %v1130
        %1186 = vmatpush1.bf16.msra.mxu0 %v1129
        %1187 = vmatprep.subr.bf16.mxu0 %v1134
        %1188 = vmatpush1.bf16.msra.mxu0 %v1133
        %1189 = vmatprep.subr.bf16.mxu0 %v1138
        %1190 = vmatpush1.bf16.msra.mxu0 %v1137
        %1191 = vmatprep.subr.bf16.mxu0 %v1142
        %1192 = vmatpush1.bf16.msra.mxu0 %v1141
        %1193 = vmatprep.subr.bf16.mxu0 0
        %1194 = vmatpush1.bf16.msra.mxu0 0
        %1195 = vmatprep.subr.bf16.mxu0 0
        %1196 = vmatpush1.bf16.msra.mxu0 0
        %1197 = vmatprep.subr.bf16.mxu0 0
        %1198 = vmatpush1.bf16.msra.mxu0 0
        %1199 = vmatprep.subr.bf16.mxu0 0
        %1200 = vmatpush1.bf16.msra.mxu0 0
        %1201 = vmatprep.subr.bf16.mxu0 0
        %1202 = vmatpush1.bf16.msra.mxu0 0
        %1203 = vmatprep.subr.bf16.mxu0 0
        %1204 = vmatpush1.bf16.msra.mxu0 0
        %1205 = vmatprep.subr.bf16.mxu0 0
        %1206 = vmatpush1.bf16.msra.mxu0 0
        %1207 = vmatprep.subr.bf16.mxu0 0
        %1208 = vmatpush1.bf16.msra.mxu0 0
        %1209 = vmatprep.mubr.bf16.mxu0 0
        %1210 = vmatmul.mubr.bf16.gmra.mrb[0].mxu0 %v1016
        %v1211 = vpop.f32.mrb[0].mxu0
        %v1212 = vadd.f32 0.0, %v1211
        %v1213 = vpop.f32.mrb[0].mxu0
        %v1214 = vadd.f32 0.0, %v1213
        %v1215 = vpop.f32.mrb[0].mxu0
        %v1216 = vpop.f32.mrb[0].mxu0
        %1217 = vdwg.mxu0
        %1218 = vmatprep.subr.bf16.mxu0 %v1116
        %1219 = vmatpush1.bf16.msra.mxu0 %v1115
        %1220 = vmatprep.subr.bf16.mxu0 %v1120
        %1221 = vmatpush1.bf16.msra.mxu0 %v1119
        %1222 = vmatprep.subr.bf16.mxu0 %v1124
        %1223 = vmatpush1.bf16.msra.mxu0 %v1123
        %1224 = vmatprep.subr.bf16.mxu0 %v1128
        %1225 = vmatpush1.bf16.msra.mxu0 %v1127
        %1226 = vmatprep.subr.bf16.mxu0 %v1132
        %1227 = vmatpush1.bf16.msra.mxu0 %v1131
        %1228 = vmatprep.subr.bf16.mxu0 %v1136
        %1229 = vmatpush1.bf16.msra.mxu0 %v1135
        %1230 = vmatprep.subr.bf16.mxu0 %v1140
        %1231 = vmatpush1.bf16.msra.mxu0 %v1139
        %1232 = vmatprep.subr.bf16.mxu0 %v1144
        %1233 = vmatpush1.bf16.msra.mxu0 %v1143
        %1234 = vmatprep.subr.bf16.mxu0 0
        %1235 = vmatpush1.bf16.msra.mxu0 0
        %1236 = vmatprep.subr.bf16.mxu0 0
        %1237 = vmatpush1.bf16.msra.mxu0 0
        %1238 = vmatprep.subr.bf16.mxu0 0
        %1239 = vmatpush1.bf16.msra.mxu0 0
        %1240 = vmatprep.subr.bf16.mxu0 0
        %1241 = vmatpush1.bf16.msra.mxu0 0
        %1242 = vmatprep.subr.bf16.mxu0 0
        %1243 = vmatpush1.bf16.msra.mxu0 0
        %1244 = vmatprep.subr.bf16.mxu0 0
        %1245 = vmatpush1.bf16.msra.mxu0 0
        %1246 = vmatprep.subr.bf16.mxu0 0
        %1247 = vmatpush1.bf16.msra.mxu0 0
        %1248 = vmatprep.subr.bf16.mxu0 0
        %1249 = vmatpush1.bf16.msra.mxu0 0
        %1250 = vmatprep.mubr.bf16.mxu0 0
        %1251 = vmatmul.mubr.bf16.gmra.mrb[0].mxu0 %v1016
        %v1252 = vpop.f32.mrb[0].mxu0
        %v1253 = vadd.f32 0.0, %v1252
        %v1254 = vpop.f32.mrb[0].mxu0
        %v1255 = vadd.f32 0.0, %v1254
        %v1256 = vpop.f32.mrb[0].mxu0
        %v1257 = vpop.f32.mrb[0].mxu0
        %1258 = vdwg.mxu0
        %v1259 = vadd.f32 %v665, %v1212
        %v1260 = vadd.f32 %v667, %v1214
        %v1261 = vadd.f32 %v858, %v1253
        %v1262 = vadd.f32 %v860, %v1255
        %v1263 = vxor.u32 %v1259, 2147483648
        %v1264 = vmul.f32 %v1263, 1.442695
        %v1265 = vpow.pop %v1264
        %v1266 = vadd.f32 %v1265, 1.0
        %v1267 = vrcp.pop %v1266
        %v1268 = vmul.f32 1.0, %v1267
        %v1269 = vxor.u32 %v1260, 2147483648
        %v1270 = vmul.f32 %v1269, 1.442695
        %v1271 = vpow.pop %v1270
        %v1272 = vadd.f32 %v1271, 1.0
        %v1273 = vrcp.pop %v1272
        %v1274 = vmul.f32 1.0, %v1273
        %v1275 = vtanh.pop %v1261
        %v1276 = vxor.u32 %v1262, 2147483648
        %v1277 = vmul.f32 %v1276, 1.442695
        %v1278 = vpow.pop %v1277
        %v1279 = vadd.f32 %v1278, 1.0
        %v1280 = vrcp.pop %v1279
        %v1281 = vmul.f32 1.0, %v1280
        %v1282 = vmul.f32 %v1274, %v255
        %v1283 = vmul.f32 %v1268, %v1275
        %v1284 = vadd.f32 %v1282, %v1283
        %v1285 = vtanh.pop %v1284
        %v1286 = vmul.f32 %v1281, %v1285
        %v1288 = vcombine.high %v1286, %v1286
        %v1290 = vunpack.c.l.s4 1966171168
        %v1291 = vunpack.c.0.s8 %v1290
        %v1292 = vlaneseq
        %v1293 = vshrl.u32 %v1292, 7
        %v1294 = vsub.s32 %v1291, %v1293
        %v1295 = vrot.slane %v1286, %v1294
        %v1297 = vunpack.c.l.s4 1966171168
        %v1298 = vunpack.c.0.s8 %v1297
        %v1299 = vlaneseq
        %v1300 = vshrl.u32 %v1299, 7
        %v1301 = vsub.s32 %v1298, %v1300
        %v1302 = vrot.slane %v1288, %v1301
        %v1303 = vcombine.high %v1295, %v1295
        %v1304 = vcombine.high %v1302, %v1302
        %v1306 = vunpack.c.l.s4 1966171168
        %v1307 = vunpack.c.0.s8 %v1306
        %v1308 = vlaneseq
        %v1309 = vshrl.u32 %v1308, 7
        %v1310 = vsub.s32 %v1307, %v1309
        %v1311 = vrot.slane %v1295, %v1310
        %v1313 = vunpack.c.l.s4 1966171168
        %v1314 = vunpack.c.0.s8 %v1313
        %v1315 = vlaneseq
        %v1316 = vshrl.u32 %v1315, 7
        %v1317 = vsub.s32 %v1314, %v1316
        %v1318 = vrot.slane %v1302, %v1317
        %v1320 = vunpack.c.l.s4 1966171168
        %v1321 = vunpack.c.0.s8 %v1320
        %v1322 = vlaneseq
        %v1323 = vshrl.u32 %v1322, 7
        %v1324 = vsub.s32 %v1321, %v1323
        %v1325 = vrot.slane %v1303, %v1324
        %v1327 = vunpack.c.l.s4 1966171168
        %v1328 = vunpack.c.0.s8 %v1327
        %v1329 = vlaneseq
        %v1330 = vshrl.u32 %v1329, 7
        %v1331 = vsub.s32 %v1328, %v1330
        %v1332 = vrot.slane %v1304, %v1331
        %v1333 = vcombine.high %v1311, %v1311
        %v1334 = vcombine.high %v1318, %v1318
        %v1335 = vcombine.high %v1325, %v1325
        %v1336 = vcombine.high %v1332, %v1332
        %1345 = vst [vmem:[%s244] sm:$0x1] %v1311
        %1346 = vst [vmem:[%s244 + $0x20] sm:$0x1] %v1325
        %1347 = vst [vmem:[%s244 + $0x40] sm:$0x1] %v1333
        %1348 = vst [vmem:[%s244 + $0x60] sm:$0x1] %v1335
        %1349 = vst [vmem:[%s244 + $0x80] sm:$0x1] %v1318
        %1350 = vst [vmem:[%s244 + $0xa0] sm:$0x1] %v1332
        %1351 = vst [vmem:[%s244 + $0xc0] sm:$0x1] %v1334
        %1352 = vst [vmem:[%s244 + $0xe0] sm:$0x1] %v1336
        %v1353 = vpack.c.bf16 %v1286, %v1286
        %1354 = vmatprep.subr.bf16.mxu0 %v1114
        %1355 = vmatpush1.bf16.msra.mxu0 %v1113
        %1356 = vmatprep.subr.bf16.mxu0 %v1118
        %1357 = vmatpush1.bf16.msra.mxu0 %v1117
        %1358 = vmatprep.subr.bf16.mxu0 %v1122
        %1359 = vmatpush1.bf16.msra.mxu0 %v1121
        %1360 = vmatprep.subr.bf16.mxu0 %v1126
        %1361 = vmatpush1.bf16.msra.mxu0 %v1125
        %1362 = vmatprep.subr.bf16.mxu0 %v1130
        %1363 = vmatpush1.bf16.msra.mxu0 %v1129
        %1364 = vmatprep.subr.bf16.mxu0 %v1134
        %1365 = vmatpush1.bf16.msra.mxu0 %v1133
        %1366 = vmatprep.subr.bf16.mxu0 %v1138
        %1367 = vmatpush1.bf16.msra.mxu0 %v1137
        %1368 = vmatprep.subr.bf16.mxu0 %v1142
        %1369 = vmatpush1.bf16.msra.mxu0 %v1141
        %1370 = vmatprep.subr.bf16.mxu0 0
        %1371 = vmatpush1.bf16.msra.mxu0 0
        %1372 = vmatprep.subr.bf16.mxu0 0
        %1373 = vmatpush1.bf16.msra.mxu0 0
        %1374 = vmatprep.subr.bf16.mxu0 0
        %1375 = vmatpush1.bf16.msra.mxu0 0
        %1376 = vmatprep.subr.bf16.mxu0 0
        %1377 = vmatpush1.bf16.msra.mxu0 0
        %1378 = vmatprep.subr.bf16.mxu0 0
        %1379 = vmatpush1.bf16.msra.mxu0 0
        %1380 = vmatprep.subr.bf16.mxu0 0
        %1381 = vmatpush1.bf16.msra.mxu0 0
        %1382 = vmatprep.subr.bf16.mxu0 0
        %1383 = vmatpush1.bf16.msra.mxu0 0
        %1384 = vmatprep.subr.bf16.mxu0 0
        %1385 = vmatpush1.bf16.msra.mxu0 0
        %1386 = vmatprep.mubr.bf16.mxu0 0
        %1387 = vmatmul.mubr.bf16.gmra.mrb[0].mxu0 %v1353
        %v1388 = vpop.f32.mrb[0].mxu0
        %v1389 = vadd.f32 0.0, %v1388
        %v1390 = vpop.f32.mrb[0].mxu0
        %v1391 = vadd.f32 0.0, %v1390
        %v1392 = vpop.f32.mrb[0].mxu0
        %v1393 = vpop.f32.mrb[0].mxu0
        %1394 = vdwg.mxu0
        %1395 = vmatprep.subr.bf16.mxu0 %v1116
        %1396 = vmatpush1.bf16.msra.mxu0 %v1115
        %1397 = vmatprep.subr.bf16.mxu0 %v1120
        %1398 = vmatpush1.bf16.msra.mxu0 %v1119
        %1399 = vmatprep.subr.bf16.mxu0 %v1124
        %1400 = vmatpush1.bf16.msra.mxu0 %v1123
        %1401 = vmatprep.subr.bf16.mxu0 %v1128
        %1402 = vmatpush1.bf16.msra.mxu0 %v1127
        %1403 = vmatprep.subr.bf16.mxu0 %v1132
        %1404 = vmatpush1.bf16.msra.mxu0 %v1131
        %1405 = vmatprep.subr.bf16.mxu0 %v1136
        %1406 = vmatpush1.bf16.msra.mxu0 %v1135
        %1407 = vmatprep.subr.bf16.mxu0 %v1140
        %1408 = vmatpush1.bf16.msra.mxu0 %v1139
        %1409 = vmatprep.subr.bf16.mxu0 %v1144
        %1410 = vmatpush1.bf16.msra.mxu0 %v1143
        %1411 = vmatprep.subr.bf16.mxu0 0
        %1412 = vmatpush1.bf16.msra.mxu0 0
        %1413 = vmatprep.subr.bf16.mxu0 0
        %1414 = vmatpush1.bf16.msra.mxu0 0
        %1415 = vmatprep.subr.bf16.mxu0 0
        %1416 = vmatpush1.bf16.msra.mxu0 0
        %1417 = vmatprep.subr.bf16.mxu0 0
        %1418 = vmatpush1.bf16.msra.mxu0 0
        %1419 = vmatprep.subr.bf16.mxu0 0
        %1420 = vmatpush1.bf16.msra.mxu0 0
        %1421 = vmatprep.subr.bf16.mxu0 0
        %1422 = vmatpush1.bf16.msra.mxu0 0
        %1423 = vmatprep.subr.bf16.mxu0 0
        %1424 = vmatpush1.bf16.msra.mxu0 0
        %1425 = vmatprep.subr.bf16.mxu0 0
        %1426 = vmatpush1.bf16.msra.mxu0 0
        %1427 = vmatprep.mubr.bf16.mxu0 0
        %1428 = vmatmul.mubr.bf16.gmra.mrb[0].mxu0 %v1353
        %v1429 = vpop.f32.mrb[0].mxu0
        %v1430 = vadd.f32 0.0, %v1429
        %v1431 = vpop.f32.mrb[0].mxu0
        %v1432 = vadd.f32 0.0, %v1431
        %v1433 = vpop.f32.mrb[0].mxu0
        %v1434 = vpop.f32.mrb[0].mxu0
        %1435 = vdwg.mxu0
        %v1436 = vadd.f32 %v669, %v1389
        %v1437 = vadd.f32 %v671, %v1391
        %v1438 = vadd.f32 %v862, %v1430
        %v1439 = vadd.f32 %v864, %v1432
        %v1440 = vxor.u32 %v1436, 2147483648
        %v1441 = vmul.f32 %v1440, 1.442695
        %v1442 = vpow.pop %v1441
        %v1443 = vadd.f32 %v1442, 1.0
        %v1444 = vrcp.pop %v1443
        %v1445 = vmul.f32 1.0, %v1444
        %v1446 = vxor.u32 %v1437, 2147483648
        %v1447 = vmul.f32 %v1446, 1.442695
        %v1448 = vpow.pop %v1447
        %v1449 = vadd.f32 %v1448, 1.0
        %v1450 = vrcp.pop %v1449
        %v1451 = vmul.f32 1.0, %v1450
        %v1452 = vtanh.pop %v1438
        %v1453 = vxor.u32 %v1439, 2147483648
        %v1454 = vmul.f32 %v1453, 1.442695
        %v1455 = vpow.pop %v1454
        %v1456 = vadd.f32 %v1455, 1.0
        %v1457 = vrcp.pop %v1456
        %v1458 = vmul.f32 1.0, %v1457
        %v1459 = vmul.f32 %v1451, %v1284
        %v1460 = vmul.f32 %v1445, %v1452
        %v1461 = vadd.f32 %v1459, %v1460
        %v1462 = vtanh.pop %v1461
        %v1463 = vmul.f32 %v1458, %v1462
        %v1465 = vcombine.high %v1463, %v1463
        %v1467 = vunpack.c.l.s4 1966171168
        %v1468 = vunpack.c.0.s8 %v1467
        %v1469 = vlaneseq
        %v1470 = vshrl.u32 %v1469, 7
        %v1471 = vsub.s32 %v1468, %v1470
        %v1472 = vrot.slane %v1463, %v1471
        %v1474 = vunpack.c.l.s4 1966171168
        %v1475 = vunpack.c.0.s8 %v1474
        %v1476 = vlaneseq
        %v1477 = vshrl.u32 %v1476, 7
        %v1478 = vsub.s32 %v1475, %v1477
        %v1479 = vrot.slane %v1465, %v1478
        %v1480 = vcombine.high %v1472, %v1472
        %v1481 = vcombine.high %v1479, %v1479
        %v1483 = vunpack.c.l.s4 1966171168
        %v1484 = vunpack.c.0.s8 %v1483
        %v1485 = vlaneseq
        %v1486 = vshrl.u32 %v1485, 7
        %v1487 = vsub.s32 %v1484, %v1486
        %v1488 = vrot.slane %v1472, %v1487
        %v1490 = vunpack.c.l.s4 1966171168
        %v1491 = vunpack.c.0.s8 %v1490
        %v1492 = vlaneseq
        %v1493 = vshrl.u32 %v1492, 7
        %v1494 = vsub.s32 %v1491, %v1493
        %v1495 = vrot.slane %v1479, %v1494
        %v1497 = vunpack.c.l.s4 1966171168
        %v1498 = vunpack.c.0.s8 %v1497
        %v1499 = vlaneseq
        %v1500 = vshrl.u32 %v1499, 7
        %v1501 = vsub.s32 %v1498, %v1500
        %v1502 = vrot.slane %v1480, %v1501
        %v1504 = vunpack.c.l.s4 1966171168
        %v1505 = vunpack.c.0.s8 %v1504
        %v1506 = vlaneseq
        %v1507 = vshrl.u32 %v1506, 7
        %v1508 = vsub.s32 %v1505, %v1507
        %v1509 = vrot.slane %v1481, %v1508
        %v1510 = vcombine.high %v1488, %v1488
        %v1511 = vcombine.high %v1495, %v1495
        %v1512 = vcombine.high %v1502, %v1502
        %v1513 = vcombine.high %v1509, %v1509
        %1522 = vst [vmem:[%s244 + $0x1] sm:$0x1] %v1488
        %1523 = vst [vmem:[%s244 + $0x21] sm:$0x1] %v1502
        %1524 = vst [vmem:[%s244 + $0x41] sm:$0x1] %v1510
        %1525 = vst [vmem:[%s244 + $0x61] sm:$0x1] %v1512
        %1526 = vst [vmem:[%s244 + $0x81] sm:$0x1] %v1495
        %1527 = vst [vmem:[%s244 + $0xa1] sm:$0x1] %v1509
        %1528 = vst [vmem:[%s244 + $0xc1] sm:$0x1] %v1511
        %1529 = vst [vmem:[%s244 + $0xe1] sm:$0x1] %v1513
        %v1530 = vpack.c.bf16 %v1463, %v1463
        %1531 = vmatprep.subr.bf16.mxu0 %v1114
        %1532 = vmatpush1.bf16.msra.mxu0 %v1113
        %1533 = vmatprep.subr.bf16.mxu0 %v1118
        %1534 = vmatpush1.bf16.msra.mxu0 %v1117
        %1535 = vmatprep.subr.bf16.mxu0 %v1122
        %1536 = vmatpush1.bf16.msra.mxu0 %v1121
        %1537 = vmatprep.subr.bf16.mxu0 %v1126
        %1538 = vmatpush1.bf16.msra.mxu0 %v1125
        %1539 = vmatprep.subr.bf16.mxu0 %v1130
        %1540 = vmatpush1.bf16.msra.mxu0 %v1129
        %1541 = vmatprep.subr.bf16.mxu0 %v1134
        %1542 = vmatpush1.bf16.msra.mxu0 %v1133
        %1543 = vmatprep.subr.bf16.mxu0 %v1138
        %1544 = vmatpush1.bf16.msra.mxu0 %v1137
        %1545 = vmatprep.subr.bf16.mxu0 %v1142
        %1546 = vmatpush1.bf16.msra.mxu0 %v1141
        %1547 = vmatprep.subr.bf16.mxu0 0
        %1548 = vmatpush1.bf16.msra.mxu0 0
        %1549 = vmatprep.subr.bf16.mxu0 0
        %1550 = vmatpush1.bf16.msra.mxu0 0
        %1551 = vmatprep.subr.bf16.mxu0 0
        %1552 = vmatpush1.bf16.msra.mxu0 0
        %1553 = vmatprep.subr.bf16.mxu0 0
        %1554 = vmatpush1.bf16.msra.mxu0 0
        %1555 = vmatprep.subr.bf16.mxu0 0
        %1556 = vmatpush1.bf16.msra.mxu0 0
        %1557 = vmatprep.subr.bf16.mxu0 0
        %1558 = vmatpush1.bf16.msra.mxu0 0
        %1559 = vmatprep.subr.bf16.mxu0 0
        %1560 = vmatpush1.bf16.msra.mxu0 0
        %1561 = vmatprep.subr.bf16.mxu0 0
        %1562 = vmatpush1.bf16.msra.mxu0 0
        %1563 = vmatprep.mubr.bf16.mxu0 0
        %1564 = vmatmul.mubr.bf16.gmra.mrb[0].mxu0 %v1530
        %v1565 = vpop.f32.mrb[0].mxu0
        %v1566 = vadd.f32 0.0, %v1565
        %v1567 = vpop.f32.mrb[0].mxu0
        %v1568 = vadd.f32 0.0, %v1567
        %v1569 = vpop.f32.mrb[0].mxu0
        %v1570 = vpop.f32.mrb[0].mxu0
        %1571 = vdwg.mxu0
        %1572 = vmatprep.subr.bf16.mxu0 %v1116
        %1573 = vmatpush1.bf16.msra.mxu0 %v1115
        %1574 = vmatprep.subr.bf16.mxu0 %v1120
        %1575 = vmatpush1.bf16.msra.mxu0 %v1119
        %1576 = vmatprep.subr.bf16.mxu0 %v1124
        %1577 = vmatpush1.bf16.msra.mxu0 %v1123
        %1578 = vmatprep.subr.bf16.mxu0 %v1128
        %1579 = vmatpush1.bf16.msra.mxu0 %v1127
        %1580 = vmatprep.subr.bf16.mxu0 %v1132
        %1581 = vmatpush1.bf16.msra.mxu0 %v1131
        %1582 = vmatprep.subr.bf16.mxu0 %v1136
        %1583 = vmatpush1.bf16.msra.mxu0 %v1135
        %1584 = vmatprep.subr.bf16.mxu0 %v1140
        %1585 = vmatpush1.bf16.msra.mxu0 %v1139
        %1586 = vmatprep.subr.bf16.mxu0 %v1144
        %1587 = vmatpush1.bf16.msra.mxu0 %v1143
        %1588 = vmatprep.subr.bf16.mxu0 0
        %1589 = vmatpush1.bf16.msra.mxu0 0
        %1590 = vmatprep.subr.bf16.mxu0 0
        %1591 = vmatpush1.bf16.msra.mxu0 0
        %1592 = vmatprep.subr.bf16.mxu0 0
        %1593 = vmatpush1.bf16.msra.mxu0 0
        %1594 = vmatprep.subr.bf16.mxu0 0
        %1595 = vmatpush1.bf16.msra.mxu0 0
        %1596 = vmatprep.subr.bf16.mxu0 0
        %1597 = vmatpush1.bf16.msra.mxu0 0
        %1598 = vmatprep.subr.bf16.mxu0 0
        %1599 = vmatpush1.bf16.msra.mxu0 0
        %1600 = vmatprep.subr.bf16.mxu0 0
        %1601 = vmatpush1.bf16.msra.mxu0 0
        %1602 = vmatprep.subr.bf16.mxu0 0
        %1603 = vmatpush1.bf16.msra.mxu0 0
        %1604 = vmatprep.mubr.bf16.mxu0 0
        %1605 = vmatmul.mubr.bf16.gmra.mrb[0].mxu0 %v1530
        %v1606 = vpop.f32.mrb[0].mxu0
        %v1607 = vadd.f32 0.0, %v1606
        %v1608 = vpop.f32.mrb[0].mxu0
        %v1609 = vadd.f32 0.0, %v1608
        %v1610 = vpop.f32.mrb[0].mxu0
        %v1611 = vpop.f32.mrb[0].mxu0
        %1612 = vdwg.mxu0
        %v1613 = vadd.f32 %v675, %v1566
        %v1614 = vadd.f32 %v677, %v1568
        %v1615 = vadd.f32 %v868, %v1607
        %v1616 = vadd.f32 %v870, %v1609
        %v1617 = vxor.u32 %v1613, 2147483648
        %v1618 = vmul.f32 %v1617, 1.442695
        %v1619 = vpow.pop %v1618
        %v1620 = vadd.f32 %v1619, 1.0
        %v1621 = vrcp.pop %v1620
        %v1622 = vmul.f32 1.0, %v1621
        %v1623 = vxor.u32 %v1614, 2147483648
        %v1624 = vmul.f32 %v1623, 1.442695
        %v1625 = vpow.pop %v1624
        %v1626 = vadd.f32 %v1625, 1.0
        %v1627 = vrcp.pop %v1626
        %v1628 = vmul.f32 1.0, %v1627
        %v1629 = vtanh.pop %v1615
        %v1630 = vxor.u32 %v1616, 2147483648
        %v1631 = vmul.f32 %v1630, 1.442695
        %v1632 = vpow.pop %v1631
        %v1633 = vadd.f32 %v1632, 1.0
        %v1634 = vrcp.pop %v1633
        %v1635 = vmul.f32 1.0, %v1634
        %v1636 = vmul.f32 %v1628, %v1461
        %v1637 = vmul.f32 %v1622, %v1629
        %v1638 = vadd.f32 %v1636, %v1637
        %v1639 = vtanh.pop %v1638
        %v1640 = vmul.f32 %v1635, %v1639
        %v1642 = vcombine.high %v1640, %v1640
        %v1644 = vunpack.c.l.s4 1966171168
        %v1645 = vunpack.c.0.s8 %v1644
        %v1646 = vlaneseq
        %v1647 = vshrl.u32 %v1646, 7
        %v1648 = vsub.s32 %v1645, %v1647
        %v1649 = vrot.slane %v1640, %v1648
        %v1651 = vunpack.c.l.s4 1966171168
        %v1652 = vunpack.c.0.s8 %v1651
        %v1653 = vlaneseq
        %v1654 = vshrl.u32 %v1653, 7
        %v1655 = vsub.s32 %v1652, %v1654
        %v1656 = vrot.slane %v1642, %v1655
        %v1657 = vcombine.high %v1649, %v1649
        %v1658 = vcombine.high %v1656, %v1656
        %v1660 = vunpack.c.l.s4 1966171168
        %v1661 = vunpack.c.0.s8 %v1660
        %v1662 = vlaneseq
        %v1663 = vshrl.u32 %v1662, 7
        %v1664 = vsub.s32 %v1661, %v1663
        %v1665 = vrot.slane %v1649, %v1664
        %v1667 = vunpack.c.l.s4 1966171168
        %v1668 = vunpack.c.0.s8 %v1667
        %v1669 = vlaneseq
        %v1670 = vshrl.u32 %v1669, 7
        %v1671 = vsub.s32 %v1668, %v1670
        %v1672 = vrot.slane %v1656, %v1671
        %v1674 = vunpack.c.l.s4 1966171168
        %v1675 = vunpack.c.0.s8 %v1674
        %v1676 = vlaneseq
        %v1677 = vshrl.u32 %v1676, 7
        %v1678 = vsub.s32 %v1675, %v1677
        %v1679 = vrot.slane %v1657, %v1678
        %v1681 = vunpack.c.l.s4 1966171168
        %v1682 = vunpack.c.0.s8 %v1681
        %v1683 = vlaneseq
        %v1684 = vshrl.u32 %v1683, 7
        %v1685 = vsub.s32 %v1682, %v1684
        %v1686 = vrot.slane %v1658, %v1685
        %v1687 = vcombine.high %v1665, %v1665
        %v1688 = vcombine.high %v1672, %v1672
        %v1689 = vcombine.high %v1679, %v1679
        %v1690 = vcombine.high %v1686, %v1686
        %1699 = vst [vmem:[%s244 + $0x2] sm:$0x1] %v1665
        %1700 = vst [vmem:[%s244 + $0x22] sm:$0x1] %v1679
        %1701 = vst [vmem:[%s244 + $0x42] sm:$0x1] %v1687
        %1702 = vst [vmem:[%s244 + $0x62] sm:$0x1] %v1689
        %1703 = vst [vmem:[%s244 + $0x82] sm:$0x1] %v1672
        %1704 = vst [vmem:[%s244 + $0xa2] sm:$0x1] %v1686
        %1705 = vst [vmem:[%s244 + $0xc2] sm:$0x1] %v1688
        %1706 = vst [vmem:[%s244 + $0xe2] sm:$0x1] %v1690
        %v1707 = vpack.c.bf16 %v1640, %v1640
        %1708 = vmatprep.subr.bf16.mxu0 %v1114
        %1709 = vmatpush1.bf16.msra.mxu0 %v1113
        %1710 = vmatprep.subr.bf16.mxu0 %v1118
        %1711 = vmatpush1.bf16.msra.mxu0 %v1117
        %1712 = vmatprep.subr.bf16.mxu0 %v1122
        %1713 = vmatpush1.bf16.msra.mxu0 %v1121
        %1714 = vmatprep.subr.bf16.mxu0 %v1126
        %1715 = vmatpush1.bf16.msra.mxu0 %v1125
        %1716 = vmatprep.subr.bf16.mxu0 %v1130
        %1717 = vmatpush1.bf16.msra.mxu0 %v1129
        %1718 = vmatprep.subr.bf16.mxu0 %v1134
        %1719 = vmatpush1.bf16.msra.mxu0 %v1133
        %1720 = vmatprep.subr.bf16.mxu0 %v1138
        %1721 = vmatpush1.bf16.msra.mxu0 %v1137
        %1722 = vmatprep.subr.bf16.mxu0 %v1142
        %1723 = vmatpush1.bf16.msra.mxu0 %v1141
        %1724 = vmatprep.subr.bf16.mxu0 0
        %1725 = vmatpush1.bf16.msra.mxu0 0
        %1726 = vmatprep.subr.bf16.mxu0 0
        %1727 = vmatpush1.bf16.msra.mxu0 0
        %1728 = vmatprep.subr.bf16.mxu0 0
        %1729 = vmatpush1.bf16.msra.mxu0 0
        %1730 = vmatprep.subr.bf16.mxu0 0
        %1731 = vmatpush1.bf16.msra.mxu0 0
        %1732 = vmatprep.subr.bf16.mxu0 0
        %1733 = vmatpush1.bf16.msra.mxu0 0
        %1734 = vmatprep.subr.bf16.mxu0 0
        %1735 = vmatpush1.bf16.msra.mxu0 0
        %1736 = vmatprep.subr.bf16.mxu0 0
        %1737 = vmatpush1.bf16.msra.mxu0 0
        %1738 = vmatprep.subr.bf16.mxu0 0
        %1739 = vmatpush1.bf16.msra.mxu0 0
        %1740 = vmatprep.mubr.bf16.mxu0 0
        %1741 = vmatmul.mubr.bf16.gmra.mrb[0].mxu0 %v1707
        %v1742 = vpop.f32.mrb[0].mxu0
        %v1743 = vadd.f32 0.0, %v1742
        %v1744 = vpop.f32.mrb[0].mxu0
        %v1745 = vadd.f32 0.0, %v1744
        %v1746 = vpop.f32.mrb[0].mxu0
        %v1747 = vpop.f32.mrb[0].mxu0
        %1748 = vdwg.mxu0
        %1749 = vmatprep.subr.bf16.mxu0 %v1116
        %1750 = vmatpush1.bf16.msra.mxu0 %v1115
        %1751 = vmatprep.subr.bf16.mxu0 %v1120
        %1752 = vmatpush1.bf16.msra.mxu0 %v1119
        %1753 = vmatprep.subr.bf16.mxu0 %v1124
        %1754 = vmatpush1.bf16.msra.mxu0 %v1123
        %1755 = vmatprep.subr.bf16.mxu0 %v1128
        %1756 = vmatpush1.bf16.msra.mxu0 %v1127
        %1757 = vmatprep.subr.bf16.mxu0 %v1132
        %1758 = vmatpush1.bf16.msra.mxu0 %v1131
        %1759 = vmatprep.subr.bf16.mxu0 %v1136
        %1760 = vmatpush1.bf16.msra.mxu0 %v1135
        %1761 = vmatprep.subr.bf16.mxu0 %v1140
        %1762 = vmatpush1.bf16.msra.mxu0 %v1139
        %1763 = vmatprep.subr.bf16.mxu0 %v1144
        %1764 = vmatpush1.bf16.msra.mxu0 %v1143
        %1765 = vmatprep.subr.bf16.mxu0 0
        %1766 = vmatpush1.bf16.msra.mxu0 0
        %1767 = vmatprep.subr.bf16.mxu0 0
        %1768 = vmatpush1.bf16.msra.mxu0 0
        %1769 = vmatprep.subr.bf16.mxu0 0
        %1770 = vmatpush1.bf16.msra.mxu0 0
        %1771 = vmatprep.subr.bf16.mxu0 0
        %1772 = vmatpush1.bf16.msra.mxu0 0
        %1773 = vmatprep.subr.bf16.mxu0 0
        %1774 = vmatpush1.bf16.msra.mxu0 0
        %1775 = vmatprep.subr.bf16.mxu0 0
        %1776 = vmatpush1.bf16.msra.mxu0 0
        %1777 = vmatprep.subr.bf16.mxu0 0
        %1778 = vmatpush1.bf16.msra.mxu0 0
        %1779 = vmatprep.subr.bf16.mxu0 0
        %1780 = vmatpush1.bf16.msra.mxu0 0
        %1781 = vmatprep.mubr.bf16.mxu0 0
        %1782 = vmatmul.mubr.bf16.gmra.mrb[0].mxu0 %v1707
        %v1783 = vpop.f32.mrb[0].mxu0
        %v1784 = vadd.f32 0.0, %v1783
        %v1785 = vpop.f32.mrb[0].mxu0
        %v1786 = vadd.f32 0.0, %v1785
        %v1787 = vpop.f32.mrb[0].mxu0
        %v1788 = vpop.f32.mrb[0].mxu0
        %1789 = vdwg.mxu0
        %v1790 = vadd.f32 %v679, %v1743
        %v1791 = vadd.f32 %v681, %v1745
        %v1792 = vadd.f32 %v872, %v1784
        %v1793 = vadd.f32 %v874, %v1786
        %v1794 = vxor.u32 %v1790, 2147483648
        %v1795 = vmul.f32 %v1794, 1.442695
        %v1796 = vpow.pop %v1795
        %v1797 = vadd.f32 %v1796, 1.0
        %v1798 = vrcp.pop %v1797
        %v1799 = vmul.f32 1.0, %v1798
        %v1800 = vxor.u32 %v1791, 2147483648
        %v1801 = vmul.f32 %v1800, 1.442695
        %v1802 = vpow.pop %v1801
        %v1803 = vadd.f32 %v1802, 1.0
        %v1804 = vrcp.pop %v1803
        %v1805 = vmul.f32 1.0, %v1804
        %v1806 = vtanh.pop %v1792
        %v1807 = vxor.u32 %v1793, 2147483648
        %v1808 = vmul.f32 %v1807, 1.442695
        %v1809 = vpow.pop %v1808
        %v1810 = vadd.f32 %v1809, 1.0
        %v1811 = vrcp.pop %v1810
        %v1812 = vmul.f32 1.0, %v1811
        %v1813 = vmul.f32 %v1805, %v1638
        %v1814 = vmul.f32 %v1799, %v1806
        %v1815 = vadd.f32 %v1813, %v1814
        %v1816 = vtanh.pop %v1815
        %v1817 = vmul.f32 %v1812, %v1816
        %v1819 = vcombine.high %v1817, %v1817
        %v1821 = vunpack.c.l.s4 1966171168
        %v1822 = vunpack.c.0.s8 %v1821
        %v1823 = vlaneseq
        %v1824 = vshrl.u32 %v1823, 7
        %v1825 = vsub.s32 %v1822, %v1824
        %v1826 = vrot.slane %v1817, %v1825
        %v1828 = vunpack.c.l.s4 1966171168
        %v1829 = vunpack.c.0.s8 %v1828
        %v1830 = vlaneseq
        %v1831 = vshrl.u32 %v1830, 7
        %v1832 = vsub.s32 %v1829, %v1831
        %v1833 = vrot.slane %v1819, %v1832
        %v1834 = vcombine.high %v1826, %v1826
        %v1835 = vcombine.high %v1833, %v1833
        %v1837 = vunpack.c.l.s4 1966171168
        %v1838 = vunpack.c.0.s8 %v1837
        %v1839 = vlaneseq
        %v1840 = vshrl.u32 %v1839, 7
        %v1841 = vsub.s32 %v1838, %v1840
        %v1842 = vrot.slane %v1826, %v1841
        %v1844 = vunpack.c.l.s4 1966171168
        %v1845 = vunpack.c.0.s8 %v1844
        %v1846 = vlaneseq
        %v1847 = vshrl.u32 %v1846, 7
        %v1848 = vsub.s32 %v1845, %v1847
        %v1849 = vrot.slane %v1833, %v1848
        %v1851 = vunpack.c.l.s4 1966171168
        %v1852 = vunpack.c.0.s8 %v1851
        %v1853 = vlaneseq
        %v1854 = vshrl.u32 %v1853, 7
        %v1855 = vsub.s32 %v1852, %v1854
        %v1856 = vrot.slane %v1834, %v1855
        %v1858 = vunpack.c.l.s4 1966171168
        %v1859 = vunpack.c.0.s8 %v1858
        %v1860 = vlaneseq
        %v1861 = vshrl.u32 %v1860, 7
        %v1862 = vsub.s32 %v1859, %v1861
        %v1863 = vrot.slane %v1835, %v1862
        %v1864 = vcombine.high %v1842, %v1842
        %v1865 = vcombine.high %v1849, %v1849
        %v1866 = vcombine.high %v1856, %v1856
        %v1867 = vcombine.high %v1863, %v1863
        %1876 = vst [vmem:[%s244 + $0x3] sm:$0x1] %v1842
        %1877 = vst [vmem:[%s244 + $0x23] sm:$0x1] %v1856
        %1878 = vst [vmem:[%s244 + $0x43] sm:$0x1] %v1864
        %1879 = vst [vmem:[%s244 + $0x63] sm:$0x1] %v1866
        %1880 = vst [vmem:[%s244 + $0x83] sm:$0x1] %v1849
        %1881 = vst [vmem:[%s244 + $0xa3] sm:$0x1] %v1863
        %1882 = vst [vmem:[%s244 + $0xc3] sm:$0x1] %v1865
        %1883 = vst [vmem:[%s244 + $0xe3] sm:$0x1] %v1867
        %v1884 = vpack.c.bf16 %v1817, %v1817
        %1885 = vmatprep.subr.bf16.mxu0 %v1114
        %1886 = vmatpush1.bf16.msra.mxu0 %v1113
        %1887 = vmatprep.subr.bf16.mxu0 %v1118
        %1888 = vmatpush1.bf16.msra.mxu0 %v1117
        %1889 = vmatprep.subr.bf16.mxu0 %v1122
        %1890 = vmatpush1.bf16.msra.mxu0 %v1121
        %1891 = vmatprep.subr.bf16.mxu0 %v1126
        %1892 = vmatpush1.bf16.msra.mxu0 %v1125
        %1893 = vmatprep.subr.bf16.mxu0 %v1130
        %1894 = vmatpush1.bf16.msra.mxu0 %v1129
        %1895 = vmatprep.subr.bf16.mxu0 %v1134
        %1896 = vmatpush1.bf16.msra.mxu0 %v1133
        %1897 = vmatprep.subr.bf16.mxu0 %v1138
        %1898 = vmatpush1.bf16.msra.mxu0 %v1137
        %1899 = vmatprep.subr.bf16.mxu0 %v1142
        %1900 = vmatpush1.bf16.msra.mxu0 %v1141
        %1901 = vmatprep.subr.bf16.mxu0 0
        %1902 = vmatpush1.bf16.msra.mxu0 0
        %1903 = vmatprep.subr.bf16.mxu0 0
        %1904 = vmatpush1.bf16.msra.mxu0 0
        %1905 = vmatprep.subr.bf16.mxu0 0
        %1906 = vmatpush1.bf16.msra.mxu0 0
        %1907 = vmatprep.subr.bf16.mxu0 0
        %1908 = vmatpush1.bf16.msra.mxu0 0
        %1909 = vmatprep.subr.bf16.mxu0 0
        %1910 = vmatpush1.bf16.msra.mxu0 0
        %1911 = vmatprep.subr.bf16.mxu0 0
        %1912 = vmatpush1.bf16.msra.mxu0 0
        %1913 = vmatprep.subr.bf16.mxu0 0
        %1914 = vmatpush1.bf16.msra.mxu0 0
        %1915 = vmatprep.subr.bf16.mxu0 0
        %1916 = vmatpush1.bf16.msra.mxu0 0
        %1917 = vmatprep.mubr.bf16.mxu0 0
        %1918 = vmatmul.mubr.bf16.gmra.mrb[0].mxu0 %v1884
        %v1919 = vpop.f32.mrb[0].mxu0
        %v1920 = vadd.f32 0.0, %v1919
        %v1921 = vpop.f32.mrb[0].mxu0
        %v1922 = vadd.f32 0.0, %v1921
        %v1923 = vpop.f32.mrb[0].mxu0
        %v1924 = vpop.f32.mrb[0].mxu0
        %1925 = vdwg.mxu0
        %1926 = vmatprep.subr.bf16.mxu0 %v1116
        %1927 = vmatpush1.bf16.msra.mxu0 %v1115
        %1928 = vmatprep.subr.bf16.mxu0 %v1120
        %1929 = vmatpush1.bf16.msra.mxu0 %v1119
        %1930 = vmatprep.subr.bf16.mxu0 %v1124
        %1931 = vmatpush1.bf16.msra.mxu0 %v1123
        %1932 = vmatprep.subr.bf16.mxu0 %v1128
        %1933 = vmatpush1.bf16.msra.mxu0 %v1127
        %1934 = vmatprep.subr.bf16.mxu0 %v1132
        %1935 = vmatpush1.bf16.msra.mxu0 %v1131
        %1936 = vmatprep.subr.bf16.mxu0 %v1136
        %1937 = vmatpush1.bf16.msra.mxu0 %v1135
        %1938 = vmatprep.subr.bf16.mxu0 %v1140
        %1939 = vmatpush1.bf16.msra.mxu0 %v1139
        %1940 = vmatprep.subr.bf16.mxu0 %v1144
        %1941 = vmatpush1.bf16.msra.mxu0 %v1143
        %1942 = vmatprep.subr.bf16.mxu0 0
        %1943 = vmatpush1.bf16.msra.mxu0 0
        %1944 = vmatprep.subr.bf16.mxu0 0
        %1945 = vmatpush1.bf16.msra.mxu0 0
        %1946 = vmatprep.subr.bf16.mxu0 0
        %1947 = vmatpush1.bf16.msra.mxu0 0
        %1948 = vmatprep.subr.bf16.mxu0 0
        %1949 = vmatpush1.bf16.msra.mxu0 0
        %1950 = vmatprep.subr.bf16.mxu0 0
        %1951 = vmatpush1.bf16.msra.mxu0 0
        %1952 = vmatprep.subr.bf16.mxu0 0
        %1953 = vmatpush1.bf16.msra.mxu0 0
        %1954 = vmatprep.subr.bf16.mxu0 0
        %1955 = vmatpush1.bf16.msra.mxu0 0
        %1956 = vmatprep.subr.bf16.mxu0 0
        %1957 = vmatpush1.bf16.msra.mxu0 0
        %1958 = vmatprep.mubr.bf16.mxu0 0
        %1959 = vmatmul.mubr.bf16.gmra.mrb[0].mxu0 %v1884
        %v1960 = vpop.f32.mrb[0].mxu0
        %v1961 = vadd.f32 0.0, %v1960
        %v1962 = vpop.f32.mrb[0].mxu0
        %v1963 = vadd.f32 0.0, %v1962
        %v1964 = vpop.f32.mrb[0].mxu0
        %v1965 = vpop.f32.mrb[0].mxu0
        %1966 = vdwg.mxu0
        %v1967 = vadd.f32 %v685, %v1920
        %v1968 = vadd.f32 %v687, %v1922
        %v1969 = vadd.f32 %v878, %v1961
        %v1970 = vadd.f32 %v880, %v1963
        %v1971 = vxor.u32 %v1967, 2147483648
        %v1972 = vmul.f32 %v1971, 1.442695
        %v1973 = vpow.pop %v1972
        %v1974 = vadd.f32 %v1973, 1.0
        %v1975 = vrcp.pop %v1974
        %v1976 = vmul.f32 1.0, %v1975
        %v1977 = vxor.u32 %v1968, 2147483648
        %v1978 = vmul.f32 %v1977, 1.442695
        %v1979 = vpow.pop %v1978
        %v1980 = vadd.f32 %v1979, 1.0
        %v1981 = vrcp.pop %v1980
        %v1982 = vmul.f32 1.0, %v1981
        %v1983 = vtanh.pop %v1969
        %v1984 = vxor.u32 %v1970, 2147483648
        %v1985 = vmul.f32 %v1984, 1.442695
        %v1986 = vpow.pop %v1985
        %v1987 = vadd.f32 %v1986, 1.0
        %v1988 = vrcp.pop %v1987
        %v1989 = vmul.f32 1.0, %v1988
        %v1990 = vmul.f32 %v1982, %v1815
        %v1991 = vmul.f32 %v1976, %v1983
        %v1992 = vadd.f32 %v1990, %v1991
        %v1993 = vtanh.pop %v1992
        %v1994 = vmul.f32 %v1989, %v1993
        %v1996 = vcombine.high %v1994, %v1994
        %v1998 = vunpack.c.l.s4 1966171168
        %v1999 = vunpack.c.0.s8 %v1998
        %v2000 = vlaneseq
        %v2001 = vshrl.u32 %v2000, 7
        %v2002 = vsub.s32 %v1999, %v2001
        %v2003 = vrot.slane %v1994, %v2002
        %v2005 = vunpack.c.l.s4 1966171168
        %v2006 = vunpack.c.0.s8 %v2005
        %v2007 = vlaneseq
        %v2008 = vshrl.u32 %v2007, 7
        %v2009 = vsub.s32 %v2006, %v2008
        %v2010 = vrot.slane %v1996, %v2009
        %v2011 = vcombine.high %v2003, %v2003
        %v2012 = vcombine.high %v2010, %v2010
        %v2014 = vunpack.c.l.s4 1966171168
        %v2015 = vunpack.c.0.s8 %v2014
        %v2016 = vlaneseq
        %v2017 = vshrl.u32 %v2016, 7
        %v2018 = vsub.s32 %v2015, %v2017
        %v2019 = vrot.slane %v2003, %v2018
        %v2021 = vunpack.c.l.s4 1966171168
        %v2022 = vunpack.c.0.s8 %v2021
        %v2023 = vlaneseq
        %v2024 = vshrl.u32 %v2023, 7
        %v2025 = vsub.s32 %v2022, %v2024
        %v2026 = vrot.slane %v2010, %v2025
        %v2028 = vunpack.c.l.s4 1966171168
        %v2029 = vunpack.c.0.s8 %v2028
        %v2030 = vlaneseq
        %v2031 = vshrl.u32 %v2030, 7
        %v2032 = vsub.s32 %v2029, %v2031
        %v2033 = vrot.slane %v2011, %v2032
        %v2035 = vunpack.c.l.s4 1966171168
        %v2036 = vunpack.c.0.s8 %v2035
        %v2037 = vlaneseq
        %v2038 = vshrl.u32 %v2037, 7
        %v2039 = vsub.s32 %v2036, %v2038
        %v2040 = vrot.slane %v2012, %v2039
        %v2041 = vcombine.high %v2019, %v2019
        %v2042 = vcombine.high %v2026, %v2026
        %v2043 = vcombine.high %v2033, %v2033
        %v2044 = vcombine.high %v2040, %v2040
        %2053 = vst [vmem:[%s244 + $0x4] sm:$0x1] %v2019
        %2054 = vst [vmem:[%s244 + $0x24] sm:$0x1] %v2033
        %2055 = vst [vmem:[%s244 + $0x44] sm:$0x1] %v2041
        %2056 = vst [vmem:[%s244 + $0x64] sm:$0x1] %v2043
        %2057 = vst [vmem:[%s244 + $0x84] sm:$0x1] %v2026
        %2058 = vst [vmem:[%s244 + $0xa4] sm:$0x1] %v2040
        %2059 = vst [vmem:[%s244 + $0xc4] sm:$0x1] %v2042
        %2060 = vst [vmem:[%s244 + $0xe4] sm:$0x1] %v2044
        %v2061 = vpack.c.bf16 %v1994, %v1994
        %2062 = vmatprep.subr.bf16.mxu0 %v1114
        %2063 = vmatpush1.bf16.msra.mxu0 %v1113
        %2064 = vmatprep.subr.bf16.mxu0 %v1118
        %2065 = vmatpush1.bf16.msra.mxu0 %v1117
        %2066 = vmatprep.subr.bf16.mxu0 %v1122
        %2067 = vmatpush1.bf16.msra.mxu0 %v1121
        %2068 = vmatprep.subr.bf16.mxu0 %v1126
        %2069 = vmatpush1.bf16.msra.mxu0 %v1125
        %2070 = vmatprep.subr.bf16.mxu0 %v1130
        %2071 = vmatpush1.bf16.msra.mxu0 %v1129
        %2072 = vmatprep.subr.bf16.mxu0 %v1134
        %2073 = vmatpush1.bf16.msra.mxu0 %v1133
        %2074 = vmatprep.subr.bf16.mxu0 %v1138
        %2075 = vmatpush1.bf16.msra.mxu0 %v1137
        %2076 = vmatprep.subr.bf16.mxu0 %v1142
        %2077 = vmatpush1.bf16.msra.mxu0 %v1141
        %2078 = vmatprep.subr.bf16.mxu0 0
        %2079 = vmatpush1.bf16.msra.mxu0 0
        %2080 = vmatprep.subr.bf16.mxu0 0
        %2081 = vmatpush1.bf16.msra.mxu0 0
        %2082 = vmatprep.subr.bf16.mxu0 0
        %2083 = vmatpush1.bf16.msra.mxu0 0
        %2084 = vmatprep.subr.bf16.mxu0 0
        %2085 = vmatpush1.bf16.msra.mxu0 0
        %2086 = vmatprep.subr.bf16.mxu0 0
        %2087 = vmatpush1.bf16.msra.mxu0 0
        %2088 = vmatprep.subr.bf16.mxu0 0
        %2089 = vmatpush1.bf16.msra.mxu0 0
        %2090 = vmatprep.subr.bf16.mxu0 0
        %2091 = vmatpush1.bf16.msra.mxu0 0
        %2092 = vmatprep.subr.bf16.mxu0 0
        %2093 = vmatpush1.bf16.msra.mxu0 0
        %2094 = vmatprep.mubr.bf16.mxu0 0
        %2095 = vmatmul.mubr.bf16.gmra.mrb[0].mxu0 %v2061
        %v2096 = vpop.f32.mrb[0].mxu0
        %v2097 = vadd.f32 0.0, %v2096
        %v2098 = vpop.f32.mrb[0].mxu0
        %v2099 = vadd.f32 0.0, %v2098
        %v2100 = vpop.f32.mrb[0].mxu0
        %v2101 = vpop.f32.mrb[0].mxu0
        %2102 = vdwg.mxu0
        %2103 = vmatprep.subr.bf16.mxu0 %v1116
        %2104 = vmatpush1.bf16.msra.mxu0 %v1115
        %2105 = vmatprep.subr.bf16.mxu0 %v1120
        %2106 = vmatpush1.bf16.msra.mxu0 %v1119
        %2107 = vmatprep.subr.bf16.mxu0 %v1124
        %2108 = vmatpush1.bf16.msra.mxu0 %v1123
        %2109 = vmatprep.subr.bf16.mxu0 %v1128
        %2110 = vmatpush1.bf16.msra.mxu0 %v1127
        %2111 = vmatprep.subr.bf16.mxu0 %v1132
        %2112 = vmatpush1.bf16.msra.mxu0 %v1131
        %2113 = vmatprep.subr.bf16.mxu0 %v1136
        %2114 = vmatpush1.bf16.msra.mxu0 %v1135
        %2115 = vmatprep.subr.bf16.mxu0 %v1140
        %2116 = vmatpush1.bf16.msra.mxu0 %v1139
        %2117 = vmatprep.subr.bf16.mxu0 %v1144
        %2118 = vmatpush1.bf16.msra.mxu0 %v1143
        %2119 = vmatprep.subr.bf16.mxu0 0
        %2120 = vmatpush1.bf16.msra.mxu0 0
        %2121 = vmatprep.subr.bf16.mxu0 0
        %2122 = vmatpush1.bf16.msra.mxu0 0
        %2123 = vmatprep.subr.bf16.mxu0 0
        %2124 = vmatpush1.bf16.msra.mxu0 0
        %2125 = vmatprep.subr.bf16.mxu0 0
        %2126 = vmatpush1.bf16.msra.mxu0 0
        %2127 = vmatprep.subr.bf16.mxu0 0
        %2128 = vmatpush1.bf16.msra.mxu0 0
        %2129 = vmatprep.subr.bf16.mxu0 0
        %2130 = vmatpush1.bf16.msra.mxu0 0
        %2131 = vmatprep.subr.bf16.mxu0 0
        %2132 = vmatpush1.bf16.msra.mxu0 0
        %2133 = vmatprep.subr.bf16.mxu0 0
        %2134 = vmatpush1.bf16.msra.mxu0 0
        %2135 = vmatprep.mubr.bf16.mxu0 0
        %2136 = vmatmul.mubr.bf16.gmra.mrb[0].mxu0 %v2061
        %v2137 = vpop.f32.mrb[0].mxu0
        %v2138 = vadd.f32 0.0, %v2137
        %v2139 = vpop.f32.mrb[0].mxu0
        %v2140 = vadd.f32 0.0, %v2139
        %v2141 = vpop.f32.mrb[0].mxu0
        %v2142 = vpop.f32.mrb[0].mxu0
        %2143 = vdwg.mxu0
        %v2144 = vadd.f32 %v689, %v2097
        %v2145 = vadd.f32 %v691, %v2099
        %v2146 = vadd.f32 %v882, %v2138
        %v2147 = vadd.f32 %v884, %v2140
        %v2148 = vxor.u32 %v2144, 2147483648
        %v2149 = vmul.f32 %v2148, 1.442695
        %v2150 = vpow.pop %v2149
        %v2151 = vadd.f32 %v2150, 1.0
        %v2152 = vrcp.pop %v2151
        %v2153 = vmul.f32 1.0, %v2152
        %v2154 = vxor.u32 %v2145, 2147483648
        %v2155 = vmul.f32 %v2154, 1.442695
        %v2156 = vpow.pop %v2155
        %v2157 = vadd.f32 %v2156, 1.0
        %v2158 = vrcp.pop %v2157
        %v2159 = vmul.f32 1.0, %v2158
        %v2160 = vtanh.pop %v2146
        %v2161 = vxor.u32 %v2147, 2147483648
        %v2162 = vmul.f32 %v2161, 1.442695
        %v2163 = vpow.pop %v2162
        %v2164 = vadd.f32 %v2163, 1.0
        %v2165 = vrcp.pop %v2164
        %v2166 = vmul.f32 1.0, %v2165
        %v2167 = vmul.f32 %v2159, %v1992
        %v2168 = vmul.f32 %v2153, %v2160
        %v2169 = vadd.f32 %v2167, %v2168
        %v2170 = vtanh.pop %v2169
        %v2171 = vmul.f32 %v2166, %v2170
        %v2173 = vcombine.high %v2171, %v2171
        %v2175 = vunpack.c.l.s4 1966171168
        %v2176 = vunpack.c.0.s8 %v2175
        %v2177 = vlaneseq
        %v2178 = vshrl.u32 %v2177, 7
        %v2179 = vsub.s32 %v2176, %v2178
        %v2180 = vrot.slane %v2171, %v2179
        %v2182 = vunpack.c.l.s4 1966171168
        %v2183 = vunpack.c.0.s8 %v2182
        %v2184 = vlaneseq
        %v2185 = vshrl.u32 %v2184, 7
        %v2186 = vsub.s32 %v2183, %v2185
        %v2187 = vrot.slane %v2173, %v2186
        %v2188 = vcombine.high %v2180, %v2180
        %v2189 = vcombine.high %v2187, %v2187
        %v2191 = vunpack.c.l.s4 1966171168
        %v2192 = vunpack.c.0.s8 %v2191
        %v2193 = vlaneseq
        %v2194 = vshrl.u32 %v2193, 7
        %v2195 = vsub.s32 %v2192, %v2194
        %v2196 = vrot.slane %v2180, %v2195
        %v2198 = vunpack.c.l.s4 1966171168
        %v2199 = vunpack.c.0.s8 %v2198
        %v2200 = vlaneseq
        %v2201 = vshrl.u32 %v2200, 7
        %v2202 = vsub.s32 %v2199, %v2201
        %v2203 = vrot.slane %v2187, %v2202
        %v2205 = vunpack.c.l.s4 1966171168
        %v2206 = vunpack.c.0.s8 %v2205
        %v2207 = vlaneseq
        %v2208 = vshrl.u32 %v2207, 7
        %v2209 = vsub.s32 %v2206, %v2208
        %v2210 = vrot.slane %v2188, %v2209
        %v2212 = vunpack.c.l.s4 1966171168
        %v2213 = vunpack.c.0.s8 %v2212
        %v2214 = vlaneseq
        %v2215 = vshrl.u32 %v2214, 7
        %v2216 = vsub.s32 %v2213, %v2215
        %v2217 = vrot.slane %v2189, %v2216
        %v2218 = vcombine.high %v2196, %v2196
        %v2219 = vcombine.high %v2203, %v2203
        %v2220 = vcombine.high %v2210, %v2210
        %v2221 = vcombine.high %v2217, %v2217
        %2230 = vst [vmem:[%s244 + $0x5] sm:$0x1] %v2196
        %2231 = vst [vmem:[%s244 + $0x25] sm:$0x1] %v2210
        %2232 = vst [vmem:[%s244 + $0x45] sm:$0x1] %v2218
        %2233 = vst [vmem:[%s244 + $0x65] sm:$0x1] %v2220
        %2234 = vst [vmem:[%s244 + $0x85] sm:$0x1] %v2203
        %2235 = vst [vmem:[%s244 + $0xa5] sm:$0x1] %v2217
        %2236 = vst [vmem:[%s244 + $0xc5] sm:$0x1] %v2219
        %2237 = vst [vmem:[%s244 + $0xe5] sm:$0x1] %v2221
        %v2238 = vpack.c.bf16 %v2171, %v2171
        %2239 = vmatprep.subr.bf16.mxu0 %v1114
        %2240 = vmatpush1.bf16.msra.mxu0 %v1113
        %2241 = vmatprep.subr.bf16.mxu0 %v1118
        %2242 = vmatpush1.bf16.msra.mxu0 %v1117
        %2243 = vmatprep.subr.bf16.mxu0 %v1122
        %2244 = vmatpush1.bf16.msra.mxu0 %v1121
        %2245 = vmatprep.subr.bf16.mxu0 %v1126
        %2246 = vmatpush1.bf16.msra.mxu0 %v1125
        %2247 = vmatprep.subr.bf16.mxu0 %v1130
        %2248 = vmatpush1.bf16.msra.mxu0 %v1129
        %2249 = vmatprep.subr.bf16.mxu0 %v1134
        %2250 = vmatpush1.bf16.msra.mxu0 %v1133
        %2251 = vmatprep.subr.bf16.mxu0 %v1138
        %2252 = vmatpush1.bf16.msra.mxu0 %v1137
        %2253 = vmatprep.subr.bf16.mxu0 %v1142
        %2254 = vmatpush1.bf16.msra.mxu0 %v1141
        %2255 = vmatprep.subr.bf16.mxu0 0
        %2256 = vmatpush1.bf16.msra.mxu0 0
        %2257 = vmatprep.subr.bf16.mxu0 0
        %2258 = vmatpush1.bf16.msra.mxu0 0
        %2259 = vmatprep.subr.bf16.mxu0 0
        %2260 = vmatpush1.bf16.msra.mxu0 0
        %2261 = vmatprep.subr.bf16.mxu0 0
        %2262 = vmatpush1.bf16.msra.mxu0 0
        %2263 = vmatprep.subr.bf16.mxu0 0
        %2264 = vmatpush1.bf16.msra.mxu0 0
        %2265 = vmatprep.subr.bf16.mxu0 0
        %2266 = vmatpush1.bf16.msra.mxu0 0
        %2267 = vmatprep.subr.bf16.mxu0 0
        %2268 = vmatpush1.bf16.msra.mxu0 0
        %2269 = vmatprep.subr.bf16.mxu0 0
        %2270 = vmatpush1.bf16.msra.mxu0 0
        %2271 = vmatprep.mubr.bf16.mxu0 0
        %2272 = vmatmul.mubr.bf16.gmra.mrb[0].mxu0 %v2238
        %v2273 = vpop.f32.mrb[0].mxu0
        %v2274 = vadd.f32 0.0, %v2273
        %v2275 = vpop.f32.mrb[0].mxu0
        %v2276 = vadd.f32 0.0, %v2275
        %v2277 = vpop.f32.mrb[0].mxu0
        %v2278 = vpop.f32.mrb[0].mxu0
        %2279 = vdwg.mxu0
        %2280 = vmatprep.subr.bf16.mxu0 %v1116
        %2281 = vmatpush1.bf16.msra.mxu0 %v1115
        %2282 = vmatprep.subr.bf16.mxu0 %v1120
        %2283 = vmatpush1.bf16.msra.mxu0 %v1119
        %2284 = vmatprep.subr.bf16.mxu0 %v1124
        %2285 = vmatpush1.bf16.msra.mxu0 %v1123
        %2286 = vmatprep.subr.bf16.mxu0 %v1128
        %2287 = vmatpush1.bf16.msra.mxu0 %v1127
        %2288 = vmatprep.subr.bf16.mxu0 %v1132
        %2289 = vmatpush1.bf16.msra.mxu0 %v1131
        %2290 = vmatprep.subr.bf16.mxu0 %v1136
        %2291 = vmatpush1.bf16.msra.mxu0 %v1135
        %2292 = vmatprep.subr.bf16.mxu0 %v1140
        %2293 = vmatpush1.bf16.msra.mxu0 %v1139
        %2294 = vmatprep.subr.bf16.mxu0 %v1144
        %2295 = vmatpush1.bf16.msra.mxu0 %v1143
        %2296 = vmatprep.subr.bf16.mxu0 0
        %2297 = vmatpush1.bf16.msra.mxu0 0
        %2298 = vmatprep.subr.bf16.mxu0 0
        %2299 = vmatpush1.bf16.msra.mxu0 0
        %2300 = vmatprep.subr.bf16.mxu0 0
        %2301 = vmatpush1.bf16.msra.mxu0 0
        %2302 = vmatprep.subr.bf16.mxu0 0
        %2303 = vmatpush1.bf16.msra.mxu0 0
        %2304 = vmatprep.subr.bf16.mxu0 0
        %2305 = vmatpush1.bf16.msra.mxu0 0
        %2306 = vmatprep.subr.bf16.mxu0 0
        %2307 = vmatpush1.bf16.msra.mxu0 0
        %2308 = vmatprep.subr.bf16.mxu0 0
        %2309 = vmatpush1.bf16.msra.mxu0 0
        %2310 = vmatprep.subr.bf16.mxu0 0
        %2311 = vmatpush1.bf16.msra.mxu0 0
        %2312 = vmatprep.mubr.bf16.mxu0 0
        %2313 = vmatmul.mubr.bf16.gmra.mrb[0].mxu0 %v2238
        %v2314 = vpop.f32.mrb[0].mxu0
        %v2315 = vadd.f32 0.0, %v2314
        %v2316 = vpop.f32.mrb[0].mxu0
        %v2317 = vadd.f32 0.0, %v2316
        %v2318 = vpop.f32.mrb[0].mxu0
        %v2319 = vpop.f32.mrb[0].mxu0
        %2320 = vdwg.mxu0
        %v2321 = vadd.f32 %v695, %v2274
        %v2322 = vadd.f32 %v697, %v2276
        %v2323 = vadd.f32 %v888, %v2315
        %v2324 = vadd.f32 %v890, %v2317
        %v2325 = vxor.u32 %v2321, 2147483648
        %v2326 = vmul.f32 %v2325, 1.442695
        %v2327 = vpow.pop %v2326
        %v2328 = vadd.f32 %v2327, 1.0
        %v2329 = vrcp.pop %v2328
        %v2330 = vmul.f32 1.0, %v2329
        %v2331 = vxor.u32 %v2322, 2147483648
        %v2332 = vmul.f32 %v2331, 1.442695
        %v2333 = vpow.pop %v2332
        %v2334 = vadd.f32 %v2333, 1.0
        %v2335 = vrcp.pop %v2334
        %v2336 = vmul.f32 1.0, %v2335
        %v2337 = vtanh.pop %v2323
        %v2338 = vxor.u32 %v2324, 2147483648
        %v2339 = vmul.f32 %v2338, 1.442695
        %v2340 = vpow.pop %v2339
        %v2341 = vadd.f32 %v2340, 1.0
        %v2342 = vrcp.pop %v2341
        %v2343 = vmul.f32 1.0, %v2342
        %v2344 = vmul.f32 %v2336, %v2169
        %v2345 = vmul.f32 %v2330, %v2337
        %v2346 = vadd.f32 %v2344, %v2345
        %v2347 = vtanh.pop %v2346
        %v2348 = vmul.f32 %v2343, %v2347
        %v2350 = vcombine.high %v2348, %v2348
        %v2352 = vunpack.c.l.s4 1966171168
        %v2353 = vunpack.c.0.s8 %v2352
        %v2354 = vlaneseq
        %v2355 = vshrl.u32 %v2354, 7
        %v2356 = vsub.s32 %v2353, %v2355
        %v2357 = vrot.slane %v2348, %v2356
        %v2359 = vunpack.c.l.s4 1966171168
        %v2360 = vunpack.c.0.s8 %v2359
        %v2361 = vlaneseq
        %v2362 = vshrl.u32 %v2361, 7
        %v2363 = vsub.s32 %v2360, %v2362
        %v2364 = vrot.slane %v2350, %v2363
        %v2365 = vcombine.high %v2357, %v2357
        %v2366 = vcombine.high %v2364, %v2364
        %v2368 = vunpack.c.l.s4 1966171168
        %v2369 = vunpack.c.0.s8 %v2368
        %v2370 = vlaneseq
        %v2371 = vshrl.u32 %v2370, 7
        %v2372 = vsub.s32 %v2369, %v2371
        %v2373 = vrot.slane %v2357, %v2372
        %v2375 = vunpack.c.l.s4 1966171168
        %v2376 = vunpack.c.0.s8 %v2375
        %v2377 = vlaneseq
        %v2378 = vshrl.u32 %v2377, 7
        %v2379 = vsub.s32 %v2376, %v2378
        %v2380 = vrot.slane %v2364, %v2379
        %v2382 = vunpack.c.l.s4 1966171168
        %v2383 = vunpack.c.0.s8 %v2382
        %v2384 = vlaneseq
        %v2385 = vshrl.u32 %v2384, 7
        %v2386 = vsub.s32 %v2383, %v2385
        %v2387 = vrot.slane %v2365, %v2386
        %v2389 = vunpack.c.l.s4 1966171168
        %v2390 = vunpack.c.0.s8 %v2389
        %v2391 = vlaneseq
        %v2392 = vshrl.u32 %v2391, 7
        %v2393 = vsub.s32 %v2390, %v2392
        %v2394 = vrot.slane %v2366, %v2393
        %v2395 = vcombine.high %v2373, %v2373
        %v2396 = vcombine.high %v2380, %v2380
        %v2397 = vcombine.high %v2387, %v2387
        %v2398 = vcombine.high %v2394, %v2394
        %2407 = vst [vmem:[%s244 + $0x6] sm:$0x1] %v2373
        %2408 = vst [vmem:[%s244 + $0x26] sm:$0x1] %v2387
        %2409 = vst [vmem:[%s244 + $0x46] sm:$0x1] %v2395
        %2410 = vst [vmem:[%s244 + $0x66] sm:$0x1] %v2397
        %2411 = vst [vmem:[%s244 + $0x86] sm:$0x1] %v2380
        %2412 = vst [vmem:[%s244 + $0xa6] sm:$0x1] %v2394
        %2413 = vst [vmem:[%s244 + $0xc6] sm:$0x1] %v2396
        %2414 = vst [vmem:[%s244 + $0xe6] sm:$0x1] %v2398
        %v2415 = vpack.c.bf16 %v2348, %v2348
        %2416 = vmatprep.subr.bf16.mxu0 %v1114
        %2417 = vmatpush1.bf16.msra.mxu0 %v1113
        %2418 = vmatprep.subr.bf16.mxu0 %v1118
        %2419 = vmatpush1.bf16.msra.mxu0 %v1117
        %2420 = vmatprep.subr.bf16.mxu0 %v1122
        %2421 = vmatpush1.bf16.msra.mxu0 %v1121
        %2422 = vmatprep.subr.bf16.mxu0 %v1126
        %2423 = vmatpush1.bf16.msra.mxu0 %v1125
        %2424 = vmatprep.subr.bf16.mxu0 %v1130
        %2425 = vmatpush1.bf16.msra.mxu0 %v1129
        %2426 = vmatprep.subr.bf16.mxu0 %v1134
        %2427 = vmatpush1.bf16.msra.mxu0 %v1133
        %2428 = vmatprep.subr.bf16.mxu0 %v1138
        %2429 = vmatpush1.bf16.msra.mxu0 %v1137
        %2430 = vmatprep.subr.bf16.mxu0 %v1142
        %2431 = vmatpush1.bf16.msra.mxu0 %v1141
        %2432 = vmatprep.subr.bf16.mxu0 0
        %2433 = vmatpush1.bf16.msra.mxu0 0
        %2434 = vmatprep.subr.bf16.mxu0 0
        %2435 = vmatpush1.bf16.msra.mxu0 0
        %2436 = vmatprep.subr.bf16.mxu0 0
        %2437 = vmatpush1.bf16.msra.mxu0 0
        %2438 = vmatprep.subr.bf16.mxu0 0
        %2439 = vmatpush1.bf16.msra.mxu0 0
        %2440 = vmatprep.subr.bf16.mxu0 0
        %2441 = vmatpush1.bf16.msra.mxu0 0
        %2442 = vmatprep.subr.bf16.mxu0 0
        %2443 = vmatpush1.bf16.msra.mxu0 0
        %2444 = vmatprep.subr.bf16.mxu0 0
        %2445 = vmatpush1.bf16.msra.mxu0 0
        %2446 = vmatprep.subr.bf16.mxu0 0
        %2447 = vmatpush1.bf16.msra.mxu0 0
        %2448 = vmatprep.mubr.bf16.mxu0 0
        %2449 = vmatmul.mubr.bf16.gmra.mrb[0].mxu0 %v2415
        %v2450 = vpop.f32.mrb[0].mxu0
        %v2451 = vadd.f32 0.0, %v2450
        %v2452 = vpop.f32.mrb[0].mxu0
        %v2453 = vadd.f32 0.0, %v2452
        %v2454 = vpop.f32.mrb[0].mxu0
        %v2455 = vpop.f32.mrb[0].mxu0
        %2456 = vdwg.mxu0
        %2457 = vmatprep.subr.bf16.mxu0 %v1116
        %2458 = vmatpush1.bf16.msra.mxu0 %v1115
        %2459 = vmatprep.subr.bf16.mxu0 %v1120
        %2460 = vmatpush1.bf16.msra.mxu0 %v1119
        %2461 = vmatprep.subr.bf16.mxu0 %v1124
        %2462 = vmatpush1.bf16.msra.mxu0 %v1123
        %2463 = vmatprep.subr.bf16.mxu0 %v1128
        %2464 = vmatpush1.bf16.msra.mxu0 %v1127
        %2465 = vmatprep.subr.bf16.mxu0 %v1132
        %2466 = vmatpush1.bf16.msra.mxu0 %v1131
        %2467 = vmatprep.subr.bf16.mxu0 %v1136
        %2468 = vmatpush1.bf16.msra.mxu0 %v1135
        %2469 = vmatprep.subr.bf16.mxu0 %v1140
        %2470 = vmatpush1.bf16.msra.mxu0 %v1139
        %2471 = vmatprep.subr.bf16.mxu0 %v1144
        %2472 = vmatpush1.bf16.msra.mxu0 %v1143
        %2473 = vmatprep.subr.bf16.mxu0 0
        %2474 = vmatpush1.bf16.msra.mxu0 0
        %2475 = vmatprep.subr.bf16.mxu0 0
        %2476 = vmatpush1.bf16.msra.mxu0 0
        %2477 = vmatprep.subr.bf16.mxu0 0
        %2478 = vmatpush1.bf16.msra.mxu0 0
        %2479 = vmatprep.subr.bf16.mxu0 0
        %2480 = vmatpush1.bf16.msra.mxu0 0
        %2481 = vmatprep.subr.bf16.mxu0 0
        %2482 = vmatpush1.bf16.msra.mxu0 0
        %2483 = vmatprep.subr.bf16.mxu0 0
        %2484 = vmatpush1.bf16.msra.mxu0 0
        %2485 = vmatprep.subr.bf16.mxu0 0
        %2486 = vmatpush1.bf16.msra.mxu0 0
        %2487 = vmatprep.subr.bf16.mxu0 0
        %2488 = vmatpush1.bf16.msra.mxu0 0
        %2489 = vmatprep.mubr.bf16.mxu0 0
        %2490 = vmatmul.mubr.bf16.gmra.mrb[0].mxu0 %v2415
        %v2491 = vpop.f32.mrb[0].mxu0
        %v2492 = vadd.f32 0.0, %v2491
        %v2493 = vpop.f32.mrb[0].mxu0
        %v2494 = vadd.f32 0.0, %v2493
        %v2495 = vpop.f32.mrb[0].mxu0
        %v2496 = vpop.f32.mrb[0].mxu0
        %2497 = vdwg.mxu0
        %v2498 = vadd.f32 %v699, %v2451
        %v2499 = vadd.f32 %v701, %v2453
        %v2500 = vadd.f32 %v892, %v2492
        %v2501 = vadd.f32 %v894, %v2494
        %v2502 = vxor.u32 %v2498, 2147483648
        %v2503 = vmul.f32 %v2502, 1.442695
        %v2504 = vpow.pop %v2503
        %v2505 = vadd.f32 %v2504, 1.0
        %v2506 = vrcp.pop %v2505
        %v2507 = vmul.f32 1.0, %v2506
        %v2508 = vxor.u32 %v2499, 2147483648
        %v2509 = vmul.f32 %v2508, 1.442695
        %v2510 = vpow.pop %v2509
        %v2511 = vadd.f32 %v2510, 1.0
        %v2512 = vrcp.pop %v2511
        %v2513 = vmul.f32 1.0, %v2512
        %v2514 = vtanh.pop %v2500
        %v2515 = vxor.u32 %v2501, 2147483648
        %v2516 = vmul.f32 %v2515, 1.442695
        %v2517 = vpow.pop %v2516
        %v2518 = vadd.f32 %v2517, 1.0
        %v2519 = vrcp.pop %v2518
        %v2520 = vmul.f32 1.0, %v2519
        %v2521 = vmul.f32 %v2513, %v2346
        %v2522 = vmul.f32 %v2507, %v2514
        %v2523 = vadd.f32 %v2521, %v2522
        %v2524 = vtanh.pop %v2523
        %v2525 = vmul.f32 %v2520, %v2524
        %v2527 = vcombine.high %v2525, %v2525
        %v2529 = vunpack.c.l.s4 1966171168
        %v2530 = vunpack.c.0.s8 %v2529
        %v2531 = vlaneseq
        %v2532 = vshrl.u32 %v2531, 7
        %v2533 = vsub.s32 %v2530, %v2532
        %v2534 = vrot.slane %v2525, %v2533
        %v2536 = vunpack.c.l.s4 1966171168
        %v2537 = vunpack.c.0.s8 %v2536
        %v2538 = vlaneseq
        %v2539 = vshrl.u32 %v2538, 7
        %v2540 = vsub.s32 %v2537, %v2539
        %v2541 = vrot.slane %v2527, %v2540
        %v2542 = vcombine.high %v2534, %v2534
        %v2543 = vcombine.high %v2541, %v2541
        %v2545 = vunpack.c.l.s4 1966171168
        %v2546 = vunpack.c.0.s8 %v2545
        %v2547 = vlaneseq
        %v2548 = vshrl.u32 %v2547, 7
        %v2549 = vsub.s32 %v2546, %v2548
        %v2550 = vrot.slane %v2534, %v2549
        %v2552 = vunpack.c.l.s4 1966171168
        %v2553 = vunpack.c.0.s8 %v2552
        %v2554 = vlaneseq
        %v2555 = vshrl.u32 %v2554, 7
        %v2556 = vsub.s32 %v2553, %v2555
        %v2557 = vrot.slane %v2541, %v2556
        %v2559 = vunpack.c.l.s4 1966171168
        %v2560 = vunpack.c.0.s8 %v2559
        %v2561 = vlaneseq
        %v2562 = vshrl.u32 %v2561, 7
        %v2563 = vsub.s32 %v2560, %v2562
        %v2564 = vrot.slane %v2542, %v2563
        %v2566 = vunpack.c.l.s4 1966171168
        %v2567 = vunpack.c.0.s8 %v2566
        %v2568 = vlaneseq
        %v2569 = vshrl.u32 %v2568, 7
        %v2570 = vsub.s32 %v2567, %v2569
        %v2571 = vrot.slane %v2543, %v2570
        %v2572 = vcombine.high %v2550, %v2550
        %v2573 = vcombine.high %v2557, %v2557
        %v2574 = vcombine.high %v2564, %v2564
        %v2575 = vcombine.high %v2571, %v2571
        %2584 = vst [vmem:[%s244 + $0x7] sm:$0x1] %v2550
        %2585 = vst [vmem:[%s244 + $0x27] sm:$0x1] %v2564
        %2586 = vst [vmem:[%s244 + $0x47] sm:$0x1] %v2572
        %2587 = vst [vmem:[%s244 + $0x67] sm:$0x1] %v2574
        %2588 = vst [vmem:[%s244 + $0x87] sm:$0x1] %v2557
        %2589 = vst [vmem:[%s244 + $0xa7] sm:$0x1] %v2571
        %2590 = vst [vmem:[%s244 + $0xc7] sm:$0x1] %v2573
        %2591 = vst [vmem:[%s244 + $0xe7] sm:$0x1] %v2575
        %v2592 = vpack.c.bf16 %v2525, %v2525
        %2593 = vmatprep.subr.bf16.mxu0 %v1114
        %2594 = vmatpush1.bf16.msra.mxu0 %v1113
        %2595 = vmatprep.subr.bf16.mxu0 %v1118
        %2596 = vmatpush1.bf16.msra.mxu0 %v1117
        %2597 = vmatprep.subr.bf16.mxu0 %v1122
        %2598 = vmatpush1.bf16.msra.mxu0 %v1121
        %2599 = vmatprep.subr.bf16.mxu0 %v1126
        %2600 = vmatpush1.bf16.msra.mxu0 %v1125
        %2601 = vmatprep.subr.bf16.mxu0 %v1130
        %2602 = vmatpush1.bf16.msra.mxu0 %v1129
        %2603 = vmatprep.subr.bf16.mxu0 %v1134
        %2604 = vmatpush1.bf16.msra.mxu0 %v1133
        %2605 = vmatprep.subr.bf16.mxu0 %v1138
        %2606 = vmatpush1.bf16.msra.mxu0 %v1137
        %2607 = vmatprep.subr.bf16.mxu0 %v1142
        %2608 = vmatpush1.bf16.msra.mxu0 %v1141
        %2609 = vmatprep.subr.bf16.mxu0 0
        %2610 = vmatpush1.bf16.msra.mxu0 0
        %2611 = vmatprep.subr.bf16.mxu0 0
        %2612 = vmatpush1.bf16.msra.mxu0 0
        %2613 = vmatprep.subr.bf16.mxu0 0
        %2614 = vmatpush1.bf16.msra.mxu0 0
        %2615 = vmatprep.subr.bf16.mxu0 0
        %2616 = vmatpush1.bf16.msra.mxu0 0
        %2617 = vmatprep.subr.bf16.mxu0 0
        %2618 = vmatpush1.bf16.msra.mxu0 0
        %2619 = vmatprep.subr.bf16.mxu0 0
        %2620 = vmatpush1.bf16.msra.mxu0 0
        %2621 = vmatprep.subr.bf16.mxu0 0
        %2622 = vmatpush1.bf16.msra.mxu0 0
        %2623 = vmatprep.subr.bf16.mxu0 0
        %2624 = vmatpush1.bf16.msra.mxu0 0
        %2625 = vmatprep.mubr.bf16.mxu0 0
        %2626 = vmatmul.mubr.bf16.gmra.mrb[0].mxu0 %v2592
        %v2627 = vpop.f32.mrb[0].mxu0
        %v2628 = vadd.f32 0.0, %v2627
        %v2629 = vpop.f32.mrb[0].mxu0
        %v2630 = vadd.f32 0.0, %v2629
        %v2631 = vpop.f32.mrb[0].mxu0
        %v2632 = vpop.f32.mrb[0].mxu0
        %2633 = vdwg.mxu0
        %2634 = vmatprep.subr.bf16.mxu0 %v1116
        %2635 = vmatpush1.bf16.msra.mxu0 %v1115
        %2636 = vmatprep.subr.bf16.mxu0 %v1120
        %2637 = vmatpush1.bf16.msra.mxu0 %v1119
        %2638 = vmatprep.subr.bf16.mxu0 %v1124
        %2639 = vmatpush1.bf16.msra.mxu0 %v1123
        %2640 = vmatprep.subr.bf16.mxu0 %v1128
        %2641 = vmatpush1.bf16.msra.mxu0 %v1127
        %2642 = vmatprep.subr.bf16.mxu0 %v1132
        %2643 = vmatpush1.bf16.msra.mxu0 %v1131
        %2644 = vmatprep.subr.bf16.mxu0 %v1136
        %2645 = vmatpush1.bf16.msra.mxu0 %v1135
        %2646 = vmatprep.subr.bf16.mxu0 %v1140
        %2647 = vmatpush1.bf16.msra.mxu0 %v1139
        %2648 = vmatprep.subr.bf16.mxu0 %v1144
        %2649 = vmatpush1.bf16.msra.mxu0 %v1143
        %2650 = vmatprep.subr.bf16.mxu0 0
        %2651 = vmatpush1.bf16.msra.mxu0 0
        %2652 = vmatprep.subr.bf16.mxu0 0
        %2653 = vmatpush1.bf16.msra.mxu0 0
        %2654 = vmatprep.subr.bf16.mxu0 0
        %2655 = vmatpush1.bf16.msra.mxu0 0
        %2656 = vmatprep.subr.bf16.mxu0 0
        %2657 = vmatpush1.bf16.msra.mxu0 0
        %2658 = vmatprep.subr.bf16.mxu0 0
        %2659 = vmatpush1.bf16.msra.mxu0 0
        %2660 = vmatprep.subr.bf16.mxu0 0
        %2661 = vmatpush1.bf16.msra.mxu0 0
        %2662 = vmatprep.subr.bf16.mxu0 0
        %2663 = vmatpush1.bf16.msra.mxu0 0
        %2664 = vmatprep.subr.bf16.mxu0 0
        %2665 = vmatpush1.bf16.msra.mxu0 0
        %2666 = vmatprep.mubr.bf16.mxu0 0
        %2667 = vmatmul.mubr.bf16.gmra.mrb[0].mxu0 %v2592
        %v2668 = vpop.f32.mrb[0].mxu0
        %v2669 = vadd.f32 0.0, %v2668
        %v2670 = vpop.f32.mrb[0].mxu0
        %v2671 = vadd.f32 0.0, %v2670
        %v2672 = vpop.f32.mrb[0].mxu0
        %v2673 = vpop.f32.mrb[0].mxu0
        %2674 = vdwg.mxu0
        %v2675 = vadd.f32 %v705, %v2628
        %v2676 = vadd.f32 %v707, %v2630
        %v2677 = vadd.f32 %v898, %v2669
        %v2678 = vadd.f32 %v900, %v2671
        %v2679 = vxor.u32 %v2675, 2147483648
        %v2680 = vmul.f32 %v2679, 1.442695
        %v2681 = vpow.pop %v2680
        %v2682 = vadd.f32 %v2681, 1.0
        %v2683 = vrcp.pop %v2682
        %v2684 = vmul.f32 1.0, %v2683
        %v2685 = vxor.u32 %v2676, 2147483648
        %v2686 = vmul.f32 %v2685, 1.442695
        %v2687 = vpow.pop %v2686
        %v2688 = vadd.f32 %v2687, 1.0
        %v2689 = vrcp.pop %v2688
        %v2690 = vmul.f32 1.0, %v2689
        %v2691 = vtanh.pop %v2677
        %v2692 = vxor.u32 %v2678, 2147483648
        %v2693 = vmul.f32 %v2692, 1.442695
        %v2694 = vpow.pop %v2693
        %v2695 = vadd.f32 %v2694, 1.0
        %v2696 = vrcp.pop %v2695
        %v2697 = vmul.f32 1.0, %v2696
        %v2698 = vmul.f32 %v2690, %v2523
        %v2699 = vmul.f32 %v2684, %v2691
        %v2700 = vadd.f32 %v2698, %v2699
        %v2701 = vtanh.pop %v2700
        %v2702 = vmul.f32 %v2697, %v2701
        %v2704 = vcombine.high %v2702, %v2702
        %v2706 = vunpack.c.l.s4 1966171168
        %v2707 = vunpack.c.0.s8 %v2706
        %v2708 = vlaneseq
        %v2709 = vshrl.u32 %v2708, 7
        %v2710 = vsub.s32 %v2707, %v2709
        %v2711 = vrot.slane %v2702, %v2710
        %v2713 = vunpack.c.l.s4 1966171168
        %v2714 = vunpack.c.0.s8 %v2713
        %v2715 = vlaneseq
        %v2716 = vshrl.u32 %v2715, 7
        %v2717 = vsub.s32 %v2714, %v2716
        %v2718 = vrot.slane %v2704, %v2717
        %v2719 = vcombine.high %v2711, %v2711
        %v2720 = vcombine.high %v2718, %v2718
        %v2722 = vunpack.c.l.s4 1966171168
        %v2723 = vunpack.c.0.s8 %v2722
        %v2724 = vlaneseq
        %v2725 = vshrl.u32 %v2724, 7
        %v2726 = vsub.s32 %v2723, %v2725
        %v2727 = vrot.slane %v2711, %v2726
        %v2729 = vunpack.c.l.s4 1966171168
        %v2730 = vunpack.c.0.s8 %v2729
        %v2731 = vlaneseq
        %v2732 = vshrl.u32 %v2731, 7
        %v2733 = vsub.s32 %v2730, %v2732
        %v2734 = vrot.slane %v2718, %v2733
        %v2736 = vunpack.c.l.s4 1966171168
        %v2737 = vunpack.c.0.s8 %v2736
        %v2738 = vlaneseq
        %v2739 = vshrl.u32 %v2738, 7
        %v2740 = vsub.s32 %v2737, %v2739
        %v2741 = vrot.slane %v2719, %v2740
        %v2743 = vunpack.c.l.s4 1966171168
        %v2744 = vunpack.c.0.s8 %v2743
        %v2745 = vlaneseq
        %v2746 = vshrl.u32 %v2745, 7
        %v2747 = vsub.s32 %v2744, %v2746
        %v2748 = vrot.slane %v2720, %v2747
        %v2749 = vcombine.high %v2727, %v2727
        %v2750 = vcombine.high %v2734, %v2734
        %v2751 = vcombine.high %v2741, %v2741
        %v2752 = vcombine.high %v2748, %v2748
        %2761 = vst [vmem:[%s244 + $0x8] sm:$0x1] %v2727
        %2762 = vst [vmem:[%s244 + $0x28] sm:$0x1] %v2741
        %2763 = vst [vmem:[%s244 + $0x48] sm:$0x1] %v2749
        %2764 = vst [vmem:[%s244 + $0x68] sm:$0x1] %v2751
        %2765 = vst [vmem:[%s244 + $0x88] sm:$0x1] %v2734
        %2766 = vst [vmem:[%s244 + $0xa8] sm:$0x1] %v2748
        %2767 = vst [vmem:[%s244 + $0xc8] sm:$0x1] %v2750
        %2768 = vst [vmem:[%s244 + $0xe8] sm:$0x1] %v2752
        %v2769 = vpack.c.bf16 %v2702, %v2702
        %2770 = vmatprep.subr.bf16.mxu0 %v1114
        %2771 = vmatpush1.bf16.msra.mxu0 %v1113
        %2772 = vmatprep.subr.bf16.mxu0 %v1118
        %2773 = vmatpush1.bf16.msra.mxu0 %v1117
        %2774 = vmatprep.subr.bf16.mxu0 %v1122
        %2775 = vmatpush1.bf16.msra.mxu0 %v1121
        %2776 = vmatprep.subr.bf16.mxu0 %v1126
        %2777 = vmatpush1.bf16.msra.mxu0 %v1125
        %2778 = vmatprep.subr.bf16.mxu0 %v1130
        %2779 = vmatpush1.bf16.msra.mxu0 %v1129
        %2780 = vmatprep.subr.bf16.mxu0 %v1134
        %2781 = vmatpush1.bf16.msra.mxu0 %v1133
        %2782 = vmatprep.subr.bf16.mxu0 %v1138
        %2783 = vmatpush1.bf16.msra.mxu0 %v1137
        %2784 = vmatprep.subr.bf16.mxu0 %v1142
        %2785 = vmatpush1.bf16.msra.mxu0 %v1141
        %2786 = vmatprep.subr.bf16.mxu0 0
        %2787 = vmatpush1.bf16.msra.mxu0 0
        %2788 = vmatprep.subr.bf16.mxu0 0
        %2789 = vmatpush1.bf16.msra.mxu0 0
        %2790 = vmatprep.subr.bf16.mxu0 0
        %2791 = vmatpush1.bf16.msra.mxu0 0
        %2792 = vmatprep.subr.bf16.mxu0 0
        %2793 = vmatpush1.bf16.msra.mxu0 0
        %2794 = vmatprep.subr.bf16.mxu0 0
        %2795 = vmatpush1.bf16.msra.mxu0 0
        %2796 = vmatprep.subr.bf16.mxu0 0
        %2797 = vmatpush1.bf16.msra.mxu0 0
        %2798 = vmatprep.subr.bf16.mxu0 0
        %2799 = vmatpush1.bf16.msra.mxu0 0
        %2800 = vmatprep.subr.bf16.mxu0 0
        %2801 = vmatpush1.bf16.msra.mxu0 0
        %2802 = vmatprep.mubr.bf16.mxu0 0
        %2803 = vmatmul.mubr.bf16.gmra.mrb[0].mxu0 %v2769
        %v2804 = vpop.f32.mrb[0].mxu0
        %v2805 = vadd.f32 0.0, %v2804
        %v2806 = vpop.f32.mrb[0].mxu0
        %v2807 = vadd.f32 0.0, %v2806
        %v2808 = vpop.f32.mrb[0].mxu0
        %v2809 = vpop.f32.mrb[0].mxu0
        %2810 = vdwg.mxu0
        %2811 = vmatprep.subr.bf16.mxu0 %v1116
        %2812 = vmatpush1.bf16.msra.mxu0 %v1115
        %2813 = vmatprep.subr.bf16.mxu0 %v1120
        %2814 = vmatpush1.bf16.msra.mxu0 %v1119
        %2815 = vmatprep.subr.bf16.mxu0 %v1124
        %2816 = vmatpush1.bf16.msra.mxu0 %v1123
        %2817 = vmatprep.subr.bf16.mxu0 %v1128
        %2818 = vmatpush1.bf16.msra.mxu0 %v1127
        %2819 = vmatprep.subr.bf16.mxu0 %v1132
        %2820 = vmatpush1.bf16.msra.mxu0 %v1131
        %2821 = vmatprep.subr.bf16.mxu0 %v1136
        %2822 = vmatpush1.bf16.msra.mxu0 %v1135
        %2823 = vmatprep.subr.bf16.mxu0 %v1140
        %2824 = vmatpush1.bf16.msra.mxu0 %v1139
        %2825 = vmatprep.subr.bf16.mxu0 %v1144
        %2826 = vmatpush1.bf16.msra.mxu0 %v1143
        %2827 = vmatprep.subr.bf16.mxu0 0
        %2828 = vmatpush1.bf16.msra.mxu0 0
        %2829 = vmatprep.subr.bf16.mxu0 0
        %2830 = vmatpush1.bf16.msra.mxu0 0
        %2831 = vmatprep.subr.bf16.mxu0 0
        %2832 = vmatpush1.bf16.msra.mxu0 0
        %2833 = vmatprep.subr.bf16.mxu0 0
        %2834 = vmatpush1.bf16.msra.mxu0 0
        %2835 = vmatprep.subr.bf16.mxu0 0
        %2836 = vmatpush1.bf16.msra.mxu0 0
        %2837 = vmatprep.subr.bf16.mxu0 0
        %2838 = vmatpush1.bf16.msra.mxu0 0
        %2839 = vmatprep.subr.bf16.mxu0 0
        %2840 = vmatpush1.bf16.msra.mxu0 0
        %2841 = vmatprep.subr.bf16.mxu0 0
        %2842 = vmatpush1.bf16.msra.mxu0 0
        %2843 = vmatprep.mubr.bf16.mxu0 0
        %2844 = vmatmul.mubr.bf16.gmra.mrb[0].mxu0 %v2769
        %v2845 = vpop.f32.mrb[0].mxu0
        %v2846 = vadd.f32 0.0, %v2845
        %v2847 = vpop.f32.mrb[0].mxu0
        %v2848 = vadd.f32 0.0, %v2847
        %v2849 = vpop.f32.mrb[0].mxu0
        %v2850 = vpop.f32.mrb[0].mxu0
        %2851 = vdwg.mxu0
        %v2852 = vadd.f32 %v709, %v2805
        %v2853 = vadd.f32 %v711, %v2807
        %v2854 = vadd.f32 %v902, %v2846
        %v2855 = vadd.f32 %v904, %v2848
        %v2856 = vxor.u32 %v2852, 2147483648
        %v2857 = vmul.f32 %v2856, 1.442695
        %v2858 = vpow.pop %v2857
        %v2859 = vadd.f32 %v2858, 1.0
        %v2860 = vrcp.pop %v2859
        %v2861 = vmul.f32 1.0, %v2860
        %v2862 = vxor.u32 %v2853, 2147483648
        %v2863 = vmul.f32 %v2862, 1.442695
        %v2864 = vpow.pop %v2863
        %v2865 = vadd.f32 %v2864, 1.0
        %v2866 = vrcp.pop %v2865
        %v2867 = vmul.f32 1.0, %v2866
        %v2868 = vtanh.pop %v2854
        %v2869 = vxor.u32 %v2855, 2147483648
        %v2870 = vmul.f32 %v2869, 1.442695
        %v2871 = vpow.pop %v2870
        %v2872 = vadd.f32 %v2871, 1.0
        %v2873 = vrcp.pop %v2872
        %v2874 = vmul.f32 1.0, %v2873
        %v2875 = vmul.f32 %v2867, %v2700
        %v2876 = vmul.f32 %v2861, %v2868
        %v2877 = vadd.f32 %v2875, %v2876
        %v2878 = vtanh.pop %v2877
        %v2879 = vmul.f32 %v2874, %v2878
        %v2881 = vcombine.high %v2879, %v2879
        %v2883 = vunpack.c.l.s4 1966171168
        %v2884 = vunpack.c.0.s8 %v2883
        %v2885 = vlaneseq
        %v2886 = vshrl.u32 %v2885, 7
        %v2887 = vsub.s32 %v2884, %v2886
        %v2888 = vrot.slane %v2879, %v2887
        %v2890 = vunpack.c.l.s4 1966171168
        %v2891 = vunpack.c.0.s8 %v2890
        %v2892 = vlaneseq
        %v2893 = vshrl.u32 %v2892, 7
        %v2894 = vsub.s32 %v2891, %v2893
        %v2895 = vrot.slane %v2881, %v2894
        %v2896 = vcombine.high %v2888, %v2888
        %v2897 = vcombine.high %v2895, %v2895
        %v2899 = vunpack.c.l.s4 1966171168
        %v2900 = vunpack.c.0.s8 %v2899
        %v2901 = vlaneseq
        %v2902 = vshrl.u32 %v2901, 7
        %v2903 = vsub.s32 %v2900, %v2902
        %v2904 = vrot.slane %v2888, %v2903
        %v2906 = vunpack.c.l.s4 1966171168
        %v2907 = vunpack.c.0.s8 %v2906
        %v2908 = vlaneseq
        %v2909 = vshrl.u32 %v2908, 7
        %v2910 = vsub.s32 %v2907, %v2909
        %v2911 = vrot.slane %v2895, %v2910
        %v2913 = vunpack.c.l.s4 1966171168
        %v2914 = vunpack.c.0.s8 %v2913
        %v2915 = vlaneseq
        %v2916 = vshrl.u32 %v2915, 7
        %v2917 = vsub.s32 %v2914, %v2916
        %v2918 = vrot.slane %v2896, %v2917
        %v2920 = vunpack.c.l.s4 1966171168
        %v2921 = vunpack.c.0.s8 %v2920
        %v2922 = vlaneseq
        %v2923 = vshrl.u32 %v2922, 7
        %v2924 = vsub.s32 %v2921, %v2923
        %v2925 = vrot.slane %v2897, %v2924
        %v2926 = vcombine.high %v2904, %v2904
        %v2927 = vcombine.high %v2911, %v2911
        %v2928 = vcombine.high %v2918, %v2918
        %v2929 = vcombine.high %v2925, %v2925
        %2938 = vst [vmem:[%s244 + $0x9] sm:$0x1] %v2904
        %2939 = vst [vmem:[%s244 + $0x29] sm:$0x1] %v2918
        %2940 = vst [vmem:[%s244 + $0x49] sm:$0x1] %v2926
        %2941 = vst [vmem:[%s244 + $0x69] sm:$0x1] %v2928
        %2942 = vst [vmem:[%s244 + $0x89] sm:$0x1] %v2911
        %2943 = vst [vmem:[%s244 + $0xa9] sm:$0x1] %v2925
        %2944 = vst [vmem:[%s244 + $0xc9] sm:$0x1] %v2927
        %2945 = vst [vmem:[%s244 + $0xe9] sm:$0x1] %v2929
        %v2946 = vpack.c.bf16 %v2879, %v2879
        %2947 = vmatprep.subr.bf16.mxu0 %v1114
        %2948 = vmatpush1.bf16.msra.mxu0 %v1113
        %2949 = vmatprep.subr.bf16.mxu0 %v1118
        %2950 = vmatpush1.bf16.msra.mxu0 %v1117
        %2951 = vmatprep.subr.bf16.mxu0 %v1122
        %2952 = vmatpush1.bf16.msra.mxu0 %v1121
        %2953 = vmatprep.subr.bf16.mxu0 %v1126
        %2954 = vmatpush1.bf16.msra.mxu0 %v1125
        %2955 = vmatprep.subr.bf16.mxu0 %v1130
        %2956 = vmatpush1.bf16.msra.mxu0 %v1129
        %2957 = vmatprep.subr.bf16.mxu0 %v1134
        %2958 = vmatpush1.bf16.msra.mxu0 %v1133
        %2959 = vmatprep.subr.bf16.mxu0 %v1138
        %2960 = vmatpush1.bf16.msra.mxu0 %v1137
        %2961 = vmatprep.subr.bf16.mxu0 %v1142
        %2962 = vmatpush1.bf16.msra.mxu0 %v1141
        %2963 = vmatprep.subr.bf16.mxu0 0
        %2964 = vmatpush1.bf16.msra.mxu0 0
        %2965 = vmatprep.subr.bf16.mxu0 0
        %2966 = vmatpush1.bf16.msra.mxu0 0
        %2967 = vmatprep.subr.bf16.mxu0 0
        %2968 = vmatpush1.bf16.msra.mxu0 0
        %2969 = vmatprep.subr.bf16.mxu0 0
        %2970 = vmatpush1.bf16.msra.mxu0 0
        %2971 = vmatprep.subr.bf16.mxu0 0
        %2972 = vmatpush1.bf16.msra.mxu0 0
        %2973 = vmatprep.subr.bf16.mxu0 0
        %2974 = vmatpush1.bf16.msra.mxu0 0
        %2975 = vmatprep.subr.bf16.mxu0 0
        %2976 = vmatpush1.bf16.msra.mxu0 0
        %2977 = vmatprep.subr.bf16.mxu0 0
        %2978 = vmatpush1.bf16.msra.mxu0 0
        %2979 = vmatprep.mubr.bf16.mxu0 0
        %2980 = vmatmul.mubr.bf16.gmra.mrb[0].mxu0 %v2946
        %v2981 = vpop.f32.mrb[0].mxu0
        %v2982 = vadd.f32 0.0, %v2981
        %v2983 = vpop.f32.mrb[0].mxu0
        %v2984 = vadd.f32 0.0, %v2983
        %v2985 = vpop.f32.mrb[0].mxu0
        %v2986 = vpop.f32.mrb[0].mxu0
        %2987 = vdwg.mxu0
        %2988 = vmatprep.subr.bf16.mxu0 %v1116
        %2989 = vmatpush1.bf16.msra.mxu0 %v1115
        %2990 = vmatprep.subr.bf16.mxu0 %v1120
        %2991 = vmatpush1.bf16.msra.mxu0 %v1119
        %2992 = vmatprep.subr.bf16.mxu0 %v1124
        %2993 = vmatpush1.bf16.msra.mxu0 %v1123
        %2994 = vmatprep.subr.bf16.mxu0 %v1128
        %2995 = vmatpush1.bf16.msra.mxu0 %v1127
        %2996 = vmatprep.subr.bf16.mxu0 %v1132
        %2997 = vmatpush1.bf16.msra.mxu0 %v1131
        %2998 = vmatprep.subr.bf16.mxu0 %v1136
        %2999 = vmatpush1.bf16.msra.mxu0 %v1135
        %3000 = vmatprep.subr.bf16.mxu0 %v1140
        %3001 = vmatpush1.bf16.msra.mxu0 %v1139
        %3002 = vmatprep.subr.bf16.mxu0 %v1144
        %3003 = vmatpush1.bf16.msra.mxu0 %v1143
        %3004 = vmatprep.subr.bf16.mxu0 0
        %3005 = vmatpush1.bf16.msra.mxu0 0
        %3006 = vmatprep.subr.bf16.mxu0 0
        %3007 = vmatpush1.bf16.msra.mxu0 0
        %3008 = vmatprep.subr.bf16.mxu0 0
        %3009 = vmatpush1.bf16.msra.mxu0 0
        %3010 = vmatprep.subr.bf16.mxu0 0
        %3011 = vmatpush1.bf16.msra.mxu0 0
        %3012 = vmatprep.subr.bf16.mxu0 0
        %3013 = vmatpush1.bf16.msra.mxu0 0
        %3014 = vmatprep.subr.bf16.mxu0 0
        %3015 = vmatpush1.bf16.msra.mxu0 0
        %3016 = vmatprep.subr.bf16.mxu0 0
        %3017 = vmatpush1.bf16.msra.mxu0 0
        %3018 = vmatprep.subr.bf16.mxu0 0
        %3019 = vmatpush1.bf16.msra.mxu0 0
        %3020 = vmatprep.mubr.bf16.mxu0 0
        %3021 = vmatmul.mubr.bf16.gmra.mrb[0].mxu0 %v2946
        %v3022 = vpop.f32.mrb[0].mxu0
        %v3023 = vadd.f32 0.0, %v3022
        %v3024 = vpop.f32.mrb[0].mxu0
        %v3025 = vadd.f32 0.0, %v3024
        %v3026 = vpop.f32.mrb[0].mxu0
        %v3027 = vpop.f32.mrb[0].mxu0
        %3028 = vdwg.mxu0
        %v3029 = vadd.f32 %v715, %v2982
        %v3030 = vadd.f32 %v717, %v2984
        %v3031 = vadd.f32 %v908, %v3023
        %v3032 = vadd.f32 %v910, %v3025
        %v3033 = vxor.u32 %v3029, 2147483648
        %v3034 = vmul.f32 %v3033, 1.442695
        %v3035 = vpow.pop %v3034
        %v3036 = vadd.f32 %v3035, 1.0
        %v3037 = vrcp.pop %v3036
        %v3038 = vmul.f32 1.0, %v3037
        %v3039 = vxor.u32 %v3030, 2147483648
        %v3040 = vmul.f32 %v3039, 1.442695
        %v3041 = vpow.pop %v3040
        %v3042 = vadd.f32 %v3041, 1.0
        %v3043 = vrcp.pop %v3042
        %v3044 = vmul.f32 1.0, %v3043
        %v3045 = vtanh.pop %v3031
        %v3046 = vxor.u32 %v3032, 2147483648
        %v3047 = vmul.f32 %v3046, 1.442695
        %v3048 = vpow.pop %v3047
        %v3049 = vadd.f32 %v3048, 1.0
        %v3050 = vrcp.pop %v3049
        %v3051 = vmul.f32 1.0, %v3050
        %v3052 = vmul.f32 %v3044, %v2877
        %v3053 = vmul.f32 %v3038, %v3045
        %v3054 = vadd.f32 %v3052, %v3053
        %v3055 = vtanh.pop %v3054
        %v3056 = vmul.f32 %v3051, %v3055
        %v3058 = vcombine.high %v3056, %v3056
        %v3060 = vunpack.c.l.s4 1966171168
        %v3061 = vunpack.c.0.s8 %v3060
        %v3062 = vlaneseq
        %v3063 = vshrl.u32 %v3062, 7
        %v3064 = vsub.s32 %v3061, %v3063
        %v3065 = vrot.slane %v3056, %v3064
        %v3067 = vunpack.c.l.s4 1966171168
        %v3068 = vunpack.c.0.s8 %v3067
        %v3069 = vlaneseq
        %v3070 = vshrl.u32 %v3069, 7
        %v3071 = vsub.s32 %v3068, %v3070
        %v3072 = vrot.slane %v3058, %v3071
        %v3073 = vcombine.high %v3065, %v3065
        %v3074 = vcombine.high %v3072, %v3072
        %v3076 = vunpack.c.l.s4 1966171168
        %v3077 = vunpack.c.0.s8 %v3076
        %v3078 = vlaneseq
        %v3079 = vshrl.u32 %v3078, 7
        %v3080 = vsub.s32 %v3077, %v3079
        %v3081 = vrot.slane %v3065, %v3080
        %v3083 = vunpack.c.l.s4 1966171168
        %v3084 = vunpack.c.0.s8 %v3083
        %v3085 = vlaneseq
        %v3086 = vshrl.u32 %v3085, 7
        %v3087 = vsub.s32 %v3084, %v3086
        %v3088 = vrot.slane %v3072, %v3087
        %v3090 = vunpack.c.l.s4 1966171168
        %v3091 = vunpack.c.0.s8 %v3090
        %v3092 = vlaneseq
        %v3093 = vshrl.u32 %v3092, 7
        %v3094 = vsub.s32 %v3091, %v3093
        %v3095 = vrot.slane %v3073, %v3094
        %v3097 = vunpack.c.l.s4 1966171168
        %v3098 = vunpack.c.0.s8 %v3097
        %v3099 = vlaneseq
        %v3100 = vshrl.u32 %v3099, 7
        %v3101 = vsub.s32 %v3098, %v3100
        %v3102 = vrot.slane %v3074, %v3101
        %v3103 = vcombine.high %v3081, %v3081
        %v3104 = vcombine.high %v3088, %v3088
        %v3105 = vcombine.high %v3095, %v3095
        %v3106 = vcombine.high %v3102, %v3102
        %3115 = vst [vmem:[%s244 + $0xa] sm:$0x1] %v3081
        %3116 = vst [vmem:[%s244 + $0x2a] sm:$0x1] %v3095
        %3117 = vst [vmem:[%s244 + $0x4a] sm:$0x1] %v3103
        %3118 = vst [vmem:[%s244 + $0x6a] sm:$0x1] %v3105
        %3119 = vst [vmem:[%s244 + $0x8a] sm:$0x1] %v3088
        %3120 = vst [vmem:[%s244 + $0xaa] sm:$0x1] %v3102
        %3121 = vst [vmem:[%s244 + $0xca] sm:$0x1] %v3104
        %3122 = vst [vmem:[%s244 + $0xea] sm:$0x1] %v3106
        %v3123 = vpack.c.bf16 %v3056, %v3056
        %3124 = vmatprep.subr.bf16.mxu0 %v1114
        %3125 = vmatpush1.bf16.msra.mxu0 %v1113
        %3126 = vmatprep.subr.bf16.mxu0 %v1118
        %3127 = vmatpush1.bf16.msra.mxu0 %v1117
        %3128 = vmatprep.subr.bf16.mxu0 %v1122
        %3129 = vmatpush1.bf16.msra.mxu0 %v1121
        %3130 = vmatprep.subr.bf16.mxu0 %v1126
        %3131 = vmatpush1.bf16.msra.mxu0 %v1125
        %3132 = vmatprep.subr.bf16.mxu0 %v1130
        %3133 = vmatpush1.bf16.msra.mxu0 %v1129
        %3134 = vmatprep.subr.bf16.mxu0 %v1134
        %3135 = vmatpush1.bf16.msra.mxu0 %v1133
        %3136 = vmatprep.subr.bf16.mxu0 %v1138
        %3137 = vmatpush1.bf16.msra.mxu0 %v1137
        %3138 = vmatprep.subr.bf16.mxu0 %v1142
        %3139 = vmatpush1.bf16.msra.mxu0 %v1141
        %3140 = vmatprep.subr.bf16.mxu0 0
        %3141 = vmatpush1.bf16.msra.mxu0 0
        %3142 = vmatprep.subr.bf16.mxu0 0
        %3143 = vmatpush1.bf16.msra.mxu0 0
        %3144 = vmatprep.subr.bf16.mxu0 0
        %3145 = vmatpush1.bf16.msra.mxu0 0
        %3146 = vmatprep.subr.bf16.mxu0 0
        %3147 = vmatpush1.bf16.msra.mxu0 0
        %3148 = vmatprep.subr.bf16.mxu0 0
        %3149 = vmatpush1.bf16.msra.mxu0 0
        %3150 = vmatprep.subr.bf16.mxu0 0
        %3151 = vmatpush1.bf16.msra.mxu0 0
        %3152 = vmatprep.subr.bf16.mxu0 0
        %3153 = vmatpush1.bf16.msra.mxu0 0
        %3154 = vmatprep.subr.bf16.mxu0 0
        %3155 = vmatpush1.bf16.msra.mxu0 0
        %3156 = vmatprep.mubr.bf16.mxu0 0
        %3157 = vmatmul.mubr.bf16.gmra.mrb[0].mxu0 %v3123
        %v3158 = vpop.f32.mrb[0].mxu0
        %v3159 = vadd.f32 0.0, %v3158
        %v3160 = vpop.f32.mrb[0].mxu0
        %v3161 = vadd.f32 0.0, %v3160
        %v3162 = vpop.f32.mrb[0].mxu0
        %v3163 = vpop.f32.mrb[0].mxu0
        %3164 = vdwg.mxu0
        %3165 = vmatprep.subr.bf16.mxu0 %v1116
        %3166 = vmatpush1.bf16.msra.mxu0 %v1115
        %3167 = vmatprep.subr.bf16.mxu0 %v1120
        %3168 = vmatpush1.bf16.msra.mxu0 %v1119
        %3169 = vmatprep.subr.bf16.mxu0 %v1124
        %3170 = vmatpush1.bf16.msra.mxu0 %v1123
        %3171 = vmatprep.subr.bf16.mxu0 %v1128
        %3172 = vmatpush1.bf16.msra.mxu0 %v1127
        %3173 = vmatprep.subr.bf16.mxu0 %v1132
        %3174 = vmatpush1.bf16.msra.mxu0 %v1131
        %3175 = vmatprep.subr.bf16.mxu0 %v1136
        %3176 = vmatpush1.bf16.msra.mxu0 %v1135
        %3177 = vmatprep.subr.bf16.mxu0 %v1140
        %3178 = vmatpush1.bf16.msra.mxu0 %v1139
        %3179 = vmatprep.subr.bf16.mxu0 %v1144
        %3180 = vmatpush1.bf16.msra.mxu0 %v1143
        %3181 = vmatprep.subr.bf16.mxu0 0
        %3182 = vmatpush1.bf16.msra.mxu0 0
        %3183 = vmatprep.subr.bf16.mxu0 0
        %3184 = vmatpush1.bf16.msra.mxu0 0
        %3185 = vmatprep.subr.bf16.mxu0 0
        %3186 = vmatpush1.bf16.msra.mxu0 0
        %3187 = vmatprep.subr.bf16.mxu0 0
        %3188 = vmatpush1.bf16.msra.mxu0 0
        %3189 = vmatprep.subr.bf16.mxu0 0
        %3190 = vmatpush1.bf16.msra.mxu0 0
        %3191 = vmatprep.subr.bf16.mxu0 0
        %3192 = vmatpush1.bf16.msra.mxu0 0
        %3193 = vmatprep.subr.bf16.mxu0 0
        %3194 = vmatpush1.bf16.msra.mxu0 0
        %3195 = vmatprep.subr.bf16.mxu0 0
        %3196 = vmatpush1.bf16.msra.mxu0 0
        %3197 = vmatprep.mubr.bf16.mxu0 0
        %3198 = vmatmul.mubr.bf16.gmra.mrb[0].mxu0 %v3123
        %v3199 = vpop.f32.mrb[0].mxu0
        %v3200 = vadd.f32 0.0, %v3199
        %v3201 = vpop.f32.mrb[0].mxu0
        %v3202 = vadd.f32 0.0, %v3201
        %v3203 = vpop.f32.mrb[0].mxu0
        %v3204 = vpop.f32.mrb[0].mxu0
        %3205 = vdwg.mxu0
        %v3206 = vadd.f32 %v719, %v3159
        %v3207 = vadd.f32 %v721, %v3161
        %v3208 = vadd.f32 %v912, %v3200
        %v3209 = vadd.f32 %v914, %v3202
        %v3210 = vxor.u32 %v3206, 2147483648
        %v3211 = vmul.f32 %v3210, 1.442695
        %v3212 = vpow.pop %v3211
        %v3213 = vadd.f32 %v3212, 1.0
        %v3214 = vrcp.pop %v3213
        %v3215 = vmul.f32 1.0, %v3214
        %v3216 = vxor.u32 %v3207, 2147483648
        %v3217 = vmul.f32 %v3216, 1.442695
        %v3218 = vpow.pop %v3217
        %v3219 = vadd.f32 %v3218, 1.0
        %v3220 = vrcp.pop %v3219
        %v3221 = vmul.f32 1.0, %v3220
        %v3222 = vtanh.pop %v3208
        %v3223 = vxor.u32 %v3209, 2147483648
        %v3224 = vmul.f32 %v3223, 1.442695
        %v3225 = vpow.pop %v3224
        %v3226 = vadd.f32 %v3225, 1.0
        %v3227 = vrcp.pop %v3226
        %v3228 = vmul.f32 1.0, %v3227
        %v3229 = vmul.f32 %v3221, %v3054
        %v3230 = vmul.f32 %v3215, %v3222
        %v3231 = vadd.f32 %v3229, %v3230
        %v3232 = vtanh.pop %v3231
        %v3233 = vmul.f32 %v3228, %v3232
        %v3235 = vcombine.high %v3233, %v3233
        %v3237 = vunpack.c.l.s4 1966171168
        %v3238 = vunpack.c.0.s8 %v3237
        %v3239 = vlaneseq
        %v3240 = vshrl.u32 %v3239, 7
        %v3241 = vsub.s32 %v3238, %v3240
        %v3242 = vrot.slane %v3233, %v3241
        %v3244 = vunpack.c.l.s4 1966171168
        %v3245 = vunpack.c.0.s8 %v3244
        %v3246 = vlaneseq
        %v3247 = vshrl.u32 %v3246, 7
        %v3248 = vsub.s32 %v3245, %v3247
        %v3249 = vrot.slane %v3235, %v3248
        %v3250 = vcombine.high %v3242, %v3242
        %v3251 = vcombine.high %v3249, %v3249
        %v3253 = vunpack.c.l.s4 1966171168
        %v3254 = vunpack.c.0.s8 %v3253
        %v3255 = vlaneseq
        %v3256 = vshrl.u32 %v3255, 7
        %v3257 = vsub.s32 %v3254, %v3256
        %v3258 = vrot.slane %v3242, %v3257
        %v3260 = vunpack.c.l.s4 1966171168
        %v3261 = vunpack.c.0.s8 %v3260
        %v3262 = vlaneseq
        %v3263 = vshrl.u32 %v3262, 7
        %v3264 = vsub.s32 %v3261, %v3263
        %v3265 = vrot.slane %v3249, %v3264
        %v3267 = vunpack.c.l.s4 1966171168
        %v3268 = vunpack.c.0.s8 %v3267
        %v3269 = vlaneseq
        %v3270 = vshrl.u32 %v3269, 7
        %v3271 = vsub.s32 %v3268, %v3270
        %v3272 = vrot.slane %v3250, %v3271
        %v3274 = vunpack.c.l.s4 1966171168
        %v3275 = vunpack.c.0.s8 %v3274
        %v3276 = vlaneseq
        %v3277 = vshrl.u32 %v3276, 7
        %v3278 = vsub.s32 %v3275, %v3277
        %v3279 = vrot.slane %v3251, %v3278
        %v3280 = vcombine.high %v3258, %v3258
        %v3281 = vcombine.high %v3265, %v3265
        %v3282 = vcombine.high %v3272, %v3272
        %v3283 = vcombine.high %v3279, %v3279
        %3292 = vst [vmem:[%s244 + $0xb] sm:$0x1] %v3258
        %3293 = vst [vmem:[%s244 + $0x2b] sm:$0x1] %v3272
        %3294 = vst [vmem:[%s244 + $0x4b] sm:$0x1] %v3280
        %3295 = vst [vmem:[%s244 + $0x6b] sm:$0x1] %v3282
        %3296 = vst [vmem:[%s244 + $0x8b] sm:$0x1] %v3265
        %3297 = vst [vmem:[%s244 + $0xab] sm:$0x1] %v3279
        %3298 = vst [vmem:[%s244 + $0xcb] sm:$0x1] %v3281
        %3299 = vst [vmem:[%s244 + $0xeb] sm:$0x1] %v3283
        %v3300 = vpack.c.bf16 %v3233, %v3233
        %3301 = vmatprep.subr.bf16.mxu0 %v1114
        %3302 = vmatpush1.bf16.msra.mxu0 %v1113
        %3303 = vmatprep.subr.bf16.mxu0 %v1118
        %3304 = vmatpush1.bf16.msra.mxu0 %v1117
        %3305 = vmatprep.subr.bf16.mxu0 %v1122
        %3306 = vmatpush1.bf16.msra.mxu0 %v1121
        %3307 = vmatprep.subr.bf16.mxu0 %v1126
        %3308 = vmatpush1.bf16.msra.mxu0 %v1125
        %3309 = vmatprep.subr.bf16.mxu0 %v1130
        %3310 = vmatpush1.bf16.msra.mxu0 %v1129
        %3311 = vmatprep.subr.bf16.mxu0 %v1134
        %3312 = vmatpush1.bf16.msra.mxu0 %v1133
        %3313 = vmatprep.subr.bf16.mxu0 %v1138
        %3314 = vmatpush1.bf16.msra.mxu0 %v1137
        %3315 = vmatprep.subr.bf16.mxu0 %v1142
        %3316 = vmatpush1.bf16.msra.mxu0 %v1141
        %3317 = vmatprep.subr.bf16.mxu0 0
        %3318 = vmatpush1.bf16.msra.mxu0 0
        %3319 = vmatprep.subr.bf16.mxu0 0
        %3320 = vmatpush1.bf16.msra.mxu0 0
        %3321 = vmatprep.subr.bf16.mxu0 0
        %3322 = vmatpush1.bf16.msra.mxu0 0
        %3323 = vmatprep.subr.bf16.mxu0 0
        %3324 = vmatpush1.bf16.msra.mxu0 0
        %3325 = vmatprep.subr.bf16.mxu0 0
        %3326 = vmatpush1.bf16.msra.mxu0 0
        %3327 = vmatprep.subr.bf16.mxu0 0
        %3328 = vmatpush1.bf16.msra.mxu0 0
        %3329 = vmatprep.subr.bf16.mxu0 0
        %3330 = vmatpush1.bf16.msra.mxu0 0
        %3331 = vmatprep.subr.bf16.mxu0 0
        %3332 = vmatpush1.bf16.msra.mxu0 0
        %3333 = vmatprep.mubr.bf16.mxu0 0
        %3334 = vmatmul.mubr.bf16.gmra.mrb[0].mxu0 %v3300
        %v3335 = vpop.f32.mrb[0].mxu0
        %v3336 = vadd.f32 0.0, %v3335
        %v3337 = vpop.f32.mrb[0].mxu0
        %v3338 = vadd.f32 0.0, %v3337
        %v3339 = vpop.f32.mrb[0].mxu0
        %v3340 = vpop.f32.mrb[0].mxu0
        %3341 = vdwg.mxu0
        %3342 = vmatprep.subr.bf16.mxu0 %v1116
        %3343 = vmatpush1.bf16.msra.mxu0 %v1115
        %3344 = vmatprep.subr.bf16.mxu0 %v1120
        %3345 = vmatpush1.bf16.msra.mxu0 %v1119
        %3346 = vmatprep.subr.bf16.mxu0 %v1124
        %3347 = vmatpush1.bf16.msra.mxu0 %v1123
        %3348 = vmatprep.subr.bf16.mxu0 %v1128
        %3349 = vmatpush1.bf16.msra.mxu0 %v1127
        %3350 = vmatprep.subr.bf16.mxu0 %v1132
        %3351 = vmatpush1.bf16.msra.mxu0 %v1131
        %3352 = vmatprep.subr.bf16.mxu0 %v1136
        %3353 = vmatpush1.bf16.msra.mxu0 %v1135
        %3354 = vmatprep.subr.bf16.mxu0 %v1140
        %3355 = vmatpush1.bf16.msra.mxu0 %v1139
        %3356 = vmatprep.subr.bf16.mxu0 %v1144
        %3357 = vmatpush1.bf16.msra.mxu0 %v1143
        %3358 = vmatprep.subr.bf16.mxu0 0
        %3359 = vmatpush1.bf16.msra.mxu0 0
        %3360 = vmatprep.subr.bf16.mxu0 0
        %3361 = vmatpush1.bf16.msra.mxu0 0
        %3362 = vmatprep.subr.bf16.mxu0 0
        %3363 = vmatpush1.bf16.msra.mxu0 0
        %3364 = vmatprep.subr.bf16.mxu0 0
        %3365 = vmatpush1.bf16.msra.mxu0 0
        %3366 = vmatprep.subr.bf16.mxu0 0
        %3367 = vmatpush1.bf16.msra.mxu0 0
        %3368 = vmatprep.subr.bf16.mxu0 0
        %3369 = vmatpush1.bf16.msra.mxu0 0
        %3370 = vmatprep.subr.bf16.mxu0 0
        %3371 = vmatpush1.bf16.msra.mxu0 0
        %3372 = vmatprep.subr.bf16.mxu0 0
        %3373 = vmatpush1.bf16.msra.mxu0 0
        %3374 = vmatprep.mubr.bf16.mxu0 0
        %3375 = vmatmul.mubr.bf16.gmra.mrb[0].mxu0 %v3300
        %v3376 = vpop.f32.mrb[0].mxu0
        %v3377 = vadd.f32 0.0, %v3376
        %v3378 = vpop.f32.mrb[0].mxu0
        %v3379 = vadd.f32 0.0, %v3378
        %v3380 = vpop.f32.mrb[0].mxu0
        %v3381 = vpop.f32.mrb[0].mxu0
        %3382 = vdwg.mxu0
        %v3383 = vadd.f32 %v725, %v3336
        %v3384 = vadd.f32 %v727, %v3338
        %v3385 = vadd.f32 %v918, %v3377
        %v3386 = vadd.f32 %v920, %v3379
        %v3387 = vxor.u32 %v3383, 2147483648
        %v3388 = vmul.f32 %v3387, 1.442695
        %v3389 = vpow.pop %v3388
        %v3390 = vadd.f32 %v3389, 1.0
        %v3391 = vrcp.pop %v3390
        %v3392 = vmul.f32 1.0, %v3391
        %v3393 = vxor.u32 %v3384, 2147483648
        %v3394 = vmul.f32 %v3393, 1.442695
        %v3395 = vpow.pop %v3394
        %v3396 = vadd.f32 %v3395, 1.0
        %v3397 = vrcp.pop %v3396
        %v3398 = vmul.f32 1.0, %v3397
        %v3399 = vtanh.pop %v3385
        %v3400 = vxor.u32 %v3386, 2147483648
        %v3401 = vmul.f32 %v3400, 1.442695
        %v3402 = vpow.pop %v3401
        %v3403 = vadd.f32 %v3402, 1.0
        %v3404 = vrcp.pop %v3403
        %v3405 = vmul.f32 1.0, %v3404
        %v3406 = vmul.f32 %v3398, %v3231
        %v3407 = vmul.f32 %v3392, %v3399
        %v3408 = vadd.f32 %v3406, %v3407
        %v3409 = vtanh.pop %v3408
        %v3410 = vmul.f32 %v3405, %v3409
        %v3412 = vcombine.high %v3410, %v3410
        %v3414 = vunpack.c.l.s4 1966171168
        %v3415 = vunpack.c.0.s8 %v3414
        %v3416 = vlaneseq
        %v3417 = vshrl.u32 %v3416, 7
        %v3418 = vsub.s32 %v3415, %v3417
        %v3419 = vrot.slane %v3410, %v3418
        %v3421 = vunpack.c.l.s4 1966171168
        %v3422 = vunpack.c.0.s8 %v3421
        %v3423 = vlaneseq
        %v3424 = vshrl.u32 %v3423, 7
        %v3425 = vsub.s32 %v3422, %v3424
        %v3426 = vrot.slane %v3412, %v3425
        %v3427 = vcombine.high %v3419, %v3419
        %v3428 = vcombine.high %v3426, %v3426
        %v3430 = vunpack.c.l.s4 1966171168
        %v3431 = vunpack.c.0.s8 %v3430
        %v3432 = vlaneseq
        %v3433 = vshrl.u32 %v3432, 7
        %v3434 = vsub.s32 %v3431, %v3433
        %v3435 = vrot.slane %v3419, %v3434
        %v3437 = vunpack.c.l.s4 1966171168
        %v3438 = vunpack.c.0.s8 %v3437
        %v3439 = vlaneseq
        %v3440 = vshrl.u32 %v3439, 7
        %v3441 = vsub.s32 %v3438, %v3440
        %v3442 = vrot.slane %v3426, %v3441
        %v3444 = vunpack.c.l.s4 1966171168
        %v3445 = vunpack.c.0.s8 %v3444
        %v3446 = vlaneseq
        %v3447 = vshrl.u32 %v3446, 7
        %v3448 = vsub.s32 %v3445, %v3447
        %v3449 = vrot.slane %v3427, %v3448
        %v3451 = vunpack.c.l.s4 1966171168
        %v3452 = vunpack.c.0.s8 %v3451
        %v3453 = vlaneseq
        %v3454 = vshrl.u32 %v3453, 7
        %v3455 = vsub.s32 %v3452, %v3454
        %v3456 = vrot.slane %v3428, %v3455
        %v3457 = vcombine.high %v3435, %v3435
        %v3458 = vcombine.high %v3442, %v3442
        %v3459 = vcombine.high %v3449, %v3449
        %v3460 = vcombine.high %v3456, %v3456
        %3469 = vst [vmem:[%s244 + $0xc] sm:$0x1] %v3435
        %3470 = vst [vmem:[%s244 + $0x2c] sm:$0x1] %v3449
        %3471 = vst [vmem:[%s244 + $0x4c] sm:$0x1] %v3457
        %3472 = vst [vmem:[%s244 + $0x6c] sm:$0x1] %v3459
        %3473 = vst [vmem:[%s244 + $0x8c] sm:$0x1] %v3442
        %3474 = vst [vmem:[%s244 + $0xac] sm:$0x1] %v3456
        %3475 = vst [vmem:[%s244 + $0xcc] sm:$0x1] %v3458
        %3476 = vst [vmem:[%s244 + $0xec] sm:$0x1] %v3460
        %v3477 = vpack.c.bf16 %v3410, %v3410
        %3478 = vmatprep.subr.bf16.mxu0 %v1114
        %3479 = vmatpush1.bf16.msra.mxu0 %v1113
        %3480 = vmatprep.subr.bf16.mxu0 %v1118
        %3481 = vmatpush1.bf16.msra.mxu0 %v1117
        %3482 = vmatprep.subr.bf16.mxu0 %v1122
        %3483 = vmatpush1.bf16.msra.mxu0 %v1121
        %3484 = vmatprep.subr.bf16.mxu0 %v1126
        %3485 = vmatpush1.bf16.msra.mxu0 %v1125
        %3486 = vmatprep.subr.bf16.mxu0 %v1130
        %3487 = vmatpush1.bf16.msra.mxu0 %v1129
        %3488 = vmatprep.subr.bf16.mxu0 %v1134
        %3489 = vmatpush1.bf16.msra.mxu0 %v1133
        %3490 = vmatprep.subr.bf16.mxu0 %v1138
        %3491 = vmatpush1.bf16.msra.mxu0 %v1137
        %3492 = vmatprep.subr.bf16.mxu0 %v1142
        %3493 = vmatpush1.bf16.msra.mxu0 %v1141
        %3494 = vmatprep.subr.bf16.mxu0 0
        %3495 = vmatpush1.bf16.msra.mxu0 0
        %3496 = vmatprep.subr.bf16.mxu0 0
        %3497 = vmatpush1.bf16.msra.mxu0 0
        %3498 = vmatprep.subr.bf16.mxu0 0
        %3499 = vmatpush1.bf16.msra.mxu0 0
        %3500 = vmatprep.subr.bf16.mxu0 0
        %3501 = vmatpush1.bf16.msra.mxu0 0
        %3502 = vmatprep.subr.bf16.mxu0 0
        %3503 = vmatpush1.bf16.msra.mxu0 0
        %3504 = vmatprep.subr.bf16.mxu0 0
        %3505 = vmatpush1.bf16.msra.mxu0 0
        %3506 = vmatprep.subr.bf16.mxu0 0
        %3507 = vmatpush1.bf16.msra.mxu0 0
        %3508 = vmatprep.subr.bf16.mxu0 0
        %3509 = vmatpush1.bf16.msra.mxu0 0
        %3510 = vmatprep.mubr.bf16.mxu0 0
        %3511 = vmatmul.mubr.bf16.gmra.mrb[0].mxu0 %v3477
        %v3512 = vpop.f32.mrb[0].mxu0
        %v3513 = vadd.f32 0.0, %v3512
        %v3514 = vpop.f32.mrb[0].mxu0
        %v3515 = vadd.f32 0.0, %v3514
        %v3516 = vpop.f32.mrb[0].mxu0
        %v3517 = vpop.f32.mrb[0].mxu0
        %3518 = vdwg.mxu0
        %3519 = vmatprep.subr.bf16.mxu0 %v1116
        %3520 = vmatpush1.bf16.msra.mxu0 %v1115
        %3521 = vmatprep.subr.bf16.mxu0 %v1120
        %3522 = vmatpush1.bf16.msra.mxu0 %v1119
        %3523 = vmatprep.subr.bf16.mxu0 %v1124
        %3524 = vmatpush1.bf16.msra.mxu0 %v1123
        %3525 = vmatprep.subr.bf16.mxu0 %v1128
        %3526 = vmatpush1.bf16.msra.mxu0 %v1127
        %3527 = vmatprep.subr.bf16.mxu0 %v1132
        %3528 = vmatpush1.bf16.msra.mxu0 %v1131
        %3529 = vmatprep.subr.bf16.mxu0 %v1136
        %3530 = vmatpush1.bf16.msra.mxu0 %v1135
        %3531 = vmatprep.subr.bf16.mxu0 %v1140
        %3532 = vmatpush1.bf16.msra.mxu0 %v1139
        %3533 = vmatprep.subr.bf16.mxu0 %v1144
        %3534 = vmatpush1.bf16.msra.mxu0 %v1143
        %3535 = vmatprep.subr.bf16.mxu0 0
        %3536 = vmatpush1.bf16.msra.mxu0 0
        %3537 = vmatprep.subr.bf16.mxu0 0
        %3538 = vmatpush1.bf16.msra.mxu0 0
        %3539 = vmatprep.subr.bf16.mxu0 0
        %3540 = vmatpush1.bf16.msra.mxu0 0
        %3541 = vmatprep.subr.bf16.mxu0 0
        %3542 = vmatpush1.bf16.msra.mxu0 0
        %3543 = vmatprep.subr.bf16.mxu0 0
        %3544 = vmatpush1.bf16.msra.mxu0 0
        %3545 = vmatprep.subr.bf16.mxu0 0
        %3546 = vmatpush1.bf16.msra.mxu0 0
        %3547 = vmatprep.subr.bf16.mxu0 0
        %3548 = vmatpush1.bf16.msra.mxu0 0
        %3549 = vmatprep.subr.bf16.mxu0 0
        %3550 = vmatpush1.bf16.msra.mxu0 0
        %3551 = vmatprep.mubr.bf16.mxu0 0
        %3552 = vmatmul.mubr.bf16.gmra.mrb[0].mxu0 %v3477
        %v3553 = vpop.f32.mrb[0].mxu0
        %v3554 = vadd.f32 0.0, %v3553
        %v3555 = vpop.f32.mrb[0].mxu0
        %v3556 = vadd.f32 0.0, %v3555
        %v3557 = vpop.f32.mrb[0].mxu0
        %v3558 = vpop.f32.mrb[0].mxu0
        %3559 = vdwg.mxu0
        %v3560 = vadd.f32 %v729, %v3513
        %v3561 = vadd.f32 %v731, %v3515
        %v3562 = vadd.f32 %v922, %v3554
        %v3563 = vadd.f32 %v924, %v3556
        %v3564 = vxor.u32 %v3560, 2147483648
        %v3565 = vmul.f32 %v3564, 1.442695
        %v3566 = vpow.pop %v3565
        %v3567 = vadd.f32 %v3566, 1.0
        %v3568 = vrcp.pop %v3567
        %v3569 = vmul.f32 1.0, %v3568
        %v3570 = vxor.u32 %v3561, 2147483648
        %v3571 = vmul.f32 %v3570, 1.442695
        %v3572 = vpow.pop %v3571
        %v3573 = vadd.f32 %v3572, 1.0
        %v3574 = vrcp.pop %v3573
        %v3575 = vmul.f32 1.0, %v3574
        %v3576 = vtanh.pop %v3562
        %v3577 = vxor.u32 %v3563, 2147483648
        %v3578 = vmul.f32 %v3577, 1.442695
        %v3579 = vpow.pop %v3578
        %v3580 = vadd.f32 %v3579, 1.0
        %v3581 = vrcp.pop %v3580
        %v3582 = vmul.f32 1.0, %v3581
        %v3583 = vmul.f32 %v3575, %v3408
        %v3584 = vmul.f32 %v3569, %v3576
        %v3585 = vadd.f32 %v3583, %v3584
        %v3586 = vtanh.pop %v3585
        %v3587 = vmul.f32 %v3582, %v3586
        %v3589 = vcombine.high %v3587, %v3587
        %v3591 = vunpack.c.l.s4 1966171168
        %v3592 = vunpack.c.0.s8 %v3591
        %v3593 = vlaneseq
        %v3594 = vshrl.u32 %v3593, 7
        %v3595 = vsub.s32 %v3592, %v3594
        %v3596 = vrot.slane %v3587, %v3595
        %v3598 = vunpack.c.l.s4 1966171168
        %v3599 = vunpack.c.0.s8 %v3598
        %v3600 = vlaneseq
        %v3601 = vshrl.u32 %v3600, 7
        %v3602 = vsub.s32 %v3599, %v3601
        %v3603 = vrot.slane %v3589, %v3602
        %v3604 = vcombine.high %v3596, %v3596
        %v3605 = vcombine.high %v3603, %v3603
        %v3607 = vunpack.c.l.s4 1966171168
        %v3608 = vunpack.c.0.s8 %v3607
        %v3609 = vlaneseq
        %v3610 = vshrl.u32 %v3609, 7
        %v3611 = vsub.s32 %v3608, %v3610
        %v3612 = vrot.slane %v3596, %v3611
        %v3614 = vunpack.c.l.s4 1966171168
        %v3615 = vunpack.c.0.s8 %v3614
        %v3616 = vlaneseq
        %v3617 = vshrl.u32 %v3616, 7
        %v3618 = vsub.s32 %v3615, %v3617
        %v3619 = vrot.slane %v3603, %v3618
        %v3621 = vunpack.c.l.s4 1966171168
        %v3622 = vunpack.c.0.s8 %v3621
        %v3623 = vlaneseq
        %v3624 = vshrl.u32 %v3623, 7
        %v3625 = vsub.s32 %v3622, %v3624
        %v3626 = vrot.slane %v3604, %v3625
        %v3628 = vunpack.c.l.s4 1966171168
        %v3629 = vunpack.c.0.s8 %v3628
        %v3630 = vlaneseq
        %v3631 = vshrl.u32 %v3630, 7
        %v3632 = vsub.s32 %v3629, %v3631
        %v3633 = vrot.slane %v3605, %v3632
        %v3634 = vcombine.high %v3612, %v3612
        %v3635 = vcombine.high %v3619, %v3619
        %v3636 = vcombine.high %v3626, %v3626
        %v3637 = vcombine.high %v3633, %v3633
        %3646 = vst [vmem:[%s244 + $0xd] sm:$0x1] %v3612
        %3647 = vst [vmem:[%s244 + $0x2d] sm:$0x1] %v3626
        %3648 = vst [vmem:[%s244 + $0x4d] sm:$0x1] %v3634
        %3649 = vst [vmem:[%s244 + $0x6d] sm:$0x1] %v3636
        %3650 = vst [vmem:[%s244 + $0x8d] sm:$0x1] %v3619
        %3651 = vst [vmem:[%s244 + $0xad] sm:$0x1] %v3633
        %3652 = vst [vmem:[%s244 + $0xcd] sm:$0x1] %v3635
        %3653 = vst [vmem:[%s244 + $0xed] sm:$0x1] %v3637
        %v3654 = vpack.c.bf16 %v3587, %v3587
        %3655 = vmatprep.subr.bf16.mxu0 %v1114
        %3656 = vmatpush1.bf16.msra.mxu0 %v1113
        %3657 = vmatprep.subr.bf16.mxu0 %v1118
        %3658 = vmatpush1.bf16.msra.mxu0 %v1117
        %3659 = vmatprep.subr.bf16.mxu0 %v1122
        %3660 = vmatpush1.bf16.msra.mxu0 %v1121
        %3661 = vmatprep.subr.bf16.mxu0 %v1126
        %3662 = vmatpush1.bf16.msra.mxu0 %v1125
        %3663 = vmatprep.subr.bf16.mxu0 %v1130
        %3664 = vmatpush1.bf16.msra.mxu0 %v1129
        %3665 = vmatprep.subr.bf16.mxu0 %v1134
        %3666 = vmatpush1.bf16.msra.mxu0 %v1133
        %3667 = vmatprep.subr.bf16.mxu0 %v1138
        %3668 = vmatpush1.bf16.msra.mxu0 %v1137
        %3669 = vmatprep.subr.bf16.mxu0 %v1142
        %3670 = vmatpush1.bf16.msra.mxu0 %v1141
        %3671 = vmatprep.subr.bf16.mxu0 0
        %3672 = vmatpush1.bf16.msra.mxu0 0
        %3673 = vmatprep.subr.bf16.mxu0 0
        %3674 = vmatpush1.bf16.msra.mxu0 0
        %3675 = vmatprep.subr.bf16.mxu0 0
        %3676 = vmatpush1.bf16.msra.mxu0 0
        %3677 = vmatprep.subr.bf16.mxu0 0
        %3678 = vmatpush1.bf16.msra.mxu0 0
        %3679 = vmatprep.subr.bf16.mxu0 0
        %3680 = vmatpush1.bf16.msra.mxu0 0
        %3681 = vmatprep.subr.bf16.mxu0 0
        %3682 = vmatpush1.bf16.msra.mxu0 0
        %3683 = vmatprep.subr.bf16.mxu0 0
        %3684 = vmatpush1.bf16.msra.mxu0 0
        %3685 = vmatprep.subr.bf16.mxu0 0
        %3686 = vmatpush1.bf16.msra.mxu0 0
        %3687 = vmatprep.mubr.bf16.mxu0 0
        %3688 = vmatmul.mubr.bf16.gmra.mrb[0].mxu0 %v3654
        %v3689 = vpop.f32.mrb[0].mxu0
        %v3690 = vadd.f32 0.0, %v3689
        %v3691 = vpop.f32.mrb[0].mxu0
        %v3692 = vadd.f32 0.0, %v3691
        %v3693 = vpop.f32.mrb[0].mxu0
        %v3694 = vpop.f32.mrb[0].mxu0
        %3695 = vdwg.mxu0
        %3696 = vmatprep.subr.bf16.mxu0 %v1116
        %3697 = vmatpush1.bf16.msra.mxu0 %v1115
        %3698 = vmatprep.subr.bf16.mxu0 %v1120
        %3699 = vmatpush1.bf16.msra.mxu0 %v1119
        %3700 = vmatprep.subr.bf16.mxu0 %v1124
        %3701 = vmatpush1.bf16.msra.mxu0 %v1123
        %3702 = vmatprep.subr.bf16.mxu0 %v1128
        %3703 = vmatpush1.bf16.msra.mxu0 %v1127
        %3704 = vmatprep.subr.bf16.mxu0 %v1132
        %3705 = vmatpush1.bf16.msra.mxu0 %v1131
        %3706 = vmatprep.subr.bf16.mxu0 %v1136
        %3707 = vmatpush1.bf16.msra.mxu0 %v1135
        %3708 = vmatprep.subr.bf16.mxu0 %v1140
        %3709 = vmatpush1.bf16.msra.mxu0 %v1139
        %3710 = vmatprep.subr.bf16.mxu0 %v1144
        %3711 = vmatpush1.bf16.msra.mxu0 %v1143
        %3712 = vmatprep.subr.bf16.mxu0 0
        %3713 = vmatpush1.bf16.msra.mxu0 0
        %3714 = vmatprep.subr.bf16.mxu0 0
        %3715 = vmatpush1.bf16.msra.mxu0 0
        %3716 = vmatprep.subr.bf16.mxu0 0
        %3717 = vmatpush1.bf16.msra.mxu0 0
        %3718 = vmatprep.subr.bf16.mxu0 0
        %3719 = vmatpush1.bf16.msra.mxu0 0
        %3720 = vmatprep.subr.bf16.mxu0 0
        %3721 = vmatpush1.bf16.msra.mxu0 0
        %3722 = vmatprep.subr.bf16.mxu0 0
        %3723 = vmatpush1.bf16.msra.mxu0 0
        %3724 = vmatprep.subr.bf16.mxu0 0
        %3725 = vmatpush1.bf16.msra.mxu0 0
        %3726 = vmatprep.subr.bf16.mxu0 0
        %3727 = vmatpush1.bf16.msra.mxu0 0
        %3728 = vmatprep.mubr.bf16.mxu0 0
        %3729 = vmatmul.mubr.bf16.gmra.mrb[0].mxu0 %v3654
        %v3730 = vpop.f32.mrb[0].mxu0
        %v3731 = vadd.f32 0.0, %v3730
        %v3732 = vpop.f32.mrb[0].mxu0
        %v3733 = vadd.f32 0.0, %v3732
        %v3734 = vpop.f32.mrb[0].mxu0
        %v3735 = vpop.f32.mrb[0].mxu0
        %3736 = vdwg.mxu0
        %v3737 = vadd.f32 %v735, %v3690
        %v3738 = vadd.f32 %v737, %v3692
        %v3739 = vadd.f32 %v928, %v3731
        %v3740 = vadd.f32 %v930, %v3733
        %v3741 = vxor.u32 %v3737, 2147483648
        %v3742 = vmul.f32 %v3741, 1.442695
        %v3743 = vpow.pop %v3742
        %v3744 = vadd.f32 %v3743, 1.0
        %v3745 = vrcp.pop %v3744
        %v3746 = vmul.f32 1.0, %v3745
        %v3747 = vxor.u32 %v3738, 2147483648
        %v3748 = vmul.f32 %v3747, 1.442695
        %v3749 = vpow.pop %v3748
        %v3750 = vadd.f32 %v3749, 1.0
        %v3751 = vrcp.pop %v3750
        %v3752 = vmul.f32 1.0, %v3751
        %v3753 = vtanh.pop %v3739
        %v3754 = vxor.u32 %v3740, 2147483648
        %v3755 = vmul.f32 %v3754, 1.442695
        %v3756 = vpow.pop %v3755
        %v3757 = vadd.f32 %v3756, 1.0
        %v3758 = vrcp.pop %v3757
        %v3759 = vmul.f32 1.0, %v3758
        %v3760 = vmul.f32 %v3752, %v3585
        %v3761 = vmul.f32 %v3746, %v3753
        %v3762 = vadd.f32 %v3760, %v3761
        %v3763 = vtanh.pop %v3762
        %v3764 = vmul.f32 %v3759, %v3763
        %v3766 = vcombine.high %v3764, %v3764
        %v3768 = vunpack.c.l.s4 1966171168
        %v3769 = vunpack.c.0.s8 %v3768
        %v3770 = vlaneseq
        %v3771 = vshrl.u32 %v3770, 7
        %v3772 = vsub.s32 %v3769, %v3771
        %v3773 = vrot.slane %v3764, %v3772
        %v3775 = vunpack.c.l.s4 1966171168
        %v3776 = vunpack.c.0.s8 %v3775
        %v3777 = vlaneseq
        %v3778 = vshrl.u32 %v3777, 7
        %v3779 = vsub.s32 %v3776, %v3778
        %v3780 = vrot.slane %v3766, %v3779
        %v3781 = vcombine.high %v3773, %v3773
        %v3782 = vcombine.high %v3780, %v3780
        %v3784 = vunpack.c.l.s4 1966171168
        %v3785 = vunpack.c.0.s8 %v3784
        %v3786 = vlaneseq
        %v3787 = vshrl.u32 %v3786, 7
        %v3788 = vsub.s32 %v3785, %v3787
        %v3789 = vrot.slane %v3773, %v3788
        %v3791 = vunpack.c.l.s4 1966171168
        %v3792 = vunpack.c.0.s8 %v3791
        %v3793 = vlaneseq
        %v3794 = vshrl.u32 %v3793, 7
        %v3795 = vsub.s32 %v3792, %v3794
        %v3796 = vrot.slane %v3780, %v3795
        %v3798 = vunpack.c.l.s4 1966171168
        %v3799 = vunpack.c.0.s8 %v3798
        %v3800 = vlaneseq
        %v3801 = vshrl.u32 %v3800, 7
        %v3802 = vsub.s32 %v3799, %v3801
        %v3803 = vrot.slane %v3781, %v3802
        %v3805 = vunpack.c.l.s4 1966171168
        %v3806 = vunpack.c.0.s8 %v3805
        %v3807 = vlaneseq
        %v3808 = vshrl.u32 %v3807, 7
        %v3809 = vsub.s32 %v3806, %v3808
        %v3810 = vrot.slane %v3782, %v3809
        %v3811 = vcombine.high %v3789, %v3789
        %v3812 = vcombine.high %v3796, %v3796
        %v3813 = vcombine.high %v3803, %v3803
        %v3814 = vcombine.high %v3810, %v3810
        %3823 = vst [vmem:[%s244 + $0xe] sm:$0x1] %v3789
        %3824 = vst [vmem:[%s244 + $0x2e] sm:$0x1] %v3803
        %3825 = vst [vmem:[%s244 + $0x4e] sm:$0x1] %v3811
        %3826 = vst [vmem:[%s244 + $0x6e] sm:$0x1] %v3813
        %3827 = vst [vmem:[%s244 + $0x8e] sm:$0x1] %v3796
        %3828 = vst [vmem:[%s244 + $0xae] sm:$0x1] %v3810
        %3829 = vst [vmem:[%s244 + $0xce] sm:$0x1] %v3812
        %3830 = vst [vmem:[%s244 + $0xee] sm:$0x1] %v3814
        %v3831 = vpack.c.bf16 %v3764, %v3764
        %3832 = vmatprep.subr.bf16.mxu0 %v1114
        %3833 = vmatpush1.bf16.msra.mxu0 %v1113
        %3834 = vmatprep.subr.bf16.mxu0 %v1118
        %3835 = vmatpush1.bf16.msra.mxu0 %v1117
        %3836 = vmatprep.subr.bf16.mxu0 %v1122
        %3837 = vmatpush1.bf16.msra.mxu0 %v1121
        %3838 = vmatprep.subr.bf16.mxu0 %v1126
        %3839 = vmatpush1.bf16.msra.mxu0 %v1125
        %3840 = vmatprep.subr.bf16.mxu0 %v1130
        %3841 = vmatpush1.bf16.msra.mxu0 %v1129
        %3842 = vmatprep.subr.bf16.mxu0 %v1134
        %3843 = vmatpush1.bf16.msra.mxu0 %v1133
        %3844 = vmatprep.subr.bf16.mxu0 %v1138
        %3845 = vmatpush1.bf16.msra.mxu0 %v1137
        %3846 = vmatprep.subr.bf16.mxu0 %v1142
        %3847 = vmatpush1.bf16.msra.mxu0 %v1141
        %3848 = vmatprep.subr.bf16.mxu0 0
        %3849 = vmatpush1.bf16.msra.mxu0 0
        %3850 = vmatprep.subr.bf16.mxu0 0
        %3851 = vmatpush1.bf16.msra.mxu0 0
        %3852 = vmatprep.subr.bf16.mxu0 0
        %3853 = vmatpush1.bf16.msra.mxu0 0
        %3854 = vmatprep.subr.bf16.mxu0 0
        %3855 = vmatpush1.bf16.msra.mxu0 0
        %3856 = vmatprep.subr.bf16.mxu0 0
        %3857 = vmatpush1.bf16.msra.mxu0 0
        %3858 = vmatprep.subr.bf16.mxu0 0
        %3859 = vmatpush1.bf16.msra.mxu0 0
        %3860 = vmatprep.subr.bf16.mxu0 0
        %3861 = vmatpush1.bf16.msra.mxu0 0
        %3862 = vmatprep.subr.bf16.mxu0 0
        %3863 = vmatpush1.bf16.msra.mxu0 0
        %3864 = vmatprep.mubr.bf16.mxu0 0
        %3865 = vmatmul.mubr.bf16.gmra.mrb[0].mxu0 %v3831
        %v3866 = vpop.f32.mrb[0].mxu0
        %v3867 = vadd.f32 0.0, %v3866
        %v3868 = vpop.f32.mrb[0].mxu0
        %v3869 = vadd.f32 0.0, %v3868
        %v3870 = vpop.f32.mrb[0].mxu0
        %v3871 = vpop.f32.mrb[0].mxu0
        %3872 = vdwg.mxu0
        %3873 = vmatprep.subr.bf16.mxu0 %v1116
        %3874 = vmatpush1.bf16.msra.mxu0 %v1115
        %3875 = vmatprep.subr.bf16.mxu0 %v1120
        %3876 = vmatpush1.bf16.msra.mxu0 %v1119
        %3877 = vmatprep.subr.bf16.mxu0 %v1124
        %3878 = vmatpush1.bf16.msra.mxu0 %v1123
        %3879 = vmatprep.subr.bf16.mxu0 %v1128
        %3880 = vmatpush1.bf16.msra.mxu0 %v1127
        %3881 = vmatprep.subr.bf16.mxu0 %v1132
        %3882 = vmatpush1.bf16.msra.mxu0 %v1131
        %3883 = vmatprep.subr.bf16.mxu0 %v1136
        %3884 = vmatpush1.bf16.msra.mxu0 %v1135
        %3885 = vmatprep.subr.bf16.mxu0 %v1140
        %3886 = vmatpush1.bf16.msra.mxu0 %v1139
        %3887 = vmatprep.subr.bf16.mxu0 %v1144
        %3888 = vmatpush1.bf16.msra.mxu0 %v1143
        %3889 = vmatprep.subr.bf16.mxu0 0
        %3890 = vmatpush1.bf16.msra.mxu0 0
        %3891 = vmatprep.subr.bf16.mxu0 0
        %3892 = vmatpush1.bf16.msra.mxu0 0
        %3893 = vmatprep.subr.bf16.mxu0 0
        %3894 = vmatpush1.bf16.msra.mxu0 0
        %3895 = vmatprep.subr.bf16.mxu0 0
        %3896 = vmatpush1.bf16.msra.mxu0 0
        %3897 = vmatprep.subr.bf16.mxu0 0
        %3898 = vmatpush1.bf16.msra.mxu0 0
        %3899 = vmatprep.subr.bf16.mxu0 0
        %3900 = vmatpush1.bf16.msra.mxu0 0
        %3901 = vmatprep.subr.bf16.mxu0 0
        %3902 = vmatpush1.bf16.msra.mxu0 0
        %3903 = vmatprep.subr.bf16.mxu0 0
        %3904 = vmatpush1.bf16.msra.mxu0 0
        %3905 = vmatprep.mubr.bf16.mxu0 0
        %3906 = vmatmul.mubr.bf16.gmra.mrb[0].mxu0 %v3831
        %v3907 = vpop.f32.mrb[0].mxu0
        %v3908 = vadd.f32 0.0, %v3907
        %v3909 = vpop.f32.mrb[0].mxu0
        %v3910 = vadd.f32 0.0, %v3909
        %v3911 = vpop.f32.mrb[0].mxu0
        %v3912 = vpop.f32.mrb[0].mxu0
        %3913 = vdwg.mxu0
        %v3914 = vadd.f32 %v739, %v3867
        %v3915 = vadd.f32 %v741, %v3869
        %v3916 = vadd.f32 %v932, %v3908
        %v3917 = vadd.f32 %v934, %v3910
        %v3918 = vxor.u32 %v3914, 2147483648
        %v3919 = vmul.f32 %v3918, 1.442695
        %v3920 = vpow.pop %v3919
        %v3921 = vadd.f32 %v3920, 1.0
        %v3922 = vrcp.pop %v3921
        %v3923 = vmul.f32 1.0, %v3922
        %v3924 = vxor.u32 %v3915, 2147483648
        %v3925 = vmul.f32 %v3924, 1.442695
        %v3926 = vpow.pop %v3925
        %v3927 = vadd.f32 %v3926, 1.0
        %v3928 = vrcp.pop %v3927
        %v3929 = vmul.f32 1.0, %v3928
        %v3930 = vtanh.pop %v3916
        %v3931 = vxor.u32 %v3917, 2147483648
        %v3932 = vmul.f32 %v3931, 1.442695
        %v3933 = vpow.pop %v3932
        %v3934 = vadd.f32 %v3933, 1.0
        %v3935 = vrcp.pop %v3934
        %v3936 = vmul.f32 1.0, %v3935
        %v3937 = vmul.f32 %v3929, %v3762
        %v3938 = vmul.f32 %v3923, %v3930
        %v3939 = vadd.f32 %v3937, %v3938
        %v3940 = vtanh.pop %v3939
        %v3941 = vmul.f32 %v3936, %v3940
        %v3943 = vcombine.high %v3941, %v3941
        %v3945 = vunpack.c.l.s4 1966171168
        %v3946 = vunpack.c.0.s8 %v3945
        %v3947 = vlaneseq
        %v3948 = vshrl.u32 %v3947, 7
        %v3949 = vsub.s32 %v3946, %v3948
        %v3950 = vrot.slane %v3941, %v3949
        %v3952 = vunpack.c.l.s4 1966171168
        %v3953 = vunpack.c.0.s8 %v3952
        %v3954 = vlaneseq
        %v3955 = vshrl.u32 %v3954, 7
        %v3956 = vsub.s32 %v3953, %v3955
        %v3957 = vrot.slane %v3943, %v3956
        %v3958 = vcombine.high %v3950, %v3950
        %v3959 = vcombine.high %v3957, %v3957
        %v3961 = vunpack.c.l.s4 1966171168
        %v3962 = vunpack.c.0.s8 %v3961
        %v3963 = vlaneseq
        %v3964 = vshrl.u32 %v3963, 7
        %v3965 = vsub.s32 %v3962, %v3964
        %v3966 = vrot.slane %v3950, %v3965
        %v3968 = vunpack.c.l.s4 1966171168
        %v3969 = vunpack.c.0.s8 %v3968
        %v3970 = vlaneseq
        %v3971 = vshrl.u32 %v3970, 7
        %v3972 = vsub.s32 %v3969, %v3971
        %v3973 = vrot.slane %v3957, %v3972
        %v3975 = vunpack.c.l.s4 1966171168
        %v3976 = vunpack.c.0.s8 %v3975
        %v3977 = vlaneseq
        %v3978 = vshrl.u32 %v3977, 7
        %v3979 = vsub.s32 %v3976, %v3978
        %v3980 = vrot.slane %v3958, %v3979
        %v3982 = vunpack.c.l.s4 1966171168
        %v3983 = vunpack.c.0.s8 %v3982
        %v3984 = vlaneseq
        %v3985 = vshrl.u32 %v3984, 7
        %v3986 = vsub.s32 %v3983, %v3985
        %v3987 = vrot.slane %v3959, %v3986
        %v3988 = vcombine.high %v3966, %v3966
        %v3989 = vcombine.high %v3973, %v3973
        %v3990 = vcombine.high %v3980, %v3980
        %v3991 = vcombine.high %v3987, %v3987
        %4000 = vst [vmem:[%s244 + $0xf] sm:$0x1] %v3966
        %4001 = vst [vmem:[%s244 + $0x2f] sm:$0x1] %v3980
        %4002 = vst [vmem:[%s244 + $0x4f] sm:$0x1] %v3988
        %4003 = vst [vmem:[%s244 + $0x6f] sm:$0x1] %v3990
        %4004 = vst [vmem:[%s244 + $0x8f] sm:$0x1] %v3973
        %4005 = vst [vmem:[%s244 + $0xaf] sm:$0x1] %v3987
        %4006 = vst [vmem:[%s244 + $0xcf] sm:$0x1] %v3989
        %4007 = vst [vmem:[%s244 + $0xef] sm:$0x1] %v3991
        %v4008 = vpack.c.bf16 %v3941, %v3941
        %4009 = vmatprep.subr.bf16.mxu0 %v1114
        %4010 = vmatpush1.bf16.msra.mxu0 %v1113
        %4011 = vmatprep.subr.bf16.mxu0 %v1118
        %4012 = vmatpush1.bf16.msra.mxu0 %v1117
        %4013 = vmatprep.subr.bf16.mxu0 %v1122
        %4014 = vmatpush1.bf16.msra.mxu0 %v1121
        %4015 = vmatprep.subr.bf16.mxu0 %v1126
        %4016 = vmatpush1.bf16.msra.mxu0 %v1125
        %4017 = vmatprep.subr.bf16.mxu0 %v1130
        %4018 = vmatpush1.bf16.msra.mxu0 %v1129
        %4019 = vmatprep.subr.bf16.mxu0 %v1134
        %4020 = vmatpush1.bf16.msra.mxu0 %v1133
        %4021 = vmatprep.subr.bf16.mxu0 %v1138
        %4022 = vmatpush1.bf16.msra.mxu0 %v1137
        %4023 = vmatprep.subr.bf16.mxu0 %v1142
        %4024 = vmatpush1.bf16.msra.mxu0 %v1141
        %4025 = vmatprep.subr.bf16.mxu0 0
        %4026 = vmatpush1.bf16.msra.mxu0 0
        %4027 = vmatprep.subr.bf16.mxu0 0
        %4028 = vmatpush1.bf16.msra.mxu0 0
        %4029 = vmatprep.subr.bf16.mxu0 0
        %4030 = vmatpush1.bf16.msra.mxu0 0
        %4031 = vmatprep.subr.bf16.mxu0 0
        %4032 = vmatpush1.bf16.msra.mxu0 0
        %4033 = vmatprep.subr.bf16.mxu0 0
        %4034 = vmatpush1.bf16.msra.mxu0 0
        %4035 = vmatprep.subr.bf16.mxu0 0
        %4036 = vmatpush1.bf16.msra.mxu0 0
        %4037 = vmatprep.subr.bf16.mxu0 0
        %4038 = vmatpush1.bf16.msra.mxu0 0
        %4039 = vmatprep.subr.bf16.mxu0 0
        %4040 = vmatpush1.bf16.msra.mxu0 0
        %4041 = vmatprep.mubr.bf16.mxu0 0
        %4042 = vmatmul.mubr.bf16.gmra.mrb[0].mxu0 %v4008
        %v4043 = vpop.f32.mrb[0].mxu0
        %v4044 = vadd.f32 0.0, %v4043
        %v4045 = vpop.f32.mrb[0].mxu0
        %v4046 = vadd.f32 0.0, %v4045
        %v4047 = vpop.f32.mrb[0].mxu0
        %v4048 = vpop.f32.mrb[0].mxu0
        %4049 = vdwg.mxu0
        %4050 = vmatprep.subr.bf16.mxu0 %v1116
        %4051 = vmatpush1.bf16.msra.mxu0 %v1115
        %4052 = vmatprep.subr.bf16.mxu0 %v1120
        %4053 = vmatpush1.bf16.msra.mxu0 %v1119
        %4054 = vmatprep.subr.bf16.mxu0 %v1124
        %4055 = vmatpush1.bf16.msra.mxu0 %v1123
        %4056 = vmatprep.subr.bf16.mxu0 %v1128
        %4057 = vmatpush1.bf16.msra.mxu0 %v1127
        %4058 = vmatprep.subr.bf16.mxu0 %v1132
        %4059 = vmatpush1.bf16.msra.mxu0 %v1131
        %4060 = vmatprep.subr.bf16.mxu0 %v1136
        %4061 = vmatpush1.bf16.msra.mxu0 %v1135
        %4062 = vmatprep.subr.bf16.mxu0 %v1140
        %4063 = vmatpush1.bf16.msra.mxu0 %v1139
        %4064 = vmatprep.subr.bf16.mxu0 %v1144
        %4065 = vmatpush1.bf16.msra.mxu0 %v1143
        %4066 = vmatprep.subr.bf16.mxu0 0
        %4067 = vmatpush1.bf16.msra.mxu0 0
        %4068 = vmatprep.subr.bf16.mxu0 0
        %4069 = vmatpush1.bf16.msra.mxu0 0
        %4070 = vmatprep.subr.bf16.mxu0 0
        %4071 = vmatpush1.bf16.msra.mxu0 0
        %4072 = vmatprep.subr.bf16.mxu0 0
        %4073 = vmatpush1.bf16.msra.mxu0 0
        %4074 = vmatprep.subr.bf16.mxu0 0
        %4075 = vmatpush1.bf16.msra.mxu0 0
        %4076 = vmatprep.subr.bf16.mxu0 0
        %4077 = vmatpush1.bf16.msra.mxu0 0
        %4078 = vmatprep.subr.bf16.mxu0 0
        %4079 = vmatpush1.bf16.msra.mxu0 0
        %4080 = vmatprep.subr.bf16.mxu0 0
        %4081 = vmatpush1.bf16.msra.mxu0 0
        %4082 = vmatprep.mubr.bf16.mxu0 0
        %4083 = vmatmul.mubr.bf16.gmra.mrb[0].mxu0 %v4008
        %v4084 = vpop.f32.mrb[0].mxu0
        %v4085 = vadd.f32 0.0, %v4084
        %v4086 = vpop.f32.mrb[0].mxu0
        %v4087 = vadd.f32 0.0, %v4086
        %v4088 = vpop.f32.mrb[0].mxu0
        %v4089 = vpop.f32.mrb[0].mxu0
        %4090 = vdwg.mxu0
        %v4091 = vadd.f32 %v745, %v4044
        %v4092 = vadd.f32 %v747, %v4046
        %v4093 = vadd.f32 %v938, %v4085
        %v4094 = vadd.f32 %v940, %v4087
        %v4095 = vxor.u32 %v4091, 2147483648
        %v4096 = vmul.f32 %v4095, 1.442695
        %v4097 = vpow.pop %v4096
        %v4098 = vadd.f32 %v4097, 1.0
        %v4099 = vrcp.pop %v4098
        %v4100 = vmul.f32 1.0, %v4099
        %v4101 = vxor.u32 %v4092, 2147483648
        %v4102 = vmul.f32 %v4101, 1.442695
        %v4103 = vpow.pop %v4102
        %v4104 = vadd.f32 %v4103, 1.0
        %v4105 = vrcp.pop %v4104
        %v4106 = vmul.f32 1.0, %v4105
        %v4107 = vtanh.pop %v4093
        %v4108 = vxor.u32 %v4094, 2147483648
        %v4109 = vmul.f32 %v4108, 1.442695
        %v4110 = vpow.pop %v4109
        %v4111 = vadd.f32 %v4110, 1.0
        %v4112 = vrcp.pop %v4111
        %v4113 = vmul.f32 1.0, %v4112
        %v4114 = vmul.f32 %v4106, %v3939
        %v4115 = vmul.f32 %v4100, %v4107
        %v4116 = vadd.f32 %v4114, %v4115
        %v4117 = vtanh.pop %v4116
        %v4118 = vmul.f32 %v4113, %v4117
        %v4120 = vcombine.high %v4118, %v4118
        %v4122 = vunpack.c.l.s4 1966171168
        %v4123 = vunpack.c.0.s8 %v4122
        %v4124 = vlaneseq
        %v4125 = vshrl.u32 %v4124, 7
        %v4126 = vsub.s32 %v4123, %v4125
        %v4127 = vrot.slane %v4118, %v4126
        %v4129 = vunpack.c.l.s4 1966171168
        %v4130 = vunpack.c.0.s8 %v4129
        %v4131 = vlaneseq
        %v4132 = vshrl.u32 %v4131, 7
        %v4133 = vsub.s32 %v4130, %v4132
        %v4134 = vrot.slane %v4120, %v4133
        %v4135 = vcombine.high %v4127, %v4127
        %v4136 = vcombine.high %v4134, %v4134
        %v4138 = vunpack.c.l.s4 1966171168
        %v4139 = vunpack.c.0.s8 %v4138
        %v4140 = vlaneseq
        %v4141 = vshrl.u32 %v4140, 7
        %v4142 = vsub.s32 %v4139, %v4141
        %v4143 = vrot.slane %v4127, %v4142
        %v4145 = vunpack.c.l.s4 1966171168
        %v4146 = vunpack.c.0.s8 %v4145
        %v4147 = vlaneseq
        %v4148 = vshrl.u32 %v4147, 7
        %v4149 = vsub.s32 %v4146, %v4148
        %v4150 = vrot.slane %v4134, %v4149
        %v4152 = vunpack.c.l.s4 1966171168
        %v4153 = vunpack.c.0.s8 %v4152
        %v4154 = vlaneseq
        %v4155 = vshrl.u32 %v4154, 7
        %v4156 = vsub.s32 %v4153, %v4155
        %v4157 = vrot.slane %v4135, %v4156
        %v4159 = vunpack.c.l.s4 1966171168
        %v4160 = vunpack.c.0.s8 %v4159
        %v4161 = vlaneseq
        %v4162 = vshrl.u32 %v4161, 7
        %v4163 = vsub.s32 %v4160, %v4162
        %v4164 = vrot.slane %v4136, %v4163
        %v4165 = vcombine.high %v4143, %v4143
        %v4166 = vcombine.high %v4150, %v4150
        %v4167 = vcombine.high %v4157, %v4157
        %v4168 = vcombine.high %v4164, %v4164
        %4177 = vst [vmem:[%s244 + $0x10] sm:$0x1] %v4143
        %4178 = vst [vmem:[%s244 + $0x30] sm:$0x1] %v4157
        %4179 = vst [vmem:[%s244 + $0x50] sm:$0x1] %v4165
        %4180 = vst [vmem:[%s244 + $0x70] sm:$0x1] %v4167
        %4181 = vst [vmem:[%s244 + $0x90] sm:$0x1] %v4150
        %4182 = vst [vmem:[%s244 + $0xb0] sm:$0x1] %v4164
        %4183 = vst [vmem:[%s244 + $0xd0] sm:$0x1] %v4166
        %4184 = vst [vmem:[%s244 + $0xf0] sm:$0x1] %v4168
        %v4185 = vpack.c.bf16 %v4118, %v4118
        %4186 = vmatprep.subr.bf16.mxu0 %v1114
        %4187 = vmatpush1.bf16.msra.mxu0 %v1113
        %4188 = vmatprep.subr.bf16.mxu0 %v1118
        %4189 = vmatpush1.bf16.msra.mxu0 %v1117
        %4190 = vmatprep.subr.bf16.mxu0 %v1122
        %4191 = vmatpush1.bf16.msra.mxu0 %v1121
        %4192 = vmatprep.subr.bf16.mxu0 %v1126
        %4193 = vmatpush1.bf16.msra.mxu0 %v1125
        %4194 = vmatprep.subr.bf16.mxu0 %v1130
        %4195 = vmatpush1.bf16.msra.mxu0 %v1129
        %4196 = vmatprep.subr.bf16.mxu0 %v1134
        %4197 = vmatpush1.bf16.msra.mxu0 %v1133
        %4198 = vmatprep.subr.bf16.mxu0 %v1138
        %4199 = vmatpush1.bf16.msra.mxu0 %v1137
        %4200 = vmatprep.subr.bf16.mxu0 %v1142
        %4201 = vmatpush1.bf16.msra.mxu0 %v1141
        %4202 = vmatprep.subr.bf16.mxu0 0
        %4203 = vmatpush1.bf16.msra.mxu0 0
        %4204 = vmatprep.subr.bf16.mxu0 0
        %4205 = vmatpush1.bf16.msra.mxu0 0
        %4206 = vmatprep.subr.bf16.mxu0 0
        %4207 = vmatpush1.bf16.msra.mxu0 0
        %4208 = vmatprep.subr.bf16.mxu0 0
        %4209 = vmatpush1.bf16.msra.mxu0 0
        %4210 = vmatprep.subr.bf16.mxu0 0
        %4211 = vmatpush1.bf16.msra.mxu0 0
        %4212 = vmatprep.subr.bf16.mxu0 0
        %4213 = vmatpush1.bf16.msra.mxu0 0
        %4214 = vmatprep.subr.bf16.mxu0 0
        %4215 = vmatpush1.bf16.msra.mxu0 0
        %4216 = vmatprep.subr.bf16.mxu0 0
        %4217 = vmatpush1.bf16.msra.mxu0 0
        %4218 = vmatprep.mubr.bf16.mxu0 0
        %4219 = vmatmul.mubr.bf16.gmra.mrb[0].mxu0 %v4185
        %v4220 = vpop.f32.mrb[0].mxu0
        %v4221 = vadd.f32 0.0, %v4220
        %v4222 = vpop.f32.mrb[0].mxu0
        %v4223 = vadd.f32 0.0, %v4222
        %v4224 = vpop.f32.mrb[0].mxu0
        %v4225 = vpop.f32.mrb[0].mxu0
        %4226 = vdwg.mxu0
        %4227 = vmatprep.subr.bf16.mxu0 %v1116
        %4228 = vmatpush1.bf16.msra.mxu0 %v1115
        %4229 = vmatprep.subr.bf16.mxu0 %v1120
        %4230 = vmatpush1.bf16.msra.mxu0 %v1119
        %4231 = vmatprep.subr.bf16.mxu0 %v1124
        %4232 = vmatpush1.bf16.msra.mxu0 %v1123
        %4233 = vmatprep.subr.bf16.mxu0 %v1128
        %4234 = vmatpush1.bf16.msra.mxu0 %v1127
        %4235 = vmatprep.subr.bf16.mxu0 %v1132
        %4236 = vmatpush1.bf16.msra.mxu0 %v1131
        %4237 = vmatprep.subr.bf16.mxu0 %v1136
        %4238 = vmatpush1.bf16.msra.mxu0 %v1135
        %4239 = vmatprep.subr.bf16.mxu0 %v1140
        %4240 = vmatpush1.bf16.msra.mxu0 %v1139
        %4241 = vmatprep.subr.bf16.mxu0 %v1144
        %4242 = vmatpush1.bf16.msra.mxu0 %v1143
        %4243 = vmatprep.subr.bf16.mxu0 0
        %4244 = vmatpush1.bf16.msra.mxu0 0
        %4245 = vmatprep.subr.bf16.mxu0 0
        %4246 = vmatpush1.bf16.msra.mxu0 0
        %4247 = vmatprep.subr.bf16.mxu0 0
        %4248 = vmatpush1.bf16.msra.mxu0 0
        %4249 = vmatprep.subr.bf16.mxu0 0
        %4250 = vmatpush1.bf16.msra.mxu0 0
        %4251 = vmatprep.subr.bf16.mxu0 0
        %4252 = vmatpush1.bf16.msra.mxu0 0
        %4253 = vmatprep.subr.bf16.mxu0 0
        %4254 = vmatpush1.bf16.msra.mxu0 0
        %4255 = vmatprep.subr.bf16.mxu0 0
        %4256 = vmatpush1.bf16.msra.mxu0 0
        %4257 = vmatprep.subr.bf16.mxu0 0
        %4258 = vmatpush1.bf16.msra.mxu0 0
        %4259 = vmatprep.mubr.bf16.mxu0 0
        %4260 = vmatmul.mubr.bf16.gmra.mrb[0].mxu0 %v4185
        %v4261 = vpop.f32.mrb[0].mxu0
        %v4262 = vadd.f32 0.0, %v4261
        %v4263 = vpop.f32.mrb[0].mxu0
        %v4264 = vadd.f32 0.0, %v4263
        %v4265 = vpop.f32.mrb[0].mxu0
        %v4266 = vpop.f32.mrb[0].mxu0
        %4267 = vdwg.mxu0
        %v4268 = vadd.f32 %v749, %v4221
        %v4269 = vadd.f32 %v751, %v4223
        %v4270 = vadd.f32 %v942, %v4262
        %v4271 = vadd.f32 %v944, %v4264
        %v4272 = vxor.u32 %v4268, 2147483648
        %v4273 = vmul.f32 %v4272, 1.442695
        %v4274 = vpow.pop %v4273
        %v4275 = vadd.f32 %v4274, 1.0
        %v4276 = vrcp.pop %v4275
        %v4277 = vmul.f32 1.0, %v4276
        %v4278 = vxor.u32 %v4269, 2147483648
        %v4279 = vmul.f32 %v4278, 1.442695
        %v4280 = vpow.pop %v4279
        %v4281 = vadd.f32 %v4280, 1.0
        %v4282 = vrcp.pop %v4281
        %v4283 = vmul.f32 1.0, %v4282
        %v4284 = vtanh.pop %v4270
        %v4285 = vxor.u32 %v4271, 2147483648
        %v4286 = vmul.f32 %v4285, 1.442695
        %v4287 = vpow.pop %v4286
        %v4288 = vadd.f32 %v4287, 1.0
        %v4289 = vrcp.pop %v4288
        %v4290 = vmul.f32 1.0, %v4289
        %v4291 = vmul.f32 %v4283, %v4116
        %v4292 = vmul.f32 %v4277, %v4284
        %v4293 = vadd.f32 %v4291, %v4292
        %v4294 = vtanh.pop %v4293
        %v4295 = vmul.f32 %v4290, %v4294
        %v4297 = vcombine.high %v4295, %v4295
        %v4299 = vunpack.c.l.s4 1966171168
        %v4300 = vunpack.c.0.s8 %v4299
        %v4301 = vlaneseq
        %v4302 = vshrl.u32 %v4301, 7
        %v4303 = vsub.s32 %v4300, %v4302
        %v4304 = vrot.slane %v4295, %v4303
        %v4306 = vunpack.c.l.s4 1966171168
        %v4307 = vunpack.c.0.s8 %v4306
        %v4308 = vlaneseq
        %v4309 = vshrl.u32 %v4308, 7
        %v4310 = vsub.s32 %v4307, %v4309
        %v4311 = vrot.slane %v4297, %v4310
        %v4312 = vcombine.high %v4304, %v4304
        %v4313 = vcombine.high %v4311, %v4311
        %v4315 = vunpack.c.l.s4 1966171168
        %v4316 = vunpack.c.0.s8 %v4315
        %v4317 = vlaneseq
        %v4318 = vshrl.u32 %v4317, 7
        %v4319 = vsub.s32 %v4316, %v4318
        %v4320 = vrot.slane %v4304, %v4319
        %v4322 = vunpack.c.l.s4 1966171168
        %v4323 = vunpack.c.0.s8 %v4322
        %v4324 = vlaneseq
        %v4325 = vshrl.u32 %v4324, 7
        %v4326 = vsub.s32 %v4323, %v4325
        %v4327 = vrot.slane %v4311, %v4326
        %v4329 = vunpack.c.l.s4 1966171168
        %v4330 = vunpack.c.0.s8 %v4329
        %v4331 = vlaneseq
        %v4332 = vshrl.u32 %v4331, 7
        %v4333 = vsub.s32 %v4330, %v4332
        %v4334 = vrot.slane %v4312, %v4333
        %v4336 = vunpack.c.l.s4 1966171168
        %v4337 = vunpack.c.0.s8 %v4336
        %v4338 = vlaneseq
        %v4339 = vshrl.u32 %v4338, 7
        %v4340 = vsub.s32 %v4337, %v4339
        %v4341 = vrot.slane %v4313, %v4340
        %v4342 = vcombine.high %v4320, %v4320
        %v4343 = vcombine.high %v4327, %v4327
        %v4344 = vcombine.high %v4334, %v4334
        %v4345 = vcombine.high %v4341, %v4341
        %4354 = vst [vmem:[%s244 + $0x11] sm:$0x1] %v4320
        %4355 = vst [vmem:[%s244 + $0x31] sm:$0x1] %v4334
        %4356 = vst [vmem:[%s244 + $0x51] sm:$0x1] %v4342
        %4357 = vst [vmem:[%s244 + $0x71] sm:$0x1] %v4344
        %4358 = vst [vmem:[%s244 + $0x91] sm:$0x1] %v4327
        %4359 = vst [vmem:[%s244 + $0xb1] sm:$0x1] %v4341
        %4360 = vst [vmem:[%s244 + $0xd1] sm:$0x1] %v4343
        %4361 = vst [vmem:[%s244 + $0xf1] sm:$0x1] %v4345
        %v4362 = vpack.c.bf16 %v4295, %v4295
        %4363 = vmatprep.subr.bf16.mxu0 %v1114
        %4364 = vmatpush1.bf16.msra.mxu0 %v1113
        %4365 = vmatprep.subr.bf16.mxu0 %v1118
        %4366 = vmatpush1.bf16.msra.mxu0 %v1117
        %4367 = vmatprep.subr.bf16.mxu0 %v1122
        %4368 = vmatpush1.bf16.msra.mxu0 %v1121
        %4369 = vmatprep.subr.bf16.mxu0 %v1126
        %4370 = vmatpush1.bf16.msra.mxu0 %v1125
        %4371 = vmatprep.subr.bf16.mxu0 %v1130
        %4372 = vmatpush1.bf16.msra.mxu0 %v1129
        %4373 = vmatprep.subr.bf16.mxu0 %v1134
        %4374 = vmatpush1.bf16.msra.mxu0 %v1133
        %4375 = vmatprep.subr.bf16.mxu0 %v1138
        %4376 = vmatpush1.bf16.msra.mxu0 %v1137
        %4377 = vmatprep.subr.bf16.mxu0 %v1142
        %4378 = vmatpush1.bf16.msra.mxu0 %v1141
        %4379 = vmatprep.subr.bf16.mxu0 0
        %4380 = vmatpush1.bf16.msra.mxu0 0
        %4381 = vmatprep.subr.bf16.mxu0 0
        %4382 = vmatpush1.bf16.msra.mxu0 0
        %4383 = vmatprep.subr.bf16.mxu0 0
        %4384 = vmatpush1.bf16.msra.mxu0 0
        %4385 = vmatprep.subr.bf16.mxu0 0
        %4386 = vmatpush1.bf16.msra.mxu0 0
        %4387 = vmatprep.subr.bf16.mxu0 0
        %4388 = vmatpush1.bf16.msra.mxu0 0
        %4389 = vmatprep.subr.bf16.mxu0 0
        %4390 = vmatpush1.bf16.msra.mxu0 0
        %4391 = vmatprep.subr.bf16.mxu0 0
        %4392 = vmatpush1.bf16.msra.mxu0 0
        %4393 = vmatprep.subr.bf16.mxu0 0
        %4394 = vmatpush1.bf16.msra.mxu0 0
        %4395 = vmatprep.mubr.bf16.mxu0 0
        %4396 = vmatmul.mubr.bf16.gmra.mrb[0].mxu0 %v4362
        %v4397 = vpop.f32.mrb[0].mxu0
        %v4398 = vadd.f32 0.0, %v4397
        %v4399 = vpop.f32.mrb[0].mxu0
        %v4400 = vadd.f32 0.0, %v4399
        %v4401 = vpop.f32.mrb[0].mxu0
        %v4402 = vpop.f32.mrb[0].mxu0
        %4403 = vdwg.mxu0
        %4404 = vmatprep.subr.bf16.mxu0 %v1116
        %4405 = vmatpush1.bf16.msra.mxu0 %v1115
        %4406 = vmatprep.subr.bf16.mxu0 %v1120
        %4407 = vmatpush1.bf16.msra.mxu0 %v1119
        %4408 = vmatprep.subr.bf16.mxu0 %v1124
        %4409 = vmatpush1.bf16.msra.mxu0 %v1123
        %4410 = vmatprep.subr.bf16.mxu0 %v1128
        %4411 = vmatpush1.bf16.msra.mxu0 %v1127
        %4412 = vmatprep.subr.bf16.mxu0 %v1132
        %4413 = vmatpush1.bf16.msra.mxu0 %v1131
        %4414 = vmatprep.subr.bf16.mxu0 %v1136
        %4415 = vmatpush1.bf16.msra.mxu0 %v1135
        %4416 = vmatprep.subr.bf16.mxu0 %v1140
        %4417 = vmatpush1.bf16.msra.mxu0 %v1139
        %4418 = vmatprep.subr.bf16.mxu0 %v1144
        %4419 = vmatpush1.bf16.msra.mxu0 %v1143
        %4420 = vmatprep.subr.bf16.mxu0 0
        %4421 = vmatpush1.bf16.msra.mxu0 0
        %4422 = vmatprep.subr.bf16.mxu0 0
        %4423 = vmatpush1.bf16.msra.mxu0 0
        %4424 = vmatprep.subr.bf16.mxu0 0
        %4425 = vmatpush1.bf16.msra.mxu0 0
        %4426 = vmatprep.subr.bf16.mxu0 0
        %4427 = vmatpush1.bf16.msra.mxu0 0
        %4428 = vmatprep.subr.bf16.mxu0 0
        %4429 = vmatpush1.bf16.msra.mxu0 0
        %4430 = vmatprep.subr.bf16.mxu0 0
        %4431 = vmatpush1.bf16.msra.mxu0 0
        %4432 = vmatprep.subr.bf16.mxu0 0
        %4433 = vmatpush1.bf16.msra.mxu0 0
        %4434 = vmatprep.subr.bf16.mxu0 0
        %4435 = vmatpush1.bf16.msra.mxu0 0
        %4436 = vmatprep.mubr.bf16.mxu0 0
        %4437 = vmatmul.mubr.bf16.gmra.mrb[0].mxu0 %v4362
        %v4438 = vpop.f32.mrb[0].mxu0
        %v4439 = vadd.f32 0.0, %v4438
        %v4440 = vpop.f32.mrb[0].mxu0
        %v4441 = vadd.f32 0.0, %v4440
        %v4442 = vpop.f32.mrb[0].mxu0
        %v4443 = vpop.f32.mrb[0].mxu0
        %4444 = vdwg.mxu0
        %v4445 = vadd.f32 %v755, %v4398
        %v4446 = vadd.f32 %v757, %v4400
        %v4447 = vadd.f32 %v948, %v4439
        %v4448 = vadd.f32 %v950, %v4441
        %v4449 = vxor.u32 %v4445, 2147483648
        %v4450 = vmul.f32 %v4449, 1.442695
        %v4451 = vpow.pop %v4450
        %v4452 = vadd.f32 %v4451, 1.0
        %v4453 = vrcp.pop %v4452
        %v4454 = vmul.f32 1.0, %v4453
        %v4455 = vxor.u32 %v4446, 2147483648
        %v4456 = vmul.f32 %v4455, 1.442695
        %v4457 = vpow.pop %v4456
        %v4458 = vadd.f32 %v4457, 1.0
        %v4459 = vrcp.pop %v4458
        %v4460 = vmul.f32 1.0, %v4459
        %v4461 = vtanh.pop %v4447
        %v4462 = vxor.u32 %v4448, 2147483648
        %v4463 = vmul.f32 %v4462, 1.442695
        %v4464 = vpow.pop %v4463
        %v4465 = vadd.f32 %v4464, 1.0
        %v4466 = vrcp.pop %v4465
        %v4467 = vmul.f32 1.0, %v4466
        %v4468 = vmul.f32 %v4460, %v4293
        %v4469 = vmul.f32 %v4454, %v4461
        %v4470 = vadd.f32 %v4468, %v4469
        %v4471 = vtanh.pop %v4470
        %v4472 = vmul.f32 %v4467, %v4471
        %v4474 = vcombine.high %v4472, %v4472
        %v4476 = vunpack.c.l.s4 1966171168
        %v4477 = vunpack.c.0.s8 %v4476
        %v4478 = vlaneseq
        %v4479 = vshrl.u32 %v4478, 7
        %v4480 = vsub.s32 %v4477, %v4479
        %v4481 = vrot.slane %v4472, %v4480
        %v4483 = vunpack.c.l.s4 1966171168
        %v4484 = vunpack.c.0.s8 %v4483
        %v4485 = vlaneseq
        %v4486 = vshrl.u32 %v4485, 7
        %v4487 = vsub.s32 %v4484, %v4486
        %v4488 = vrot.slane %v4474, %v4487
        %v4489 = vcombine.high %v4481, %v4481
        %v4490 = vcombine.high %v4488, %v4488
        %v4492 = vunpack.c.l.s4 1966171168
        %v4493 = vunpack.c.0.s8 %v4492
        %v4494 = vlaneseq
        %v4495 = vshrl.u32 %v4494, 7
        %v4496 = vsub.s32 %v4493, %v4495
        %v4497 = vrot.slane %v4481, %v4496
        %v4499 = vunpack.c.l.s4 1966171168
        %v4500 = vunpack.c.0.s8 %v4499
        %v4501 = vlaneseq
        %v4502 = vshrl.u32 %v4501, 7
        %v4503 = vsub.s32 %v4500, %v4502
        %v4504 = vrot.slane %v4488, %v4503
        %v4506 = vunpack.c.l.s4 1966171168
        %v4507 = vunpack.c.0.s8 %v4506
        %v4508 = vlaneseq
        %v4509 = vshrl.u32 %v4508, 7
        %v4510 = vsub.s32 %v4507, %v4509
        %v4511 = vrot.slane %v4489, %v4510
        %v4513 = vunpack.c.l.s4 1966171168
        %v4514 = vunpack.c.0.s8 %v4513
        %v4515 = vlaneseq
        %v4516 = vshrl.u32 %v4515, 7
        %v4517 = vsub.s32 %v4514, %v4516
        %v4518 = vrot.slane %v4490, %v4517
        %v4519 = vcombine.high %v4497, %v4497
        %v4520 = vcombine.high %v4504, %v4504
        %v4521 = vcombine.high %v4511, %v4511
        %v4522 = vcombine.high %v4518, %v4518
        %4531 = vst [vmem:[%s244 + $0x12] sm:$0x1] %v4497
        %4532 = vst [vmem:[%s244 + $0x32] sm:$0x1] %v4511
        %4533 = vst [vmem:[%s244 + $0x52] sm:$0x1] %v4519
        %4534 = vst [vmem:[%s244 + $0x72] sm:$0x1] %v4521
        %4535 = vst [vmem:[%s244 + $0x92] sm:$0x1] %v4504
        %4536 = vst [vmem:[%s244 + $0xb2] sm:$0x1] %v4518
        %4537 = vst [vmem:[%s244 + $0xd2] sm:$0x1] %v4520
        %4538 = vst [vmem:[%s244 + $0xf2] sm:$0x1] %v4522
        %v4539 = vpack.c.bf16 %v4472, %v4472
        %4540 = vmatprep.subr.bf16.mxu0 %v1114
        %4541 = vmatpush1.bf16.msra.mxu0 %v1113
        %4542 = vmatprep.subr.bf16.mxu0 %v1118
        %4543 = vmatpush1.bf16.msra.mxu0 %v1117
        %4544 = vmatprep.subr.bf16.mxu0 %v1122
        %4545 = vmatpush1.bf16.msra.mxu0 %v1121
        %4546 = vmatprep.subr.bf16.mxu0 %v1126
        %4547 = vmatpush1.bf16.msra.mxu0 %v1125
        %4548 = vmatprep.subr.bf16.mxu0 %v1130
        %4549 = vmatpush1.bf16.msra.mxu0 %v1129
        %4550 = vmatprep.subr.bf16.mxu0 %v1134
        %4551 = vmatpush1.bf16.msra.mxu0 %v1133
        %4552 = vmatprep.subr.bf16.mxu0 %v1138
        %4553 = vmatpush1.bf16.msra.mxu0 %v1137
        %4554 = vmatprep.subr.bf16.mxu0 %v1142
        %4555 = vmatpush1.bf16.msra.mxu0 %v1141
        %4556 = vmatprep.subr.bf16.mxu0 0
        %4557 = vmatpush1.bf16.msra.mxu0 0
        %4558 = vmatprep.subr.bf16.mxu0 0
        %4559 = vmatpush1.bf16.msra.mxu0 0
        %4560 = vmatprep.subr.bf16.mxu0 0
        %4561 = vmatpush1.bf16.msra.mxu0 0
        %4562 = vmatprep.subr.bf16.mxu0 0
        %4563 = vmatpush1.bf16.msra.mxu0 0
        %4564 = vmatprep.subr.bf16.mxu0 0
        %4565 = vmatpush1.bf16.msra.mxu0 0
        %4566 = vmatprep.subr.bf16.mxu0 0
        %4567 = vmatpush1.bf16.msra.mxu0 0
        %4568 = vmatprep.subr.bf16.mxu0 0
        %4569 = vmatpush1.bf16.msra.mxu0 0
        %4570 = vmatprep.subr.bf16.mxu0 0
        %4571 = vmatpush1.bf16.msra.mxu0 0
        %4572 = vmatprep.mubr.bf16.mxu0 0
        %4573 = vmatmul.mubr.bf16.gmra.mrb[0].mxu0 %v4539
        %v4574 = vpop.f32.mrb[0].mxu0
        %v4575 = vadd.f32 0.0, %v4574
        %v4576 = vpop.f32.mrb[0].mxu0
        %v4577 = vadd.f32 0.0, %v4576
        %v4578 = vpop.f32.mrb[0].mxu0
        %v4579 = vpop.f32.mrb[0].mxu0
        %4580 = vdwg.mxu0
        %4581 = vmatprep.subr.bf16.mxu0 %v1116
        %4582 = vmatpush1.bf16.msra.mxu0 %v1115
        %4583 = vmatprep.subr.bf16.mxu0 %v1120
        %4584 = vmatpush1.bf16.msra.mxu0 %v1119
        %4585 = vmatprep.subr.bf16.mxu0 %v1124
        %4586 = vmatpush1.bf16.msra.mxu0 %v1123
        %4587 = vmatprep.subr.bf16.mxu0 %v1128
        %4588 = vmatpush1.bf16.msra.mxu0 %v1127
        %4589 = vmatprep.subr.bf16.mxu0 %v1132
        %4590 = vmatpush1.bf16.msra.mxu0 %v1131
        %4591 = vmatprep.subr.bf16.mxu0 %v1136
        %4592 = vmatpush1.bf16.msra.mxu0 %v1135
        %4593 = vmatprep.subr.bf16.mxu0 %v1140
        %4594 = vmatpush1.bf16.msra.mxu0 %v1139
        %4595 = vmatprep.subr.bf16.mxu0 %v1144
        %4596 = vmatpush1.bf16.msra.mxu0 %v1143
        %4597 = vmatprep.subr.bf16.mxu0 0
        %4598 = vmatpush1.bf16.msra.mxu0 0
        %4599 = vmatprep.subr.bf16.mxu0 0
        %4600 = vmatpush1.bf16.msra.mxu0 0
        %4601 = vmatprep.subr.bf16.mxu0 0
        %4602 = vmatpush1.bf16.msra.mxu0 0
        %4603 = vmatprep.subr.bf16.mxu0 0
        %4604 = vmatpush1.bf16.msra.mxu0 0
        %4605 = vmatprep.subr.bf16.mxu0 0
        %4606 = vmatpush1.bf16.msra.mxu0 0
        %4607 = vmatprep.subr.bf16.mxu0 0
        %4608 = vmatpush1.bf16.msra.mxu0 0
        %4609 = vmatprep.subr.bf16.mxu0 0
        %4610 = vmatpush1.bf16.msra.mxu0 0
        %4611 = vmatprep.subr.bf16.mxu0 0
        %4612 = vmatpush1.bf16.msra.mxu0 0
        %4613 = vmatprep.mubr.bf16.mxu0 0
        %4614 = vmatmul.mubr.bf16.gmra.mrb[0].mxu0 %v4539
        %v4615 = vpop.f32.mrb[0].mxu0
        %v4616 = vadd.f32 0.0, %v4615
        %v4617 = vpop.f32.mrb[0].mxu0
        %v4618 = vadd.f32 0.0, %v4617
        %v4619 = vpop.f32.mrb[0].mxu0
        %v4620 = vpop.f32.mrb[0].mxu0
        %4621 = vdwg.mxu0
        %v4622 = vadd.f32 %v759, %v4575
        %v4623 = vadd.f32 %v761, %v4577
        %v4624 = vadd.f32 %v952, %v4616
        %v4625 = vadd.f32 %v954, %v4618
        %v4626 = vxor.u32 %v4622, 2147483648
        %v4627 = vmul.f32 %v4626, 1.442695
        %v4628 = vpow.pop %v4627
        %v4629 = vadd.f32 %v4628, 1.0
        %v4630 = vrcp.pop %v4629
        %v4631 = vmul.f32 1.0, %v4630
        %v4632 = vxor.u32 %v4623, 2147483648
        %v4633 = vmul.f32 %v4632, 1.442695
        %v4634 = vpow.pop %v4633
        %v4635 = vadd.f32 %v4634, 1.0
        %v4636 = vrcp.pop %v4635
        %v4637 = vmul.f32 1.0, %v4636
        %v4638 = vtanh.pop %v4624
        %v4639 = vxor.u32 %v4625, 2147483648
        %v4640 = vmul.f32 %v4639, 1.442695
        %v4641 = vpow.pop %v4640
        %v4642 = vadd.f32 %v4641, 1.0
        %v4643 = vrcp.pop %v4642
        %v4644 = vmul.f32 1.0, %v4643
        %v4645 = vmul.f32 %v4637, %v4470
        %v4646 = vmul.f32 %v4631, %v4638
        %v4647 = vadd.f32 %v4645, %v4646
        %v4648 = vtanh.pop %v4647
        %v4649 = vmul.f32 %v4644, %v4648
        %v4651 = vcombine.high %v4649, %v4649
        %v4653 = vunpack.c.l.s4 1966171168
        %v4654 = vunpack.c.0.s8 %v4653
        %v4655 = vlaneseq
        %v4656 = vshrl.u32 %v4655, 7
        %v4657 = vsub.s32 %v4654, %v4656
        %v4658 = vrot.slane %v4649, %v4657
        %v4660 = vunpack.c.l.s4 1966171168
        %v4661 = vunpack.c.0.s8 %v4660
        %v4662 = vlaneseq
        %v4663 = vshrl.u32 %v4662, 7
        %v4664 = vsub.s32 %v4661, %v4663
        %v4665 = vrot.slane %v4651, %v4664
        %v4666 = vcombine.high %v4658, %v4658
        %v4667 = vcombine.high %v4665, %v4665
        %v4669 = vunpack.c.l.s4 1966171168
        %v4670 = vunpack.c.0.s8 %v4669
        %v4671 = vlaneseq
        %v4672 = vshrl.u32 %v4671, 7
        %v4673 = vsub.s32 %v4670, %v4672
        %v4674 = vrot.slane %v4658, %v4673
        %v4676 = vunpack.c.l.s4 1966171168
        %v4677 = vunpack.c.0.s8 %v4676
        %v4678 = vlaneseq
        %v4679 = vshrl.u32 %v4678, 7
        %v4680 = vsub.s32 %v4677, %v4679
        %v4681 = vrot.slane %v4665, %v4680
        %v4683 = vunpack.c.l.s4 1966171168
        %v4684 = vunpack.c.0.s8 %v4683
        %v4685 = vlaneseq
        %v4686 = vshrl.u32 %v4685, 7
        %v4687 = vsub.s32 %v4684, %v4686
        %v4688 = vrot.slane %v4666, %v4687
        %v4690 = vunpack.c.l.s4 1966171168
        %v4691 = vunpack.c.0.s8 %v4690
        %v4692 = vlaneseq
        %v4693 = vshrl.u32 %v4692, 7
        %v4694 = vsub.s32 %v4691, %v4693
        %v4695 = vrot.slane %v4667, %v4694
        %v4696 = vcombine.high %v4674, %v4674
        %v4697 = vcombine.high %v4681, %v4681
        %v4698 = vcombine.high %v4688, %v4688
        %v4699 = vcombine.high %v4695, %v4695
        %4708 = vst [vmem:[%s244 + $0x13] sm:$0x1] %v4674
        %4709 = vst [vmem:[%s244 + $0x33] sm:$0x1] %v4688
        %4710 = vst [vmem:[%s244 + $0x53] sm:$0x1] %v4696
        %4711 = vst [vmem:[%s244 + $0x73] sm:$0x1] %v4698
        %4712 = vst [vmem:[%s244 + $0x93] sm:$0x1] %v4681
        %4713 = vst [vmem:[%s244 + $0xb3] sm:$0x1] %v4695
        %4714 = vst [vmem:[%s244 + $0xd3] sm:$0x1] %v4697
        %4715 = vst [vmem:[%s244 + $0xf3] sm:$0x1] %v4699
        %v4716 = vpack.c.bf16 %v4649, %v4649
        %4717 = vmatprep.subr.bf16.mxu0 %v1114
        %4718 = vmatpush1.bf16.msra.mxu0 %v1113
        %4719 = vmatprep.subr.bf16.mxu0 %v1118
        %4720 = vmatpush1.bf16.msra.mxu0 %v1117
        %4721 = vmatprep.subr.bf16.mxu0 %v1122
        %4722 = vmatpush1.bf16.msra.mxu0 %v1121
        %4723 = vmatprep.subr.bf16.mxu0 %v1126
        %4724 = vmatpush1.bf16.msra.mxu0 %v1125
        %4725 = vmatprep.subr.bf16.mxu0 %v1130
        %4726 = vmatpush1.bf16.msra.mxu0 %v1129
        %4727 = vmatprep.subr.bf16.mxu0 %v1134
        %4728 = vmatpush1.bf16.msra.mxu0 %v1133
        %4729 = vmatprep.subr.bf16.mxu0 %v1138
        %4730 = vmatpush1.bf16.msra.mxu0 %v1137
        %4731 = vmatprep.subr.bf16.mxu0 %v1142
        %4732 = vmatpush1.bf16.msra.mxu0 %v1141
        %4733 = vmatprep.subr.bf16.mxu0 0
        %4734 = vmatpush1.bf16.msra.mxu0 0
        %4735 = vmatprep.subr.bf16.mxu0 0
        %4736 = vmatpush1.bf16.msra.mxu0 0
        %4737 = vmatprep.subr.bf16.mxu0 0
        %4738 = vmatpush1.bf16.msra.mxu0 0
        %4739 = vmatprep.subr.bf16.mxu0 0
        %4740 = vmatpush1.bf16.msra.mxu0 0
        %4741 = vmatprep.subr.bf16.mxu0 0
        %4742 = vmatpush1.bf16.msra.mxu0 0
        %4743 = vmatprep.subr.bf16.mxu0 0
        %4744 = vmatpush1.bf16.msra.mxu0 0
        %4745 = vmatprep.subr.bf16.mxu0 0
        %4746 = vmatpush1.bf16.msra.mxu0 0
        %4747 = vmatprep.subr.bf16.mxu0 0
        %4748 = vmatpush1.bf16.msra.mxu0 0
        %4749 = vmatprep.mubr.bf16.mxu0 0
        %4750 = vmatmul.mubr.bf16.gmra.mrb[0].mxu0 %v4716
        %v4751 = vpop.f32.mrb[0].mxu0
        %v4752 = vadd.f32 0.0, %v4751
        %v4753 = vpop.f32.mrb[0].mxu0
        %v4754 = vadd.f32 0.0, %v4753
        %v4755 = vpop.f32.mrb[0].mxu0
        %v4756 = vpop.f32.mrb[0].mxu0
        %4757 = vdwg.mxu0
        %4758 = vmatprep.subr.bf16.mxu0 %v1116
        %4759 = vmatpush1.bf16.msra.mxu0 %v1115
        %4760 = vmatprep.subr.bf16.mxu0 %v1120
        %4761 = vmatpush1.bf16.msra.mxu0 %v1119
        %4762 = vmatprep.subr.bf16.mxu0 %v1124
        %4763 = vmatpush1.bf16.msra.mxu0 %v1123
        %4764 = vmatprep.subr.bf16.mxu0 %v1128
        %4765 = vmatpush1.bf16.msra.mxu0 %v1127
        %4766 = vmatprep.subr.bf16.mxu0 %v1132
        %4767 = vmatpush1.bf16.msra.mxu0 %v1131
        %4768 = vmatprep.subr.bf16.mxu0 %v1136
        %4769 = vmatpush1.bf16.msra.mxu0 %v1135
        %4770 = vmatprep.subr.bf16.mxu0 %v1140
        %4771 = vmatpush1.bf16.msra.mxu0 %v1139
        %4772 = vmatprep.subr.bf16.mxu0 %v1144
        %4773 = vmatpush1.bf16.msra.mxu0 %v1143
        %4774 = vmatprep.subr.bf16.mxu0 0
        %4775 = vmatpush1.bf16.msra.mxu0 0
        %4776 = vmatprep.subr.bf16.mxu0 0
        %4777 = vmatpush1.bf16.msra.mxu0 0
        %4778 = vmatprep.subr.bf16.mxu0 0
        %4779 = vmatpush1.bf16.msra.mxu0 0
        %4780 = vmatprep.subr.bf16.mxu0 0
        %4781 = vmatpush1.bf16.msra.mxu0 0
        %4782 = vmatprep.subr.bf16.mxu0 0
        %4783 = vmatpush1.bf16.msra.mxu0 0
        %4784 = vmatprep.subr.bf16.mxu0 0
        %4785 = vmatpush1.bf16.msra.mxu0 0
        %4786 = vmatprep.subr.bf16.mxu0 0
        %4787 = vmatpush1.bf16.msra.mxu0 0
        %4788 = vmatprep.subr.bf16.mxu0 0
        %4789 = vmatpush1.bf16.msra.mxu0 0
        %4790 = vmatprep.mubr.bf16.mxu0 0
        %4791 = vmatmul.mubr.bf16.gmra.mrb[0].mxu0 %v4716
        %v4792 = vpop.f32.mrb[0].mxu0
        %v4793 = vadd.f32 0.0, %v4792
        %v4794 = vpop.f32.mrb[0].mxu0
        %v4795 = vadd.f32 0.0, %v4794
        %v4796 = vpop.f32.mrb[0].mxu0
        %v4797 = vpop.f32.mrb[0].mxu0
        %4798 = vdwg.mxu0
        %v4799 = vadd.f32 %v765, %v4752
        %v4800 = vadd.f32 %v767, %v4754
        %v4801 = vadd.f32 %v958, %v4793
        %v4802 = vadd.f32 %v960, %v4795
        %v4803 = vxor.u32 %v4799, 2147483648
        %v4804 = vmul.f32 %v4803, 1.442695
        %v4805 = vpow.pop %v4804
        %v4806 = vadd.f32 %v4805, 1.0
        %v4807 = vrcp.pop %v4806
        %v4808 = vmul.f32 1.0, %v4807
        %v4809 = vxor.u32 %v4800, 2147483648
        %v4810 = vmul.f32 %v4809, 1.442695
        %v4811 = vpow.pop %v4810
        %v4812 = vadd.f32 %v4811, 1.0
        %v4813 = vrcp.pop %v4812
        %v4814 = vmul.f32 1.0, %v4813
        %v4815 = vtanh.pop %v4801
        %v4816 = vxor.u32 %v4802, 2147483648
        %v4817 = vmul.f32 %v4816, 1.442695
        %v4818 = vpow.pop %v4817
        %v4819 = vadd.f32 %v4818, 1.0
        %v4820 = vrcp.pop %v4819
        %v4821 = vmul.f32 1.0, %v4820
        %v4822 = vmul.f32 %v4814, %v4647
        %v4823 = vmul.f32 %v4808, %v4815
        %v4824 = vadd.f32 %v4822, %v4823
        %v4825 = vtanh.pop %v4824
        %v4826 = vmul.f32 %v4821, %v4825
        %v4828 = vcombine.high %v4826, %v4826
        %v4830 = vunpack.c.l.s4 1966171168
        %v4831 = vunpack.c.0.s8 %v4830
        %v4832 = vlaneseq
        %v4833 = vshrl.u32 %v4832, 7
        %v4834 = vsub.s32 %v4831, %v4833
        %v4835 = vrot.slane %v4826, %v4834
        %v4837 = vunpack.c.l.s4 1966171168
        %v4838 = vunpack.c.0.s8 %v4837
        %v4839 = vlaneseq
        %v4840 = vshrl.u32 %v4839, 7
        %v4841 = vsub.s32 %v4838, %v4840
        %v4842 = vrot.slane %v4828, %v4841
        %v4843 = vcombine.high %v4835, %v4835
        %v4844 = vcombine.high %v4842, %v4842
        %v4846 = vunpack.c.l.s4 1966171168
        %v4847 = vunpack.c.0.s8 %v4846
        %v4848 = vlaneseq
        %v4849 = vshrl.u32 %v4848, 7
        %v4850 = vsub.s32 %v4847, %v4849
        %v4851 = vrot.slane %v4835, %v4850
        %v4853 = vunpack.c.l.s4 1966171168
        %v4854 = vunpack.c.0.s8 %v4853
        %v4855 = vlaneseq
        %v4856 = vshrl.u32 %v4855, 7
        %v4857 = vsub.s32 %v4854, %v4856
        %v4858 = vrot.slane %v4842, %v4857
        %v4860 = vunpack.c.l.s4 1966171168
        %v4861 = vunpack.c.0.s8 %v4860
        %v4862 = vlaneseq
        %v4863 = vshrl.u32 %v4862, 7
        %v4864 = vsub.s32 %v4861, %v4863
        %v4865 = vrot.slane %v4843, %v4864
        %v4867 = vunpack.c.l.s4 1966171168
        %v4868 = vunpack.c.0.s8 %v4867
        %v4869 = vlaneseq
        %v4870 = vshrl.u32 %v4869, 7
        %v4871 = vsub.s32 %v4868, %v4870
        %v4872 = vrot.slane %v4844, %v4871
        %v4873 = vcombine.high %v4851, %v4851
        %v4874 = vcombine.high %v4858, %v4858
        %v4875 = vcombine.high %v4865, %v4865
        %v4876 = vcombine.high %v4872, %v4872
        %4885 = vst [vmem:[%s244 + $0x14] sm:$0x1] %v4851
        %4886 = vst [vmem:[%s244 + $0x34] sm:$0x1] %v4865
        %4887 = vst [vmem:[%s244 + $0x54] sm:$0x1] %v4873
        %4888 = vst [vmem:[%s244 + $0x74] sm:$0x1] %v4875
        %4889 = vst [vmem:[%s244 + $0x94] sm:$0x1] %v4858
        %4890 = vst [vmem:[%s244 + $0xb4] sm:$0x1] %v4872
        %4891 = vst [vmem:[%s244 + $0xd4] sm:$0x1] %v4874
        %4892 = vst [vmem:[%s244 + $0xf4] sm:$0x1] %v4876
        %v4893 = vpack.c.bf16 %v4826, %v4826
        %4894 = vmatprep.subr.bf16.mxu0 %v1114
        %4895 = vmatpush1.bf16.msra.mxu0 %v1113
        %4896 = vmatprep.subr.bf16.mxu0 %v1118
        %4897 = vmatpush1.bf16.msra.mxu0 %v1117
        %4898 = vmatprep.subr.bf16.mxu0 %v1122
        %4899 = vmatpush1.bf16.msra.mxu0 %v1121
        %4900 = vmatprep.subr.bf16.mxu0 %v1126
        %4901 = vmatpush1.bf16.msra.mxu0 %v1125
        %4902 = vmatprep.subr.bf16.mxu0 %v1130
        %4903 = vmatpush1.bf16.msra.mxu0 %v1129
        %4904 = vmatprep.subr.bf16.mxu0 %v1134
        %4905 = vmatpush1.bf16.msra.mxu0 %v1133
        %4906 = vmatprep.subr.bf16.mxu0 %v1138
        %4907 = vmatpush1.bf16.msra.mxu0 %v1137
        %4908 = vmatprep.subr.bf16.mxu0 %v1142
        %4909 = vmatpush1.bf16.msra.mxu0 %v1141
        %4910 = vmatprep.subr.bf16.mxu0 0
        %4911 = vmatpush1.bf16.msra.mxu0 0
        %4912 = vmatprep.subr.bf16.mxu0 0
        %4913 = vmatpush1.bf16.msra.mxu0 0
        %4914 = vmatprep.subr.bf16.mxu0 0
        %4915 = vmatpush1.bf16.msra.mxu0 0
        %4916 = vmatprep.subr.bf16.mxu0 0
        %4917 = vmatpush1.bf16.msra.mxu0 0
        %4918 = vmatprep.subr.bf16.mxu0 0
        %4919 = vmatpush1.bf16.msra.mxu0 0
        %4920 = vmatprep.subr.bf16.mxu0 0
        %4921 = vmatpush1.bf16.msra.mxu0 0
        %4922 = vmatprep.subr.bf16.mxu0 0
        %4923 = vmatpush1.bf16.msra.mxu0 0
        %4924 = vmatprep.subr.bf16.mxu0 0
        %4925 = vmatpush1.bf16.msra.mxu0 0
        %4926 = vmatprep.mubr.bf16.mxu0 0
        %4927 = vmatmul.mubr.bf16.gmra.mrb[0].mxu0 %v4893
        %v4928 = vpop.f32.mrb[0].mxu0
        %v4929 = vadd.f32 0.0, %v4928
        %v4930 = vpop.f32.mrb[0].mxu0
        %v4931 = vadd.f32 0.0, %v4930
        %v4932 = vpop.f32.mrb[0].mxu0
        %v4933 = vpop.f32.mrb[0].mxu0
        %4934 = vdwg.mxu0
        %4935 = vmatprep.subr.bf16.mxu0 %v1116
        %4936 = vmatpush1.bf16.msra.mxu0 %v1115
        %4937 = vmatprep.subr.bf16.mxu0 %v1120
        %4938 = vmatpush1.bf16.msra.mxu0 %v1119
        %4939 = vmatprep.subr.bf16.mxu0 %v1124
        %4940 = vmatpush1.bf16.msra.mxu0 %v1123
        %4941 = vmatprep.subr.bf16.mxu0 %v1128
        %4942 = vmatpush1.bf16.msra.mxu0 %v1127
        %4943 = vmatprep.subr.bf16.mxu0 %v1132
        %4944 = vmatpush1.bf16.msra.mxu0 %v1131
        %4945 = vmatprep.subr.bf16.mxu0 %v1136
        %4946 = vmatpush1.bf16.msra.mxu0 %v1135
        %4947 = vmatprep.subr.bf16.mxu0 %v1140
        %4948 = vmatpush1.bf16.msra.mxu0 %v1139
        %4949 = vmatprep.subr.bf16.mxu0 %v1144
        %4950 = vmatpush1.bf16.msra.mxu0 %v1143
        %4951 = vmatprep.subr.bf16.mxu0 0
        %4952 = vmatpush1.bf16.msra.mxu0 0
        %4953 = vmatprep.subr.bf16.mxu0 0
        %4954 = vmatpush1.bf16.msra.mxu0 0
        %4955 = vmatprep.subr.bf16.mxu0 0
        %4956 = vmatpush1.bf16.msra.mxu0 0
        %4957 = vmatprep.subr.bf16.mxu0 0
        %4958 = vmatpush1.bf16.msra.mxu0 0
        %4959 = vmatprep.subr.bf16.mxu0 0
        %4960 = vmatpush1.bf16.msra.mxu0 0
        %4961 = vmatprep.subr.bf16.mxu0 0
        %4962 = vmatpush1.bf16.msra.mxu0 0
        %4963 = vmatprep.subr.bf16.mxu0 0
        %4964 = vmatpush1.bf16.msra.mxu0 0
        %4965 = vmatprep.subr.bf16.mxu0 0
        %4966 = vmatpush1.bf16.msra.mxu0 0
        %4967 = vmatprep.mubr.bf16.mxu0 0
        %4968 = vmatmul.mubr.bf16.gmra.mrb[0].mxu0 %v4893
        %v4969 = vpop.f32.mrb[0].mxu0
        %v4970 = vadd.f32 0.0, %v4969
        %v4971 = vpop.f32.mrb[0].mxu0
        %v4972 = vadd.f32 0.0, %v4971
        %v4973 = vpop.f32.mrb[0].mxu0
        %v4974 = vpop.f32.mrb[0].mxu0
        %4975 = vdwg.mxu0
        %v4976 = vadd.f32 %v769, %v4929
        %v4977 = vadd.f32 %v771, %v4931
        %v4978 = vadd.f32 %v962, %v4970
        %v4979 = vadd.f32 %v964, %v4972
        %v4980 = vxor.u32 %v4976, 2147483648
        %v4981 = vmul.f32 %v4980, 1.442695
        %v4982 = vpow.pop %v4981
        %v4983 = vadd.f32 %v4982, 1.0
        %v4984 = vrcp.pop %v4983
        %v4985 = vmul.f32 1.0, %v4984
        %v4986 = vxor.u32 %v4977, 2147483648
        %v4987 = vmul.f32 %v4986, 1.442695
        %v4988 = vpow.pop %v4987
        %v4989 = vadd.f32 %v4988, 1.0
        %v4990 = vrcp.pop %v4989
        %v4991 = vmul.f32 1.0, %v4990
        %v4992 = vtanh.pop %v4978
        %v4993 = vxor.u32 %v4979, 2147483648
        %v4994 = vmul.f32 %v4993, 1.442695
        %v4995 = vpow.pop %v4994
        %v4996 = vadd.f32 %v4995, 1.0
        %v4997 = vrcp.pop %v4996
        %v4998 = vmul.f32 1.0, %v4997
        %v4999 = vmul.f32 %v4991, %v4824
        %v5000 = vmul.f32 %v4985, %v4992
        %v5001 = vadd.f32 %v4999, %v5000
        %v5002 = vtanh.pop %v5001
        %v5003 = vmul.f32 %v4998, %v5002
        %v5005 = vcombine.high %v5003, %v5003
        %v5007 = vunpack.c.l.s4 1966171168
        %v5008 = vunpack.c.0.s8 %v5007
        %v5009 = vlaneseq
        %v5010 = vshrl.u32 %v5009, 7
        %v5011 = vsub.s32 %v5008, %v5010
        %v5012 = vrot.slane %v5003, %v5011
        %v5014 = vunpack.c.l.s4 1966171168
        %v5015 = vunpack.c.0.s8 %v5014
        %v5016 = vlaneseq
        %v5017 = vshrl.u32 %v5016, 7
        %v5018 = vsub.s32 %v5015, %v5017
        %v5019 = vrot.slane %v5005, %v5018
        %v5020 = vcombine.high %v5012, %v5012
        %v5021 = vcombine.high %v5019, %v5019
        %v5023 = vunpack.c.l.s4 1966171168
        %v5024 = vunpack.c.0.s8 %v5023
        %v5025 = vlaneseq
        %v5026 = vshrl.u32 %v5025, 7
        %v5027 = vsub.s32 %v5024, %v5026
        %v5028 = vrot.slane %v5012, %v5027
        %v5030 = vunpack.c.l.s4 1966171168
        %v5031 = vunpack.c.0.s8 %v5030
        %v5032 = vlaneseq
        %v5033 = vshrl.u32 %v5032, 7
        %v5034 = vsub.s32 %v5031, %v5033
        %v5035 = vrot.slane %v5019, %v5034
        %v5037 = vunpack.c.l.s4 1966171168
        %v5038 = vunpack.c.0.s8 %v5037
        %v5039 = vlaneseq
        %v5040 = vshrl.u32 %v5039, 7
        %v5041 = vsub.s32 %v5038, %v5040
        %v5042 = vrot.slane %v5020, %v5041
        %v5044 = vunpack.c.l.s4 1966171168
        %v5045 = vunpack.c.0.s8 %v5044
        %v5046 = vlaneseq
        %v5047 = vshrl.u32 %v5046, 7
        %v5048 = vsub.s32 %v5045, %v5047
        %v5049 = vrot.slane %v5021, %v5048
        %v5050 = vcombine.high %v5028, %v5028
        %v5051 = vcombine.high %v5035, %v5035
        %v5052 = vcombine.high %v5042, %v5042
        %v5053 = vcombine.high %v5049, %v5049
        %5062 = vst [vmem:[%s244 + $0x15] sm:$0x1] %v5028
        %5063 = vst [vmem:[%s244 + $0x35] sm:$0x1] %v5042
        %5064 = vst [vmem:[%s244 + $0x55] sm:$0x1] %v5050
        %5065 = vst [vmem:[%s244 + $0x75] sm:$0x1] %v5052
        %5066 = vst [vmem:[%s244 + $0x95] sm:$0x1] %v5035
        %5067 = vst [vmem:[%s244 + $0xb5] sm:$0x1] %v5049
        %5068 = vst [vmem:[%s244 + $0xd5] sm:$0x1] %v5051
        %5069 = vst [vmem:[%s244 + $0xf5] sm:$0x1] %v5053
        %v5070 = vpack.c.bf16 %v5003, %v5003
        %5071 = vmatprep.subr.bf16.mxu0 %v1114
        %5072 = vmatpush1.bf16.msra.mxu0 %v1113
        %5073 = vmatprep.subr.bf16.mxu0 %v1118
        %5074 = vmatpush1.bf16.msra.mxu0 %v1117
        %5075 = vmatprep.subr.bf16.mxu0 %v1122
        %5076 = vmatpush1.bf16.msra.mxu0 %v1121
        %5077 = vmatprep.subr.bf16.mxu0 %v1126
        %5078 = vmatpush1.bf16.msra.mxu0 %v1125
        %5079 = vmatprep.subr.bf16.mxu0 %v1130
        %5080 = vmatpush1.bf16.msra.mxu0 %v1129
        %5081 = vmatprep.subr.bf16.mxu0 %v1134
        %5082 = vmatpush1.bf16.msra.mxu0 %v1133
        %5083 = vmatprep.subr.bf16.mxu0 %v1138
        %5084 = vmatpush1.bf16.msra.mxu0 %v1137
        %5085 = vmatprep.subr.bf16.mxu0 %v1142
        %5086 = vmatpush1.bf16.msra.mxu0 %v1141
        %5087 = vmatprep.subr.bf16.mxu0 0
        %5088 = vmatpush1.bf16.msra.mxu0 0
        %5089 = vmatprep.subr.bf16.mxu0 0
        %5090 = vmatpush1.bf16.msra.mxu0 0
        %5091 = vmatprep.subr.bf16.mxu0 0
        %5092 = vmatpush1.bf16.msra.mxu0 0
        %5093 = vmatprep.subr.bf16.mxu0 0
        %5094 = vmatpush1.bf16.msra.mxu0 0
        %5095 = vmatprep.subr.bf16.mxu0 0
        %5096 = vmatpush1.bf16.msra.mxu0 0
        %5097 = vmatprep.subr.bf16.mxu0 0
        %5098 = vmatpush1.bf16.msra.mxu0 0
        %5099 = vmatprep.subr.bf16.mxu0 0
        %5100 = vmatpush1.bf16.msra.mxu0 0
        %5101 = vmatprep.subr.bf16.mxu0 0
        %5102 = vmatpush1.bf16.msra.mxu0 0
        %5103 = vmatprep.mubr.bf16.mxu0 0
        %5104 = vmatmul.mubr.bf16.gmra.mrb[0].mxu0 %v5070
        %v5105 = vpop.f32.mrb[0].mxu0
        %v5106 = vadd.f32 0.0, %v5105
        %v5107 = vpop.f32.mrb[0].mxu0
        %v5108 = vadd.f32 0.0, %v5107
        %v5109 = vpop.f32.mrb[0].mxu0
        %v5110 = vpop.f32.mrb[0].mxu0
        %5111 = vdwg.mxu0
        %5112 = vmatprep.subr.bf16.mxu0 %v1116
        %5113 = vmatpush1.bf16.msra.mxu0 %v1115
        %5114 = vmatprep.subr.bf16.mxu0 %v1120
        %5115 = vmatpush1.bf16.msra.mxu0 %v1119
        %5116 = vmatprep.subr.bf16.mxu0 %v1124
        %5117 = vmatpush1.bf16.msra.mxu0 %v1123
        %5118 = vmatprep.subr.bf16.mxu0 %v1128
        %5119 = vmatpush1.bf16.msra.mxu0 %v1127
        %5120 = vmatprep.subr.bf16.mxu0 %v1132
        %5121 = vmatpush1.bf16.msra.mxu0 %v1131
        %5122 = vmatprep.subr.bf16.mxu0 %v1136
        %5123 = vmatpush1.bf16.msra.mxu0 %v1135
        %5124 = vmatprep.subr.bf16.mxu0 %v1140
        %5125 = vmatpush1.bf16.msra.mxu0 %v1139
        %5126 = vmatprep.subr.bf16.mxu0 %v1144
        %5127 = vmatpush1.bf16.msra.mxu0 %v1143
        %5128 = vmatprep.subr.bf16.mxu0 0
        %5129 = vmatpush1.bf16.msra.mxu0 0
        %5130 = vmatprep.subr.bf16.mxu0 0
        %5131 = vmatpush1.bf16.msra.mxu0 0
        %5132 = vmatprep.subr.bf16.mxu0 0
        %5133 = vmatpush1.bf16.msra.mxu0 0
        %5134 = vmatprep.subr.bf16.mxu0 0
        %5135 = vmatpush1.bf16.msra.mxu0 0
        %5136 = vmatprep.subr.bf16.mxu0 0
        %5137 = vmatpush1.bf16.msra.mxu0 0
        %5138 = vmatprep.subr.bf16.mxu0 0
        %5139 = vmatpush1.bf16.msra.mxu0 0
        %5140 = vmatprep.subr.bf16.mxu0 0
        %5141 = vmatpush1.bf16.msra.mxu0 0
        %5142 = vmatprep.subr.bf16.mxu0 0
        %5143 = vmatpush1.bf16.msra.mxu0 0
        %5144 = vmatprep.mubr.bf16.mxu0 0
        %5145 = vmatmul.mubr.bf16.gmra.mrb[0].mxu0 %v5070
        %v5146 = vpop.f32.mrb[0].mxu0
        %v5147 = vadd.f32 0.0, %v5146
        %v5148 = vpop.f32.mrb[0].mxu0
        %v5149 = vadd.f32 0.0, %v5148
        %v5150 = vpop.f32.mrb[0].mxu0
        %v5151 = vpop.f32.mrb[0].mxu0
        %5152 = vdwg.mxu0
        %v5153 = vadd.f32 %v775, %v5106
        %v5154 = vadd.f32 %v777, %v5108
        %v5155 = vadd.f32 %v968, %v5147
        %v5156 = vadd.f32 %v970, %v5149
        %v5157 = vxor.u32 %v5153, 2147483648
        %v5158 = vmul.f32 %v5157, 1.442695
        %v5159 = vpow.pop %v5158
        %v5160 = vadd.f32 %v5159, 1.0
        %v5161 = vrcp.pop %v5160
        %v5162 = vmul.f32 1.0, %v5161
        %v5163 = vxor.u32 %v5154, 2147483648
        %v5164 = vmul.f32 %v5163, 1.442695
        %v5165 = vpow.pop %v5164
        %v5166 = vadd.f32 %v5165, 1.0
        %v5167 = vrcp.pop %v5166
        %v5168 = vmul.f32 1.0, %v5167
        %v5169 = vtanh.pop %v5155
        %v5170 = vxor.u32 %v5156, 2147483648
        %v5171 = vmul.f32 %v5170, 1.442695
        %v5172 = vpow.pop %v5171
        %v5173 = vadd.f32 %v5172, 1.0
        %v5174 = vrcp.pop %v5173
        %v5175 = vmul.f32 1.0, %v5174
        %v5176 = vmul.f32 %v5168, %v5001
        %v5177 = vmul.f32 %v5162, %v5169
        %v5178 = vadd.f32 %v5176, %v5177
        %v5179 = vtanh.pop %v5178
        %v5180 = vmul.f32 %v5175, %v5179
        %v5182 = vcombine.high %v5180, %v5180
        %v5184 = vunpack.c.l.s4 1966171168
        %v5185 = vunpack.c.0.s8 %v5184
        %v5186 = vlaneseq
        %v5187 = vshrl.u32 %v5186, 7
        %v5188 = vsub.s32 %v5185, %v5187
        %v5189 = vrot.slane %v5180, %v5188
        %v5191 = vunpack.c.l.s4 1966171168
        %v5192 = vunpack.c.0.s8 %v5191
        %v5193 = vlaneseq
        %v5194 = vshrl.u32 %v5193, 7
        %v5195 = vsub.s32 %v5192, %v5194
        %v5196 = vrot.slane %v5182, %v5195
        %v5197 = vcombine.high %v5189, %v5189
        %v5198 = vcombine.high %v5196, %v5196
        %v5200 = vunpack.c.l.s4 1966171168
        %v5201 = vunpack.c.0.s8 %v5200
        %v5202 = vlaneseq
        %v5203 = vshrl.u32 %v5202, 7
        %v5204 = vsub.s32 %v5201, %v5203
        %v5205 = vrot.slane %v5189, %v5204
        %v5207 = vunpack.c.l.s4 1966171168
        %v5208 = vunpack.c.0.s8 %v5207
        %v5209 = vlaneseq
        %v5210 = vshrl.u32 %v5209, 7
        %v5211 = vsub.s32 %v5208, %v5210
        %v5212 = vrot.slane %v5196, %v5211
        %v5214 = vunpack.c.l.s4 1966171168
        %v5215 = vunpack.c.0.s8 %v5214
        %v5216 = vlaneseq
        %v5217 = vshrl.u32 %v5216, 7
        %v5218 = vsub.s32 %v5215, %v5217
        %v5219 = vrot.slane %v5197, %v5218
        %v5221 = vunpack.c.l.s4 1966171168
        %v5222 = vunpack.c.0.s8 %v5221
        %v5223 = vlaneseq
        %v5224 = vshrl.u32 %v5223, 7
        %v5225 = vsub.s32 %v5222, %v5224
        %v5226 = vrot.slane %v5198, %v5225
        %v5227 = vcombine.high %v5205, %v5205
        %v5228 = vcombine.high %v5212, %v5212
        %v5229 = vcombine.high %v5219, %v5219
        %v5230 = vcombine.high %v5226, %v5226
        %5239 = vst [vmem:[%s244 + $0x16] sm:$0x1] %v5205
        %5240 = vst [vmem:[%s244 + $0x36] sm:$0x1] %v5219
        %5241 = vst [vmem:[%s244 + $0x56] sm:$0x1] %v5227
        %5242 = vst [vmem:[%s244 + $0x76] sm:$0x1] %v5229
        %5243 = vst [vmem:[%s244 + $0x96] sm:$0x1] %v5212
        %5244 = vst [vmem:[%s244 + $0xb6] sm:$0x1] %v5226
        %5245 = vst [vmem:[%s244 + $0xd6] sm:$0x1] %v5228
        %5246 = vst [vmem:[%s244 + $0xf6] sm:$0x1] %v5230
        %v5247 = vpack.c.bf16 %v5180, %v5180
        %5248 = vmatprep.subr.bf16.mxu0 %v1114
        %5249 = vmatpush1.bf16.msra.mxu0 %v1113
        %5250 = vmatprep.subr.bf16.mxu0 %v1118
        %5251 = vmatpush1.bf16.msra.mxu0 %v1117
        %5252 = vmatprep.subr.bf16.mxu0 %v1122
        %5253 = vmatpush1.bf16.msra.mxu0 %v1121
        %5254 = vmatprep.subr.bf16.mxu0 %v1126
        %5255 = vmatpush1.bf16.msra.mxu0 %v1125
        %5256 = vmatprep.subr.bf16.mxu0 %v1130
        %5257 = vmatpush1.bf16.msra.mxu0 %v1129
        %5258 = vmatprep.subr.bf16.mxu0 %v1134
        %5259 = vmatpush1.bf16.msra.mxu0 %v1133
        %5260 = vmatprep.subr.bf16.mxu0 %v1138
        %5261 = vmatpush1.bf16.msra.mxu0 %v1137
        %5262 = vmatprep.subr.bf16.mxu0 %v1142
        %5263 = vmatpush1.bf16.msra.mxu0 %v1141
        %5264 = vmatprep.subr.bf16.mxu0 0
        %5265 = vmatpush1.bf16.msra.mxu0 0
        %5266 = vmatprep.subr.bf16.mxu0 0
        %5267 = vmatpush1.bf16.msra.mxu0 0
        %5268 = vmatprep.subr.bf16.mxu0 0
        %5269 = vmatpush1.bf16.msra.mxu0 0
        %5270 = vmatprep.subr.bf16.mxu0 0
        %5271 = vmatpush1.bf16.msra.mxu0 0
        %5272 = vmatprep.subr.bf16.mxu0 0
        %5273 = vmatpush1.bf16.msra.mxu0 0
        %5274 = vmatprep.subr.bf16.mxu0 0
        %5275 = vmatpush1.bf16.msra.mxu0 0
        %5276 = vmatprep.subr.bf16.mxu0 0
        %5277 = vmatpush1.bf16.msra.mxu0 0
        %5278 = vmatprep.subr.bf16.mxu0 0
        %5279 = vmatpush1.bf16.msra.mxu0 0
        %5280 = vmatprep.mubr.bf16.mxu0 0
        %5281 = vmatmul.mubr.bf16.gmra.mrb[0].mxu0 %v5247
        %v5282 = vpop.f32.mrb[0].mxu0
        %v5283 = vadd.f32 0.0, %v5282
        %v5284 = vpop.f32.mrb[0].mxu0
        %v5285 = vadd.f32 0.0, %v5284
        %v5286 = vpop.f32.mrb[0].mxu0
        %v5287 = vpop.f32.mrb[0].mxu0
        %5288 = vdwg.mxu0
        %5289 = vmatprep.subr.bf16.mxu0 %v1116
        %5290 = vmatpush1.bf16.msra.mxu0 %v1115
        %5291 = vmatprep.subr.bf16.mxu0 %v1120
        %5292 = vmatpush1.bf16.msra.mxu0 %v1119
        %5293 = vmatprep.subr.bf16.mxu0 %v1124
        %5294 = vmatpush1.bf16.msra.mxu0 %v1123
        %5295 = vmatprep.subr.bf16.mxu0 %v1128
        %5296 = vmatpush1.bf16.msra.mxu0 %v1127
        %5297 = vmatprep.subr.bf16.mxu0 %v1132
        %5298 = vmatpush1.bf16.msra.mxu0 %v1131
        %5299 = vmatprep.subr.bf16.mxu0 %v1136
        %5300 = vmatpush1.bf16.msra.mxu0 %v1135
        %5301 = vmatprep.subr.bf16.mxu0 %v1140
        %5302 = vmatpush1.bf16.msra.mxu0 %v1139
        %5303 = vmatprep.subr.bf16.mxu0 %v1144
        %5304 = vmatpush1.bf16.msra.mxu0 %v1143
        %5305 = vmatprep.subr.bf16.mxu0 0
        %5306 = vmatpush1.bf16.msra.mxu0 0
        %5307 = vmatprep.subr.bf16.mxu0 0
        %5308 = vmatpush1.bf16.msra.mxu0 0
        %5309 = vmatprep.subr.bf16.mxu0 0
        %5310 = vmatpush1.bf16.msra.mxu0 0
        %5311 = vmatprep.subr.bf16.mxu0 0
        %5312 = vmatpush1.bf16.msra.mxu0 0
        %5313 = vmatprep.subr.bf16.mxu0 0
        %5314 = vmatpush1.bf16.msra.mxu0 0
        %5315 = vmatprep.subr.bf16.mxu0 0
        %5316 = vmatpush1.bf16.msra.mxu0 0
        %5317 = vmatprep.subr.bf16.mxu0 0
        %5318 = vmatpush1.bf16.msra.mxu0 0
        %5319 = vmatprep.subr.bf16.mxu0 0
        %5320 = vmatpush1.bf16.msra.mxu0 0
        %5321 = vmatprep.mubr.bf16.mxu0 0
        %5322 = vmatmul.mubr.bf16.gmra.mrb[0].mxu0 %v5247
        %v5323 = vpop.f32.mrb[0].mxu0
        %v5324 = vadd.f32 0.0, %v5323
        %v5325 = vpop.f32.mrb[0].mxu0
        %v5326 = vadd.f32 0.0, %v5325
        %v5327 = vpop.f32.mrb[0].mxu0
        %v5328 = vpop.f32.mrb[0].mxu0
        %5329 = vdwg.mxu0
        %v5330 = vadd.f32 %v779, %v5283
        %v5331 = vadd.f32 %v781, %v5285
        %v5332 = vadd.f32 %v972, %v5324
        %v5333 = vadd.f32 %v974, %v5326
        %v5334 = vxor.u32 %v5330, 2147483648
        %v5335 = vmul.f32 %v5334, 1.442695
        %v5336 = vpow.pop %v5335
        %v5337 = vadd.f32 %v5336, 1.0
        %v5338 = vrcp.pop %v5337
        %v5339 = vmul.f32 1.0, %v5338
        %v5340 = vxor.u32 %v5331, 2147483648
        %v5341 = vmul.f32 %v5340, 1.442695
        %v5342 = vpow.pop %v5341
        %v5343 = vadd.f32 %v5342, 1.0
        %v5344 = vrcp.pop %v5343
        %v5345 = vmul.f32 1.0, %v5344
        %v5346 = vtanh.pop %v5332
        %v5347 = vxor.u32 %v5333, 2147483648
        %v5348 = vmul.f32 %v5347, 1.442695
        %v5349 = vpow.pop %v5348
        %v5350 = vadd.f32 %v5349, 1.0
        %v5351 = vrcp.pop %v5350
        %v5352 = vmul.f32 1.0, %v5351
        %v5353 = vmul.f32 %v5345, %v5178
        %v5354 = vmul.f32 %v5339, %v5346
        %v5355 = vadd.f32 %v5353, %v5354
        %v5356 = vtanh.pop %v5355
        %v5357 = vmul.f32 %v5352, %v5356
        %v5359 = vcombine.high %v5357, %v5357
        %v5361 = vunpack.c.l.s4 1966171168
        %v5362 = vunpack.c.0.s8 %v5361
        %v5363 = vlaneseq
        %v5364 = vshrl.u32 %v5363, 7
        %v5365 = vsub.s32 %v5362, %v5364
        %v5366 = vrot.slane %v5357, %v5365
        %v5368 = vunpack.c.l.s4 1966171168
        %v5369 = vunpack.c.0.s8 %v5368
        %v5370 = vlaneseq
        %v5371 = vshrl.u32 %v5370, 7
        %v5372 = vsub.s32 %v5369, %v5371
        %v5373 = vrot.slane %v5359, %v5372
        %v5374 = vcombine.high %v5366, %v5366
        %v5375 = vcombine.high %v5373, %v5373
        %v5377 = vunpack.c.l.s4 1966171168
        %v5378 = vunpack.c.0.s8 %v5377
        %v5379 = vlaneseq
        %v5380 = vshrl.u32 %v5379, 7
        %v5381 = vsub.s32 %v5378, %v5380
        %v5382 = vrot.slane %v5366, %v5381
        %v5384 = vunpack.c.l.s4 1966171168
        %v5385 = vunpack.c.0.s8 %v5384
        %v5386 = vlaneseq
        %v5387 = vshrl.u32 %v5386, 7
        %v5388 = vsub.s32 %v5385, %v5387
        %v5389 = vrot.slane %v5373, %v5388
        %v5391 = vunpack.c.l.s4 1966171168
        %v5392 = vunpack.c.0.s8 %v5391
        %v5393 = vlaneseq
        %v5394 = vshrl.u32 %v5393, 7
        %v5395 = vsub.s32 %v5392, %v5394
        %v5396 = vrot.slane %v5374, %v5395
        %v5398 = vunpack.c.l.s4 1966171168
        %v5399 = vunpack.c.0.s8 %v5398
        %v5400 = vlaneseq
        %v5401 = vshrl.u32 %v5400, 7
        %v5402 = vsub.s32 %v5399, %v5401
        %v5403 = vrot.slane %v5375, %v5402
        %v5404 = vcombine.high %v5382, %v5382
        %v5405 = vcombine.high %v5389, %v5389
        %v5406 = vcombine.high %v5396, %v5396
        %v5407 = vcombine.high %v5403, %v5403
        %5416 = vst [vmem:[%s244 + $0x17] sm:$0x1] %v5382
        %5417 = vst [vmem:[%s244 + $0x37] sm:$0x1] %v5396
        %5418 = vst [vmem:[%s244 + $0x57] sm:$0x1] %v5404
        %5419 = vst [vmem:[%s244 + $0x77] sm:$0x1] %v5406
        %5420 = vst [vmem:[%s244 + $0x97] sm:$0x1] %v5389
        %5421 = vst [vmem:[%s244 + $0xb7] sm:$0x1] %v5403
        %5422 = vst [vmem:[%s244 + $0xd7] sm:$0x1] %v5405
        %5423 = vst [vmem:[%s244 + $0xf7] sm:$0x1] %v5407
        %v5424 = vpack.c.bf16 %v5357, %v5357
        %5425 = vmatprep.subr.bf16.mxu0 %v1114
        %5426 = vmatpush1.bf16.msra.mxu0 %v1113
        %5427 = vmatprep.subr.bf16.mxu0 %v1118
        %5428 = vmatpush1.bf16.msra.mxu0 %v1117
        %5429 = vmatprep.subr.bf16.mxu0 %v1122
        %5430 = vmatpush1.bf16.msra.mxu0 %v1121
        %5431 = vmatprep.subr.bf16.mxu0 %v1126
        %5432 = vmatpush1.bf16.msra.mxu0 %v1125
        %5433 = vmatprep.subr.bf16.mxu0 %v1130
        %5434 = vmatpush1.bf16.msra.mxu0 %v1129
        %5435 = vmatprep.subr.bf16.mxu0 %v1134
        %5436 = vmatpush1.bf16.msra.mxu0 %v1133
        %5437 = vmatprep.subr.bf16.mxu0 %v1138
        %5438 = vmatpush1.bf16.msra.mxu0 %v1137
        %5439 = vmatprep.subr.bf16.mxu0 %v1142
        %5440 = vmatpush1.bf16.msra.mxu0 %v1141
        %5441 = vmatprep.subr.bf16.mxu0 0
        %5442 = vmatpush1.bf16.msra.mxu0 0
        %5443 = vmatprep.subr.bf16.mxu0 0
        %5444 = vmatpush1.bf16.msra.mxu0 0
        %5445 = vmatprep.subr.bf16.mxu0 0
        %5446 = vmatpush1.bf16.msra.mxu0 0
        %5447 = vmatprep.subr.bf16.mxu0 0
        %5448 = vmatpush1.bf16.msra.mxu0 0
        %5449 = vmatprep.subr.bf16.mxu0 0
        %5450 = vmatpush1.bf16.msra.mxu0 0
        %5451 = vmatprep.subr.bf16.mxu0 0
        %5452 = vmatpush1.bf16.msra.mxu0 0
        %5453 = vmatprep.subr.bf16.mxu0 0
        %5454 = vmatpush1.bf16.msra.mxu0 0
        %5455 = vmatprep.subr.bf16.mxu0 0
        %5456 = vmatpush1.bf16.msra.mxu0 0
        %5457 = vmatprep.mubr.bf16.mxu0 0
        %5458 = vmatmul.mubr.bf16.gmra.mrb[0].mxu0 %v5424
        %v5459 = vpop.f32.mrb[0].mxu0
        %v5460 = vadd.f32 0.0, %v5459
        %v5461 = vpop.f32.mrb[0].mxu0
        %v5462 = vadd.f32 0.0, %v5461
        %v5463 = vpop.f32.mrb[0].mxu0
        %v5464 = vpop.f32.mrb[0].mxu0
        %5465 = vdwg.mxu0
        %5466 = vmatprep.subr.bf16.mxu0 %v1116
        %5467 = vmatpush1.bf16.msra.mxu0 %v1115
        %5468 = vmatprep.subr.bf16.mxu0 %v1120
        %5469 = vmatpush1.bf16.msra.mxu0 %v1119
        %5470 = vmatprep.subr.bf16.mxu0 %v1124
        %5471 = vmatpush1.bf16.msra.mxu0 %v1123
        %5472 = vmatprep.subr.bf16.mxu0 %v1128
        %5473 = vmatpush1.bf16.msra.mxu0 %v1127
        %5474 = vmatprep.subr.bf16.mxu0 %v1132
        %5475 = vmatpush1.bf16.msra.mxu0 %v1131
        %5476 = vmatprep.subr.bf16.mxu0 %v1136
        %5477 = vmatpush1.bf16.msra.mxu0 %v1135
        %5478 = vmatprep.subr.bf16.mxu0 %v1140
        %5479 = vmatpush1.bf16.msra.mxu0 %v1139
        %5480 = vmatprep.subr.bf16.mxu0 %v1144
        %5481 = vmatpush1.bf16.msra.mxu0 %v1143
        %5482 = vmatprep.subr.bf16.mxu0 0
        %5483 = vmatpush1.bf16.msra.mxu0 0
        %5484 = vmatprep.subr.bf16.mxu0 0
        %5485 = vmatpush1.bf16.msra.mxu0 0
        %5486 = vmatprep.subr.bf16.mxu0 0
        %5487 = vmatpush1.bf16.msra.mxu0 0
        %5488 = vmatprep.subr.bf16.mxu0 0
        %5489 = vmatpush1.bf16.msra.mxu0 0
        %5490 = vmatprep.subr.bf16.mxu0 0
        %5491 = vmatpush1.bf16.msra.mxu0 0
        %5492 = vmatprep.subr.bf16.mxu0 0
        %5493 = vmatpush1.bf16.msra.mxu0 0
        %5494 = vmatprep.subr.bf16.mxu0 0
        %5495 = vmatpush1.bf16.msra.mxu0 0
        %5496 = vmatprep.subr.bf16.mxu0 0
        %5497 = vmatpush1.bf16.msra.mxu0 0
        %5498 = vmatprep.mubr.bf16.mxu0 0
        %5499 = vmatmul.mubr.bf16.gmra.mrb[0].mxu0 %v5424
        %v5500 = vpop.f32.mrb[0].mxu0
        %v5501 = vadd.f32 0.0, %v5500
        %v5502 = vpop.f32.mrb[0].mxu0
        %v5503 = vadd.f32 0.0, %v5502
        %v5504 = vpop.f32.mrb[0].mxu0
        %v5505 = vpop.f32.mrb[0].mxu0
        %5506 = vdwg.mxu0
        %v5507 = vadd.f32 %v785, %v5460
        %v5508 = vadd.f32 %v787, %v5462
        %v5509 = vadd.f32 %v978, %v5501
        %v5510 = vadd.f32 %v980, %v5503
        %v5511 = vxor.u32 %v5507, 2147483648
        %v5512 = vmul.f32 %v5511, 1.442695
        %v5513 = vpow.pop %v5512
        %v5514 = vadd.f32 %v5513, 1.0
        %v5515 = vrcp.pop %v5514
        %v5516 = vmul.f32 1.0, %v5515
        %v5517 = vxor.u32 %v5508, 2147483648
        %v5518 = vmul.f32 %v5517, 1.442695
        %v5519 = vpow.pop %v5518
        %v5520 = vadd.f32 %v5519, 1.0
        %v5521 = vrcp.pop %v5520
        %v5522 = vmul.f32 1.0, %v5521
        %v5523 = vtanh.pop %v5509
        %v5524 = vxor.u32 %v5510, 2147483648
        %v5525 = vmul.f32 %v5524, 1.442695
        %v5526 = vpow.pop %v5525
        %v5527 = vadd.f32 %v5526, 1.0
        %v5528 = vrcp.pop %v5527
        %v5529 = vmul.f32 1.0, %v5528
        %v5530 = vmul.f32 %v5522, %v5355
        %v5531 = vmul.f32 %v5516, %v5523
        %v5532 = vadd.f32 %v5530, %v5531
        %v5533 = vtanh.pop %v5532
        %v5534 = vmul.f32 %v5529, %v5533
        %v5536 = vcombine.high %v5534, %v5534
        %v5538 = vunpack.c.l.s4 1966171168
        %v5539 = vunpack.c.0.s8 %v5538
        %v5540 = vlaneseq
        %v5541 = vshrl.u32 %v5540, 7
        %v5542 = vsub.s32 %v5539, %v5541
        %v5543 = vrot.slane %v5534, %v5542
        %v5545 = vunpack.c.l.s4 1966171168
        %v5546 = vunpack.c.0.s8 %v5545
        %v5547 = vlaneseq
        %v5548 = vshrl.u32 %v5547, 7
        %v5549 = vsub.s32 %v5546, %v5548
        %v5550 = vrot.slane %v5536, %v5549
        %v5551 = vcombine.high %v5543, %v5543
        %v5552 = vcombine.high %v5550, %v5550
        %v5554 = vunpack.c.l.s4 1966171168
        %v5555 = vunpack.c.0.s8 %v5554
        %v5556 = vlaneseq
        %v5557 = vshrl.u32 %v5556, 7
        %v5558 = vsub.s32 %v5555, %v5557
        %v5559 = vrot.slane %v5543, %v5558
        %v5561 = vunpack.c.l.s4 1966171168
        %v5562 = vunpack.c.0.s8 %v5561
        %v5563 = vlaneseq
        %v5564 = vshrl.u32 %v5563, 7
        %v5565 = vsub.s32 %v5562, %v5564
        %v5566 = vrot.slane %v5550, %v5565
        %v5568 = vunpack.c.l.s4 1966171168
        %v5569 = vunpack.c.0.s8 %v5568
        %v5570 = vlaneseq
        %v5571 = vshrl.u32 %v5570, 7
        %v5572 = vsub.s32 %v5569, %v5571
        %v5573 = vrot.slane %v5551, %v5572
        %v5575 = vunpack.c.l.s4 1966171168
        %v5576 = vunpack.c.0.s8 %v5575
        %v5577 = vlaneseq
        %v5578 = vshrl.u32 %v5577, 7
        %v5579 = vsub.s32 %v5576, %v5578
        %v5580 = vrot.slane %v5552, %v5579
        %v5581 = vcombine.high %v5559, %v5559
        %v5582 = vcombine.high %v5566, %v5566
        %v5583 = vcombine.high %v5573, %v5573
        %v5584 = vcombine.high %v5580, %v5580
        %5593 = vst [vmem:[%s244 + $0x18] sm:$0x1] %v5559
        %5594 = vst [vmem:[%s244 + $0x38] sm:$0x1] %v5573
        %5595 = vst [vmem:[%s244 + $0x58] sm:$0x1] %v5581
        %5596 = vst [vmem:[%s244 + $0x78] sm:$0x1] %v5583
        %5597 = vst [vmem:[%s244 + $0x98] sm:$0x1] %v5566
        %5598 = vst [vmem:[%s244 + $0xb8] sm:$0x1] %v5580
        %5599 = vst [vmem:[%s244 + $0xd8] sm:$0x1] %v5582
        %5600 = vst [vmem:[%s244 + $0xf8] sm:$0x1] %v5584
        %v5601 = vpack.c.bf16 %v5534, %v5534
        %5602 = vmatprep.subr.bf16.mxu0 %v1114
        %5603 = vmatpush1.bf16.msra.mxu0 %v1113
        %5604 = vmatprep.subr.bf16.mxu0 %v1118
        %5605 = vmatpush1.bf16.msra.mxu0 %v1117
        %5606 = vmatprep.subr.bf16.mxu0 %v1122
        %5607 = vmatpush1.bf16.msra.mxu0 %v1121
        %5608 = vmatprep.subr.bf16.mxu0 %v1126
        %5609 = vmatpush1.bf16.msra.mxu0 %v1125
        %5610 = vmatprep.subr.bf16.mxu0 %v1130
        %5611 = vmatpush1.bf16.msra.mxu0 %v1129
        %5612 = vmatprep.subr.bf16.mxu0 %v1134
        %5613 = vmatpush1.bf16.msra.mxu0 %v1133
        %5614 = vmatprep.subr.bf16.mxu0 %v1138
        %5615 = vmatpush1.bf16.msra.mxu0 %v1137
        %5616 = vmatprep.subr.bf16.mxu0 %v1142
        %5617 = vmatpush1.bf16.msra.mxu0 %v1141
        %5618 = vmatprep.subr.bf16.mxu0 0
        %5619 = vmatpush1.bf16.msra.mxu0 0
        %5620 = vmatprep.subr.bf16.mxu0 0
        %5621 = vmatpush1.bf16.msra.mxu0 0
        %5622 = vmatprep.subr.bf16.mxu0 0
        %5623 = vmatpush1.bf16.msra.mxu0 0
        %5624 = vmatprep.subr.bf16.mxu0 0
        %5625 = vmatpush1.bf16.msra.mxu0 0
        %5626 = vmatprep.subr.bf16.mxu0 0
        %5627 = vmatpush1.bf16.msra.mxu0 0
        %5628 = vmatprep.subr.bf16.mxu0 0
        %5629 = vmatpush1.bf16.msra.mxu0 0
        %5630 = vmatprep.subr.bf16.mxu0 0
        %5631 = vmatpush1.bf16.msra.mxu0 0
        %5632 = vmatprep.subr.bf16.mxu0 0
        %5633 = vmatpush1.bf16.msra.mxu0 0
        %5634 = vmatprep.mubr.bf16.mxu0 0
        %5635 = vmatmul.mubr.bf16.gmra.mrb[0].mxu0 %v5601
        %v5636 = vpop.f32.mrb[0].mxu0
        %v5637 = vadd.f32 0.0, %v5636
        %v5638 = vpop.f32.mrb[0].mxu0
        %v5639 = vadd.f32 0.0, %v5638
        %v5640 = vpop.f32.mrb[0].mxu0
        %v5641 = vpop.f32.mrb[0].mxu0
        %5642 = vdwg.mxu0
        %5643 = vmatprep.subr.bf16.mxu0 %v1116
        %5644 = vmatpush1.bf16.msra.mxu0 %v1115
        %5645 = vmatprep.subr.bf16.mxu0 %v1120
        %5646 = vmatpush1.bf16.msra.mxu0 %v1119
        %5647 = vmatprep.subr.bf16.mxu0 %v1124
        %5648 = vmatpush1.bf16.msra.mxu0 %v1123
        %5649 = vmatprep.subr.bf16.mxu0 %v1128
        %5650 = vmatpush1.bf16.msra.mxu0 %v1127
        %5651 = vmatprep.subr.bf16.mxu0 %v1132
        %5652 = vmatpush1.bf16.msra.mxu0 %v1131
        %5653 = vmatprep.subr.bf16.mxu0 %v1136
        %5654 = vmatpush1.bf16.msra.mxu0 %v1135
        %5655 = vmatprep.subr.bf16.mxu0 %v1140
        %5656 = vmatpush1.bf16.msra.mxu0 %v1139
        %5657 = vmatprep.subr.bf16.mxu0 %v1144
        %5658 = vmatpush1.bf16.msra.mxu0 %v1143
        %5659 = vmatprep.subr.bf16.mxu0 0
        %5660 = vmatpush1.bf16.msra.mxu0 0
        %5661 = vmatprep.subr.bf16.mxu0 0
        %5662 = vmatpush1.bf16.msra.mxu0 0
        %5663 = vmatprep.subr.bf16.mxu0 0
        %5664 = vmatpush1.bf16.msra.mxu0 0
        %5665 = vmatprep.subr.bf16.mxu0 0
        %5666 = vmatpush1.bf16.msra.mxu0 0
        %5667 = vmatprep.subr.bf16.mxu0 0
        %5668 = vmatpush1.bf16.msra.mxu0 0
        %5669 = vmatprep.subr.bf16.mxu0 0
        %5670 = vmatpush1.bf16.msra.mxu0 0
        %5671 = vmatprep.subr.bf16.mxu0 0
        %5672 = vmatpush1.bf16.msra.mxu0 0
        %5673 = vmatprep.subr.bf16.mxu0 0
        %5674 = vmatpush1.bf16.msra.mxu0 0
        %5675 = vmatprep.mubr.bf16.mxu0 0
        %5676 = vmatmul.mubr.bf16.gmra.mrb[0].mxu0 %v5601
        %v5677 = vpop.f32.mrb[0].mxu0
        %v5678 = vadd.f32 0.0, %v5677
        %v5679 = vpop.f32.mrb[0].mxu0
        %v5680 = vadd.f32 0.0, %v5679
        %v5681 = vpop.f32.mrb[0].mxu0
        %v5682 = vpop.f32.mrb[0].mxu0
        %5683 = vdwg.mxu0
        %v5684 = vadd.f32 %v789, %v5637
        %v5685 = vadd.f32 %v791, %v5639
        %v5686 = vadd.f32 %v982, %v5678
        %v5687 = vadd.f32 %v984, %v5680
        %v5688 = vxor.u32 %v5684, 2147483648
        %v5689 = vmul.f32 %v5688, 1.442695
        %v5690 = vpow.pop %v5689
        %v5691 = vadd.f32 %v5690, 1.0
        %v5692 = vrcp.pop %v5691
        %v5693 = vmul.f32 1.0, %v5692
        %v5694 = vxor.u32 %v5685, 2147483648
        %v5695 = vmul.f32 %v5694, 1.442695
        %v5696 = vpow.pop %v5695
        %v5697 = vadd.f32 %v5696, 1.0
        %v5698 = vrcp.pop %v5697
        %v5699 = vmul.f32 1.0, %v5698
        %v5700 = vtanh.pop %v5686
        %v5701 = vxor.u32 %v5687, 2147483648
        %v5702 = vmul.f32 %v5701, 1.442695
        %v5703 = vpow.pop %v5702
        %v5704 = vadd.f32 %v5703, 1.0
        %v5705 = vrcp.pop %v5704
        %v5706 = vmul.f32 1.0, %v5705
        %v5707 = vmul.f32 %v5699, %v5532
        %v5708 = vmul.f32 %v5693, %v5700
        %v5709 = vadd.f32 %v5707, %v5708
        %v5710 = vtanh.pop %v5709
        %v5711 = vmul.f32 %v5706, %v5710
        %v5713 = vcombine.high %v5711, %v5711
        %v5715 = vunpack.c.l.s4 1966171168
        %v5716 = vunpack.c.0.s8 %v5715
        %v5717 = vlaneseq
        %v5718 = vshrl.u32 %v5717, 7
        %v5719 = vsub.s32 %v5716, %v5718
        %v5720 = vrot.slane %v5711, %v5719
        %v5722 = vunpack.c.l.s4 1966171168
        %v5723 = vunpack.c.0.s8 %v5722
        %v5724 = vlaneseq
        %v5725 = vshrl.u32 %v5724, 7
        %v5726 = vsub.s32 %v5723, %v5725
        %v5727 = vrot.slane %v5713, %v5726
        %v5728 = vcombine.high %v5720, %v5720
        %v5729 = vcombine.high %v5727, %v5727
        %v5731 = vunpack.c.l.s4 1966171168
        %v5732 = vunpack.c.0.s8 %v5731
        %v5733 = vlaneseq
        %v5734 = vshrl.u32 %v5733, 7
        %v5735 = vsub.s32 %v5732, %v5734
        %v5736 = vrot.slane %v5720, %v5735
        %v5738 = vunpack.c.l.s4 1966171168
        %v5739 = vunpack.c.0.s8 %v5738
        %v5740 = vlaneseq
        %v5741 = vshrl.u32 %v5740, 7
        %v5742 = vsub.s32 %v5739, %v5741
        %v5743 = vrot.slane %v5727, %v5742
        %v5745 = vunpack.c.l.s4 1966171168
        %v5746 = vunpack.c.0.s8 %v5745
        %v5747 = vlaneseq
        %v5748 = vshrl.u32 %v5747, 7
        %v5749 = vsub.s32 %v5746, %v5748
        %v5750 = vrot.slane %v5728, %v5749
        %v5752 = vunpack.c.l.s4 1966171168
        %v5753 = vunpack.c.0.s8 %v5752
        %v5754 = vlaneseq
        %v5755 = vshrl.u32 %v5754, 7
        %v5756 = vsub.s32 %v5753, %v5755
        %v5757 = vrot.slane %v5729, %v5756
        %v5758 = vcombine.high %v5736, %v5736
        %v5759 = vcombine.high %v5743, %v5743
        %v5760 = vcombine.high %v5750, %v5750
        %v5761 = vcombine.high %v5757, %v5757
        %5770 = vst [vmem:[%s244 + $0x19] sm:$0x1] %v5736
        %5771 = vst [vmem:[%s244 + $0x39] sm:$0x1] %v5750
        %5772 = vst [vmem:[%s244 + $0x59] sm:$0x1] %v5758
        %5773 = vst [vmem:[%s244 + $0x79] sm:$0x1] %v5760
        %5774 = vst [vmem:[%s244 + $0x99] sm:$0x1] %v5743
        %5775 = vst [vmem:[%s244 + $0xb9] sm:$0x1] %v5757
        %5776 = vst [vmem:[%s244 + $0xd9] sm:$0x1] %v5759
        %5777 = vst [vmem:[%s244 + $0xf9] sm:$0x1] %v5761
        %v5778 = vpack.c.bf16 %v5711, %v5711
        %5779 = vmatprep.subr.bf16.mxu0 %v1114
        %5780 = vmatpush1.bf16.msra.mxu0 %v1113
        %5781 = vmatprep.subr.bf16.mxu0 %v1118
        %5782 = vmatpush1.bf16.msra.mxu0 %v1117
        %5783 = vmatprep.subr.bf16.mxu0 %v1122
        %5784 = vmatpush1.bf16.msra.mxu0 %v1121
        %5785 = vmatprep.subr.bf16.mxu0 %v1126
        %5786 = vmatpush1.bf16.msra.mxu0 %v1125
        %5787 = vmatprep.subr.bf16.mxu0 %v1130
        %5788 = vmatpush1.bf16.msra.mxu0 %v1129
        %5789 = vmatprep.subr.bf16.mxu0 %v1134
        %5790 = vmatpush1.bf16.msra.mxu0 %v1133
        %5791 = vmatprep.subr.bf16.mxu0 %v1138
        %5792 = vmatpush1.bf16.msra.mxu0 %v1137
        %5793 = vmatprep.subr.bf16.mxu0 %v1142
        %5794 = vmatpush1.bf16.msra.mxu0 %v1141
        %5795 = vmatprep.subr.bf16.mxu0 0
        %5796 = vmatpush1.bf16.msra.mxu0 0
        %5797 = vmatprep.subr.bf16.mxu0 0
        %5798 = vmatpush1.bf16.msra.mxu0 0
        %5799 = vmatprep.subr.bf16.mxu0 0
        %5800 = vmatpush1.bf16.msra.mxu0 0
        %5801 = vmatprep.subr.bf16.mxu0 0
        %5802 = vmatpush1.bf16.msra.mxu0 0
        %5803 = vmatprep.subr.bf16.mxu0 0
        %5804 = vmatpush1.bf16.msra.mxu0 0
        %5805 = vmatprep.subr.bf16.mxu0 0
        %5806 = vmatpush1.bf16.msra.mxu0 0
        %5807 = vmatprep.subr.bf16.mxu0 0
        %5808 = vmatpush1.bf16.msra.mxu0 0
        %5809 = vmatprep.subr.bf16.mxu0 0
        %5810 = vmatpush1.bf16.msra.mxu0 0
        %5811 = vmatprep.mubr.bf16.mxu0 0
        %5812 = vmatmul.mubr.bf16.gmra.mrb[0].mxu0 %v5778
        %v5813 = vpop.f32.mrb[0].mxu0
        %v5814 = vadd.f32 0.0, %v5813
        %v5815 = vpop.f32.mrb[0].mxu0
        %v5816 = vadd.f32 0.0, %v5815
        %v5817 = vpop.f32.mrb[0].mxu0
        %v5818 = vpop.f32.mrb[0].mxu0
        %5819 = vdwg.mxu0
        %5820 = vmatprep.subr.bf16.mxu0 %v1116
        %5821 = vmatpush1.bf16.msra.mxu0 %v1115
        %5822 = vmatprep.subr.bf16.mxu0 %v1120
        %5823 = vmatpush1.bf16.msra.mxu0 %v1119
        %5824 = vmatprep.subr.bf16.mxu0 %v1124
        %5825 = vmatpush1.bf16.msra.mxu0 %v1123
        %5826 = vmatprep.subr.bf16.mxu0 %v1128
        %5827 = vmatpush1.bf16.msra.mxu0 %v1127
        %5828 = vmatprep.subr.bf16.mxu0 %v1132
        %5829 = vmatpush1.bf16.msra.mxu0 %v1131
        %5830 = vmatprep.subr.bf16.mxu0 %v1136
        %5831 = vmatpush1.bf16.msra.mxu0 %v1135
        %5832 = vmatprep.subr.bf16.mxu0 %v1140
        %5833 = vmatpush1.bf16.msra.mxu0 %v1139
        %5834 = vmatprep.subr.bf16.mxu0 %v1144
        %5835 = vmatpush1.bf16.msra.mxu0 %v1143
        %5836 = vmatprep.subr.bf16.mxu0 0
        %5837 = vmatpush1.bf16.msra.mxu0 0
        %5838 = vmatprep.subr.bf16.mxu0 0
        %5839 = vmatpush1.bf16.msra.mxu0 0
        %5840 = vmatprep.subr.bf16.mxu0 0
        %5841 = vmatpush1.bf16.msra.mxu0 0
        %5842 = vmatprep.subr.bf16.mxu0 0
        %5843 = vmatpush1.bf16.msra.mxu0 0
        %5844 = vmatprep.subr.bf16.mxu0 0
        %5845 = vmatpush1.bf16.msra.mxu0 0
        %5846 = vmatprep.subr.bf16.mxu0 0
        %5847 = vmatpush1.bf16.msra.mxu0 0
        %5848 = vmatprep.subr.bf16.mxu0 0
        %5849 = vmatpush1.bf16.msra.mxu0 0
        %5850 = vmatprep.subr.bf16.mxu0 0
        %5851 = vmatpush1.bf16.msra.mxu0 0
        %5852 = vmatprep.mubr.bf16.mxu0 0
        %5853 = vmatmul.mubr.bf16.gmra.mrb[0].mxu0 %v5778
        %v5854 = vpop.f32.mrb[0].mxu0
        %v5855 = vadd.f32 0.0, %v5854
        %v5856 = vpop.f32.mrb[0].mxu0
        %v5857 = vadd.f32 0.0, %v5856
        %v5858 = vpop.f32.mrb[0].mxu0
        %v5859 = vpop.f32.mrb[0].mxu0
        %5860 = vdwg.mxu0
        %v5861 = vadd.f32 %v795, %v5814
        %v5862 = vadd.f32 %v797, %v5816
        %v5863 = vadd.f32 %v988, %v5855
        %v5864 = vadd.f32 %v990, %v5857
        %v5865 = vxor.u32 %v5861, 2147483648
        %v5866 = vmul.f32 %v5865, 1.442695
        %v5867 = vpow.pop %v5866
        %v5868 = vadd.f32 %v5867, 1.0
        %v5869 = vrcp.pop %v5868
        %v5870 = vmul.f32 1.0, %v5869
        %v5871 = vxor.u32 %v5862, 2147483648
        %v5872 = vmul.f32 %v5871, 1.442695
        %v5873 = vpow.pop %v5872
        %v5874 = vadd.f32 %v5873, 1.0
        %v5875 = vrcp.pop %v5874
        %v5876 = vmul.f32 1.0, %v5875
        %v5877 = vtanh.pop %v5863
        %v5878 = vxor.u32 %v5864, 2147483648
        %v5879 = vmul.f32 %v5878, 1.442695
        %v5880 = vpow.pop %v5879
        %v5881 = vadd.f32 %v5880, 1.0
        %v5882 = vrcp.pop %v5881
        %v5883 = vmul.f32 1.0, %v5882
        %v5884 = vmul.f32 %v5876, %v5709
        %v5885 = vmul.f32 %v5870, %v5877
        %v5886 = vadd.f32 %v5884, %v5885
        %v5887 = vtanh.pop %v5886
        %v5888 = vmul.f32 %v5883, %v5887
        %v5890 = vcombine.high %v5888, %v5888
        %v5892 = vunpack.c.l.s4 1966171168
        %v5893 = vunpack.c.0.s8 %v5892
        %v5894 = vlaneseq
        %v5895 = vshrl.u32 %v5894, 7
        %v5896 = vsub.s32 %v5893, %v5895
        %v5897 = vrot.slane %v5888, %v5896
        %v5899 = vunpack.c.l.s4 1966171168
        %v5900 = vunpack.c.0.s8 %v5899
        %v5901 = vlaneseq
        %v5902 = vshrl.u32 %v5901, 7
        %v5903 = vsub.s32 %v5900, %v5902
        %v5904 = vrot.slane %v5890, %v5903
        %v5905 = vcombine.high %v5897, %v5897
        %v5906 = vcombine.high %v5904, %v5904
        %v5908 = vunpack.c.l.s4 1966171168
        %v5909 = vunpack.c.0.s8 %v5908
        %v5910 = vlaneseq
        %v5911 = vshrl.u32 %v5910, 7
        %v5912 = vsub.s32 %v5909, %v5911
        %v5913 = vrot.slane %v5897, %v5912
        %v5915 = vunpack.c.l.s4 1966171168
        %v5916 = vunpack.c.0.s8 %v5915
        %v5917 = vlaneseq
        %v5918 = vshrl.u32 %v5917, 7
        %v5919 = vsub.s32 %v5916, %v5918
        %v5920 = vrot.slane %v5904, %v5919
        %v5922 = vunpack.c.l.s4 1966171168
        %v5923 = vunpack.c.0.s8 %v5922
        %v5924 = vlaneseq
        %v5925 = vshrl.u32 %v5924, 7
        %v5926 = vsub.s32 %v5923, %v5925
        %v5927 = vrot.slane %v5905, %v5926
        %v5929 = vunpack.c.l.s4 1966171168
        %v5930 = vunpack.c.0.s8 %v5929
        %v5931 = vlaneseq
        %v5932 = vshrl.u32 %v5931, 7
        %v5933 = vsub.s32 %v5930, %v5932
        %v5934 = vrot.slane %v5906, %v5933
        %v5935 = vcombine.high %v5913, %v5913
        %v5936 = vcombine.high %v5920, %v5920
        %v5937 = vcombine.high %v5927, %v5927
        %v5938 = vcombine.high %v5934, %v5934
        %5947 = vst [vmem:[%s244 + $0x1a] sm:$0x1] %v5913
        %5948 = vst [vmem:[%s244 + $0x3a] sm:$0x1] %v5927
        %5949 = vst [vmem:[%s244 + $0x5a] sm:$0x1] %v5935
        %5950 = vst [vmem:[%s244 + $0x7a] sm:$0x1] %v5937
        %5951 = vst [vmem:[%s244 + $0x9a] sm:$0x1] %v5920
        %5952 = vst [vmem:[%s244 + $0xba] sm:$0x1] %v5934
        %5953 = vst [vmem:[%s244 + $0xda] sm:$0x1] %v5936
        %5954 = vst [vmem:[%s244 + $0xfa] sm:$0x1] %v5938
        %v5955 = vpack.c.bf16 %v5888, %v5888
        %5956 = vmatprep.subr.bf16.mxu0 %v1114
        %5957 = vmatpush1.bf16.msra.mxu0 %v1113
        %5958 = vmatprep.subr.bf16.mxu0 %v1118
        %5959 = vmatpush1.bf16.msra.mxu0 %v1117
        %5960 = vmatprep.subr.bf16.mxu0 %v1122
        %5961 = vmatpush1.bf16.msra.mxu0 %v1121
        %5962 = vmatprep.subr.bf16.mxu0 %v1126
        %5963 = vmatpush1.bf16.msra.mxu0 %v1125
        %5964 = vmatprep.subr.bf16.mxu0 %v1130
        %5965 = vmatpush1.bf16.msra.mxu0 %v1129
        %5966 = vmatprep.subr.bf16.mxu0 %v1134
        %5967 = vmatpush1.bf16.msra.mxu0 %v1133
        %5968 = vmatprep.subr.bf16.mxu0 %v1138
        %5969 = vmatpush1.bf16.msra.mxu0 %v1137
        %5970 = vmatprep.subr.bf16.mxu0 %v1142
        %5971 = vmatpush1.bf16.msra.mxu0 %v1141
        %5972 = vmatprep.subr.bf16.mxu0 0
        %5973 = vmatpush1.bf16.msra.mxu0 0
        %5974 = vmatprep.subr.bf16.mxu0 0
        %5975 = vmatpush1.bf16.msra.mxu0 0
        %5976 = vmatprep.subr.bf16.mxu0 0
        %5977 = vmatpush1.bf16.msra.mxu0 0
        %5978 = vmatprep.subr.bf16.mxu0 0
        %5979 = vmatpush1.bf16.msra.mxu0 0
        %5980 = vmatprep.subr.bf16.mxu0 0
        %5981 = vmatpush1.bf16.msra.mxu0 0
        %5982 = vmatprep.subr.bf16.mxu0 0
        %5983 = vmatpush1.bf16.msra.mxu0 0
        %5984 = vmatprep.subr.bf16.mxu0 0
        %5985 = vmatpush1.bf16.msra.mxu0 0
        %5986 = vmatprep.subr.bf16.mxu0 0
        %5987 = vmatpush1.bf16.msra.mxu0 0
        %5988 = vmatprep.mubr.bf16.mxu0 0
        %5989 = vmatmul.mubr.bf16.gmra.mrb[0].mxu0 %v5955
        %v5990 = vpop.f32.mrb[0].mxu0
        %v5991 = vadd.f32 0.0, %v5990
        %v5992 = vpop.f32.mrb[0].mxu0
        %v5993 = vadd.f32 0.0, %v5992
        %v5994 = vpop.f32.mrb[0].mxu0
        %v5995 = vpop.f32.mrb[0].mxu0
        %5996 = vdwg.mxu0
        %5997 = vmatprep.subr.bf16.mxu0 %v1116
        %5998 = vmatpush1.bf16.msra.mxu0 %v1115
        %5999 = vmatprep.subr.bf16.mxu0 %v1120
        %6000 = vmatpush1.bf16.msra.mxu0 %v1119
        %6001 = vmatprep.subr.bf16.mxu0 %v1124
        %6002 = vmatpush1.bf16.msra.mxu0 %v1123
        %6003 = vmatprep.subr.bf16.mxu0 %v1128
        %6004 = vmatpush1.bf16.msra.mxu0 %v1127
        %6005 = vmatprep.subr.bf16.mxu0 %v1132
        %6006 = vmatpush1.bf16.msra.mxu0 %v1131
        %6007 = vmatprep.subr.bf16.mxu0 %v1136
        %6008 = vmatpush1.bf16.msra.mxu0 %v1135
        %6009 = vmatprep.subr.bf16.mxu0 %v1140
        %6010 = vmatpush1.bf16.msra.mxu0 %v1139
        %6011 = vmatprep.subr.bf16.mxu0 %v1144
        %6012 = vmatpush1.bf16.msra.mxu0 %v1143
        %6013 = vmatprep.subr.bf16.mxu0 0
        %6014 = vmatpush1.bf16.msra.mxu0 0
        %6015 = vmatprep.subr.bf16.mxu0 0
        %6016 = vmatpush1.bf16.msra.mxu0 0
        %6017 = vmatprep.subr.bf16.mxu0 0
        %6018 = vmatpush1.bf16.msra.mxu0 0
        %6019 = vmatprep.subr.bf16.mxu0 0
        %6020 = vmatpush1.bf16.msra.mxu0 0
        %6021 = vmatprep.subr.bf16.mxu0 0
        %6022 = vmatpush1.bf16.msra.mxu0 0
        %6023 = vmatprep.subr.bf16.mxu0 0
        %6024 = vmatpush1.bf16.msra.mxu0 0
        %6025 = vmatprep.subr.bf16.mxu0 0
        %6026 = vmatpush1.bf16.msra.mxu0 0
        %6027 = vmatprep.subr.bf16.mxu0 0
        %6028 = vmatpush1.bf16.msra.mxu0 0
        %6029 = vmatprep.mubr.bf16.mxu0 0
        %6030 = vmatmul.mubr.bf16.gmra.mrb[0].mxu0 %v5955
        %v6031 = vpop.f32.mrb[0].mxu0
        %v6032 = vadd.f32 0.0, %v6031
        %v6033 = vpop.f32.mrb[0].mxu0
        %v6034 = vadd.f32 0.0, %v6033
        %v6035 = vpop.f32.mrb[0].mxu0
        %v6036 = vpop.f32.mrb[0].mxu0
        %6037 = vdwg.mxu0
        %v6038 = vadd.f32 %v799, %v5991
        %v6039 = vadd.f32 %v801, %v5993
        %v6040 = vadd.f32 %v992, %v6032
        %v6041 = vadd.f32 %v994, %v6034
        %v6042 = vxor.u32 %v6038, 2147483648
        %v6043 = vmul.f32 %v6042, 1.442695
        %v6044 = vpow.pop %v6043
        %v6045 = vadd.f32 %v6044, 1.0
        %v6046 = vrcp.pop %v6045
        %v6047 = vmul.f32 1.0, %v6046
        %v6048 = vxor.u32 %v6039, 2147483648
        %v6049 = vmul.f32 %v6048, 1.442695
        %v6050 = vpow.pop %v6049
        %v6051 = vadd.f32 %v6050, 1.0
        %v6052 = vrcp.pop %v6051
        %v6053 = vmul.f32 1.0, %v6052
        %v6054 = vtanh.pop %v6040
        %v6055 = vxor.u32 %v6041, 2147483648
        %v6056 = vmul.f32 %v6055, 1.442695
        %v6057 = vpow.pop %v6056
        %v6058 = vadd.f32 %v6057, 1.0
        %v6059 = vrcp.pop %v6058
        %v6060 = vmul.f32 1.0, %v6059
        %v6061 = vmul.f32 %v6053, %v5886
        %v6062 = vmul.f32 %v6047, %v6054
        %v6063 = vadd.f32 %v6061, %v6062
        %v6064 = vtanh.pop %v6063
        %v6065 = vmul.f32 %v6060, %v6064
        %v6067 = vcombine.high %v6065, %v6065
        %v6069 = vunpack.c.l.s4 1966171168
        %v6070 = vunpack.c.0.s8 %v6069
        %v6071 = vlaneseq
        %v6072 = vshrl.u32 %v6071, 7
        %v6073 = vsub.s32 %v6070, %v6072
        %v6074 = vrot.slane %v6065, %v6073
        %v6076 = vunpack.c.l.s4 1966171168
        %v6077 = vunpack.c.0.s8 %v6076
        %v6078 = vlaneseq
        %v6079 = vshrl.u32 %v6078, 7
        %v6080 = vsub.s32 %v6077, %v6079
        %v6081 = vrot.slane %v6067, %v6080
        %v6082 = vcombine.high %v6074, %v6074
        %v6083 = vcombine.high %v6081, %v6081
        %v6085 = vunpack.c.l.s4 1966171168
        %v6086 = vunpack.c.0.s8 %v6085
        %v6087 = vlaneseq
        %v6088 = vshrl.u32 %v6087, 7
        %v6089 = vsub.s32 %v6086, %v6088
        %v6090 = vrot.slane %v6074, %v6089
        %v6092 = vunpack.c.l.s4 1966171168
        %v6093 = vunpack.c.0.s8 %v6092
        %v6094 = vlaneseq
        %v6095 = vshrl.u32 %v6094, 7
        %v6096 = vsub.s32 %v6093, %v6095
        %v6097 = vrot.slane %v6081, %v6096
        %v6099 = vunpack.c.l.s4 1966171168
        %v6100 = vunpack.c.0.s8 %v6099
        %v6101 = vlaneseq
        %v6102 = vshrl.u32 %v6101, 7
        %v6103 = vsub.s32 %v6100, %v6102
        %v6104 = vrot.slane %v6082, %v6103
        %v6106 = vunpack.c.l.s4 1966171168
        %v6107 = vunpack.c.0.s8 %v6106
        %v6108 = vlaneseq
        %v6109 = vshrl.u32 %v6108, 7
        %v6110 = vsub.s32 %v6107, %v6109
        %v6111 = vrot.slane %v6083, %v6110
        %v6112 = vcombine.high %v6090, %v6090
        %v6113 = vcombine.high %v6097, %v6097
        %v6114 = vcombine.high %v6104, %v6104
        %v6115 = vcombine.high %v6111, %v6111
        %6124 = vst [vmem:[%s244 + $0x1b] sm:$0x1] %v6090
        %6125 = vst [vmem:[%s244 + $0x3b] sm:$0x1] %v6104
        %6126 = vst [vmem:[%s244 + $0x5b] sm:$0x1] %v6112
        %6127 = vst [vmem:[%s244 + $0x7b] sm:$0x1] %v6114
        %6128 = vst [vmem:[%s244 + $0x9b] sm:$0x1] %v6097
        %6129 = vst [vmem:[%s244 + $0xbb] sm:$0x1] %v6111
        %6130 = vst [vmem:[%s244 + $0xdb] sm:$0x1] %v6113
        %6131 = vst [vmem:[%s244 + $0xfb] sm:$0x1] %v6115
        %v6132 = vpack.c.bf16 %v6065, %v6065
        %6133 = vmatprep.subr.bf16.mxu0 %v1114
        %6134 = vmatpush1.bf16.msra.mxu0 %v1113
        %6135 = vmatprep.subr.bf16.mxu0 %v1118
        %6136 = vmatpush1.bf16.msra.mxu0 %v1117
        %6137 = vmatprep.subr.bf16.mxu0 %v1122
        %6138 = vmatpush1.bf16.msra.mxu0 %v1121
        %6139 = vmatprep.subr.bf16.mxu0 %v1126
        %6140 = vmatpush1.bf16.msra.mxu0 %v1125
        %6141 = vmatprep.subr.bf16.mxu0 %v1130
        %6142 = vmatpush1.bf16.msra.mxu0 %v1129
        %6143 = vmatprep.subr.bf16.mxu0 %v1134
        %6144 = vmatpush1.bf16.msra.mxu0 %v1133
        %6145 = vmatprep.subr.bf16.mxu0 %v1138
        %6146 = vmatpush1.bf16.msra.mxu0 %v1137
        %6147 = vmatprep.subr.bf16.mxu0 %v1142
        %6148 = vmatpush1.bf16.msra.mxu0 %v1141
        %6149 = vmatprep.subr.bf16.mxu0 0
        %6150 = vmatpush1.bf16.msra.mxu0 0
        %6151 = vmatprep.subr.bf16.mxu0 0
        %6152 = vmatpush1.bf16.msra.mxu0 0
        %6153 = vmatprep.subr.bf16.mxu0 0
        %6154 = vmatpush1.bf16.msra.mxu0 0
        %6155 = vmatprep.subr.bf16.mxu0 0
        %6156 = vmatpush1.bf16.msra.mxu0 0
        %6157 = vmatprep.subr.bf16.mxu0 0
        %6158 = vmatpush1.bf16.msra.mxu0 0
        %6159 = vmatprep.subr.bf16.mxu0 0
        %6160 = vmatpush1.bf16.msra.mxu0 0
        %6161 = vmatprep.subr.bf16.mxu0 0
        %6162 = vmatpush1.bf16.msra.mxu0 0
        %6163 = vmatprep.subr.bf16.mxu0 0
        %6164 = vmatpush1.bf16.msra.mxu0 0
        %6165 = vmatprep.mubr.bf16.mxu0 0
        %6166 = vmatmul.mubr.bf16.gmra.mrb[0].mxu0 %v6132
        %v6167 = vpop.f32.mrb[0].mxu0
        %v6168 = vadd.f32 0.0, %v6167
        %v6169 = vpop.f32.mrb[0].mxu0
        %v6170 = vadd.f32 0.0, %v6169
        %v6171 = vpop.f32.mrb[0].mxu0
        %v6172 = vpop.f32.mrb[0].mxu0
        %6173 = vdwg.mxu0
        %6174 = vmatprep.subr.bf16.mxu0 %v1116
        %6175 = vmatpush1.bf16.msra.mxu0 %v1115
        %6176 = vmatprep.subr.bf16.mxu0 %v1120
        %6177 = vmatpush1.bf16.msra.mxu0 %v1119
        %6178 = vmatprep.subr.bf16.mxu0 %v1124
        %6179 = vmatpush1.bf16.msra.mxu0 %v1123
        %6180 = vmatprep.subr.bf16.mxu0 %v1128
        %6181 = vmatpush1.bf16.msra.mxu0 %v1127
        %6182 = vmatprep.subr.bf16.mxu0 %v1132
        %6183 = vmatpush1.bf16.msra.mxu0 %v1131
        %6184 = vmatprep.subr.bf16.mxu0 %v1136
        %6185 = vmatpush1.bf16.msra.mxu0 %v1135
        %6186 = vmatprep.subr.bf16.mxu0 %v1140
        %6187 = vmatpush1.bf16.msra.mxu0 %v1139
        %6188 = vmatprep.subr.bf16.mxu0 %v1144
        %6189 = vmatpush1.bf16.msra.mxu0 %v1143
        %6190 = vmatprep.subr.bf16.mxu0 0
        %6191 = vmatpush1.bf16.msra.mxu0 0
        %6192 = vmatprep.subr.bf16.mxu0 0
        %6193 = vmatpush1.bf16.msra.mxu0 0
        %6194 = vmatprep.subr.bf16.mxu0 0
        %6195 = vmatpush1.bf16.msra.mxu0 0
        %6196 = vmatprep.subr.bf16.mxu0 0
        %6197 = vmatpush1.bf16.msra.mxu0 0
        %6198 = vmatprep.subr.bf16.mxu0 0
        %6199 = vmatpush1.bf16.msra.mxu0 0
        %6200 = vmatprep.subr.bf16.mxu0 0
        %6201 = vmatpush1.bf16.msra.mxu0 0
        %6202 = vmatprep.subr.bf16.mxu0 0
        %6203 = vmatpush1.bf16.msra.mxu0 0
        %6204 = vmatprep.subr.bf16.mxu0 0
        %6205 = vmatpush1.bf16.msra.mxu0 0
        %6206 = vmatprep.mubr.bf16.mxu0 0
        %6207 = vmatmul.mubr.bf16.gmra.mrb[0].mxu0 %v6132
        %v6208 = vpop.f32.mrb[0].mxu0
        %v6209 = vadd.f32 0.0, %v6208
        %v6210 = vpop.f32.mrb[0].mxu0
        %v6211 = vadd.f32 0.0, %v6210
        %v6212 = vpop.f32.mrb[0].mxu0
        %v6213 = vpop.f32.mrb[0].mxu0
        %6214 = vdwg.mxu0
        %v6215 = vadd.f32 %v805, %v6168
        %v6216 = vadd.f32 %v807, %v6170
        %v6217 = vadd.f32 %v998, %v6209
        %v6218 = vadd.f32 %v1000, %v6211
        %v6219 = vxor.u32 %v6215, 2147483648
        %v6220 = vmul.f32 %v6219, 1.442695
        %v6221 = vpow.pop %v6220
        %v6222 = vadd.f32 %v6221, 1.0
        %v6223 = vrcp.pop %v6222
        %v6224 = vmul.f32 1.0, %v6223
        %v6225 = vxor.u32 %v6216, 2147483648
        %v6226 = vmul.f32 %v6225, 1.442695
        %v6227 = vpow.pop %v6226
        %v6228 = vadd.f32 %v6227, 1.0
        %v6229 = vrcp.pop %v6228
        %v6230 = vmul.f32 1.0, %v6229
        %v6231 = vtanh.pop %v6217
        %v6232 = vxor.u32 %v6218, 2147483648
        %v6233 = vmul.f32 %v6232, 1.442695
        %v6234 = vpow.pop %v6233
        %v6235 = vadd.f32 %v6234, 1.0
        %v6236 = vrcp.pop %v6235
        %v6237 = vmul.f32 1.0, %v6236
        %v6238 = vmul.f32 %v6230, %v6063
        %v6239 = vmul.f32 %v6224, %v6231
        %v6240 = vadd.f32 %v6238, %v6239
        %v6241 = vtanh.pop %v6240
        %v6242 = vmul.f32 %v6237, %v6241
        %v6244 = vcombine.high %v6242, %v6242
        %v6246 = vunpack.c.l.s4 1966171168
        %v6247 = vunpack.c.0.s8 %v6246
        %v6248 = vlaneseq
        %v6249 = vshrl.u32 %v6248, 7
        %v6250 = vsub.s32 %v6247, %v6249
        %v6251 = vrot.slane %v6242, %v6250
        %v6253 = vunpack.c.l.s4 1966171168
        %v6254 = vunpack.c.0.s8 %v6253
        %v6255 = vlaneseq
        %v6256 = vshrl.u32 %v6255, 7
        %v6257 = vsub.s32 %v6254, %v6256
        %v6258 = vrot.slane %v6244, %v6257
        %v6259 = vcombine.high %v6251, %v6251
        %v6260 = vcombine.high %v6258, %v6258
        %v6262 = vunpack.c.l.s4 1966171168
        %v6263 = vunpack.c.0.s8 %v6262
        %v6264 = vlaneseq
        %v6265 = vshrl.u32 %v6264, 7
        %v6266 = vsub.s32 %v6263, %v6265
        %v6267 = vrot.slane %v6251, %v6266
        %v6269 = vunpack.c.l.s4 1966171168
        %v6270 = vunpack.c.0.s8 %v6269
        %v6271 = vlaneseq
        %v6272 = vshrl.u32 %v6271, 7
        %v6273 = vsub.s32 %v6270, %v6272
        %v6274 = vrot.slane %v6258, %v6273
        %v6276 = vunpack.c.l.s4 1966171168
        %v6277 = vunpack.c.0.s8 %v6276
        %v6278 = vlaneseq
        %v6279 = vshrl.u32 %v6278, 7
        %v6280 = vsub.s32 %v6277, %v6279
        %v6281 = vrot.slane %v6259, %v6280
        %v6283 = vunpack.c.l.s4 1966171168
        %v6284 = vunpack.c.0.s8 %v6283
        %v6285 = vlaneseq
        %v6286 = vshrl.u32 %v6285, 7
        %v6287 = vsub.s32 %v6284, %v6286
        %v6288 = vrot.slane %v6260, %v6287
        %v6289 = vcombine.high %v6267, %v6267
        %v6290 = vcombine.high %v6274, %v6274
        %v6291 = vcombine.high %v6281, %v6281
        %v6292 = vcombine.high %v6288, %v6288
        %6301 = vst [vmem:[%s244 + $0x1c] sm:$0x1] %v6267
        %6302 = vst [vmem:[%s244 + $0x3c] sm:$0x1] %v6281
        %6303 = vst [vmem:[%s244 + $0x5c] sm:$0x1] %v6289
        %6304 = vst [vmem:[%s244 + $0x7c] sm:$0x1] %v6291
        %6305 = vst [vmem:[%s244 + $0x9c] sm:$0x1] %v6274
        %6306 = vst [vmem:[%s244 + $0xbc] sm:$0x1] %v6288
        %6307 = vst [vmem:[%s244 + $0xdc] sm:$0x1] %v6290
        %6308 = vst [vmem:[%s244 + $0xfc] sm:$0x1] %v6292
        %v6309 = vpack.c.bf16 %v6242, %v6242
        %6310 = vmatprep.subr.bf16.mxu0 %v1114
        %6311 = vmatpush1.bf16.msra.mxu0 %v1113
        %6312 = vmatprep.subr.bf16.mxu0 %v1118
        %6313 = vmatpush1.bf16.msra.mxu0 %v1117
        %6314 = vmatprep.subr.bf16.mxu0 %v1122
        %6315 = vmatpush1.bf16.msra.mxu0 %v1121
        %6316 = vmatprep.subr.bf16.mxu0 %v1126
        %6317 = vmatpush1.bf16.msra.mxu0 %v1125
        %6318 = vmatprep.subr.bf16.mxu0 %v1130
        %6319 = vmatpush1.bf16.msra.mxu0 %v1129
        %6320 = vmatprep.subr.bf16.mxu0 %v1134
        %6321 = vmatpush1.bf16.msra.mxu0 %v1133
        %6322 = vmatprep.subr.bf16.mxu0 %v1138
        %6323 = vmatpush1.bf16.msra.mxu0 %v1137
        %6324 = vmatprep.subr.bf16.mxu0 %v1142
        %6325 = vmatpush1.bf16.msra.mxu0 %v1141
        %6326 = vmatprep.subr.bf16.mxu0 0
        %6327 = vmatpush1.bf16.msra.mxu0 0
        %6328 = vmatprep.subr.bf16.mxu0 0
        %6329 = vmatpush1.bf16.msra.mxu0 0
        %6330 = vmatprep.subr.bf16.mxu0 0
        %6331 = vmatpush1.bf16.msra.mxu0 0
        %6332 = vmatprep.subr.bf16.mxu0 0
        %6333 = vmatpush1.bf16.msra.mxu0 0
        %6334 = vmatprep.subr.bf16.mxu0 0
        %6335 = vmatpush1.bf16.msra.mxu0 0
        %6336 = vmatprep.subr.bf16.mxu0 0
        %6337 = vmatpush1.bf16.msra.mxu0 0
        %6338 = vmatprep.subr.bf16.mxu0 0
        %6339 = vmatpush1.bf16.msra.mxu0 0
        %6340 = vmatprep.subr.bf16.mxu0 0
        %6341 = vmatpush1.bf16.msra.mxu0 0
        %6342 = vmatprep.mubr.bf16.mxu0 0
        %6343 = vmatmul.mubr.bf16.gmra.mrb[0].mxu0 %v6309
        %v6344 = vpop.f32.mrb[0].mxu0
        %v6345 = vadd.f32 0.0, %v6344
        %v6346 = vpop.f32.mrb[0].mxu0
        %v6347 = vadd.f32 0.0, %v6346
        %v6348 = vpop.f32.mrb[0].mxu0
        %v6349 = vpop.f32.mrb[0].mxu0
        %6350 = vdwg.mxu0
        %6351 = vmatprep.subr.bf16.mxu0 %v1116
        %6352 = vmatpush1.bf16.msra.mxu0 %v1115
        %6353 = vmatprep.subr.bf16.mxu0 %v1120
        %6354 = vmatpush1.bf16.msra.mxu0 %v1119
        %6355 = vmatprep.subr.bf16.mxu0 %v1124
        %6356 = vmatpush1.bf16.msra.mxu0 %v1123
        %6357 = vmatprep.subr.bf16.mxu0 %v1128
        %6358 = vmatpush1.bf16.msra.mxu0 %v1127
        %6359 = vmatprep.subr.bf16.mxu0 %v1132
        %6360 = vmatpush1.bf16.msra.mxu0 %v1131
        %6361 = vmatprep.subr.bf16.mxu0 %v1136
        %6362 = vmatpush1.bf16.msra.mxu0 %v1135
        %6363 = vmatprep.subr.bf16.mxu0 %v1140
        %6364 = vmatpush1.bf16.msra.mxu0 %v1139
        %6365 = vmatprep.subr.bf16.mxu0 %v1144
        %6366 = vmatpush1.bf16.msra.mxu0 %v1143
        %6367 = vmatprep.subr.bf16.mxu0 0
        %6368 = vmatpush1.bf16.msra.mxu0 0
        %6369 = vmatprep.subr.bf16.mxu0 0
        %6370 = vmatpush1.bf16.msra.mxu0 0
        %6371 = vmatprep.subr.bf16.mxu0 0
        %6372 = vmatpush1.bf16.msra.mxu0 0
        %6373 = vmatprep.subr.bf16.mxu0 0
        %6374 = vmatpush1.bf16.msra.mxu0 0
        %6375 = vmatprep.subr.bf16.mxu0 0
        %6376 = vmatpush1.bf16.msra.mxu0 0
        %6377 = vmatprep.subr.bf16.mxu0 0
        %6378 = vmatpush1.bf16.msra.mxu0 0
        %6379 = vmatprep.subr.bf16.mxu0 0
        %6380 = vmatpush1.bf16.msra.mxu0 0
        %6381 = vmatprep.subr.bf16.mxu0 0
        %6382 = vmatpush1.bf16.msra.mxu0 0
        %6383 = vmatprep.mubr.bf16.mxu0 0
        %6384 = vmatmul.mubr.bf16.gmra.mrb[0].mxu0 %v6309
        %v6385 = vpop.f32.mrb[0].mxu0
        %v6386 = vadd.f32 0.0, %v6385
        %v6387 = vpop.f32.mrb[0].mxu0
        %v6388 = vadd.f32 0.0, %v6387
        %v6389 = vpop.f32.mrb[0].mxu0
        %v6390 = vpop.f32.mrb[0].mxu0
        %6391 = vdwg.mxu0
        %v6392 = vadd.f32 %v809, %v6345
        %v6393 = vadd.f32 %v811, %v6347
        %v6394 = vadd.f32 %v1002, %v6386
        %v6395 = vadd.f32 %v1004, %v6388
        %v6396 = vxor.u32 %v6392, 2147483648
        %v6397 = vmul.f32 %v6396, 1.442695
        %v6398 = vpow.pop %v6397
        %v6399 = vadd.f32 %v6398, 1.0
        %v6400 = vrcp.pop %v6399
        %v6401 = vmul.f32 1.0, %v6400
        %v6402 = vxor.u32 %v6393, 2147483648
        %v6403 = vmul.f32 %v6402, 1.442695
        %v6404 = vpow.pop %v6403
        %v6405 = vadd.f32 %v6404, 1.0
        %v6406 = vrcp.pop %v6405
        %v6407 = vmul.f32 1.0, %v6406
        %v6408 = vtanh.pop %v6394
        %v6409 = vxor.u32 %v6395, 2147483648
        %v6410 = vmul.f32 %v6409, 1.442695
        %v6411 = vpow.pop %v6410
        %v6412 = vadd.f32 %v6411, 1.0
        %v6413 = vrcp.pop %v6412
        %v6414 = vmul.f32 1.0, %v6413
        %v6415 = vmul.f32 %v6407, %v6240
        %v6416 = vmul.f32 %v6401, %v6408
        %v6417 = vadd.f32 %v6415, %v6416
        %v6418 = vtanh.pop %v6417
        %v6419 = vmul.f32 %v6414, %v6418
        %v6421 = vcombine.high %v6419, %v6419
        %v6423 = vunpack.c.l.s4 1966171168
        %v6424 = vunpack.c.0.s8 %v6423
        %v6425 = vlaneseq
        %v6426 = vshrl.u32 %v6425, 7
        %v6427 = vsub.s32 %v6424, %v6426
        %v6428 = vrot.slane %v6419, %v6427
        %v6430 = vunpack.c.l.s4 1966171168
        %v6431 = vunpack.c.0.s8 %v6430
        %v6432 = vlaneseq
        %v6433 = vshrl.u32 %v6432, 7
        %v6434 = vsub.s32 %v6431, %v6433
        %v6435 = vrot.slane %v6421, %v6434
        %v6436 = vcombine.high %v6428, %v6428
        %v6437 = vcombine.high %v6435, %v6435
        %v6439 = vunpack.c.l.s4 1966171168
        %v6440 = vunpack.c.0.s8 %v6439
        %v6441 = vlaneseq
        %v6442 = vshrl.u32 %v6441, 7
        %v6443 = vsub.s32 %v6440, %v6442
        %v6444 = vrot.slane %v6428, %v6443
        %v6446 = vunpack.c.l.s4 1966171168
        %v6447 = vunpack.c.0.s8 %v6446
        %v6448 = vlaneseq
        %v6449 = vshrl.u32 %v6448, 7
        %v6450 = vsub.s32 %v6447, %v6449
        %v6451 = vrot.slane %v6435, %v6450
        %v6453 = vunpack.c.l.s4 1966171168
        %v6454 = vunpack.c.0.s8 %v6453
        %v6455 = vlaneseq
        %v6456 = vshrl.u32 %v6455, 7
        %v6457 = vsub.s32 %v6454, %v6456
        %v6458 = vrot.slane %v6436, %v6457
        %v6460 = vunpack.c.l.s4 1966171168
        %v6461 = vunpack.c.0.s8 %v6460
        %v6462 = vlaneseq
        %v6463 = vshrl.u32 %v6462, 7
        %v6464 = vsub.s32 %v6461, %v6463
        %v6465 = vrot.slane %v6437, %v6464
        %v6466 = vcombine.high %v6444, %v6444
        %v6467 = vcombine.high %v6451, %v6451
        %v6468 = vcombine.high %v6458, %v6458
        %v6469 = vcombine.high %v6465, %v6465
        %6478 = vst [vmem:[%s244 + $0x1d] sm:$0x1] %v6444
        %6479 = vst [vmem:[%s244 + $0x3d] sm:$0x1] %v6458
        %6480 = vst [vmem:[%s244 + $0x5d] sm:$0x1] %v6466
        %6481 = vst [vmem:[%s244 + $0x7d] sm:$0x1] %v6468
        %6482 = vst [vmem:[%s244 + $0x9d] sm:$0x1] %v6451
        %6483 = vst [vmem:[%s244 + $0xbd] sm:$0x1] %v6465
        %6484 = vst [vmem:[%s244 + $0xdd] sm:$0x1] %v6467
        %6485 = vst [vmem:[%s244 + $0xfd] sm:$0x1] %v6469
        %v6486 = vpack.c.bf16 %v6419, %v6419
        %6487 = vmatprep.subr.bf16.mxu0 %v1114
        %6488 = vmatpush1.bf16.msra.mxu0 %v1113
        %6489 = vmatprep.subr.bf16.mxu0 %v1118
        %6490 = vmatpush1.bf16.msra.mxu0 %v1117
        %6491 = vmatprep.subr.bf16.mxu0 %v1122
        %6492 = vmatpush1.bf16.msra.mxu0 %v1121
        %6493 = vmatprep.subr.bf16.mxu0 %v1126
        %6494 = vmatpush1.bf16.msra.mxu0 %v1125
        %6495 = vmatprep.subr.bf16.mxu0 %v1130
        %6496 = vmatpush1.bf16.msra.mxu0 %v1129
        %6497 = vmatprep.subr.bf16.mxu0 %v1134
        %6498 = vmatpush1.bf16.msra.mxu0 %v1133
        %6499 = vmatprep.subr.bf16.mxu0 %v1138
        %6500 = vmatpush1.bf16.msra.mxu0 %v1137
        %6501 = vmatprep.subr.bf16.mxu0 %v1142
        %6502 = vmatpush1.bf16.msra.mxu0 %v1141
        %6503 = vmatprep.subr.bf16.mxu0 0
        %6504 = vmatpush1.bf16.msra.mxu0 0
        %6505 = vmatprep.subr.bf16.mxu0 0
        %6506 = vmatpush1.bf16.msra.mxu0 0
        %6507 = vmatprep.subr.bf16.mxu0 0
        %6508 = vmatpush1.bf16.msra.mxu0 0
        %6509 = vmatprep.subr.bf16.mxu0 0
        %6510 = vmatpush1.bf16.msra.mxu0 0
        %6511 = vmatprep.subr.bf16.mxu0 0
        %6512 = vmatpush1.bf16.msra.mxu0 0
        %6513 = vmatprep.subr.bf16.mxu0 0
        %6514 = vmatpush1.bf16.msra.mxu0 0
        %6515 = vmatprep.subr.bf16.mxu0 0
        %6516 = vmatpush1.bf16.msra.mxu0 0
        %6517 = vmatprep.subr.bf16.mxu0 0
        %6518 = vmatpush1.bf16.msra.mxu0 0
        %6519 = vmatprep.mubr.bf16.mxu0 0
        %6520 = vmatmul.mubr.bf16.gmra.mrb[0].mxu0 %v6486
        %v6521 = vpop.f32.mrb[0].mxu0
        %v6522 = vadd.f32 0.0, %v6521
        %v6523 = vpop.f32.mrb[0].mxu0
        %v6524 = vadd.f32 0.0, %v6523
        %v6525 = vpop.f32.mrb[0].mxu0
        %v6526 = vpop.f32.mrb[0].mxu0
        %6527 = vdwg.mxu0
        %6528 = vmatprep.subr.bf16.mxu0 %v1116
        %6529 = vmatpush1.bf16.msra.mxu0 %v1115
        %6530 = vmatprep.subr.bf16.mxu0 %v1120
        %6531 = vmatpush1.bf16.msra.mxu0 %v1119
        %6532 = vmatprep.subr.bf16.mxu0 %v1124
        %6533 = vmatpush1.bf16.msra.mxu0 %v1123
        %6534 = vmatprep.subr.bf16.mxu0 %v1128
        %6535 = vmatpush1.bf16.msra.mxu0 %v1127
        %6536 = vmatprep.subr.bf16.mxu0 %v1132
        %6537 = vmatpush1.bf16.msra.mxu0 %v1131
        %6538 = vmatprep.subr.bf16.mxu0 %v1136
        %6539 = vmatpush1.bf16.msra.mxu0 %v1135
        %6540 = vmatprep.subr.bf16.mxu0 %v1140
        %6541 = vmatpush1.bf16.msra.mxu0 %v1139
        %6542 = vmatprep.subr.bf16.mxu0 %v1144
        %6543 = vmatpush1.bf16.msra.mxu0 %v1143
        %6544 = vmatprep.subr.bf16.mxu0 0
        %6545 = vmatpush1.bf16.msra.mxu0 0
        %6546 = vmatprep.subr.bf16.mxu0 0
        %6547 = vmatpush1.bf16.msra.mxu0 0
        %6548 = vmatprep.subr.bf16.mxu0 0
        %6549 = vmatpush1.bf16.msra.mxu0 0
        %6550 = vmatprep.subr.bf16.mxu0 0
        %6551 = vmatpush1.bf16.msra.mxu0 0
        %6552 = vmatprep.subr.bf16.mxu0 0
        %6553 = vmatpush1.bf16.msra.mxu0 0
        %6554 = vmatprep.subr.bf16.mxu0 0
        %6555 = vmatpush1.bf16.msra.mxu0 0
        %6556 = vmatprep.subr.bf16.mxu0 0
        %6557 = vmatpush1.bf16.msra.mxu0 0
        %6558 = vmatprep.subr.bf16.mxu0 0
        %6559 = vmatpush1.bf16.msra.mxu0 0
        %6560 = vmatprep.mubr.bf16.mxu0 0
        %6561 = vmatmul.mubr.bf16.gmra.mrb[0].mxu0 %v6486
        %v6562 = vpop.f32.mrb[0].mxu0
        %v6563 = vadd.f32 0.0, %v6562
        %v6564 = vpop.f32.mrb[0].mxu0
        %v6565 = vadd.f32 0.0, %v6564
        %v6566 = vpop.f32.mrb[0].mxu0
        %v6567 = vpop.f32.mrb[0].mxu0
        %6568 = vdwg.mxu0
        %v6569 = vadd.f32 %v815, %v6522
        %v6570 = vadd.f32 %v817, %v6524
        %v6571 = vadd.f32 %v1008, %v6563
        %v6572 = vadd.f32 %v1010, %v6565
        %v6573 = vxor.u32 %v6569, 2147483648
        %v6574 = vmul.f32 %v6573, 1.442695
        %v6575 = vpow.pop %v6574
        %v6576 = vadd.f32 %v6575, 1.0
        %v6577 = vrcp.pop %v6576
        %v6578 = vmul.f32 1.0, %v6577
        %v6579 = vxor.u32 %v6570, 2147483648
        %v6580 = vmul.f32 %v6579, 1.442695
        %v6581 = vpow.pop %v6580
        %v6582 = vadd.f32 %v6581, 1.0
        %v6583 = vrcp.pop %v6582
        %v6584 = vmul.f32 1.0, %v6583
        %v6585 = vtanh.pop %v6571
        %v6586 = vxor.u32 %v6572, 2147483648
        %v6587 = vmul.f32 %v6586, 1.442695
        %v6588 = vpow.pop %v6587
        %v6589 = vadd.f32 %v6588, 1.0
        %v6590 = vrcp.pop %v6589
        %v6591 = vmul.f32 1.0, %v6590
        %v6592 = vmul.f32 %v6584, %v6417
        %v6593 = vmul.f32 %v6578, %v6585
        %v6594 = vadd.f32 %v6592, %v6593
        %v6595 = vtanh.pop %v6594
        %v6596 = vmul.f32 %v6591, %v6595
        %v6598 = vcombine.high %v6596, %v6596
        %v6600 = vunpack.c.l.s4 1966171168
        %v6601 = vunpack.c.0.s8 %v6600
        %v6602 = vlaneseq
        %v6603 = vshrl.u32 %v6602, 7
        %v6604 = vsub.s32 %v6601, %v6603
        %v6605 = vrot.slane %v6596, %v6604
        %v6607 = vunpack.c.l.s4 1966171168
        %v6608 = vunpack.c.0.s8 %v6607
        %v6609 = vlaneseq
        %v6610 = vshrl.u32 %v6609, 7
        %v6611 = vsub.s32 %v6608, %v6610
        %v6612 = vrot.slane %v6598, %v6611
        %v6613 = vcombine.high %v6605, %v6605
        %v6614 = vcombine.high %v6612, %v6612
        %v6616 = vunpack.c.l.s4 1966171168
        %v6617 = vunpack.c.0.s8 %v6616
        %v6618 = vlaneseq
        %v6619 = vshrl.u32 %v6618, 7
        %v6620 = vsub.s32 %v6617, %v6619
        %v6621 = vrot.slane %v6605, %v6620
        %v6623 = vunpack.c.l.s4 1966171168
        %v6624 = vunpack.c.0.s8 %v6623
        %v6625 = vlaneseq
        %v6626 = vshrl.u32 %v6625, 7
        %v6627 = vsub.s32 %v6624, %v6626
        %v6628 = vrot.slane %v6612, %v6627
        %v6630 = vunpack.c.l.s4 1966171168
        %v6631 = vunpack.c.0.s8 %v6630
        %v6632 = vlaneseq
        %v6633 = vshrl.u32 %v6632, 7
        %v6634 = vsub.s32 %v6631, %v6633
        %v6635 = vrot.slane %v6613, %v6634
        %v6637 = vunpack.c.l.s4 1966171168
        %v6638 = vunpack.c.0.s8 %v6637
        %v6639 = vlaneseq
        %v6640 = vshrl.u32 %v6639, 7
        %v6641 = vsub.s32 %v6638, %v6640
        %v6642 = vrot.slane %v6614, %v6641
        %v6643 = vcombine.high %v6621, %v6621
        %v6644 = vcombine.high %v6628, %v6628
        %v6645 = vcombine.high %v6635, %v6635
        %v6646 = vcombine.high %v6642, %v6642
        %6655 = vst [vmem:[%s244 + $0x1e] sm:$0x1] %v6621
        %6656 = vst [vmem:[%s244 + $0x3e] sm:$0x1] %v6635
        %6657 = vst [vmem:[%s244 + $0x5e] sm:$0x1] %v6643
        %6658 = vst [vmem:[%s244 + $0x7e] sm:$0x1] %v6645
        %6659 = vst [vmem:[%s244 + $0x9e] sm:$0x1] %v6628
        %6660 = vst [vmem:[%s244 + $0xbe] sm:$0x1] %v6642
        %6661 = vst [vmem:[%s244 + $0xde] sm:$0x1] %v6644
        %6662 = vst [vmem:[%s244 + $0xfe] sm:$0x1] %v6646
        %v6663 = vpack.c.bf16 %v6596, %v6596
        %6664 = vmatprep.subr.bf16.mxu0 %v1114
        %6665 = vmatpush1.bf16.msra.mxu0 %v1113
        %6666 = vmatprep.subr.bf16.mxu0 %v1118
        %6667 = vmatpush1.bf16.msra.mxu0 %v1117
        %6668 = vmatprep.subr.bf16.mxu0 %v1122
        %6669 = vmatpush1.bf16.msra.mxu0 %v1121
        %6670 = vmatprep.subr.bf16.mxu0 %v1126
        %6671 = vmatpush1.bf16.msra.mxu0 %v1125
        %6672 = vmatprep.subr.bf16.mxu0 %v1130
        %6673 = vmatpush1.bf16.msra.mxu0 %v1129
        %6674 = vmatprep.subr.bf16.mxu0 %v1134
        %6675 = vmatpush1.bf16.msra.mxu0 %v1133
        %6676 = vmatprep.subr.bf16.mxu0 %v1138
        %6677 = vmatpush1.bf16.msra.mxu0 %v1137
        %6678 = vmatprep.subr.bf16.mxu0 %v1142
        %6679 = vmatpush1.bf16.msra.mxu0 %v1141
        %6680 = vmatprep.subr.bf16.mxu0 0
        %6681 = vmatpush1.bf16.msra.mxu0 0
        %6682 = vmatprep.subr.bf16.mxu0 0
        %6683 = vmatpush1.bf16.msra.mxu0 0
        %6684 = vmatprep.subr.bf16.mxu0 0
        %6685 = vmatpush1.bf16.msra.mxu0 0
        %6686 = vmatprep.subr.bf16.mxu0 0
        %6687 = vmatpush1.bf16.msra.mxu0 0
        %6688 = vmatprep.subr.bf16.mxu0 0
        %6689 = vmatpush1.bf16.msra.mxu0 0
        %6690 = vmatprep.subr.bf16.mxu0 0
        %6691 = vmatpush1.bf16.msra.mxu0 0
        %6692 = vmatprep.subr.bf16.mxu0 0
        %6693 = vmatpush1.bf16.msra.mxu0 0
        %6694 = vmatprep.subr.bf16.mxu0 0
        %6695 = vmatpush1.bf16.msra.mxu0 0
        %6696 = vmatprep.mubr.bf16.mxu0 0
        %6697 = vmatmul.mubr.bf16.gmra.mrb[0].mxu0 %v6663
        %v6698 = vpop.f32.mrb[0].mxu0
        %v6699 = vadd.f32 0.0, %v6698
        %v6700 = vpop.f32.mrb[0].mxu0
        %v6701 = vadd.f32 0.0, %v6700
        %v6702 = vpop.f32.mrb[0].mxu0
        %v6703 = vpop.f32.mrb[0].mxu0
        %6704 = vdwg.mxu0
        %6705 = vmatprep.subr.bf16.mxu0 %v1116
        %6706 = vmatpush1.bf16.msra.mxu0 %v1115
        %6707 = vmatprep.subr.bf16.mxu0 %v1120
        %6708 = vmatpush1.bf16.msra.mxu0 %v1119
        %6709 = vmatprep.subr.bf16.mxu0 %v1124
        %6710 = vmatpush1.bf16.msra.mxu0 %v1123
        %6711 = vmatprep.subr.bf16.mxu0 %v1128
        %6712 = vmatpush1.bf16.msra.mxu0 %v1127
        %6713 = vmatprep.subr.bf16.mxu0 %v1132
        %6714 = vmatpush1.bf16.msra.mxu0 %v1131
        %6715 = vmatprep.subr.bf16.mxu0 %v1136
        %6716 = vmatpush1.bf16.msra.mxu0 %v1135
        %6717 = vmatprep.subr.bf16.mxu0 %v1140
        %6718 = vmatpush1.bf16.msra.mxu0 %v1139
        %6719 = vmatprep.subr.bf16.mxu0 %v1144
        %6720 = vmatpush1.bf16.msra.mxu0 %v1143
        %6721 = vmatprep.subr.bf16.mxu0 0
        %6722 = vmatpush1.bf16.msra.mxu0 0
        %6723 = vmatprep.subr.bf16.mxu0 0
        %6724 = vmatpush1.bf16.msra.mxu0 0
        %6725 = vmatprep.subr.bf16.mxu0 0
        %6726 = vmatpush1.bf16.msra.mxu0 0
        %6727 = vmatprep.subr.bf16.mxu0 0
        %6728 = vmatpush1.bf16.msra.mxu0 0
        %6729 = vmatprep.subr.bf16.mxu0 0
        %6730 = vmatpush1.bf16.msra.mxu0 0
        %6731 = vmatprep.subr.bf16.mxu0 0
        %6732 = vmatpush1.bf16.msra.mxu0 0
        %6733 = vmatprep.subr.bf16.mxu0 0
        %6734 = vmatpush1.bf16.msra.mxu0 0
        %6735 = vmatprep.subr.bf16.mxu0 0
        %6736 = vmatpush1.bf16.msra.mxu0 0
        %6737 = vmatprep.mubr.bf16.mxu0 0
        %6738 = vmatmul.mubr.bf16.gmra.mrb[0].mxu0 %v6663
        %v6739 = vpop.f32.mrb[0].mxu0
        %v6740 = vadd.f32 0.0, %v6739
        %v6741 = vpop.f32.mrb[0].mxu0
        %v6742 = vadd.f32 0.0, %v6741
        %v6743 = vpop.f32.mrb[0].mxu0
        %v6744 = vpop.f32.mrb[0].mxu0
        %6745 = vdwg.mxu0
        %v6746 = vadd.f32 %v819, %v6699
        %v6747 = vadd.f32 %v821, %v6701
        %v6748 = vadd.f32 %v1012, %v6740
        %v6749 = vadd.f32 %v1014, %v6742
        %v6750 = vxor.u32 %v6746, 2147483648
        %v6751 = vmul.f32 %v6750, 1.442695
        %v6752 = vpow.pop %v6751
        %v6753 = vadd.f32 %v6752, 1.0
        %v6754 = vrcp.pop %v6753
        %v6755 = vmul.f32 1.0, %v6754
        %v6756 = vxor.u32 %v6747, 2147483648
        %v6757 = vmul.f32 %v6756, 1.442695
        %v6758 = vpow.pop %v6757
        %v6759 = vadd.f32 %v6758, 1.0
        %v6760 = vrcp.pop %v6759
        %v6761 = vmul.f32 1.0, %v6760
        %v6762 = vtanh.pop %v6748
        %v6763 = vxor.u32 %v6749, 2147483648
        %v6764 = vmul.f32 %v6763, 1.442695
        %v6765 = vpow.pop %v6764
        %v6766 = vadd.f32 %v6765, 1.0
        %v6767 = vrcp.pop %v6766
        %v6768 = vmul.f32 1.0, %v6767
        %v6769 = vmul.f32 %v6761, %v6594
        %v6770 = vmul.f32 %v6755, %v6762
        %v6771 = vadd.f32 %v6769, %v6770
        %v6772 = vtanh.pop %v6771
        %v6773 = vmul.f32 %v6768, %v6772
        %v6775 = vcombine.high %v6773, %v6773
        %v6777 = vunpack.c.l.s4 1966171168
        %v6778 = vunpack.c.0.s8 %v6777
        %v6779 = vlaneseq
        %v6780 = vshrl.u32 %v6779, 7
        %v6781 = vsub.s32 %v6778, %v6780
        %v6782 = vrot.slane %v6773, %v6781
        %v6784 = vunpack.c.l.s4 1966171168
        %v6785 = vunpack.c.0.s8 %v6784
        %v6786 = vlaneseq
        %v6787 = vshrl.u32 %v6786, 7
        %v6788 = vsub.s32 %v6785, %v6787
        %v6789 = vrot.slane %v6775, %v6788
        %v6790 = vcombine.high %v6782, %v6782
        %v6791 = vcombine.high %v6789, %v6789
        %v6793 = vunpack.c.l.s4 1966171168
        %v6794 = vunpack.c.0.s8 %v6793
        %v6795 = vlaneseq
        %v6796 = vshrl.u32 %v6795, 7
        %v6797 = vsub.s32 %v6794, %v6796
        %v6798 = vrot.slane %v6782, %v6797
        %v6800 = vunpack.c.l.s4 1966171168
        %v6801 = vunpack.c.0.s8 %v6800
        %v6802 = vlaneseq
        %v6803 = vshrl.u32 %v6802, 7
        %v6804 = vsub.s32 %v6801, %v6803
        %v6805 = vrot.slane %v6789, %v6804
        %v6807 = vunpack.c.l.s4 1966171168
        %v6808 = vunpack.c.0.s8 %v6807
        %v6809 = vlaneseq
        %v6810 = vshrl.u32 %v6809, 7
        %v6811 = vsub.s32 %v6808, %v6810
        %v6812 = vrot.slane %v6790, %v6811
        %v6814 = vunpack.c.l.s4 1966171168
        %v6815 = vunpack.c.0.s8 %v6814
        %v6816 = vlaneseq
        %v6817 = vshrl.u32 %v6816, 7
        %v6818 = vsub.s32 %v6815, %v6817
        %v6819 = vrot.slane %v6791, %v6818
        %v6820 = vcombine.high %v6798, %v6798
        %v6821 = vcombine.high %v6805, %v6805
        %v6822 = vcombine.high %v6812, %v6812
        %v6823 = vcombine.high %v6819, %v6819
        %6832 = vst [vmem:[%s244 + $0x1f] sm:$0x1] %v6798
        %6833 = vst [vmem:[%s244 + $0x3f] sm:$0x1] %v6812
        %6834 = vst [vmem:[%s244 + $0x5f] sm:$0x1] %v6820
        %6835 = vst [vmem:[%s244 + $0x7f] sm:$0x1] %v6822
        %6836 = vst [vmem:[%s244 + $0x9f] sm:$0x1] %v6805
        %6837 = vst [vmem:[%s244 + $0xbf] sm:$0x1] %v6819
        %6838 = vst [vmem:[%s244 + $0xdf] sm:$0x1] %v6821
        %6839 = vst [vmem:[%s244 + $0xff] sm:$0x1] %v6823
        %6840 = vst [vmem:[#allocation2] sm:$0xff] %v6773
        %6841 = vst [vmem:[#allocation3] sm:$0xff] %v6771
        %s6842 = sand.u32 %s119, 1
        %s6843 = scalar_lea.sflag [#allocation6], %s6842
        %s6844 = sand.u32 %s119, 1
        %s6845 = smul.addr %s6844, 256
        %s6846 = scalar_lea.vmem [#allocation10], %s6845
        // Predicated region
        $region53: #{tpu_custom_call.1} parent=35 // pred_check
          %p6847 = pneg %p129
        $region54: #{tpu_custom_call.1} parent=35 // pred_check_branch
          %6849 = sbr.rel (%p6847) target = $region56
        $region55: #{tpu_custom_call.1} parent=35 // pred_region
          #allocation12 [shape = 'u32[6]{0}', space=smem, size = 0x18, scoped, tag = 'DMA stride descriptor']
          %s6850 = smul.u32 4, %s22
          %s6852 = ssub.s32 4096, 4096
          %6853 = vsyncadd %s6843, %s6852
          %s6854 = smul.addr %s6850, 128
          %s6855 = scalar_lea.hbm %s4, %s6854
          %s6857 = sshll.u32 1, 14
          %s6858 = sxor.u32 4294967295, %s6857
          %s6861 = sshll.u32 7, 18
          %s6862 = sxor.u32 4294967295, %s6861
          %s6863 = sand.u32 0, %s6862
          %s6865 = sor.u32 %s6863, 0
          %s6867 = sshll.u32 3, 24
          %s6868 = sxor.u32 4294967295, %s6867
          %s6869 = sand.u32 %s6865, %s6868
          %s6871 = sor.u32 %s6869, 0
          %s6872 = sshll.u32 %s6846, 4
          %s6873 = int_to_ptr.vmem [resolvable:$true] %s6872
          %6879 = sst [smem:[#allocation12]] 512
          %s6880 = scalar_lea.smem [#allocation12], 1
          %6881 = sst [smem:[%s6880]] 2048
          %s6882 = scalar_lea.smem [#allocation12], 2
          %6883 = sst [smem:[%s6882]] 4
          %s6884 = scalar_lea.smem [#allocation12], 3
          %6885 = sst [smem:[%s6884]] 128
          %s6886 = scalar_lea.smem [#allocation12], 4
          %6887 = sst [smem:[%s6886]] 128
          %s6888 = scalar_lea.smem [#allocation12], 5
          %6889 = sst [smem:[%s6888]] 8
          %6891 = dma.general %s6873, 4096, %s6855, %s6843, [#allocation11], [#allocation12], %s6871, 0
        $region56: #{tpu_custom_call.1} parent=35 // pred_fallthru
          _
      $region36: #{tpu_custom_call.1} parent=5 // pred_fallthru
        _
      %p6892 = scmp.le.s32.totalorder 2, %s17
      // Predicated region
      $region57: #{tpu_custom_call.1} parent=5 // pred_check
        %p6893 = pneg %p6892
      $region58: #{tpu_custom_call.1} parent=5 // pred_check_branch
        %6895 = sbr.rel (%p6893) target = $region60
      $region59: #{tpu_custom_call.1} parent=5 // pred_region
        %s6896 = ssub.s32 %s17, 2
        // Predicated region
        $region61: #{tpu_custom_call.1} parent=59 // pred_check
          %p6897 = pneg %p135
        $region62: #{tpu_custom_call.1} parent=59 // pred_check_branch
          %6899 = sbr.rel (%p6897) target = $region64
        $region63: #{tpu_custom_call.1} parent=59 // pred_region
          %s6900 = sand.u32 %s120, 1
          %s6901 = scalar_lea.sflag [#allocation6], %s6900
          %s6902 = sand.u32 %s120, 1
          %s6903 = smul.addr %s6902, 256
          %s6904 = scalar_lea.vmem [#allocation10], %s6903
          %6905 = dma.done %s6901, 4096
        $region64: #{tpu_custom_call.1} parent=59 // pred_fallthru
          _
      $region60: #{tpu_custom_call.1} parent=5 // pred_fallthru
        _
    $region6: #{tpu_custom_call.1} parent=1 // loop_footer
      %s21 = sadd.s32 1, %s17
    $region7: #{tpu_custom_call.1} parent=1 // loop_footer_branch
      %16 = sbr.rel target = $region3
    $region8: #{tpu_custom_call.1} parent=1 // loop_exit
      _
    %6906 = vsyncpa [#allocation5], 1
    %s6907 = scalar_lea.sflag [#allocation5], 1
    %6908 = vsyncpa %s6907, 1
    %6909 = vsyncpa [#allocation8], 1
    %6910 = vsyncpa [#allocation6], 1
    %s6911 = scalar_lea.sflag [#allocation6], 1
    %6912 = vsyncpa %s6911, 1

</llo_original>
